<compile_context>
chip_gen: v6e
topology: v6e:2x2x1
jax: 0.10.0
libtpu: 0.0.40
codegen_flags: <defaults>
</compile_context>

<pallas_src>
import functools
import math

import jax
import jax.numpy as jnp
from jax import lax
from jax.experimental import pallas as pl
from jax.experimental.pallas import tpu as pltpu

BN_EPS = 1e-5

# ----------------------------- model config ---------------------------------
INPUT_SIZE = 24        # MLP "input_size"
OUTPUT_SIZE = 2        # MLP "output_size"
UP_SIZE = 4            # LSTM input feature size
LSTM_HIDDEN = 8        # LSTM hidden size
LSTM_LAYERS = 2        # LSTM layer count
FC_DIMS = [INPUT_SIZE, 1280, 1024, 896, 768, 512, 384, 256, 256, 128, 64, 32,
           OUTPUT_SIZE]
N_FC = len(FC_DIMS) - 1
HEAD = INPUT_SIZE - LSTM_HIDDEN          # input columns that survive overwrite
MAX_OUT = max(FC_DIMS[1:])

GATE_PAD = 128                           # each LSTM gate gets its own 128-lane block
LSTM_IN_PAD = 8                          # LSTM input widths (4 and 8) pad to one 8-row block

TAIL_START = 8                           # FC layers >= this index share one packed buffer
TAIL_WIDTH = 128


def _tail_layout():
    offs, rows = [], 0
    for i in range(TAIL_START, N_FC):
        offs.append(rows)
        rows += ((FC_DIMS[i] + 31) // 32) * 32    # int8 sublane tile = 32 rows
    return tuple(offs), rows


TAIL_OFFS, TAIL_ROWS = _tail_layout()
assert max(FC_DIMS[TAIL_START + 1:]) <= TAIL_WIDTH
N_W = TAIL_START + 2                     # 2 blocks (layer 0) + solo layers + 1 tail buffer

_VMEM = pl.BlockSpec(memory_space=pltpu.MemorySpace.VMEM)
_SMEM = pl.BlockSpec(memory_space=pltpu.MemorySpace.SMEM)
_HBM = pl.BlockSpec(memory_space=pl.ANY)


# ------------------------------ fused kernel ---------------------------------
def _fused_mlp_kernel(*args, n_fc, n_lstm, hidden, gate_pad, t_len,
                      tail_start, tail_offs, fc_dims, n_w):
    idx = 0
    inp_ref = args[idx]; idx += 1              # (Bp, HEAD)        f32 VMEM
    up_ref = args[idx]; idx += 1               # (T*Bp, 8)         f32 VMEM
    alpha_ref = args[idx]; idx += 1            # (n_fc-1,)         f32 SMEM
    lstm_ref = args[idx]; idx += 1             # (24*n_lstm, 512)  f32 VMEM
    meta_ref = args[idx]; idx += 1             # (2*n_fc, MAX_OUT) f32 VMEM
    w_hbm = args[idx:idx + n_w]; idx += n_w    # int8 weights (HBM)
    out_ref = args[idx]; idx += 1              # (Bp, OUTPUT_SIZE) f32 VMEM
    w_vmem = args[idx:idx + n_w]; idx += n_w   # int8 VMEM weight scratch
    sem = args[idx]                            # DMA semaphores (n_w,)

    # (perf) hoist all SMEM scalar reads before any DMA .wait().
    alphas = [alpha_ref[i] for i in range(n_fc - 1)]

    # Kick off every weight DMA now; they stream while the LSTM and the earlier
    # (smaller) FC layers compute.
    copies = []
    for i in range(n_w):
        cp = pltpu.make_async_copy(w_hbm[i], w_vmem[i], sem.at[i])
        cp.start()
        copies.append(cp)

    bp = inp_ref.shape[0]
    hh = hidden
    gp = gate_pad

    # ---------------- LSTM: hoisted input projection + lane-aligned gates ----
    def run_lstm_layer(x_proj, whh):
        # x_proj: (T*Bp, 4*gp) with bias folded in; whh: (8, 4*gp).
        h = jnp.zeros((bp, gp), jnp.float32)
        c = jnp.zeros((bp, gp), jnp.float32)
        hs = []
        for t in range(t_len):
            g = x_proj[t * bp:(t + 1) * bp, :] + jnp.dot(
                h[:, :hh], whh, preferred_element_type=jnp.float32)
            i_g = jax.nn.sigmoid(g[:, 0 * gp:1 * gp])
            f_g = jax.nn.sigmoid(g[:, 1 * gp:2 * gp])
            g_g = jnp.tanh(g[:, 2 * gp:3 * gp])
            o_g = jax.nn.sigmoid(g[:, 3 * gp:4 * gp])
            c = f_g * c + i_g * g_g
            h = o_g * jnp.tanh(c)
            hs.append(h[:, :hh])
        return hs

    x_seq = up_ref[...]                                     # (T*Bp, 8)
    hs = None
    for l in range(n_lstm):
        wih = lstm_ref[16 * l:16 * l + 8, :]                # (8, 4*gp)
        whh = lstm_ref[16 * l + 8:16 * (l + 1), :]          # (8, 4*gp)
        brow = 16 * n_lstm + 8 * l
        bias = lstm_ref[brow:brow + 1, :]                   # (1, 4*gp)
        proj = jnp.dot(x_seq, wih, preferred_element_type=jnp.float32) + bias
        hs = run_lstm_layer(proj, whh)
        if l + 1 < n_lstm:
            x_seq = jnp.concatenate(hs, axis=0)             # (T*Bp, hh)
    up_hidden = hs[-1]                                      # (Bp, hh) = h_n top layer

    # ---------------- FC chain: int8 weights, bf16 matmul, f32 accumulate ----
    def affine(acc, i):
        out_i = fc_dims[i + 1]
        scale = meta_ref[2 * i + 1:2 * i + 2, :out_i]       # per-channel dequant
        bias = meta_ref[2 * i:2 * i + 1, :out_i]            # BN-folded bias
        return acc * scale + bias

    # Layer 0: new_input = [inp_head | up_hidden] realized as a split matmul.
    copies[0].wait()
    copies[1].wait()
    acc = (jnp.dot(inp_ref[...].astype(jnp.bfloat16),
                   w_vmem[0][...].astype(jnp.bfloat16),
                   preferred_element_type=jnp.float32)
           + jnp.dot(up_hidden.astype(jnp.bfloat16),
                     w_vmem[1][...].astype(jnp.bfloat16),
                     preferred_element_type=jnp.float32))
    y = affine(acc, 0)
    x = jnp.where(y > 0, y, alphas[0] * y).astype(jnp.bfloat16)

    for i in range(1, n_fc):
        if i < tail_start:
            copies[i + 1].wait()
            wq = w_vmem[i + 1][...]
        else:
            if i == tail_start:
                copies[n_w - 1].wait()                      # one wait for all tail layers
            o = tail_offs[i - tail_start]
            wq = w_vmem[n_w - 1][o:o + fc_dims[i], :fc_dims[i + 1]]
        acc = jnp.dot(x, wq.astype(jnp.bfloat16),
                      preferred_element_type=jnp.float32)
        y = affine(acc, i)
        if i < n_fc - 1:
            x = jnp.where(y > 0, y, alphas[i] * y).astype(jnp.bfloat16)
        else:
            out_ref[...] = y.astype(out_ref.dtype)


# ------------------------------ param packing --------------------------------
def _scatter_gates(w, hidden, gate_pad):
    """(rows, 4*hidden) -> (rows, 4*gate_pad); gate g -> lanes [g*gate_pad, +hidden)."""
    rows = w.shape[0]
    out = jnp.zeros((rows, 4 * gate_pad), w.dtype)
    for g in range(4):
        out = out.at[:, g * gate_pad:g * gate_pad + hidden].set(
            w[:, g * hidden:(g + 1) * hidden])
    return out


def prepare_kernel_params(params):
    """Transpose FC weights to (in,out), fold eval BN into the next linear,
    quantize to int8 per output channel, split layer 0 into [input|lstm-hidden]
    blocks, pack the small tail weights into one buffer, and pack biases/scales
    and LSTM weights into single DMA-able buffers."""
    fc = params["fc"]
    n_fc = len(fc)
    assert n_fc == N_FC
    fc_w, tail_blocks, alphas = [], [], []
    meta = jnp.zeros((2 * n_fc, MAX_OUT), jnp.float32)
    for i, layer in enumerate(fc):
        wt = layer["w"].T.astype(jnp.float32)               # (in, out)
        b = layer["b"].astype(jnp.float32)
        if i > 0:                                           # fold BN_{i-1}
            prev = fc[i - 1]
            s = prev["gamma"] * lax.rsqrt(prev["var"] + BN_EPS)
            t = prev["beta"] - prev["mean"] * s
            b = b + t @ wt
            wt = wt * s[:, None]
        # Weight-only int8 quantization (per output channel).  The BN scale is
        # absorbed into the per-channel dequant scale, so it cannot inflate the
        # quantized dynamic range.
        amax = jnp.max(jnp.abs(wt), axis=0)
        scale = jnp.maximum(amax, 1e-30) / 127.0
        q = jnp.clip(jnp.round(wt / scale), -127.0, 127.0).astype(jnp.int8)
        out_i = wt.shape[1]
        meta = meta.at[2 * i, :out_i].set(b)
        meta = meta.at[2 * i + 1, :out_i].set(scale)
        if i == 0:
            fc_w.append(q[:HEAD])                           # acts on inp part
            fc_w.append(q[HEAD:])                           # acts on up_hidden
        elif i < TAIL_START:
            fc_w.append(q)
        else:
            tail_blocks.append(q)
        if i < n_fc - 1:
            alphas.append(layer["alpha"])
    tail = jnp.zeros((TAIL_ROWS, TAIL_WIDTH), jnp.int8)
    for k, q in enumerate(tail_blocks):
        o = TAIL_OFFS[k]
        tail = tail.at[o:o + q.shape[0], :q.shape[1]].set(q)
    fc_w.append(tail)
    assert len(fc_w) == N_W

    # LSTM weights: per-gate 128-lane blocks, packed into one f32 buffer whose
    # row offsets are multiples of the 8-row f32 sublane tile.
    n_lstm = len(params["lstm"])
    assert LSTM_HIDDEN <= LSTM_IN_PAD and UP_SIZE <= LSTM_IN_PAD
    lstm_packed = jnp.zeros((24 * n_lstm, 4 * GATE_PAD), jnp.float32)
    for l, (wih, whh, bih, bhh) in enumerate(params["lstm"]):
        wih_p = _scatter_gates(wih.T.astype(jnp.float32), LSTM_HIDDEN, GATE_PAD)
        whh_p = _scatter_gates(whh.T.astype(jnp.float32), LSTM_HIDDEN, GATE_PAD)
        b_p = _scatter_gates((bih + bhh).reshape(1, -1).astype(jnp.float32),
                             LSTM_HIDDEN, GATE_PAD)
        lstm_packed = lstm_packed.at[16 * l:16 * l + wih_p.shape[0], :].set(wih_p)
        lstm_packed = lstm_packed.at[
            16 * l + 8:16 * l + 8 + whh_p.shape[0], :].set(whh_p)
        brow = 16 * n_lstm + 8 * l
        lstm_packed = lstm_packed.at[brow:brow + 1, :].set(b_p)

    return {"fc_w": fc_w, "meta": meta,
            "alpha": jnp.stack(alphas).astype(jnp.float32),
            "lstm": lstm_packed}


# ------------------------------ wrapper ---------------------------------------
def mlp_forward(inp, up, kparams):
    """inp: (B, F_in) with F_in <= INPUT_SIZE;  up: (B, T, UP_SIZE)."""
    batch, f_in = inp.shape
    t_len = up.shape[1]
    assert f_in <= INPUT_SIZE
    assert HEAD == INPUT_SIZE - LSTM_HIDDEN
    bp = max(8, ((batch + 7) // 8) * 8)          # pad batch to the sublane tile

    # new_input[:, :F_in] = inp is followed by new_input[:, -H:] = up_hidden,
    # so input columns >= HEAD are always overwritten: dropping them is exact.
    keep = min(f_in, HEAD)
    inp_head = jnp.zeros((bp, HEAD), jnp.float32)
    inp_head = inp_head.at[:batch, :keep].set(inp[:, :keep].astype(jnp.float32))

    up_t = jnp.transpose(up, (1, 0, 2)).astype(jnp.float32)       # (T, B, up)
    up_pad = jnp.zeros((t_len, bp, LSTM_IN_PAD), jnp.float32)
    up_pad = up_pad.at[:, :batch, :UP_SIZE].set(up_t)
    up2d = up_pad.reshape(t_len * bp, LSTM_IN_PAD)                # time-major, flat

    fc_w = kparams["fc_w"]
    n_w = len(fc_w)

    kernel = functools.partial(
        _fused_mlp_kernel, n_fc=N_FC, n_lstm=LSTM_LAYERS, hidden=LSTM_HIDDEN,
        gate_pad=GATE_PAD, t_len=t_len, tail_start=TAIL_START,
        tail_offs=TAIL_OFFS, fc_dims=tuple(FC_DIMS), n_w=n_w)

    out = pl.pallas_call(
        kernel,
        out_shape=jax.ShapeDtypeStruct((bp, OUTPUT_SIZE), jnp.float32),
        in_specs=([_VMEM, _VMEM, _SMEM, _VMEM, _VMEM] + [_HBM] * n_w),
        out_specs=_VMEM,
        scratch_shapes=([pltpu.VMEM(w.shape, jnp.int8) for w in fc_w]
                        + [pltpu.SemaphoreType.DMA((n_w,))]),
        compiler_params=pltpu.CompilerParams(
            vmem_limit_bytes=32 * 1024 * 1024),
    )(inp_head, up2d, kparams["alpha"], kparams["lstm"], kparams["meta"], *fc_w)
    return out[:batch]


# --------------------------- pure-JAX reference -------------------------------
def mlp_reference(inp, up, params):
    x = jnp.transpose(up, (1, 0, 2)).astype(jnp.float32)     # (T, B, up)
    for (wih, whh, bih, bhh) in params["lstm"]:
        hsz = whh.shape[1]
        b = x.shape[1]
        h = jnp.zeros((b, hsz), jnp.float32)
        c = jnp.zeros((b, hsz), jnp.float32)
        outs = []
        for t in range(x.shape[0]):
            g = x[t] @ wih.T + h @ whh.T + bih + bhh
            i_g = jax.nn.sigmoid(g[:, :hsz])
            f_g = jax.nn.sigmoid(g[:, hsz:2 * hsz])
            g_g = jnp.tanh(g[:, 2 * hsz:3 * hsz])
            o_g = jax.nn.sigmoid(g[:, 3 * hsz:])
            c = f_g * c + i_g * g_g
            h = o_g * jnp.tanh(c)
            outs.append(h)
        x = jnp.stack(outs)
    up_hidden = x[-1]
    b = inp.shape[0]
    new_input = jnp.zeros((b, INPUT_SIZE), jnp.float32)
    new_input = new_input.at[:, :inp.shape[1]].set(inp.astype(jnp.float32))
    new_input = new_input.at[:, -LSTM_HIDDEN:].set(up_hidden)
    z = new_input
    fc = params["fc"]
    for idx, layer in enumerate(fc):
        z = z @ layer["w"].T + layer["b"]
        if idx < len(fc) - 1:
            z = jnp.where(z > 0, z, layer["alpha"] * z)
            inv = lax.rsqrt(layer["var"] + BN_EPS)
            z = (z - layer["mean"]) * inv * layer["gamma"] + layer["beta"]
    return z


# --------------------------- deterministic params -----------------------------
def init_params(key):
    fc = []
    for i in range(len(FC_DIMS) - 1):
        key, k1, k2, k3, k4, k5, k6 = jax.random.split(key, 7)
        fan_in, fan_out = FC_DIMS[i], FC_DIMS[i + 1]
        bound = 1.0 / math.sqrt(fan_in)
        fc.append(dict(
            w=jax.random.uniform(k1, (fan_out, fan_in), jnp.float32,
                                 -bound, bound),
            b=jax.random.uniform(k2, (fan_out,), jnp.float32, -bound, bound),
            alpha=jax.random.uniform(k6, (), jnp.float32, 0.1, 0.4),
            gamma=jax.random.uniform(k3, (fan_out,), jnp.float32, 0.8, 1.2),
            beta=jax.random.uniform(k4, (fan_out,), jnp.float32, -0.1, 0.1),
            mean=jax.random.uniform(k5, (fan_out,), jnp.float32, -0.1, 0.1),
            var=jnp.ones((fan_out,), jnp.float32),
        ))
    lstm = []
    d_in = UP_SIZE
    for _ in range(LSTM_LAYERS):
        key, k1, k2, k3, k4 = jax.random.split(key, 5)
        bound = 1.0 / math.sqrt(LSTM_HIDDEN)
        lstm.append((
            jax.random.uniform(k1, (4 * LSTM_HIDDEN, d_in), jnp.float32,
                               -bound, bound),
            jax.random.uniform(k2, (4 * LSTM_HIDDEN, LSTM_HIDDEN), jnp.float32,
                               -bound, bound),
            jax.random.uniform(k3, (4 * LSTM_HIDDEN,), jnp.float32,
                               -bound, bound),
            jax.random.uniform(k4, (4 * LSTM_HIDDEN,), jnp.float32,
                               -bound, bound),
        ))
        d_in = LSTM_HIDDEN
    return {"fc": fc, "lstm": lstm}


if __name__ == "__main__":
    key = jax.random.PRNGKey(0)
    key, kp, kx, ku = jax.random.split(key, 4)
    params = init_params(kp)
    kparams = prepare_kernel_params(params)

    batch, seq, in_feat = 4, 6, 16          # in_feat <= INPUT_SIZE
    inp = jax.random.normal(kx, (batch, in_feat), jnp.float32)
    up = jax.random.normal(ku, (batch, seq, UP_SIZE), jnp.float32)

    fwd = jax.jit(mlp_forward)
    out = fwd(inp, up, kparams)
    jax.block_until_ready(out)
    assert out.shape == (batch, OUTPUT_SIZE), out.shape

    ref = mlp_reference(inp, up, params)
    err = float(jnp.max(jnp.abs(out - ref)))
    assert err < 5e-2, f"max abs error vs fp32 reference: {err}"
    print("KERNEL_OK")
</pallas_src>

<mosaic_0001>
module attributes {stable_mosaic.version = 11 : i64} {
  func.func @_fused_mlp_kernel(%arg0: memref<8x16xf32, #tpu.memory_space<vmem>>, %arg1: memref<48x8xf32, #tpu.memory_space<vmem>>, %arg2: memref<11xf32, #tpu.memory_space<smem>>, %arg3: memref<48x512xf32, #tpu.memory_space<vmem>>, %arg4: memref<24x1280xf32, #tpu.memory_space<vmem>>, %arg5: memref<16x1280xi8, #tpu.memory_space<any>>, %arg6: memref<8x1280xi8, #tpu.memory_space<any>>, %arg7: memref<1280x1024xi8, #tpu.memory_space<any>>, %arg8: memref<1024x896xi8, #tpu.memory_space<any>>, %arg9: memref<896x768xi8, #tpu.memory_space<any>>, %arg10: memref<768x512xi8, #tpu.memory_space<any>>, %arg11: memref<512x384xi8, #tpu.memory_space<any>>, %arg12: memref<384x256xi8, #tpu.memory_space<any>>, %arg13: memref<256x256xi8, #tpu.memory_space<any>>, %arg14: memref<480x128xi8, #tpu.memory_space<any>>, %arg15: memref<8x2xf32, #tpu.memory_space<vmem>>, %arg16: memref<16x1280xi8, #tpu.memory_space<vmem>>, %arg17: memref<8x1280xi8, #tpu.memory_space<vmem>>, %arg18: memref<1280x1024xi8, #tpu.memory_space<vmem>>, %arg19: memref<1024x896xi8, #tpu.memory_space<vmem>>, %arg20: memref<896x768xi8, #tpu.memory_space<vmem>>, %arg21: memref<768x512xi8, #tpu.memory_space<vmem>>, %arg22: memref<512x384xi8, #tpu.memory_space<vmem>>, %arg23: memref<384x256xi8, #tpu.memory_space<vmem>>, %arg24: memref<256x256xi8, #tpu.memory_space<vmem>>, %arg25: memref<480x128xi8, #tpu.memory_space<vmem>>, %arg26: memref<10x!tpu.dma_semaphore, #tpu.memory_space<semaphore_mem>>) attributes {dimension_semantics = [], scalar_prefetch = 0 : i64, scratch_operands = 11 : i64, tpu.core_type = #tpu.core_type<tc>} {
    %c0 = arith.constant 0 : index
    %0 = memref.load %arg2[%c0] : memref<11xf32, #tpu.memory_space<smem>>
    %c1 = arith.constant 1 : index
    %1 = memref.load %arg2[%c1] : memref<11xf32, #tpu.memory_space<smem>>
    %c2 = arith.constant 2 : index
    %2 = memref.load %arg2[%c2] : memref<11xf32, #tpu.memory_space<smem>>
    %c3 = arith.constant 3 : index
    %3 = memref.load %arg2[%c3] : memref<11xf32, #tpu.memory_space<smem>>
    %c4 = arith.constant 4 : index
    %4 = memref.load %arg2[%c4] : memref<11xf32, #tpu.memory_space<smem>>
    %c5 = arith.constant 5 : index
    %5 = memref.load %arg2[%c5] : memref<11xf32, #tpu.memory_space<smem>>
    %c6 = arith.constant 6 : index
    %6 = memref.load %arg2[%c6] : memref<11xf32, #tpu.memory_space<smem>>
    %c7 = arith.constant 7 : index
    %7 = memref.load %arg2[%c7] : memref<11xf32, #tpu.memory_space<smem>>
    %c8 = arith.constant 8 : index
    %8 = memref.load %arg2[%c8] : memref<11xf32, #tpu.memory_space<smem>>
    %c9 = arith.constant 9 : index
    %9 = memref.load %arg2[%c9] : memref<11xf32, #tpu.memory_space<smem>>
    %c10 = arith.constant 10 : index
    %10 = memref.load %arg2[%c10] : memref<11xf32, #tpu.memory_space<smem>>
    %c0_i32 = arith.constant 0 : i32
    %11 = tpu.memref_slice %arg26[%c0_i32] : memref<10x!tpu.dma_semaphore, #tpu.memory_space<semaphore_mem>> -> memref<1x!tpu.dma_semaphore, #tpu.memory_space<semaphore_mem>>
    %12 = tpu.memref_squeeze %11 : memref<1x!tpu.dma_semaphore, #tpu.memory_space<semaphore_mem>> -> memref<!tpu.dma_semaphore, #tpu.memory_space<semaphore_mem>>
    tpu.enqueue_dma source(%arg5 : memref<16x1280xi8, #tpu.memory_space<any>>) target(%arg16 : memref<16x1280xi8, #tpu.memory_space<vmem>>) target_semaphore(%12 : memref<!tpu.dma_semaphore, #tpu.memory_space<semaphore_mem>>)
    %c1_i32 = arith.constant 1 : i32
    %13 = tpu.memref_slice %arg26[%c1_i32] : memref<10x!tpu.dma_semaphore, #tpu.memory_space<semaphore_mem>> -> memref<1x!tpu.dma_semaphore, #tpu.memory_space<semaphore_mem>>
    %14 = tpu.memref_squeeze %13 : memref<1x!tpu.dma_semaphore, #tpu.memory_space<semaphore_mem>> -> memref<!tpu.dma_semaphore, #tpu.memory_space<semaphore_mem>>
    tpu.enqueue_dma source(%arg6 : memref<8x1280xi8, #tpu.memory_space<any>>) target(%arg17 : memref<8x1280xi8, #tpu.memory_space<vmem>>) target_semaphore(%14 : memref<!tpu.dma_semaphore, #tpu.memory_space<semaphore_mem>>)
    %c2_i32 = arith.constant 2 : i32
    %15 = tpu.memref_slice %arg26[%c2_i32] : memref<10x!tpu.dma_semaphore, #tpu.memory_space<semaphore_mem>> -> memref<1x!tpu.dma_semaphore, #tpu.memory_space<semaphore_mem>>
    %16 = tpu.memref_squeeze %15 : memref<1x!tpu.dma_semaphore, #tpu.memory_space<semaphore_mem>> -> memref<!tpu.dma_semaphore, #tpu.memory_space<semaphore_mem>>
    tpu.enqueue_dma source(%arg7 : memref<1280x1024xi8, #tpu.memory_space<any>>) target(%arg18 : memref<1280x1024xi8, #tpu.memory_space<vmem>>) target_semaphore(%16 : memref<!tpu.dma_semaphore, #tpu.memory_space<semaphore_mem>>)
    %c3_i32 = arith.constant 3 : i32
    %17 = tpu.memref_slice %arg26[%c3_i32] : memref<10x!tpu.dma_semaphore, #tpu.memory_space<semaphore_mem>> -> memref<1x!tpu.dma_semaphore, #tpu.memory_space<semaphore_mem>>
    %18 = tpu.memref_squeeze %17 : memref<1x!tpu.dma_semaphore, #tpu.memory_space<semaphore_mem>> -> memref<!tpu.dma_semaphore, #tpu.memory_space<semaphore_mem>>
    tpu.enqueue_dma source(%arg8 : memref<1024x896xi8, #tpu.memory_space<any>>) target(%arg19 : memref<1024x896xi8, #tpu.memory_space<vmem>>) target_semaphore(%18 : memref<!tpu.dma_semaphore, #tpu.memory_space<semaphore_mem>>)
    %c4_i32 = arith.constant 4 : i32
    %19 = tpu.memref_slice %arg26[%c4_i32] : memref<10x!tpu.dma_semaphore, #tpu.memory_space<semaphore_mem>> -> memref<1x!tpu.dma_semaphore, #tpu.memory_space<semaphore_mem>>
    %20 = tpu.memref_squeeze %19 : memref<1x!tpu.dma_semaphore, #tpu.memory_space<semaphore_mem>> -> memref<!tpu.dma_semaphore, #tpu.memory_space<semaphore_mem>>
    tpu.enqueue_dma source(%arg9 : memref<896x768xi8, #tpu.memory_space<any>>) target(%arg20 : memref<896x768xi8, #tpu.memory_space<vmem>>) target_semaphore(%20 : memref<!tpu.dma_semaphore, #tpu.memory_space<semaphore_mem>>)
    %c5_i32 = arith.constant 5 : i32
    %21 = tpu.memref_slice %arg26[%c5_i32] : memref<10x!tpu.dma_semaphore, #tpu.memory_space<semaphore_mem>> -> memref<1x!tpu.dma_semaphore, #tpu.memory_space<semaphore_mem>>
    %22 = tpu.memref_squeeze %21 : memref<1x!tpu.dma_semaphore, #tpu.memory_space<semaphore_mem>> -> memref<!tpu.dma_semaphore, #tpu.memory_space<semaphore_mem>>
    tpu.enqueue_dma source(%arg10 : memref<768x512xi8, #tpu.memory_space<any>>) target(%arg21 : memref<768x512xi8, #tpu.memory_space<vmem>>) target_semaphore(%22 : memref<!tpu.dma_semaphore, #tpu.memory_space<semaphore_mem>>)
    %c6_i32 = arith.constant 6 : i32
    %23 = tpu.memref_slice %arg26[%c6_i32] : memref<10x!tpu.dma_semaphore, #tpu.memory_space<semaphore_mem>> -> memref<1x!tpu.dma_semaphore, #tpu.memory_space<semaphore_mem>>
    %24 = tpu.memref_squeeze %23 : memref<1x!tpu.dma_semaphore, #tpu.memory_space<semaphore_mem>> -> memref<!tpu.dma_semaphore, #tpu.memory_space<semaphore_mem>>
    tpu.enqueue_dma source(%arg11 : memref<512x384xi8, #tpu.memory_space<any>>) target(%arg22 : memref<512x384xi8, #tpu.memory_space<vmem>>) target_semaphore(%24 : memref<!tpu.dma_semaphore, #tpu.memory_space<semaphore_mem>>)
    %c7_i32 = arith.constant 7 : i32
    %25 = tpu.memref_slice %arg26[%c7_i32] : memref<10x!tpu.dma_semaphore, #tpu.memory_space<semaphore_mem>> -> memref<1x!tpu.dma_semaphore, #tpu.memory_space<semaphore_mem>>
    %26 = tpu.memref_squeeze %25 : memref<1x!tpu.dma_semaphore, #tpu.memory_space<semaphore_mem>> -> memref<!tpu.dma_semaphore, #tpu.memory_space<semaphore_mem>>
    tpu.enqueue_dma source(%arg12 : memref<384x256xi8, #tpu.memory_space<any>>) target(%arg23 : memref<384x256xi8, #tpu.memory_space<vmem>>) target_semaphore(%26 : memref<!tpu.dma_semaphore, #tpu.memory_space<semaphore_mem>>)
    %c8_i32 = arith.constant 8 : i32
    %27 = tpu.memref_slice %arg26[%c8_i32] : memref<10x!tpu.dma_semaphore, #tpu.memory_space<semaphore_mem>> -> memref<1x!tpu.dma_semaphore, #tpu.memory_space<semaphore_mem>>
    %28 = tpu.memref_squeeze %27 : memref<1x!tpu.dma_semaphore, #tpu.memory_space<semaphore_mem>> -> memref<!tpu.dma_semaphore, #tpu.memory_space<semaphore_mem>>
    tpu.enqueue_dma source(%arg13 : memref<256x256xi8, #tpu.memory_space<any>>) target(%arg24 : memref<256x256xi8, #tpu.memory_space<vmem>>) target_semaphore(%28 : memref<!tpu.dma_semaphore, #tpu.memory_space<semaphore_mem>>)
    %c9_i32 = arith.constant 9 : i32
    %29 = tpu.memref_slice %arg26[%c9_i32] : memref<10x!tpu.dma_semaphore, #tpu.memory_space<semaphore_mem>> -> memref<1x!tpu.dma_semaphore, #tpu.memory_space<semaphore_mem>>
    %30 = tpu.memref_squeeze %29 : memref<1x!tpu.dma_semaphore, #tpu.memory_space<semaphore_mem>> -> memref<!tpu.dma_semaphore, #tpu.memory_space<semaphore_mem>>
    tpu.enqueue_dma source(%arg14 : memref<480x128xi8, #tpu.memory_space<any>>) target(%arg25 : memref<480x128xi8, #tpu.memory_space<vmem>>) target_semaphore(%30 : memref<!tpu.dma_semaphore, #tpu.memory_space<semaphore_mem>>)
    %c0_0 = arith.constant 0 : index
    %c0_1 = arith.constant 0 : index
    %31 = vector.load %arg1[%c0_0, %c0_1] : memref<48x8xf32, #tpu.memory_space<vmem>>, vector<48x8xf32>
    %c0_2 = arith.constant 0 : index
    %c0_3 = arith.constant 0 : index
    %32 = vector.load %arg3[%c0_2, %c0_3] : memref<48x512xf32, #tpu.memory_space<vmem>>, vector<8x512xf32>
    %c8_4 = arith.constant 8 : index
    %c0_5 = arith.constant 0 : index
    %33 = vector.load %arg3[%c8_4, %c0_5] : memref<48x512xf32, #tpu.memory_space<vmem>>, vector<8x512xf32>
    %c32 = arith.constant 32 : index
    %c0_6 = arith.constant 0 : index
    %34 = vector.load %arg3[%c32, %c0_6] : memref<48x512xf32, #tpu.memory_space<vmem>>, vector<1x512xf32>
    %cst = arith.constant dense<0.000000e+00> : vector<48x512xf32>
    %35 = tpu.matmul %31, %32, %cst {dimension_numbers = #tpu.dot_dimension_numbers<[1], [0], [0], [1], [0, 0, 1, 1], [], []>} : vector<48x8xf32>, vector<8x512xf32>, vector<48x512xf32> -> vector<48x512xf32>
    %36 = vector.broadcast %34 : vector<1x512xf32> to vector<48x512xf32>
    %37 = arith.addf %35, %36 : vector<48x512xf32>
    %cst_7 = arith.constant 0.000000e+00 : f32
    %38 = vector.broadcast %cst_7 : f32 to vector<8x128xf32>
    %cst_8 = arith.constant 0.000000e+00 : f32
    %39 = vector.broadcast %cst_8 : f32 to vector<8x128xf32>
    %40 = vector.extract_strided_slice %37 {offsets = [0, 0], sizes = [8, 512], strides = [1, 1]} : vector<48x512xf32> to vector<8x512xf32>
    %41 = vector.extract_strided_slice %38 {offsets = [0, 0], sizes = [8, 8], strides = [1, 1]} : vector<8x128xf32> to vector<8x8xf32>
    %cst_9 = arith.constant dense<0.000000e+00> : vector<8x512xf32>
    %42 = tpu.matmul %41, %33, %cst_9 {dimension_numbers = #tpu.dot_dimension_numbers<[1], [0], [0], [1], [0, 0, 1, 1], [], []>} : vector<8x8xf32>, vector<8x512xf32>, vector<8x512xf32> -> vector<8x512xf32>
    %43 = arith.addf %40, %42 : vector<8x512xf32>
    %44 = vector.extract_strided_slice %43 {offsets = [0, 0], sizes = [8, 128], strides = [1, 1]} : vector<8x512xf32> to vector<8x128xf32>
    %45 = arith.negf %44 : vector<8x128xf32>
    %46 = math.exp %45 : vector<8x128xf32>
    %cst_10 = arith.constant 1.000000e+00 : f32
    %47 = vector.broadcast %cst_10 : f32 to vector<8x128xf32>
    %48 = arith.addf %47, %46 : vector<8x128xf32>
    %49 = arith.divf %47, %48 : vector<8x128xf32>
    %50 = vector.extract_strided_slice %43 {offsets = [0, 128], sizes = [8, 128], strides = [1, 1]} : vector<8x512xf32> to vector<8x128xf32>
    %51 = arith.negf %50 : vector<8x128xf32>
    %52 = math.exp %51 : vector<8x128xf32>
    %cst_11 = arith.constant 1.000000e+00 : f32
    %53 = vector.broadcast %cst_11 : f32 to vector<8x128xf32>
    %54 = arith.addf %53, %52 : vector<8x128xf32>
    %55 = arith.divf %53, %54 : vector<8x128xf32>
    %56 = vector.extract_strided_slice %43 {offsets = [0, 256], sizes = [8, 128], strides = [1, 1]} : vector<8x512xf32> to vector<8x128xf32>
    %57 = math.tanh %56 : vector<8x128xf32>
    %58 = vector.extract_strided_slice %43 {offsets = [0, 384], sizes = [8, 128], strides = [1, 1]} : vector<8x512xf32> to vector<8x128xf32>
    %59 = arith.negf %58 : vector<8x128xf32>
    %60 = math.exp %59 : vector<8x128xf32>
    %cst_12 = arith.constant 1.000000e+00 : f32
    %61 = vector.broadcast %cst_12 : f32 to vector<8x128xf32>
    %62 = arith.addf %61, %60 : vector<8x128xf32>
    %63 = arith.divf %61, %62 : vector<8x128xf32>
    %64 = arith.mulf %55, %39 : vector<8x128xf32>
    %65 = arith.mulf %49, %57 : vector<8x128xf32>
    %66 = arith.addf %64, %65 : vector<8x128xf32>
    %67 = math.tanh %66 : vector<8x128xf32>
    %68 = arith.mulf %63, %67 : vector<8x128xf32>
    %69 = vector.extract_strided_slice %68 {offsets = [0, 0], sizes = [8, 8], strides = [1, 1]} : vector<8x128xf32> to vector<8x8xf32>
    %70 = vector.extract_strided_slice %37 {offsets = [8, 0], sizes = [8, 512], strides = [1, 1]} : vector<48x512xf32> to vector<8x512xf32>
    %71 = vector.extract_strided_slice %68 {offsets = [0, 0], sizes = [8, 8], strides = [1, 1]} : vector<8x128xf32> to vector<8x8xf32>
    %cst_13 = arith.constant dense<0.000000e+00> : vector<8x512xf32>
    %72 = tpu.matmul %71, %33, %cst_13 {dimension_numbers = #tpu.dot_dimension_numbers<[1], [0], [0], [1], [0, 0, 1, 1], [], []>} : vector<8x8xf32>, vector<8x512xf32>, vector<8x512xf32> -> vector<8x512xf32>
    %73 = arith.addf %70, %72 : vector<8x512xf32>
    %74 = vector.extract_strided_slice %73 {offsets = [0, 0], sizes = [8, 128], strides = [1, 1]} : vector<8x512xf32> to vector<8x128xf32>
    %75 = arith.negf %74 : vector<8x128xf32>
    %76 = math.exp %75 : vector<8x128xf32>
    %cst_14 = arith.constant 1.000000e+00 : f32
    %77 = vector.broadcast %cst_14 : f32 to vector<8x128xf32>
    %78 = arith.addf %77, %76 : vector<8x128xf32>
    %79 = arith.divf %77, %78 : vector<8x128xf32>
    %80 = vector.extract_strided_slice %73 {offsets = [0, 128], sizes = [8, 128], strides = [1, 1]} : vector<8x512xf32> to vector<8x128xf32>
    %81 = arith.negf %80 : vector<8x128xf32>
    %82 = math.exp %81 : vector<8x128xf32>
    %cst_15 = arith.constant 1.000000e+00 : f32
    %83 = vector.broadcast %cst_15 : f32 to vector<8x128xf32>
    %84 = arith.addf %83, %82 : vector<8x128xf32>
    %85 = arith.divf %83, %84 : vector<8x128xf32>
    %86 = vector.extract_strided_slice %73 {offsets = [0, 256], sizes = [8, 128], strides = [1, 1]} : vector<8x512xf32> to vector<8x128xf32>
    %87 = math.tanh %86 : vector<8x128xf32>
    %88 = vector.extract_strided_slice %73 {offsets = [0, 384], sizes = [8, 128], strides = [1, 1]} : vector<8x512xf32> to vector<8x128xf32>
    %89 = arith.negf %88 : vector<8x128xf32>
    %90 = math.exp %89 : vector<8x128xf32>
    %cst_16 = arith.constant 1.000000e+00 : f32
    %91 = vector.broadcast %cst_16 : f32 to vector<8x128xf32>
    %92 = arith.addf %91, %90 : vector<8x128xf32>
    %93 = arith.divf %91, %92 : vector<8x128xf32>
    %94 = arith.mulf %85, %66 : vector<8x128xf32>
    %95 = arith.mulf %79, %87 : vector<8x128xf32>
    %96 = arith.addf %94, %95 : vector<8x128xf32>
    %97 = math.tanh %96 : vector<8x128xf32>
    %98 = arith.mulf %93, %97 : vector<8x128xf32>
    %99 = vector.extract_strided_slice %98 {offsets = [0, 0], sizes = [8, 8], strides = [1, 1]} : vector<8x128xf32> to vector<8x8xf32>
    %100 = vector.extract_strided_slice %37 {offsets = [16, 0], sizes = [8, 512], strides = [1, 1]} : vector<48x512xf32> to vector<8x512xf32>
    %101 = vector.extract_strided_slice %98 {offsets = [0, 0], sizes = [8, 8], strides = [1, 1]} : vector<8x128xf32> to vector<8x8xf32>
    %cst_17 = arith.constant dense<0.000000e+00> : vector<8x512xf32>
    %102 = tpu.matmul %101, %33, %cst_17 {dimension_numbers = #tpu.dot_dimension_numbers<[1], [0], [0], [1], [0, 0, 1, 1], [], []>} : vector<8x8xf32>, vector<8x512xf32>, vector<8x512xf32> -> vector<8x512xf32>
    %103 = arith.addf %100, %102 : vector<8x512xf32>
    %104 = vector.extract_strided_slice %103 {offsets = [0, 0], sizes = [8, 128], strides = [1, 1]} : vector<8x512xf32> to vector<8x128xf32>
    %105 = arith.negf %104 : vector<8x128xf32>
    %106 = math.exp %105 : vector<8x128xf32>
    %cst_18 = arith.constant 1.000000e+00 : f32
    %107 = vector.broadcast %cst_18 : f32 to vector<8x128xf32>
    %108 = arith.addf %107, %106 : vector<8x128xf32>
    %109 = arith.divf %107, %108 : vector<8x128xf32>
    %110 = vector.extract_strided_slice %103 {offsets = [0, 128], sizes = [8, 128], strides = [1, 1]} : vector<8x512xf32> to vector<8x128xf32>
    %111 = arith.negf %110 : vector<8x128xf32>
    %112 = math.exp %111 : vector<8x128xf32>
    %cst_19 = arith.constant 1.000000e+00 : f32
    %113 = vector.broadcast %cst_19 : f32 to vector<8x128xf32>
    %114 = arith.addf %113, %112 : vector<8x128xf32>
    %115 = arith.divf %113, %114 : vector<8x128xf32>
    %116 = vector.extract_strided_slice %103 {offsets = [0, 256], sizes = [8, 128], strides = [1, 1]} : vector<8x512xf32> to vector<8x128xf32>
    %117 = math.tanh %116 : vector<8x128xf32>
    %118 = vector.extract_strided_slice %103 {offsets = [0, 384], sizes = [8, 128], strides = [1, 1]} : vector<8x512xf32> to vector<8x128xf32>
    %119 = arith.negf %118 : vector<8x128xf32>
    %120 = math.exp %119 : vector<8x128xf32>
    %cst_20 = arith.constant 1.000000e+00 : f32
    %121 = vector.broadcast %cst_20 : f32 to vector<8x128xf32>
    %122 = arith.addf %121, %120 : vector<8x128xf32>
    %123 = arith.divf %121, %122 : vector<8x128xf32>
    %124 = arith.mulf %115, %96 : vector<8x128xf32>
    %125 = arith.mulf %109, %117 : vector<8x128xf32>
    %126 = arith.addf %124, %125 : vector<8x128xf32>
    %127 = math.tanh %126 : vector<8x128xf32>
    %128 = arith.mulf %123, %127 : vector<8x128xf32>
    %129 = vector.extract_strided_slice %128 {offsets = [0, 0], sizes = [8, 8], strides = [1, 1]} : vector<8x128xf32> to vector<8x8xf32>
    %130 = vector.extract_strided_slice %37 {offsets = [24, 0], sizes = [8, 512], strides = [1, 1]} : vector<48x512xf32> to vector<8x512xf32>
    %131 = vector.extract_strided_slice %128 {offsets = [0, 0], sizes = [8, 8], strides = [1, 1]} : vector<8x128xf32> to vector<8x8xf32>
    %cst_21 = arith.constant dense<0.000000e+00> : vector<8x512xf32>
    %132 = tpu.matmul %131, %33, %cst_21 {dimension_numbers = #tpu.dot_dimension_numbers<[1], [0], [0], [1], [0, 0, 1, 1], [], []>} : vector<8x8xf32>, vector<8x512xf32>, vector<8x512xf32> -> vector<8x512xf32>
    %133 = arith.addf %130, %132 : vector<8x512xf32>
    %134 = vector.extract_strided_slice %133 {offsets = [0, 0], sizes = [8, 128], strides = [1, 1]} : vector<8x512xf32> to vector<8x128xf32>
    %135 = arith.negf %134 : vector<8x128xf32>
    %136 = math.exp %135 : vector<8x128xf32>
    %cst_22 = arith.constant 1.000000e+00 : f32
    %137 = vector.broadcast %cst_22 : f32 to vector<8x128xf32>
    %138 = arith.addf %137, %136 : vector<8x128xf32>
    %139 = arith.divf %137, %138 : vector<8x128xf32>
    %140 = vector.extract_strided_slice %133 {offsets = [0, 128], sizes = [8, 128], strides = [1, 1]} : vector<8x512xf32> to vector<8x128xf32>
    %141 = arith.negf %140 : vector<8x128xf32>
    %142 = math.exp %141 : vector<8x128xf32>
    %cst_23 = arith.constant 1.000000e+00 : f32
    %143 = vector.broadcast %cst_23 : f32 to vector<8x128xf32>
    %144 = arith.addf %143, %142 : vector<8x128xf32>
    %145 = arith.divf %143, %144 : vector<8x128xf32>
    %146 = vector.extract_strided_slice %133 {offsets = [0, 256], sizes = [8, 128], strides = [1, 1]} : vector<8x512xf32> to vector<8x128xf32>
    %147 = math.tanh %146 : vector<8x128xf32>
    %148 = vector.extract_strided_slice %133 {offsets = [0, 384], sizes = [8, 128], strides = [1, 1]} : vector<8x512xf32> to vector<8x128xf32>
    %149 = arith.negf %148 : vector<8x128xf32>
    %150 = math.exp %149 : vector<8x128xf32>
    %cst_24 = arith.constant 1.000000e+00 : f32
    %151 = vector.broadcast %cst_24 : f32 to vector<8x128xf32>
    %152 = arith.addf %151, %150 : vector<8x128xf32>
    %153 = arith.divf %151, %152 : vector<8x128xf32>
    %154 = arith.mulf %145, %126 : vector<8x128xf32>
    %155 = arith.mulf %139, %147 : vector<8x128xf32>
    %156 = arith.addf %154, %155 : vector<8x128xf32>
    %157 = math.tanh %156 : vector<8x128xf32>
    %158 = arith.mulf %153, %157 : vector<8x128xf32>
    %159 = vector.extract_strided_slice %158 {offsets = [0, 0], sizes = [8, 8], strides = [1, 1]} : vector<8x128xf32> to vector<8x8xf32>
    %160 = vector.extract_strided_slice %37 {offsets = [32, 0], sizes = [8, 512], strides = [1, 1]} : vector<48x512xf32> to vector<8x512xf32>
    %161 = vector.extract_strided_slice %158 {offsets = [0, 0], sizes = [8, 8], strides = [1, 1]} : vector<8x128xf32> to vector<8x8xf32>
    %cst_25 = arith.constant dense<0.000000e+00> : vector<8x512xf32>
    %162 = tpu.matmul %161, %33, %cst_25 {dimension_numbers = #tpu.dot_dimension_numbers<[1], [0], [0], [1], [0, 0, 1, 1], [], []>} : vector<8x8xf32>, vector<8x512xf32>, vector<8x512xf32> -> vector<8x512xf32>
    %163 = arith.addf %160, %162 : vector<8x512xf32>
    %164 = vector.extract_strided_slice %163 {offsets = [0, 0], sizes = [8, 128], strides = [1, 1]} : vector<8x512xf32> to vector<8x128xf32>
    %165 = arith.negf %164 : vector<8x128xf32>
    %166 = math.exp %165 : vector<8x128xf32>
    %cst_26 = arith.constant 1.000000e+00 : f32
    %167 = vector.broadcast %cst_26 : f32 to vector<8x128xf32>
    %168 = arith.addf %167, %166 : vector<8x128xf32>
    %169 = arith.divf %167, %168 : vector<8x128xf32>
    %170 = vector.extract_strided_slice %163 {offsets = [0, 128], sizes = [8, 128], strides = [1, 1]} : vector<8x512xf32> to vector<8x128xf32>
    %171 = arith.negf %170 : vector<8x128xf32>
    %172 = math.exp %171 : vector<8x128xf32>
    %cst_27 = arith.constant 1.000000e+00 : f32
    %173 = vector.broadcast %cst_27 : f32 to vector<8x128xf32>
    %174 = arith.addf %173, %172 : vector<8x128xf32>
    %175 = arith.divf %173, %174 : vector<8x128xf32>
    %176 = vector.extract_strided_slice %163 {offsets = [0, 256], sizes = [8, 128], strides = [1, 1]} : vector<8x512xf32> to vector<8x128xf32>
    %177 = math.tanh %176 : vector<8x128xf32>
    %178 = vector.extract_strided_slice %163 {offsets = [0, 384], sizes = [8, 128], strides = [1, 1]} : vector<8x512xf32> to vector<8x128xf32>
    %179 = arith.negf %178 : vector<8x128xf32>
    %180 = math.exp %179 : vector<8x128xf32>
    %cst_28 = arith.constant 1.000000e+00 : f32
    %181 = vector.broadcast %cst_28 : f32 to vector<8x128xf32>
    %182 = arith.addf %181, %180 : vector<8x128xf32>
    %183 = arith.divf %181, %182 : vector<8x128xf32>
    %184 = arith.mulf %175, %156 : vector<8x128xf32>
    %185 = arith.mulf %169, %177 : vector<8x128xf32>
    %186 = arith.addf %184, %185 : vector<8x128xf32>
    %187 = math.tanh %186 : vector<8x128xf32>
    %188 = arith.mulf %183, %187 : vector<8x128xf32>
    %189 = vector.extract_strided_slice %188 {offsets = [0, 0], sizes = [8, 8], strides = [1, 1]} : vector<8x128xf32> to vector<8x8xf32>
    %190 = vector.extract_strided_slice %37 {offsets = [40, 0], sizes = [8, 512], strides = [1, 1]} : vector<48x512xf32> to vector<8x512xf32>
    %191 = vector.extract_strided_slice %188 {offsets = [0, 0], sizes = [8, 8], strides = [1, 1]} : vector<8x128xf32> to vector<8x8xf32>
    %cst_29 = arith.constant dense<0.000000e+00> : vector<8x512xf32>
    %192 = tpu.matmul %191, %33, %cst_29 {dimension_numbers = #tpu.dot_dimension_numbers<[1], [0], [0], [1], [0, 0, 1, 1], [], []>} : vector<8x8xf32>, vector<8x512xf32>, vector<8x512xf32> -> vector<8x512xf32>
    %193 = arith.addf %190, %192 : vector<8x512xf32>
    %194 = vector.extract_strided_slice %193 {offsets = [0, 0], sizes = [8, 128], strides = [1, 1]} : vector<8x512xf32> to vector<8x128xf32>
    %195 = arith.negf %194 : vector<8x128xf32>
    %196 = math.exp %195 : vector<8x128xf32>
    %cst_30 = arith.constant 1.000000e+00 : f32
    %197 = vector.broadcast %cst_30 : f32 to vector<8x128xf32>
    %198 = arith.addf %197, %196 : vector<8x128xf32>
    %199 = arith.divf %197, %198 : vector<8x128xf32>
    %200 = vector.extract_strided_slice %193 {offsets = [0, 128], sizes = [8, 128], strides = [1, 1]} : vector<8x512xf32> to vector<8x128xf32>
    %201 = arith.negf %200 : vector<8x128xf32>
    %202 = math.exp %201 : vector<8x128xf32>
    %cst_31 = arith.constant 1.000000e+00 : f32
    %203 = vector.broadcast %cst_31 : f32 to vector<8x128xf32>
    %204 = arith.addf %203, %202 : vector<8x128xf32>
    %205 = arith.divf %203, %204 : vector<8x128xf32>
    %206 = vector.extract_strided_slice %193 {offsets = [0, 256], sizes = [8, 128], strides = [1, 1]} : vector<8x512xf32> to vector<8x128xf32>
    %207 = math.tanh %206 : vector<8x128xf32>
    %208 = vector.extract_strided_slice %193 {offsets = [0, 384], sizes = [8, 128], strides = [1, 1]} : vector<8x512xf32> to vector<8x128xf32>
    %209 = arith.negf %208 : vector<8x128xf32>
    %210 = math.exp %209 : vector<8x128xf32>
    %cst_32 = arith.constant 1.000000e+00 : f32
    %211 = vector.broadcast %cst_32 : f32 to vector<8x128xf32>
    %212 = arith.addf %211, %210 : vector<8x128xf32>
    %213 = arith.divf %211, %212 : vector<8x128xf32>
    %214 = arith.mulf %205, %186 : vector<8x128xf32>
    %215 = arith.mulf %199, %207 : vector<8x128xf32>
    %216 = arith.addf %214, %215 : vector<8x128xf32>
    %217 = math.tanh %216 : vector<8x128xf32>
    %218 = arith.mulf %213, %217 : vector<8x128xf32>
    %219 = vector.extract_strided_slice %218 {offsets = [0, 0], sizes = [8, 8], strides = [1, 1]} : vector<8x128xf32> to vector<8x8xf32>
    %220 = tpu.concatenate %69, %99, %129, %159, %189, %219 in 0 : vector<8x8xf32>, vector<8x8xf32>, vector<8x8xf32>, vector<8x8xf32>, vector<8x8xf32>, vector<8x8xf32> -> vector<48x8xf32>
    %c16 = arith.constant 16 : index
    %c0_33 = arith.constant 0 : index
    %221 = vector.load %arg3[%c16, %c0_33] : memref<48x512xf32, #tpu.memory_space<vmem>>, vector<8x512xf32>
    %c24 = arith.constant 24 : index
    %c0_34 = arith.constant 0 : index
    %222 = vector.load %arg3[%c24, %c0_34] : memref<48x512xf32, #tpu.memory_space<vmem>>, vector<8x512xf32>
    %c40 = arith.constant 40 : index
    %c0_35 = arith.constant 0 : index
    %223 = vector.load %arg3[%c40, %c0_35] : memref<48x512xf32, #tpu.memory_space<vmem>>, vector<1x512xf32>
    %cst_36 = arith.constant dense<0.000000e+00> : vector<48x512xf32>
    %224 = tpu.matmul %220, %221, %cst_36 {dimension_numbers = #tpu.dot_dimension_numbers<[1], [0], [0], [1], [0, 0, 1, 1], [], []>} : vector<48x8xf32>, vector<8x512xf32>, vector<48x512xf32> -> vector<48x512xf32>
    %225 = vector.broadcast %223 : vector<1x512xf32> to vector<48x512xf32>
    %226 = arith.addf %224, %225 : vector<48x512xf32>
    %cst_37 = arith.constant 0.000000e+00 : f32
    %227 = vector.broadcast %cst_37 : f32 to vector<8x128xf32>
    %cst_38 = arith.constant 0.000000e+00 : f32
    %228 = vector.broadcast %cst_38 : f32 to vector<8x128xf32>
    %229 = vector.extract_strided_slice %226 {offsets = [0, 0], sizes = [8, 512], strides = [1, 1]} : vector<48x512xf32> to vector<8x512xf32>
    %230 = vector.extract_strided_slice %227 {offsets = [0, 0], sizes = [8, 8], strides = [1, 1]} : vector<8x128xf32> to vector<8x8xf32>
    %cst_39 = arith.constant dense<0.000000e+00> : vector<8x512xf32>
    %231 = tpu.matmul %230, %222, %cst_39 {dimension_numbers = #tpu.dot_dimension_numbers<[1], [0], [0], [1], [0, 0, 1, 1], [], []>} : vector<8x8xf32>, vector<8x512xf32>, vector<8x512xf32> -> vector<8x512xf32>
    %232 = arith.addf %229, %231 : vector<8x512xf32>
    %233 = vector.extract_strided_slice %232 {offsets = [0, 0], sizes = [8, 128], strides = [1, 1]} : vector<8x512xf32> to vector<8x128xf32>
    %234 = arith.negf %233 : vector<8x128xf32>
    %235 = math.exp %234 : vector<8x128xf32>
    %cst_40 = arith.constant 1.000000e+00 : f32
    %236 = vector.broadcast %cst_40 : f32 to vector<8x128xf32>
    %237 = arith.addf %236, %235 : vector<8x128xf32>
    %238 = arith.divf %236, %237 : vector<8x128xf32>
    %239 = vector.extract_strided_slice %232 {offsets = [0, 128], sizes = [8, 128], strides = [1, 1]} : vector<8x512xf32> to vector<8x128xf32>
    %240 = arith.negf %239 : vector<8x128xf32>
    %241 = math.exp %240 : vector<8x128xf32>
    %cst_41 = arith.constant 1.000000e+00 : f32
    %242 = vector.broadcast %cst_41 : f32 to vector<8x128xf32>
    %243 = arith.addf %242, %241 : vector<8x128xf32>
    %244 = arith.divf %242, %243 : vector<8x128xf32>
    %245 = vector.extract_strided_slice %232 {offsets = [0, 256], sizes = [8, 128], strides = [1, 1]} : vector<8x512xf32> to vector<8x128xf32>
    %246 = math.tanh %245 : vector<8x128xf32>
    %247 = vector.extract_strided_slice %232 {offsets = [0, 384], sizes = [8, 128], strides = [1, 1]} : vector<8x512xf32> to vector<8x128xf32>
    %248 = arith.negf %247 : vector<8x128xf32>
    %249 = math.exp %248 : vector<8x128xf32>
    %cst_42 = arith.constant 1.000000e+00 : f32
    %250 = vector.broadcast %cst_42 : f32 to vector<8x128xf32>
    %251 = arith.addf %250, %249 : vector<8x128xf32>
    %252 = arith.divf %250, %251 : vector<8x128xf32>
    %253 = arith.mulf %244, %228 : vector<8x128xf32>
    %254 = arith.mulf %238, %246 : vector<8x128xf32>
    %255 = arith.addf %253, %254 : vector<8x128xf32>
    %256 = math.tanh %255 : vector<8x128xf32>
    %257 = arith.mulf %252, %256 : vector<8x128xf32>
    %258 = vector.extract_strided_slice %226 {offsets = [8, 0], sizes = [8, 512], strides = [1, 1]} : vector<48x512xf32> to vector<8x512xf32>
    %259 = vector.extract_strided_slice %257 {offsets = [0, 0], sizes = [8, 8], strides = [1, 1]} : vector<8x128xf32> to vector<8x8xf32>
    %cst_43 = arith.constant dense<0.000000e+00> : vector<8x512xf32>
    %260 = tpu.matmul %259, %222, %cst_43 {dimension_numbers = #tpu.dot_dimension_numbers<[1], [0], [0], [1], [0, 0, 1, 1], [], []>} : vector<8x8xf32>, vector<8x512xf32>, vector<8x512xf32> -> vector<8x512xf32>
    %261 = arith.addf %258, %260 : vector<8x512xf32>
    %262 = vector.extract_strided_slice %261 {offsets = [0, 0], sizes = [8, 128], strides = [1, 1]} : vector<8x512xf32> to vector<8x128xf32>
    %263 = arith.negf %262 : vector<8x128xf32>
    %264 = math.exp %263 : vector<8x128xf32>
    %cst_44 = arith.constant 1.000000e+00 : f32
    %265 = vector.broadcast %cst_44 : f32 to vector<8x128xf32>
    %266 = arith.addf %265, %264 : vector<8x128xf32>
    %267 = arith.divf %265, %266 : vector<8x128xf32>
    %268 = vector.extract_strided_slice %261 {offsets = [0, 128], sizes = [8, 128], strides = [1, 1]} : vector<8x512xf32> to vector<8x128xf32>
    %269 = arith.negf %268 : vector<8x128xf32>
    %270 = math.exp %269 : vector<8x128xf32>
    %cst_45 = arith.constant 1.000000e+00 : f32
    %271 = vector.broadcast %cst_45 : f32 to vector<8x128xf32>
    %272 = arith.addf %271, %270 : vector<8x128xf32>
    %273 = arith.divf %271, %272 : vector<8x128xf32>
    %274 = vector.extract_strided_slice %261 {offsets = [0, 256], sizes = [8, 128], strides = [1, 1]} : vector<8x512xf32> to vector<8x128xf32>
    %275 = math.tanh %274 : vector<8x128xf32>
    %276 = vector.extract_strided_slice %261 {offsets = [0, 384], sizes = [8, 128], strides = [1, 1]} : vector<8x512xf32> to vector<8x128xf32>
    %277 = arith.negf %276 : vector<8x128xf32>
    %278 = math.exp %277 : vector<8x128xf32>
    %cst_46 = arith.constant 1.000000e+00 : f32
    %279 = vector.broadcast %cst_46 : f32 to vector<8x128xf32>
    %280 = arith.addf %279, %278 : vector<8x128xf32>
    %281 = arith.divf %279, %280 : vector<8x128xf32>
    %282 = arith.mulf %273, %255 : vector<8x128xf32>
    %283 = arith.mulf %267, %275 : vector<8x128xf32>
    %284 = arith.addf %282, %283 : vector<8x128xf32>
    %285 = math.tanh %284 : vector<8x128xf32>
    %286 = arith.mulf %281, %285 : vector<8x128xf32>
    %287 = vector.extract_strided_slice %226 {offsets = [16, 0], sizes = [8, 512], strides = [1, 1]} : vector<48x512xf32> to vector<8x512xf32>
    %288 = vector.extract_strided_slice %286 {offsets = [0, 0], sizes = [8, 8], strides = [1, 1]} : vector<8x128xf32> to vector<8x8xf32>
    %cst_47 = arith.constant dense<0.000000e+00> : vector<8x512xf32>
    %289 = tpu.matmul %288, %222, %cst_47 {dimension_numbers = #tpu.dot_dimension_numbers<[1], [0], [0], [1], [0, 0, 1, 1], [], []>} : vector<8x8xf32>, vector<8x512xf32>, vector<8x512xf32> -> vector<8x512xf32>
    %290 = arith.addf %287, %289 : vector<8x512xf32>
    %291 = vector.extract_strided_slice %290 {offsets = [0, 0], sizes = [8, 128], strides = [1, 1]} : vector<8x512xf32> to vector<8x128xf32>
    %292 = arith.negf %291 : vector<8x128xf32>
    %293 = math.exp %292 : vector<8x128xf32>
    %cst_48 = arith.constant 1.000000e+00 : f32
    %294 = vector.broadcast %cst_48 : f32 to vector<8x128xf32>
    %295 = arith.addf %294, %293 : vector<8x128xf32>
    %296 = arith.divf %294, %295 : vector<8x128xf32>
    %297 = vector.extract_strided_slice %290 {offsets = [0, 128], sizes = [8, 128], strides = [1, 1]} : vector<8x512xf32> to vector<8x128xf32>
    %298 = arith.negf %297 : vector<8x128xf32>
    %299 = math.exp %298 : vector<8x128xf32>
    %cst_49 = arith.constant 1.000000e+00 : f32
    %300 = vector.broadcast %cst_49 : f32 to vector<8x128xf32>
    %301 = arith.addf %300, %299 : vector<8x128xf32>
    %302 = arith.divf %300, %301 : vector<8x128xf32>
    %303 = vector.extract_strided_slice %290 {offsets = [0, 256], sizes = [8, 128], strides = [1, 1]} : vector<8x512xf32> to vector<8x128xf32>
    %304 = math.tanh %303 : vector<8x128xf32>
    %305 = vector.extract_strided_slice %290 {offsets = [0, 384], sizes = [8, 128], strides = [1, 1]} : vector<8x512xf32> to vector<8x128xf32>
    %306 = arith.negf %305 : vector<8x128xf32>
    %307 = math.exp %306 : vector<8x128xf32>
    %cst_50 = arith.constant 1.000000e+00 : f32
    %308 = vector.broadcast %cst_50 : f32 to vector<8x128xf32>
    %309 = arith.addf %308, %307 : vector<8x128xf32>
    %310 = arith.divf %308, %309 : vector<8x128xf32>
    %311 = arith.mulf %302, %284 : vector<8x128xf32>
    %312 = arith.mulf %296, %304 : vector<8x128xf32>
    %313 = arith.addf %311, %312 : vector<8x128xf32>
    %314 = math.tanh %313 : vector<8x128xf32>
    %315 = arith.mulf %310, %314 : vector<8x128xf32>
    %316 = vector.extract_strided_slice %226 {offsets = [24, 0], sizes = [8, 512], strides = [1, 1]} : vector<48x512xf32> to vector<8x512xf32>
    %317 = vector.extract_strided_slice %315 {offsets = [0, 0], sizes = [8, 8], strides = [1, 1]} : vector<8x128xf32> to vector<8x8xf32>
    %cst_51 = arith.constant dense<0.000000e+00> : vector<8x512xf32>
    %318 = tpu.matmul %317, %222, %cst_51 {dimension_numbers = #tpu.dot_dimension_numbers<[1], [0], [0], [1], [0, 0, 1, 1], [], []>} : vector<8x8xf32>, vector<8x512xf32>, vector<8x512xf32> -> vector<8x512xf32>
    %319 = arith.addf %316, %318 : vector<8x512xf32>
    %320 = vector.extract_strided_slice %319 {offsets = [0, 0], sizes = [8, 128], strides = [1, 1]} : vector<8x512xf32> to vector<8x128xf32>
    %321 = arith.negf %320 : vector<8x128xf32>
    %322 = math.exp %321 : vector<8x128xf32>
    %cst_52 = arith.constant 1.000000e+00 : f32
    %323 = vector.broadcast %cst_52 : f32 to vector<8x128xf32>
    %324 = arith.addf %323, %322 : vector<8x128xf32>
    %325 = arith.divf %323, %324 : vector<8x128xf32>
    %326 = vector.extract_strided_slice %319 {offsets = [0, 128], sizes = [8, 128], strides = [1, 1]} : vector<8x512xf32> to vector<8x128xf32>
    %327 = arith.negf %326 : vector<8x128xf32>
    %328 = math.exp %327 : vector<8x128xf32>
    %cst_53 = arith.constant 1.000000e+00 : f32
    %329 = vector.broadcast %cst_53 : f32 to vector<8x128xf32>
    %330 = arith.addf %329, %328 : vector<8x128xf32>
    %331 = arith.divf %329, %330 : vector<8x128xf32>
    %332 = vector.extract_strided_slice %319 {offsets = [0, 256], sizes = [8, 128], strides = [1, 1]} : vector<8x512xf32> to vector<8x128xf32>
    %333 = math.tanh %332 : vector<8x128xf32>
    %334 = vector.extract_strided_slice %319 {offsets = [0, 384], sizes = [8, 128], strides = [1, 1]} : vector<8x512xf32> to vector<8x128xf32>
    %335 = arith.negf %334 : vector<8x128xf32>
    %336 = math.exp %335 : vector<8x128xf32>
    %cst_54 = arith.constant 1.000000e+00 : f32
    %337 = vector.broadcast %cst_54 : f32 to vector<8x128xf32>
    %338 = arith.addf %337, %336 : vector<8x128xf32>
    %339 = arith.divf %337, %338 : vector<8x128xf32>
    %340 = arith.mulf %331, %313 : vector<8x128xf32>
    %341 = arith.mulf %325, %333 : vector<8x128xf32>
    %342 = arith.addf %340, %341 : vector<8x128xf32>
    %343 = math.tanh %342 : vector<8x128xf32>
    %344 = arith.mulf %339, %343 : vector<8x128xf32>
    %345 = vector.extract_strided_slice %226 {offsets = [32, 0], sizes = [8, 512], strides = [1, 1]} : vector<48x512xf32> to vector<8x512xf32>
    %346 = vector.extract_strided_slice %344 {offsets = [0, 0], sizes = [8, 8], strides = [1, 1]} : vector<8x128xf32> to vector<8x8xf32>
    %cst_55 = arith.constant dense<0.000000e+00> : vector<8x512xf32>
    %347 = tpu.matmul %346, %222, %cst_55 {dimension_numbers = #tpu.dot_dimension_numbers<[1], [0], [0], [1], [0, 0, 1, 1], [], []>} : vector<8x8xf32>, vector<8x512xf32>, vector<8x512xf32> -> vector<8x512xf32>
    %348 = arith.addf %345, %347 : vector<8x512xf32>
    %349 = vector.extract_strided_slice %348 {offsets = [0, 0], sizes = [8, 128], strides = [1, 1]} : vector<8x512xf32> to vector<8x128xf32>
    %350 = arith.negf %349 : vector<8x128xf32>
    %351 = math.exp %350 : vector<8x128xf32>
    %cst_56 = arith.constant 1.000000e+00 : f32
    %352 = vector.broadcast %cst_56 : f32 to vector<8x128xf32>
    %353 = arith.addf %352, %351 : vector<8x128xf32>
    %354 = arith.divf %352, %353 : vector<8x128xf32>
    %355 = vector.extract_strided_slice %348 {offsets = [0, 128], sizes = [8, 128], strides = [1, 1]} : vector<8x512xf32> to vector<8x128xf32>
    %356 = arith.negf %355 : vector<8x128xf32>
    %357 = math.exp %356 : vector<8x128xf32>
    %cst_57 = arith.constant 1.000000e+00 : f32
    %358 = vector.broadcast %cst_57 : f32 to vector<8x128xf32>
    %359 = arith.addf %358, %357 : vector<8x128xf32>
    %360 = arith.divf %358, %359 : vector<8x128xf32>
    %361 = vector.extract_strided_slice %348 {offsets = [0, 256], sizes = [8, 128], strides = [1, 1]} : vector<8x512xf32> to vector<8x128xf32>
    %362 = math.tanh %361 : vector<8x128xf32>
    %363 = vector.extract_strided_slice %348 {offsets = [0, 384], sizes = [8, 128], strides = [1, 1]} : vector<8x512xf32> to vector<8x128xf32>
    %364 = arith.negf %363 : vector<8x128xf32>
    %365 = math.exp %364 : vector<8x128xf32>
    %cst_58 = arith.constant 1.000000e+00 : f32
    %366 = vector.broadcast %cst_58 : f32 to vector<8x128xf32>
    %367 = arith.addf %366, %365 : vector<8x128xf32>
    %368 = arith.divf %366, %367 : vector<8x128xf32>
    %369 = arith.mulf %360, %342 : vector<8x128xf32>
    %370 = arith.mulf %354, %362 : vector<8x128xf32>
    %371 = arith.addf %369, %370 : vector<8x128xf32>
    %372 = math.tanh %371 : vector<8x128xf32>
    %373 = arith.mulf %368, %372 : vector<8x128xf32>
    %374 = vector.extract_strided_slice %226 {offsets = [40, 0], sizes = [8, 512], strides = [1, 1]} : vector<48x512xf32> to vector<8x512xf32>
    %375 = vector.extract_strided_slice %373 {offsets = [0, 0], sizes = [8, 8], strides = [1, 1]} : vector<8x128xf32> to vector<8x8xf32>
    %cst_59 = arith.constant dense<0.000000e+00> : vector<8x512xf32>
    %376 = tpu.matmul %375, %222, %cst_59 {dimension_numbers = #tpu.dot_dimension_numbers<[1], [0], [0], [1], [0, 0, 1, 1], [], []>} : vector<8x8xf32>, vector<8x512xf32>, vector<8x512xf32> -> vector<8x512xf32>
    %377 = arith.addf %374, %376 : vector<8x512xf32>
    %378 = vector.extract_strided_slice %377 {offsets = [0, 0], sizes = [8, 128], strides = [1, 1]} : vector<8x512xf32> to vector<8x128xf32>
    %379 = arith.negf %378 : vector<8x128xf32>
    %380 = math.exp %379 : vector<8x128xf32>
    %cst_60 = arith.constant 1.000000e+00 : f32
    %381 = vector.broadcast %cst_60 : f32 to vector<8x128xf32>
    %382 = arith.addf %381, %380 : vector<8x128xf32>
    %383 = arith.divf %381, %382 : vector<8x128xf32>
    %384 = vector.extract_strided_slice %377 {offsets = [0, 128], sizes = [8, 128], strides = [1, 1]} : vector<8x512xf32> to vector<8x128xf32>
    %385 = arith.negf %384 : vector<8x128xf32>
    %386 = math.exp %385 : vector<8x128xf32>
    %cst_61 = arith.constant 1.000000e+00 : f32
    %387 = vector.broadcast %cst_61 : f32 to vector<8x128xf32>
    %388 = arith.addf %387, %386 : vector<8x128xf32>
    %389 = arith.divf %387, %388 : vector<8x128xf32>
    %390 = vector.extract_strided_slice %377 {offsets = [0, 256], sizes = [8, 128], strides = [1, 1]} : vector<8x512xf32> to vector<8x128xf32>
    %391 = math.tanh %390 : vector<8x128xf32>
    %392 = vector.extract_strided_slice %377 {offsets = [0, 384], sizes = [8, 128], strides = [1, 1]} : vector<8x512xf32> to vector<8x128xf32>
    %393 = arith.negf %392 : vector<8x128xf32>
    %394 = math.exp %393 : vector<8x128xf32>
    %cst_62 = arith.constant 1.000000e+00 : f32
    %395 = vector.broadcast %cst_62 : f32 to vector<8x128xf32>
    %396 = arith.addf %395, %394 : vector<8x128xf32>
    %397 = arith.divf %395, %396 : vector<8x128xf32>
    %398 = arith.mulf %389, %371 : vector<8x128xf32>
    %399 = arith.mulf %383, %391 : vector<8x128xf32>
    %400 = arith.addf %398, %399 : vector<8x128xf32>
    %401 = math.tanh %400 : vector<8x128xf32>
    %402 = arith.mulf %397, %401 : vector<8x128xf32>
    %403 = vector.extract_strided_slice %402 {offsets = [0, 0], sizes = [8, 8], strides = [1, 1]} : vector<8x128xf32> to vector<8x8xf32>
    %c0_i32_63 = arith.constant 0 : i32
    %404 = tpu.memref_slice %arg26[%c0_i32_63] : memref<10x!tpu.dma_semaphore, #tpu.memory_space<semaphore_mem>> -> memref<1x!tpu.dma_semaphore, #tpu.memory_space<semaphore_mem>>
    %405 = tpu.memref_squeeze %404 : memref<1x!tpu.dma_semaphore, #tpu.memory_space<semaphore_mem>> -> memref<!tpu.dma_semaphore, #tpu.memory_space<semaphore_mem>>
    tpu.wait_dma2 semaphore(%405 : memref<!tpu.dma_semaphore, #tpu.memory_space<semaphore_mem>>) src(%arg5 : memref<16x1280xi8, #tpu.memory_space<any>>) dst(%arg16 : memref<16x1280xi8, #tpu.memory_space<vmem>>)
    %c1_i32_64 = arith.constant 1 : i32
    %406 = tpu.memref_slice %arg26[%c1_i32_64] : memref<10x!tpu.dma_semaphore, #tpu.memory_space<semaphore_mem>> -> memref<1x!tpu.dma_semaphore, #tpu.memory_space<semaphore_mem>>
    %407 = tpu.memref_squeeze %406 : memref<1x!tpu.dma_semaphore, #tpu.memory_space<semaphore_mem>> -> memref<!tpu.dma_semaphore, #tpu.memory_space<semaphore_mem>>
    tpu.wait_dma2 semaphore(%407 : memref<!tpu.dma_semaphore, #tpu.memory_space<semaphore_mem>>) src(%arg6 : memref<8x1280xi8, #tpu.memory_space<any>>) dst(%arg17 : memref<8x1280xi8, #tpu.memory_space<vmem>>)
    %c0_65 = arith.constant 0 : index
    %c0_66 = arith.constant 0 : index
    %408 = vector.load %arg0[%c0_65, %c0_66] : memref<8x16xf32, #tpu.memory_space<vmem>>, vector<8x16xf32>
    %409 = arith.truncf %408 : vector<8x16xf32> to vector<8x16xbf16>
    %c0_67 = arith.constant 0 : index
    %c0_68 = arith.constant 0 : index
    %410 = vector.load %arg16[%c0_67, %c0_68] : memref<16x1280xi8, #tpu.memory_space<vmem>>, vector<16x1280xi8>
    %411 = arith.sitofp %410 : vector<16x1280xi8> to vector<16x1280xbf16>
    %cst_69 = arith.constant dense<0.000000e+00> : vector<8x1280xf32>
    %412 = tpu.matmul %409, %411, %cst_69 {dimension_numbers = #tpu.dot_dimension_numbers<[1], [0], [0], [1], [0, 0, 1, 1], [], []>} : vector<8x16xbf16>, vector<16x1280xbf16>, vector<8x1280xf32> -> vector<8x1280xf32>
    %413 = arith.truncf %403 : vector<8x8xf32> to vector<8x8xbf16>
    %c0_70 = arith.constant 0 : index
    %c0_71 = arith.constant 0 : index
    %414 = vector.load %arg17[%c0_70, %c0_71] : memref<8x1280xi8, #tpu.memory_space<vmem>>, vector<8x1280xi8>
    %415 = arith.sitofp %414 : vector<8x1280xi8> to vector<8x1280xbf16>
    %cst_72 = arith.constant dense<0.000000e+00> : vector<8x1280xf32>
    %416 = tpu.matmul %413, %415, %cst_72 {dimension_numbers = #tpu.dot_dimension_numbers<[1], [0], [0], [1], [0, 0, 1, 1], [], []>} : vector<8x8xbf16>, vector<8x1280xbf16>, vector<8x1280xf32> -> vector<8x1280xf32>
    %417 = arith.addf %412, %416 : vector<8x1280xf32>
    %c1_73 = arith.constant 1 : index
    %c0_74 = arith.constant 0 : index
    %418 = vector.load %arg4[%c1_73, %c0_74] : memref<24x1280xf32, #tpu.memory_space<vmem>>, vector<1x1280xf32>
    %c0_75 = arith.constant 0 : index
    %c0_76 = arith.constant 0 : index
    %419 = vector.load %arg4[%c0_75, %c0_76] : memref<24x1280xf32, #tpu.memory_space<vmem>>, vector<1x1280xf32>
    %420 = vector.broadcast %418 : vector<1x1280xf32> to vector<8x1280xf32>
    %421 = arith.mulf %417, %420 : vector<8x1280xf32>
    %422 = vector.broadcast %419 : vector<1x1280xf32> to vector<8x1280xf32>
    %423 = arith.addf %421, %422 : vector<8x1280xf32>
    %cst_77 = arith.constant 0.000000e+00 : f32
    %424 = vector.broadcast %cst_77 : f32 to vector<8x1280xf32>
    %425 = arith.cmpf ogt, %423, %424 : vector<8x1280xf32>
    %426 = vector.broadcast %0 : f32 to vector<8x1280xf32>
    %427 = arith.mulf %426, %423 : vector<8x1280xf32>
    %428 = arith.select %425, %423, %427 : vector<8x1280xi1>, vector<8x1280xf32>
    %429 = arith.truncf %428 : vector<8x1280xf32> to vector<8x1280xbf16>
    %c2_i32_78 = arith.constant 2 : i32
    %430 = tpu.memref_slice %arg26[%c2_i32_78] : memref<10x!tpu.dma_semaphore, #tpu.memory_space<semaphore_mem>> -> memref<1x!tpu.dma_semaphore, #tpu.memory_space<semaphore_mem>>
    %431 = tpu.memref_squeeze %430 : memref<1x!tpu.dma_semaphore, #tpu.memory_space<semaphore_mem>> -> memref<!tpu.dma_semaphore, #tpu.memory_space<semaphore_mem>>
    tpu.wait_dma2 semaphore(%431 : memref<!tpu.dma_semaphore, #tpu.memory_space<semaphore_mem>>) src(%arg7 : memref<1280x1024xi8, #tpu.memory_space<any>>) dst(%arg18 : memref<1280x1024xi8, #tpu.memory_space<vmem>>)
    %c0_79 = arith.constant 0 : index
    %c0_80 = arith.constant 0 : index
    %432 = vector.load %arg18[%c0_79, %c0_80] : memref<1280x1024xi8, #tpu.memory_space<vmem>>, vector<1280x1024xi8>
    %433 = arith.sitofp %432 : vector<1280x1024xi8> to vector<1280x1024xbf16>
    %cst_81 = arith.constant dense<0.000000e+00> : vector<8x1024xf32>
    %434 = tpu.matmul %429, %433, %cst_81 {dimension_numbers = #tpu.dot_dimension_numbers<[1], [0], [0], [1], [0, 0, 1, 1], [], []>} : vector<8x1280xbf16>, vector<1280x1024xbf16>, vector<8x1024xf32> -> vector<8x1024xf32>
    %c3_82 = arith.constant 3 : index
    %c0_83 = arith.constant 0 : index
    %435 = vector.load %arg4[%c3_82, %c0_83] : memref<24x1280xf32, #tpu.memory_space<vmem>>, vector<1x1024xf32>
    %c2_84 = arith.constant 2 : index
    %c0_85 = arith.constant 0 : index
    %436 = vector.load %arg4[%c2_84, %c0_85] : memref<24x1280xf32, #tpu.memory_space<vmem>>, vector<1x1024xf32>
    %437 = vector.broadcast %435 : vector<1x1024xf32> to vector<8x1024xf32>
    %438 = arith.mulf %434, %437 : vector<8x1024xf32>
    %439 = vector.broadcast %436 : vector<1x1024xf32> to vector<8x1024xf32>
    %440 = arith.addf %438, %439 : vector<8x1024xf32>
    %cst_86 = arith.constant 0.000000e+00 : f32
    %441 = vector.broadcast %cst_86 : f32 to vector<8x1024xf32>
    %442 = arith.cmpf ogt, %440, %441 : vector<8x1024xf32>
    %443 = vector.broadcast %1 : f32 to vector<8x1024xf32>
    %444 = arith.mulf %443, %440 : vector<8x1024xf32>
    %445 = arith.select %442, %440, %444 : vector<8x1024xi1>, vector<8x1024xf32>
    %446 = arith.truncf %445 : vector<8x1024xf32> to vector<8x1024xbf16>
    %c3_i32_87 = arith.constant 3 : i32
    %447 = tpu.memref_slice %arg26[%c3_i32_87] : memref<10x!tpu.dma_semaphore, #tpu.memory_space<semaphore_mem>> -> memref<1x!tpu.dma_semaphore, #tpu.memory_space<semaphore_mem>>
    %448 = tpu.memref_squeeze %447 : memref<1x!tpu.dma_semaphore, #tpu.memory_space<semaphore_mem>> -> memref<!tpu.dma_semaphore, #tpu.memory_space<semaphore_mem>>
    tpu.wait_dma2 semaphore(%448 : memref<!tpu.dma_semaphore, #tpu.memory_space<semaphore_mem>>) src(%arg8 : memref<1024x896xi8, #tpu.memory_space<any>>) dst(%arg19 : memref<1024x896xi8, #tpu.memory_space<vmem>>)
    %c0_88 = arith.constant 0 : index
    %c0_89 = arith.constant 0 : index
    %449 = vector.load %arg19[%c0_88, %c0_89] : memref<1024x896xi8, #tpu.memory_space<vmem>>, vector<1024x896xi8>
    %450 = arith.sitofp %449 : vector<1024x896xi8> to vector<1024x896xbf16>
    %cst_90 = arith.constant dense<0.000000e+00> : vector<8x896xf32>
    %451 = tpu.matmul %446, %450, %cst_90 {dimension_numbers = #tpu.dot_dimension_numbers<[1], [0], [0], [1], [0, 0, 1, 1], [], []>} : vector<8x1024xbf16>, vector<1024x896xbf16>, vector<8x896xf32> -> vector<8x896xf32>
    %c5_91 = arith.constant 5 : index
    %c0_92 = arith.constant 0 : index
    %452 = vector.load %arg4[%c5_91, %c0_92] : memref<24x1280xf32, #tpu.memory_space<vmem>>, vector<1x896xf32>
    %c4_93 = arith.constant 4 : index
    %c0_94 = arith.constant 0 : index
    %453 = vector.load %arg4[%c4_93, %c0_94] : memref<24x1280xf32, #tpu.memory_space<vmem>>, vector<1x896xf32>
    %454 = vector.broadcast %452 : vector<1x896xf32> to vector<8x896xf32>
    %455 = arith.mulf %451, %454 : vector<8x896xf32>
    %456 = vector.broadcast %453 : vector<1x896xf32> to vector<8x896xf32>
    %457 = arith.addf %455, %456 : vector<8x896xf32>
    %cst_95 = arith.constant 0.000000e+00 : f32
    %458 = vector.broadcast %cst_95 : f32 to vector<8x896xf32>
    %459 = arith.cmpf ogt, %457, %458 : vector<8x896xf32>
    %460 = vector.broadcast %2 : f32 to vector<8x896xf32>
    %461 = arith.mulf %460, %457 : vector<8x896xf32>
    %462 = arith.select %459, %457, %461 : vector<8x896xi1>, vector<8x896xf32>
    %463 = arith.truncf %462 : vector<8x896xf32> to vector<8x896xbf16>
    %c4_i32_96 = arith.constant 4 : i32
    %464 = tpu.memref_slice %arg26[%c4_i32_96] : memref<10x!tpu.dma_semaphore, #tpu.memory_space<semaphore_mem>> -> memref<1x!tpu.dma_semaphore, #tpu.memory_space<semaphore_mem>>
    %465 = tpu.memref_squeeze %464 : memref<1x!tpu.dma_semaphore, #tpu.memory_space<semaphore_mem>> -> memref<!tpu.dma_semaphore, #tpu.memory_space<semaphore_mem>>
    tpu.wait_dma2 semaphore(%465 : memref<!tpu.dma_semaphore, #tpu.memory_space<semaphore_mem>>) src(%arg9 : memref<896x768xi8, #tpu.memory_space<any>>) dst(%arg20 : memref<896x768xi8, #tpu.memory_space<vmem>>)
    %c0_97 = arith.constant 0 : index
    %c0_98 = arith.constant 0 : index
    %466 = vector.load %arg20[%c0_97, %c0_98] : memref<896x768xi8, #tpu.memory_space<vmem>>, vector<896x768xi8>
    %467 = arith.sitofp %466 : vector<896x768xi8> to vector<896x768xbf16>
    %cst_99 = arith.constant dense<0.000000e+00> : vector<8x768xf32>
    %468 = tpu.matmul %463, %467, %cst_99 {dimension_numbers = #tpu.dot_dimension_numbers<[1], [0], [0], [1], [0, 0, 1, 1], [], []>} : vector<8x896xbf16>, vector<896x768xbf16>, vector<8x768xf32> -> vector<8x768xf32>
    %c7_100 = arith.constant 7 : index
    %c0_101 = arith.constant 0 : index
    %469 = vector.load %arg4[%c7_100, %c0_101] : memref<24x1280xf32, #tpu.memory_space<vmem>>, vector<1x768xf32>
    %c6_102 = arith.constant 6 : index
    %c0_103 = arith.constant 0 : index
    %470 = vector.load %arg4[%c6_102, %c0_103] : memref<24x1280xf32, #tpu.memory_space<vmem>>, vector<1x768xf32>
    %471 = vector.broadcast %469 : vector<1x768xf32> to vector<8x768xf32>
    %472 = arith.mulf %468, %471 : vector<8x768xf32>
    %473 = vector.broadcast %470 : vector<1x768xf32> to vector<8x768xf32>
    %474 = arith.addf %472, %473 : vector<8x768xf32>
    %cst_104 = arith.constant 0.000000e+00 : f32
    %475 = vector.broadcast %cst_104 : f32 to vector<8x768xf32>
    %476 = arith.cmpf ogt, %474, %475 : vector<8x768xf32>
    %477 = vector.broadcast %3 : f32 to vector<8x768xf32>
    %478 = arith.mulf %477, %474 : vector<8x768xf32>
    %479 = arith.select %476, %474, %478 : vector<8x768xi1>, vector<8x768xf32>
    %480 = arith.truncf %479 : vector<8x768xf32> to vector<8x768xbf16>
    %c5_i32_105 = arith.constant 5 : i32
    %481 = tpu.memref_slice %arg26[%c5_i32_105] : memref<10x!tpu.dma_semaphore, #tpu.memory_space<semaphore_mem>> -> memref<1x!tpu.dma_semaphore, #tpu.memory_space<semaphore_mem>>
    %482 = tpu.memref_squeeze %481 : memref<1x!tpu.dma_semaphore, #tpu.memory_space<semaphore_mem>> -> memref<!tpu.dma_semaphore, #tpu.memory_space<semaphore_mem>>
    tpu.wait_dma2 semaphore(%482 : memref<!tpu.dma_semaphore, #tpu.memory_space<semaphore_mem>>) src(%arg10 : memref<768x512xi8, #tpu.memory_space<any>>) dst(%arg21 : memref<768x512xi8, #tpu.memory_space<vmem>>)
    %c0_106 = arith.constant 0 : index
    %c0_107 = arith.constant 0 : index
    %483 = vector.load %arg21[%c0_106, %c0_107] : memref<768x512xi8, #tpu.memory_space<vmem>>, vector<768x512xi8>
    %484 = arith.sitofp %483 : vector<768x512xi8> to vector<768x512xbf16>
    %cst_108 = arith.constant dense<0.000000e+00> : vector<8x512xf32>
    %485 = tpu.matmul %480, %484, %cst_108 {dimension_numbers = #tpu.dot_dimension_numbers<[1], [0], [0], [1], [0, 0, 1, 1], [], []>} : vector<8x768xbf16>, vector<768x512xbf16>, vector<8x512xf32> -> vector<8x512xf32>
    %c9_109 = arith.constant 9 : index
    %c0_110 = arith.constant 0 : index
    %486 = vector.load %arg4[%c9_109, %c0_110] : memref<24x1280xf32, #tpu.memory_space<vmem>>, vector<1x512xf32>
    %c8_111 = arith.constant 8 : index
    %c0_112 = arith.constant 0 : index
    %487 = vector.load %arg4[%c8_111, %c0_112] : memref<24x1280xf32, #tpu.memory_space<vmem>>, vector<1x512xf32>
    %488 = vector.broadcast %486 : vector<1x512xf32> to vector<8x512xf32>
    %489 = arith.mulf %485, %488 : vector<8x512xf32>
    %490 = vector.broadcast %487 : vector<1x512xf32> to vector<8x512xf32>
    %491 = arith.addf %489, %490 : vector<8x512xf32>
    %cst_113 = arith.constant 0.000000e+00 : f32
    %492 = vector.broadcast %cst_113 : f32 to vector<8x512xf32>
    %493 = arith.cmpf ogt, %491, %492 : vector<8x512xf32>
    %494 = vector.broadcast %4 : f32 to vector<8x512xf32>
    %495 = arith.mulf %494, %491 : vector<8x512xf32>
    %496 = arith.select %493, %491, %495 : vector<8x512xi1>, vector<8x512xf32>
    %497 = arith.truncf %496 : vector<8x512xf32> to vector<8x512xbf16>
    %c6_i32_114 = arith.constant 6 : i32
    %498 = tpu.memref_slice %arg26[%c6_i32_114] : memref<10x!tpu.dma_semaphore, #tpu.memory_space<semaphore_mem>> -> memref<1x!tpu.dma_semaphore, #tpu.memory_space<semaphore_mem>>
    %499 = tpu.memref_squeeze %498 : memref<1x!tpu.dma_semaphore, #tpu.memory_space<semaphore_mem>> -> memref<!tpu.dma_semaphore, #tpu.memory_space<semaphore_mem>>
    tpu.wait_dma2 semaphore(%499 : memref<!tpu.dma_semaphore, #tpu.memory_space<semaphore_mem>>) src(%arg11 : memref<512x384xi8, #tpu.memory_space<any>>) dst(%arg22 : memref<512x384xi8, #tpu.memory_space<vmem>>)
    %c0_115 = arith.constant 0 : index
    %c0_116 = arith.constant 0 : index
    %500 = vector.load %arg22[%c0_115, %c0_116] : memref<512x384xi8, #tpu.memory_space<vmem>>, vector<512x384xi8>
    %501 = arith.sitofp %500 : vector<512x384xi8> to vector<512x384xbf16>
    %cst_117 = arith.constant dense<0.000000e+00> : vector<8x384xf32>
    %502 = tpu.matmul %497, %501, %cst_117 {dimension_numbers = #tpu.dot_dimension_numbers<[1], [0], [0], [1], [0, 0, 1, 1], [], []>} : vector<8x512xbf16>, vector<512x384xbf16>, vector<8x384xf32> -> vector<8x384xf32>
    %c11 = arith.constant 11 : index
    %c0_118 = arith.constant 0 : index
    %503 = vector.load %arg4[%c11, %c0_118] : memref<24x1280xf32, #tpu.memory_space<vmem>>, vector<1x384xf32>
    %c10_119 = arith.constant 10 : index
    %c0_120 = arith.constant 0 : index
    %504 = vector.load %arg4[%c10_119, %c0_120] : memref<24x1280xf32, #tpu.memory_space<vmem>>, vector<1x384xf32>
    %505 = vector.broadcast %503 : vector<1x384xf32> to vector<8x384xf32>
    %506 = arith.mulf %502, %505 : vector<8x384xf32>
    %507 = vector.broadcast %504 : vector<1x384xf32> to vector<8x384xf32>
    %508 = arith.addf %506, %507 : vector<8x384xf32>
    %cst_121 = arith.constant 0.000000e+00 : f32
    %509 = vector.broadcast %cst_121 : f32 to vector<8x384xf32>
    %510 = arith.cmpf ogt, %508, %509 : vector<8x384xf32>
    %511 = vector.broadcast %5 : f32 to vector<8x384xf32>
    %512 = arith.mulf %511, %508 : vector<8x384xf32>
    %513 = arith.select %510, %508, %512 : vector<8x384xi1>, vector<8x384xf32>
    %514 = arith.truncf %513 : vector<8x384xf32> to vector<8x384xbf16>
    %c7_i32_122 = arith.constant 7 : i32
    %515 = tpu.memref_slice %arg26[%c7_i32_122] : memref<10x!tpu.dma_semaphore, #tpu.memory_space<semaphore_mem>> -> memref<1x!tpu.dma_semaphore, #tpu.memory_space<semaphore_mem>>
    %516 = tpu.memref_squeeze %515 : memref<1x!tpu.dma_semaphore, #tpu.memory_space<semaphore_mem>> -> memref<!tpu.dma_semaphore, #tpu.memory_space<semaphore_mem>>
    tpu.wait_dma2 semaphore(%516 : memref<!tpu.dma_semaphore, #tpu.memory_space<semaphore_mem>>) src(%arg12 : memref<384x256xi8, #tpu.memory_space<any>>) dst(%arg23 : memref<384x256xi8, #tpu.memory_space<vmem>>)
    %c0_123 = arith.constant 0 : index
    %c0_124 = arith.constant 0 : index
    %517 = vector.load %arg23[%c0_123, %c0_124] : memref<384x256xi8, #tpu.memory_space<vmem>>, vector<384x256xi8>
    %518 = arith.sitofp %517 : vector<384x256xi8> to vector<384x256xbf16>
    %cst_125 = arith.constant dense<0.000000e+00> : vector<8x256xf32>
    %519 = tpu.matmul %514, %518, %cst_125 {dimension_numbers = #tpu.dot_dimension_numbers<[1], [0], [0], [1], [0, 0, 1, 1], [], []>} : vector<8x384xbf16>, vector<384x256xbf16>, vector<8x256xf32> -> vector<8x256xf32>
    %c13 = arith.constant 13 : index
    %c0_126 = arith.constant 0 : index
    %520 = vector.load %arg4[%c13, %c0_126] : memref<24x1280xf32, #tpu.memory_space<vmem>>, vector<1x256xf32>
    %c12 = arith.constant 12 : index
    %c0_127 = arith.constant 0 : index
    %521 = vector.load %arg4[%c12, %c0_127] : memref<24x1280xf32, #tpu.memory_space<vmem>>, vector<1x256xf32>
    %522 = vector.broadcast %520 : vector<1x256xf32> to vector<8x256xf32>
    %523 = arith.mulf %519, %522 : vector<8x256xf32>
    %524 = vector.broadcast %521 : vector<1x256xf32> to vector<8x256xf32>
    %525 = arith.addf %523, %524 : vector<8x256xf32>
    %cst_128 = arith.constant 0.000000e+00 : f32
    %526 = vector.broadcast %cst_128 : f32 to vector<8x256xf32>
    %527 = arith.cmpf ogt, %525, %526 : vector<8x256xf32>
    %528 = vector.broadcast %6 : f32 to vector<8x256xf32>
    %529 = arith.mulf %528, %525 : vector<8x256xf32>
    %530 = arith.select %527, %525, %529 : vector<8x256xi1>, vector<8x256xf32>
    %531 = arith.truncf %530 : vector<8x256xf32> to vector<8x256xbf16>
    %c8_i32_129 = arith.constant 8 : i32
    %532 = tpu.memref_slice %arg26[%c8_i32_129] : memref<10x!tpu.dma_semaphore, #tpu.memory_space<semaphore_mem>> -> memref<1x!tpu.dma_semaphore, #tpu.memory_space<semaphore_mem>>
    %533 = tpu.memref_squeeze %532 : memref<1x!tpu.dma_semaphore, #tpu.memory_space<semaphore_mem>> -> memref<!tpu.dma_semaphore, #tpu.memory_space<semaphore_mem>>
    tpu.wait_dma2 semaphore(%533 : memref<!tpu.dma_semaphore, #tpu.memory_space<semaphore_mem>>) src(%arg13 : memref<256x256xi8, #tpu.memory_space<any>>) dst(%arg24 : memref<256x256xi8, #tpu.memory_space<vmem>>)
    %c0_130 = arith.constant 0 : index
    %c0_131 = arith.constant 0 : index
    %534 = vector.load %arg24[%c0_130, %c0_131] : memref<256x256xi8, #tpu.memory_space<vmem>>, vector<256x256xi8>
    %535 = arith.sitofp %534 : vector<256x256xi8> to vector<256x256xbf16>
    %cst_132 = arith.constant dense<0.000000e+00> : vector<8x256xf32>
    %536 = tpu.matmul %531, %535, %cst_132 {dimension_numbers = #tpu.dot_dimension_numbers<[1], [0], [0], [1], [0, 0, 1, 1], [], []>} : vector<8x256xbf16>, vector<256x256xbf16>, vector<8x256xf32> -> vector<8x256xf32>
    %c15 = arith.constant 15 : index
    %c0_133 = arith.constant 0 : index
    %537 = vector.load %arg4[%c15, %c0_133] : memref<24x1280xf32, #tpu.memory_space<vmem>>, vector<1x256xf32>
    %c14 = arith.constant 14 : index
    %c0_134 = arith.constant 0 : index
    %538 = vector.load %arg4[%c14, %c0_134] : memref<24x1280xf32, #tpu.memory_space<vmem>>, vector<1x256xf32>
    %539 = vector.broadcast %537 : vector<1x256xf32> to vector<8x256xf32>
    %540 = arith.mulf %536, %539 : vector<8x256xf32>
    %541 = vector.broadcast %538 : vector<1x256xf32> to vector<8x256xf32>
    %542 = arith.addf %540, %541 : vector<8x256xf32>
    %cst_135 = arith.constant 0.000000e+00 : f32
    %543 = vector.broadcast %cst_135 : f32 to vector<8x256xf32>
    %544 = arith.cmpf ogt, %542, %543 : vector<8x256xf32>
    %545 = vector.broadcast %7 : f32 to vector<8x256xf32>
    %546 = arith.mulf %545, %542 : vector<8x256xf32>
    %547 = arith.select %544, %542, %546 : vector<8x256xi1>, vector<8x256xf32>
    %548 = arith.truncf %547 : vector<8x256xf32> to vector<8x256xbf16>
    %c9_i32_136 = arith.constant 9 : i32
    %549 = tpu.memref_slice %arg26[%c9_i32_136] : memref<10x!tpu.dma_semaphore, #tpu.memory_space<semaphore_mem>> -> memref<1x!tpu.dma_semaphore, #tpu.memory_space<semaphore_mem>>
    %550 = tpu.memref_squeeze %549 : memref<1x!tpu.dma_semaphore, #tpu.memory_space<semaphore_mem>> -> memref<!tpu.dma_semaphore, #tpu.memory_space<semaphore_mem>>
    tpu.wait_dma2 semaphore(%550 : memref<!tpu.dma_semaphore, #tpu.memory_space<semaphore_mem>>) src(%arg14 : memref<480x128xi8, #tpu.memory_space<any>>) dst(%arg25 : memref<480x128xi8, #tpu.memory_space<vmem>>)
    %c0_137 = arith.constant 0 : index
    %c0_138 = arith.constant 0 : index
    %551 = vector.load %arg25[%c0_137, %c0_138] : memref<480x128xi8, #tpu.memory_space<vmem>>, vector<256x128xi8>
    %552 = arith.sitofp %551 : vector<256x128xi8> to vector<256x128xbf16>
    %cst_139 = arith.constant dense<0.000000e+00> : vector<8x128xf32>
    %553 = tpu.matmul %548, %552, %cst_139 {dimension_numbers = #tpu.dot_dimension_numbers<[1], [0], [0], [1], [0, 0, 1, 1], [], []>} : vector<8x256xbf16>, vector<256x128xbf16>, vector<8x128xf32> -> vector<8x128xf32>
    %c17 = arith.constant 17 : index
    %c0_140 = arith.constant 0 : index
    %554 = vector.load %arg4[%c17, %c0_140] : memref<24x1280xf32, #tpu.memory_space<vmem>>, vector<1x128xf32>
    %c16_141 = arith.constant 16 : index
    %c0_142 = arith.constant 0 : index
    %555 = vector.load %arg4[%c16_141, %c0_142] : memref<24x1280xf32, #tpu.memory_space<vmem>>, vector<1x128xf32>
    %556 = vector.broadcast %554 : vector<1x128xf32> to vector<8x128xf32>
    %557 = arith.mulf %553, %556 : vector<8x128xf32>
    %558 = vector.broadcast %555 : vector<1x128xf32> to vector<8x128xf32>
    %559 = arith.addf %557, %558 : vector<8x128xf32>
    %cst_143 = arith.constant 0.000000e+00 : f32
    %560 = vector.broadcast %cst_143 : f32 to vector<8x128xf32>
    %561 = arith.cmpf ogt, %559, %560 : vector<8x128xf32>
    %562 = vector.broadcast %8 : f32 to vector<8x128xf32>
    %563 = arith.mulf %562, %559 : vector<8x128xf32>
    %564 = arith.select %561, %559, %563 : vector<8x128xi1>, vector<8x128xf32>
    %565 = arith.truncf %564 : vector<8x128xf32> to vector<8x128xbf16>
    %c256 = arith.constant 256 : index
    %c0_144 = arith.constant 0 : index
    %566 = vector.load %arg25[%c256, %c0_144] : memref<480x128xi8, #tpu.memory_space<vmem>>, vector<128x64xi8>
    %567 = arith.sitofp %566 : vector<128x64xi8> to vector<128x64xbf16>
    %cst_145 = arith.constant dense<0.000000e+00> : vector<8x64xf32>
    %568 = tpu.matmul %565, %567, %cst_145 {dimension_numbers = #tpu.dot_dimension_numbers<[1], [0], [0], [1], [0, 0, 1, 1], [], []>} : vector<8x128xbf16>, vector<128x64xbf16>, vector<8x64xf32> -> vector<8x64xf32>
    %c19 = arith.constant 19 : index
    %c0_146 = arith.constant 0 : index
    %569 = vector.load %arg4[%c19, %c0_146] : memref<24x1280xf32, #tpu.memory_space<vmem>>, vector<1x64xf32>
    %c18 = arith.constant 18 : index
    %c0_147 = arith.constant 0 : index
    %570 = vector.load %arg4[%c18, %c0_147] : memref<24x1280xf32, #tpu.memory_space<vmem>>, vector<1x64xf32>
    %571 = vector.broadcast %569 : vector<1x64xf32> to vector<8x64xf32>
    %572 = arith.mulf %568, %571 : vector<8x64xf32>
    %573 = vector.broadcast %570 : vector<1x64xf32> to vector<8x64xf32>
    %574 = arith.addf %572, %573 : vector<8x64xf32>
    %cst_148 = arith.constant 0.000000e+00 : f32
    %575 = vector.broadcast %cst_148 : f32 to vector<8x64xf32>
    %576 = arith.cmpf ogt, %574, %575 : vector<8x64xf32>
    %577 = vector.broadcast %9 : f32 to vector<8x64xf32>
    %578 = arith.mulf %577, %574 : vector<8x64xf32>
    %579 = arith.select %576, %574, %578 : vector<8x64xi1>, vector<8x64xf32>
    %580 = arith.truncf %579 : vector<8x64xf32> to vector<8x64xbf16>
    %c384 = arith.constant 384 : index
    %c0_149 = arith.constant 0 : index
    %581 = vector.load %arg25[%c384, %c0_149] : memref<480x128xi8, #tpu.memory_space<vmem>>, vector<64x32xi8>
    %582 = arith.sitofp %581 : vector<64x32xi8> to vector<64x32xbf16>
    %cst_150 = arith.constant dense<0.000000e+00> : vector<8x32xf32>
    %583 = tpu.matmul %580, %582, %cst_150 {dimension_numbers = #tpu.dot_dimension_numbers<[1], [0], [0], [1], [0, 0, 1, 1], [], []>} : vector<8x64xbf16>, vector<64x32xbf16>, vector<8x32xf32> -> vector<8x32xf32>
    %c21 = arith.constant 21 : index
    %c0_151 = arith.constant 0 : index
    %584 = vector.load %arg4[%c21, %c0_151] : memref<24x1280xf32, #tpu.memory_space<vmem>>, vector<1x32xf32>
    %c20 = arith.constant 20 : index
    %c0_152 = arith.constant 0 : index
    %585 = vector.load %arg4[%c20, %c0_152] : memref<24x1280xf32, #tpu.memory_space<vmem>>, vector<1x32xf32>
    %586 = vector.broadcast %584 : vector<1x32xf32> to vector<8x32xf32>
    %587 = arith.mulf %583, %586 : vector<8x32xf32>
    %588 = vector.broadcast %585 : vector<1x32xf32> to vector<8x32xf32>
    %589 = arith.addf %587, %588 : vector<8x32xf32>
    %cst_153 = arith.constant 0.000000e+00 : f32
    %590 = vector.broadcast %cst_153 : f32 to vector<8x32xf32>
    %591 = arith.cmpf ogt, %589, %590 : vector<8x32xf32>
    %592 = vector.broadcast %10 : f32 to vector<8x32xf32>
    %593 = arith.mulf %592, %589 : vector<8x32xf32>
    %594 = arith.select %591, %589, %593 : vector<8x32xi1>, vector<8x32xf32>
    %595 = arith.truncf %594 : vector<8x32xf32> to vector<8x32xbf16>
    %c448 = arith.constant 448 : index
    %c0_154 = arith.constant 0 : index
    %596 = vector.load %arg25[%c448, %c0_154] : memref<480x128xi8, #tpu.memory_space<vmem>>, vector<32x2xi8>
    %597 = arith.sitofp %596 : vector<32x2xi8> to vector<32x2xbf16>
    %cst_155 = arith.constant dense<0.000000e+00> : vector<8x2xf32>
    %598 = tpu.matmul %595, %597, %cst_155 {dimension_numbers = #tpu.dot_dimension_numbers<[1], [0], [0], [1], [0, 0, 1, 1], [], []>} : vector<8x32xbf16>, vector<32x2xbf16>, vector<8x2xf32> -> vector<8x2xf32>
    %c23 = arith.constant 23 : index
    %c0_156 = arith.constant 0 : index
    %599 = vector.load %arg4[%c23, %c0_156] : memref<24x1280xf32, #tpu.memory_space<vmem>>, vector<1x2xf32>
    %c22 = arith.constant 22 : index
    %c0_157 = arith.constant 0 : index
    %600 = vector.load %arg4[%c22, %c0_157] : memref<24x1280xf32, #tpu.memory_space<vmem>>, vector<1x2xf32>
    %601 = vector.broadcast %599 : vector<1x2xf32> to vector<8x2xf32>
    %602 = arith.mulf %598, %601 : vector<8x2xf32>
    %603 = vector.broadcast %600 : vector<1x2xf32> to vector<8x2xf32>
    %604 = arith.addf %602, %603 : vector<8x2xf32>
    %c0_158 = arith.constant 0 : index
    %c0_159 = arith.constant 0 : index
    %605 = vector.load %arg15[%c0_158, %c0_159] : memref<8x2xf32, #tpu.memory_space<vmem>>, vector<8x2xf32>
    tpu.vector_store %arg15[%c0_158, %c0_159], %604 {strides = array<i32>} : memref<8x2xf32, #tpu.memory_space<vmem>>, vector<8x2xf32>,
    return
  }
}

</mosaic_0001>

<llo_original>
// kernel: mlp_forward.1
$region0: #{mlp_forward.1}
  #allocation0 [shape = 'u32[]', space=smem, size = 0x4, offset = 0x4, fixed_abs, tag = 'smem constant byte address 0x4 - core index']
  #allocation1 [shape = 'u32[144,128]{1,0:T(1,128)}', space=vmem, size = 0x12000, scoped, tag = 'internal scratch']
  #allocation2 [shape = 's8[16,1280]{1,0:T(8,128)(4,1)}', space=vmem, size = 0x5000, scoped, tag = 'scratch operand']
  #allocation3 [shape = 's8[8,1280]{1,0:T(8,128)(4,1)}', space=vmem, size = 0x2800, scoped, tag = 'scratch operand']
  #allocation4 [shape = 's8[1280,1024]{1,0:T(32,128)(4,1)}', space=vmem, size = 0x140000, scoped, tag = 'scratch operand']
  #allocation5 [shape = 's8[1024,896]{1,0:T(32,128)(4,1)}', space=vmem, size = 0xe0000, scoped, tag = 'scratch operand']
  #allocation6 [shape = 's8[896,768]{1,0:T(32,128)(4,1)}', space=vmem, size = 0xa8000, scoped, tag = 'scratch operand']
  #allocation7 [shape = 's8[768,512]{1,0:T(32,128)(4,1)}', space=vmem, size = 0x60000, scoped, tag = 'scratch operand']
  #allocation8 [shape = 's8[512,384]{1,0:T(32,128)(4,1)}', space=vmem, size = 0x30000, scoped, tag = 'scratch operand']
  #allocation9 [shape = 's8[384,256]{1,0:T(32,128)(4,1)}', space=vmem, size = 0x18000, scoped, tag = 'scratch operand']
  #allocation10 [shape = 's8[256,256]{1,0:T(32,128)(4,1)}', space=vmem, size = 0x10000, scoped, tag = 'scratch operand']
  #allocation11 [shape = 's8[480,128]{1,0:T(32,128)(4,1)}', space=vmem, size = 0xf000, scoped, tag = 'scratch operand']
  #allocation12 [shape = 's32[10]{0}', space=sflag, size = 0x28, scoped, tag = 'scratch operand']
  #allocation19 [shape = 's32[]', space=sflag, size = 0x4, offset = 0, fixed_abs, tag = 'sflag constant byte address 0x0 - dummy sync flag']
  #allocation20 [shape = 's32[]', space=sflag, size = 0x4, offset = 0, fixed_abs, tag = 'sflag constant byte address 0x0 - dummy sync flag']
  #allocation21 [shape = 'u32[]', space=smem, size = 0x4, offset = 0x44, fixed_abs, tag = 'smem constant byte address 0x44 - assertion arg 0']
  #allocation22 [shape = 'u32[]', space=smem, size = 0x4, offset = 0x48, fixed_abs, tag = 'smem constant byte address 0x48 - assertion arg 1']
  #allocation23 [shape = 's32[]', space=sflag, size = 0x4, offset = 0, fixed_abs, tag = 'sflag constant byte address 0x0 - dummy sync flag']
  #allocation24 [shape = 's32[]', space=sflag, size = 0x4, offset = 0, fixed_abs, tag = 'sflag constant byte address 0x0 - dummy sync flag']
  #allocation25 [shape = 's32[]', space=sflag, size = 0x4, offset = 0, fixed_abs, tag = 'sflag constant byte address 0x0 - dummy sync flag']
  #allocation26 [shape = 's32[]', space=sflag, size = 0x4, offset = 0, fixed_abs, tag = 'sflag constant byte address 0x0 - dummy sync flag']
  #allocation27 [shape = 's32[]', space=sflag, size = 0x4, offset = 0, fixed_abs, tag = 'sflag constant byte address 0x0 - dummy sync flag']
  #allocation28 [shape = 's32[]', space=sflag, size = 0x4, offset = 0, fixed_abs, tag = 'sflag constant byte address 0x0 - dummy sync flag']
  #allocation29 [shape = 's32[]', space=sflag, size = 0x4, offset = 0, fixed_abs, tag = 'sflag constant byte address 0x0 - dummy sync flag']
  #allocation30 [shape = 's32[]', space=sflag, size = 0x4, offset = 0, fixed_abs, tag = 'sflag constant byte address 0x0 - dummy sync flag']
  #allocation31 [shape = 's32[]', space=sflag, size = 0x4, offset = 0, fixed_abs, tag = 'sflag constant byte address 0x0 - dummy sync flag']
  #allocation32 [shape = 's32[]', space=sflag, size = 0x4, offset = 0, fixed_abs, tag = 'sflag constant byte address 0x0 - dummy sync flag']
  #allocation33 [shape = 's32[]', space=sflag, size = 0x4, offset = 0, fixed_abs, tag = 'sflag constant byte address 0x0 - dummy sync flag']
  #allocation34 [shape = 's32[]', space=sflag, size = 0x4, offset = 0, fixed_abs, tag = 'sflag constant byte address 0x0 - dummy sync flag']
  #allocation35 [shape = 's32[]', space=sflag, size = 0x4, offset = 0, fixed_abs, tag = 'sflag constant byte address 0x0 - dummy sync flag']
  #allocation36 [shape = 's32[]', space=sflag, size = 0x4, offset = 0, fixed_abs, tag = 'sflag constant byte address 0x0 - dummy sync flag']
  #allocation37 [shape = 's32[]', space=sflag, size = 0x4, offset = 0, fixed_abs, tag = 'sflag constant byte address 0x0 - dummy sync flag']
  #allocation38 [shape = 's32[]', space=sflag, size = 0x4, offset = 0, fixed_abs, tag = 'sflag constant byte address 0x0 - dummy sync flag']
  #allocation39 [shape = 's32[]', space=sflag, size = 0x4, offset = 0, fixed_abs, tag = 'sflag constant byte address 0x0 - dummy sync flag']
  #allocation40 [shape = 's32[]', space=sflag, size = 0x4, offset = 0, fixed_abs, tag = 'sflag constant byte address 0x0 - dummy sync flag']
  %s0 = inlined_call_operand.vmem [shape: f32[8,16], index: 0, kind: input, shape index: {}]
  %s1 = inlined_call_operand.vmem [shape: f32[48,8], index: 1, kind: input, shape index: {}]
  %s2 = inlined_call_operand.hbm [shape: f32[11], index: 2, kind: input, shape index: {}]
  %s3 = inlined_call_operand.hbm [shape: f32[48,512], index: 3, kind: input, shape index: {}]
  %s4 = inlined_call_operand.hbm [shape: f32[24,1280], index: 4, kind: input, shape index: {}]
  %s5 = inlined_call_operand.hbm [shape: s8[16,1280], index: 5, kind: input, shape index: {}]
  %s6 = inlined_call_operand.hbm [shape: s8[8,1280], index: 6, kind: input, shape index: {}]
  %s7 = inlined_call_operand.hbm [shape: s8[1280,1024], index: 7, kind: input, shape index: {}]
  %s8 = inlined_call_operand.hbm [shape: s8[1024,896], index: 8, kind: input, shape index: {}]
  %s9 = inlined_call_operand.hbm [shape: s8[896,768], index: 9, kind: input, shape index: {}]
  %s10 = inlined_call_operand.hbm [shape: s8[768,512], index: 10, kind: input, shape index: {}]
  %s11 = inlined_call_operand.hbm [shape: s8[512,384], index: 11, kind: input, shape index: {}]
  %s12 = inlined_call_operand.hbm [shape: s8[384,256], index: 12, kind: input, shape index: {}]
  %s13 = inlined_call_operand.hbm [shape: s8[256,256], index: 13, kind: input, shape index: {}]
  %s14 = inlined_call_operand.hbm [shape: s8[480,128], index: 14, kind: input, shape index: {}]
  %s15 = inlined_call_operand.vmem [shape: f32[8,2], index: 15, kind: output, shape index: {}]
  %s16 = sld [smem:[#allocation0]]
  $region82: #{mlp_forward.1} parent=0
    _
  %s18 = ssub.s32 1, %s16
  %s19 = scalar_select 0, %s18, %s16
  $region1: #{mlp_forward.1} parent=0
    #allocation13 [shape = 'u8[512]{0}', space=smem, size = 0x200, scoped, tag = 'input window, operand 2, single buffered']
    #allocation14 [shape = 's32[1]{0}', space=sflag, size = 0x4, scoped, tag = 'scoped memory for mlp_forward.1']
    #allocation15 [shape = 's32[1]{0}', space=sflag, size = 0x4, scoped, tag = 'scoped memory for mlp_forward.1']
    #allocation16 [shape = 'u8[98304]{0}', space=vmem, size = 0x18000, scoped, tag = 'input window, operand 3, single buffered']
    #allocation17 [shape = 'u8[122880]{0}', space=vmem, size = 0x1e000, scoped, tag = 'input window, operand 4, single buffered']
    #allocation18 [shape = 's32[1]{0}', space=sflag, size = 0x4, scoped, tag = 'scoped memory for mlp_forward.1']
    %20 = vsyncpa [#allocation15], 0
    %21 = vsyncpa [#allocation14], 0
    %22 = vsyncpa [#allocation18], 0
    // Predicated region
    $region2: #{mlp_forward.1} parent=1 // pred_check
      _
    $region3: #{mlp_forward.1} parent=1 // pred_check_branch
      %24 = sbr.rel (0) target = $region5
    $region4: #{mlp_forward.1} parent=1 // pred_region
      _
    $region5: #{mlp_forward.1} parent=1 // pred_fallthru
      _
    // Predicated region
    $region6: #{mlp_forward.1} parent=1 // pred_check
      _
    $region7: #{mlp_forward.1} parent=1 // pred_check_branch
      %26 = sbr.rel (0) target = $region9
    $region8: #{mlp_forward.1} parent=1 // pred_region
      _
    $region9: #{mlp_forward.1} parent=1 // pred_fallthru
      _
    // Predicated region
    $region10: #{mlp_forward.1} parent=1 // pred_check
      _
    $region11: #{mlp_forward.1} parent=1 // pred_check_branch
      %28 = sbr.rel (0) target = $region13
    $region12: #{mlp_forward.1} parent=1 // pred_region
      %s30 = ssub.s32 16, 16
      %31 = vsyncadd [#allocation15], %s30
      %34 = dma.hbm_to_smem %s2, 16, [#allocation13], [#allocation15]
    $region13: #{mlp_forward.1} parent=1 // pred_fallthru
      _
    // Predicated region
    $region14: #{mlp_forward.1} parent=1 // pred_check
      _
    $region15: #{mlp_forward.1} parent=1 // pred_check_branch
      %36 = sbr.rel (0) target = $region17
    $region16: #{mlp_forward.1} parent=1 // pred_region
      %s38 = ssub.s32 3072, 3072
      %39 = vsyncadd [#allocation14], %s38
      %s40 = sshll.u32 [#allocation16], 4
      %s41 = int_to_ptr.vmem [resolvable:$true] %s40
      %46 = dma.hbm_to_vmem [thread:$0]  %s3, 3072, %s41, [#allocation14], 512, 512, 32
    $region17: #{mlp_forward.1} parent=1 // pred_fallthru
      _
    // Predicated region
    $region18: #{mlp_forward.1} parent=1 // pred_check
      _
    $region19: #{mlp_forward.1} parent=1 // pred_check_branch
      %48 = sbr.rel (0) target = $region21
    $region20: #{mlp_forward.1} parent=1 // pred_region
      %s50 = ssub.s32 3840, 3840
      %51 = vsyncadd [#allocation18], %s50
      %s52 = sshll.u32 [#allocation17], 4
      %s53 = int_to_ptr.vmem [resolvable:$true] %s52
      %58 = dma.hbm_to_vmem [thread:$0]  %s4, 3840, %s53, [#allocation18], 1280, 1280, 80
    $region21: #{mlp_forward.1} parent=1 // pred_fallthru
      _
    // Predicated region
    $region22: #{mlp_forward.1} parent=1 // pred_check
      _
    $region23: #{mlp_forward.1} parent=1 // pred_check_branch
      %60 = sbr.rel (0) target = $region25
    $region24: #{mlp_forward.1} parent=1 // pred_region
      %61 = dma.done [#allocation15], 16
    $region25: #{mlp_forward.1} parent=1 // pred_fallthru
      _
    // Predicated region
    $region26: #{mlp_forward.1} parent=1 // pred_check
      _
    $region27: #{mlp_forward.1} parent=1 // pred_check_branch
      %63 = sbr.rel (0) target = $region29
    $region28: #{mlp_forward.1} parent=1 // pred_region
      %64 = dma.done [#allocation14], 3072
    $region29: #{mlp_forward.1} parent=1 // pred_fallthru
      _
    // Predicated region
    $region30: #{mlp_forward.1} parent=1 // pred_check
      _
    $region31: #{mlp_forward.1} parent=1 // pred_check_branch
      %66 = sbr.rel (0) target = $region33
    $region32: #{mlp_forward.1} parent=1 // pred_region
      %67 = dma.done [#allocation18], 3840
    $region33: #{mlp_forward.1} parent=1 // pred_fallthru
      _
    %68 = sfence
    %s70 = sld [smem:[#allocation13]]
    %s71 = sld [smem:[#allocation13 + $0x1]]
    %s72 = sld [smem:[#allocation13 + $0x2]]
    %s73 = sld [smem:[#allocation13 + $0x3]]
    %s74 = sld [smem:[#allocation13 + $0x4]]
    %s75 = sld [smem:[#allocation13 + $0x5]]
    %s76 = sld [smem:[#allocation13 + $0x6]]
    %s77 = sld [smem:[#allocation13 + $0x7]]
    %s78 = sld [smem:[#allocation13 + $0x8]]
    %s79 = sld [smem:[#allocation13 + $0x9]]
    %s80 = sld [smem:[#allocation13 + $0xa]]
    // Predicated region
    $region34: #{mlp_forward.1} parent=1 // pred_check
      _
    $region35: #{mlp_forward.1} parent=1 // pred_check_branch
      %82 = sbr.rel target = $region37
    $region36: #{mlp_forward.1} parent=1 // pred_region
      %83 = sst [smem:[#allocation21]] [#allocation20]
      %84 = sst [smem:[#allocation22]] [#allocation19]
    $region37: #{mlp_forward.1} parent=1 // pred_fallthru
      _
    %86 = shalt.err (0)
    %s88 = sshll.u32 [#allocation2], 4
    %s89 = int_to_ptr.vmem [resolvable:$true] %s88
    %91 = dma.hbm_to_vmem [thread:$0]  %s5, 640, %s89, [#allocation12]
    %s92 = scalar_lea.sflag [#allocation12], 1
    // Predicated region
    $region38: #{mlp_forward.1} parent=1 // pred_check
      _
    $region39: #{mlp_forward.1} parent=1 // pred_check_branch
      %94 = sbr.rel target = $region41
    $region40: #{mlp_forward.1} parent=1 // pred_region
      %95 = sst [smem:[#allocation21]] [#allocation24]
      %96 = sst [smem:[#allocation22]] [#allocation23]
    $region41: #{mlp_forward.1} parent=1 // pred_fallthru
      _
    %98 = shalt.err (0)
    %s100 = sshll.u32 [#allocation3], 4
    %s101 = int_to_ptr.vmem [resolvable:$true] %s100
    %103 = dma.hbm_to_vmem [thread:$0]  %s6, 320, %s101, %s92
    %s104 = scalar_lea.sflag [#allocation12], 2
    // Predicated region
    $region42: #{mlp_forward.1} parent=1 // pred_check
      _
    $region43: #{mlp_forward.1} parent=1 // pred_check_branch
      %106 = sbr.rel target = $region45
    $region44: #{mlp_forward.1} parent=1 // pred_region
      %107 = sst [smem:[#allocation21]] [#allocation26]
      %108 = sst [smem:[#allocation22]] [#allocation25]
    $region45: #{mlp_forward.1} parent=1 // pred_fallthru
      _
    %110 = shalt.err (0)
    %s112 = sshll.u32 [#allocation4], 4
    %s113 = int_to_ptr.vmem [resolvable:$true] %s112
    %115 = dma.hbm_to_vmem [thread:$0]  %s7, 40960, %s113, %s104
    %s116 = scalar_lea.sflag [#allocation12], 3
    // Predicated region
    $region46: #{mlp_forward.1} parent=1 // pred_check
      _
    $region47: #{mlp_forward.1} parent=1 // pred_check_branch
      %118 = sbr.rel target = $region49
    $region48: #{mlp_forward.1} parent=1 // pred_region
      %119 = sst [smem:[#allocation21]] [#allocation28]
      %120 = sst [smem:[#allocation22]] [#allocation27]
    $region49: #{mlp_forward.1} parent=1 // pred_fallthru
      _
    %122 = shalt.err (0)
    %s124 = sshll.u32 [#allocation5], 4
    %s125 = int_to_ptr.vmem [resolvable:$true] %s124
    %127 = dma.hbm_to_vmem [thread:$0]  %s8, 28672, %s125, %s116
    %s128 = scalar_lea.sflag [#allocation12], 4
    // Predicated region
    $region50: #{mlp_forward.1} parent=1 // pred_check
      _
    $region51: #{mlp_forward.1} parent=1 // pred_check_branch
      %130 = sbr.rel target = $region53
    $region52: #{mlp_forward.1} parent=1 // pred_region
      %131 = sst [smem:[#allocation21]] [#allocation30]
      %132 = sst [smem:[#allocation22]] [#allocation29]
    $region53: #{mlp_forward.1} parent=1 // pred_fallthru
      _
    %134 = shalt.err (0)
    %s136 = sshll.u32 [#allocation6], 4
    %s137 = int_to_ptr.vmem [resolvable:$true] %s136
    %139 = dma.hbm_to_vmem [thread:$0]  %s9, 21504, %s137, %s128
    %s140 = scalar_lea.sflag [#allocation12], 5
    // Predicated region
    $region54: #{mlp_forward.1} parent=1 // pred_check
      _
    $region55: #{mlp_forward.1} parent=1 // pred_check_branch
      %142 = sbr.rel target = $region57
    $region56: #{mlp_forward.1} parent=1 // pred_region
      %143 = sst [smem:[#allocation21]] [#allocation32]
      %144 = sst [smem:[#allocation22]] [#allocation31]
    $region57: #{mlp_forward.1} parent=1 // pred_fallthru
      _
    %146 = shalt.err (0)
    %s148 = sshll.u32 [#allocation7], 4
    %s149 = int_to_ptr.vmem [resolvable:$true] %s148
    %151 = dma.hbm_to_vmem [thread:$0]  %s10, 12288, %s149, %s140
    %s152 = scalar_lea.sflag [#allocation12], 6
    // Predicated region
    $region58: #{mlp_forward.1} parent=1 // pred_check
      _
    $region59: #{mlp_forward.1} parent=1 // pred_check_branch
      %154 = sbr.rel target = $region61
    $region60: #{mlp_forward.1} parent=1 // pred_region
      %155 = sst [smem:[#allocation21]] [#allocation34]
      %156 = sst [smem:[#allocation22]] [#allocation33]
    $region61: #{mlp_forward.1} parent=1 // pred_fallthru
      _
    %158 = shalt.err (0)
    %s160 = sshll.u32 [#allocation8], 4
    %s161 = int_to_ptr.vmem [resolvable:$true] %s160
    %163 = dma.hbm_to_vmem [thread:$0]  %s11, 6144, %s161, %s152
    %s164 = scalar_lea.sflag [#allocation12], 7
    // Predicated region
    $region62: #{mlp_forward.1} parent=1 // pred_check
      _
    $region63: #{mlp_forward.1} parent=1 // pred_check_branch
      %166 = sbr.rel target = $region65
    $region64: #{mlp_forward.1} parent=1 // pred_region
      %167 = sst [smem:[#allocation21]] [#allocation36]
      %168 = sst [smem:[#allocation22]] [#allocation35]
    $region65: #{mlp_forward.1} parent=1 // pred_fallthru
      _
    %170 = shalt.err (0)
    %s172 = sshll.u32 [#allocation9], 4
    %s173 = int_to_ptr.vmem [resolvable:$true] %s172
    %175 = dma.hbm_to_vmem [thread:$0]  %s12, 3072, %s173, %s164
    %s176 = scalar_lea.sflag [#allocation12], 8
    // Predicated region
    $region66: #{mlp_forward.1} parent=1 // pred_check
      _
    $region67: #{mlp_forward.1} parent=1 // pred_check_branch
      %178 = sbr.rel target = $region69
    $region68: #{mlp_forward.1} parent=1 // pred_region
      %179 = sst [smem:[#allocation21]] [#allocation38]
      %180 = sst [smem:[#allocation22]] [#allocation37]
    $region69: #{mlp_forward.1} parent=1 // pred_fallthru
      _
    %182 = shalt.err (0)
    %s184 = sshll.u32 [#allocation10], 4
    %s185 = int_to_ptr.vmem [resolvable:$true] %s184
    %187 = dma.hbm_to_vmem [thread:$0]  %s13, 2048, %s185, %s176
    %s188 = scalar_lea.sflag [#allocation12], 9
    // Predicated region
    $region70: #{mlp_forward.1} parent=1 // pred_check
      _
    $region71: #{mlp_forward.1} parent=1 // pred_check_branch
      %190 = sbr.rel target = $region73
    $region72: #{mlp_forward.1} parent=1 // pred_region
      %191 = sst [smem:[#allocation21]] [#allocation40]
      %192 = sst [smem:[#allocation22]] [#allocation39]
    $region73: #{mlp_forward.1} parent=1 // pred_fallthru
      _
    %194 = shalt.err (0)
    %s196 = sshll.u32 [#allocation11], 4
    %s197 = int_to_ptr.vmem [resolvable:$true] %s196
    %199 = dma.hbm_to_vmem [thread:$0]  %s14, 1920, %s197, %s188
    %v200 = vld [vmem:[%s1] sm:$0xff]
    %v201 = vld [vmem:[%s1 + $0x8] sm:$0xff]
    %v202 = vld [vmem:[%s1 + $0x10] sm:$0xff]
    %v203 = vld [vmem:[%s1 + $0x18] sm:$0xff]
    %v204 = vld [vmem:[%s1 + $0x20] sm:$0xff]
    %v205 = vld [vmem:[%s1 + $0x28] sm:$0xff]
    %v206 = vld [vmem:[#allocation16] sm:$0xff]
    %v207 = vld [vmem:[#allocation16 + $0x8] sm:$0xff]
    %v208 = vld [vmem:[#allocation16 + $0x10] sm:$0xff]
    %v209 = vld [vmem:[#allocation16 + $0x18] sm:$0xff]
    %v210 = vld [vmem:[#allocation16 + $0x20] sm:$0xff]
    %v211 = vld [vmem:[#allocation16 + $0x28] sm:$0xff]
    %v212 = vld [vmem:[#allocation16 + $0x30] sm:$0xff]
    %v213 = vld [vmem:[#allocation16 + $0x38] sm:$0xff]
    %s214 = scalar_lea.vmem [#allocation16], 128
    %v215 = vld [vmem:[%s214] ss:$8 sm:$0xf]
    %v217 = vlaneseq
    %v218 = vshrl.u32 %v217, 7
    %v219 = vsub.s32 0, %v218
    %v220 = vrot.slane %v215, %v219
    %v221 = vlaneseq
    %v222 = vshrl.u32 %v221, 7
    %v223 = vsub.s32 1, %v222
    %v224 = vrot.slane %v215, %v223
    %v225 = vlaneseq
    %v226 = vshrl.u32 %v225, 7
    %v227 = vsub.s32 2, %v226
    %v228 = vrot.slane %v215, %v227
    %v229 = vlaneseq
    %v230 = vshrl.u32 %v229, 7
    %v231 = vsub.s32 3, %v230
    %v232 = vrot.slane %v215, %v231
    %vm237 = vcmask 64512
    %v239 = vsel %vm237, %v200, 0
    %v242 = vsel %vm237, %v201, 0
    %v245 = vsel %vm237, %v202, 0
    %v248 = vsel %vm237, %v203, 0
    %v251 = vsel %vm237, %v204, 0
    %v254 = vsel %vm237, %v205, 0
    %256 = vmatprep.subr.mxu0 0.0
    %257 = vmatpush1.msra.mxu0 0.0
    %258 = vmatprep.subr.mxu0 0.0
    %259 = vmatpush1.msra.mxu0 0.0
    %260 = vmatprep.subr.mxu0 0.0
    %261 = vmatpush1.msra.mxu0 0.0
    %262 = vmatprep.subr.mxu0 0.0
    %263 = vmatpush1.msra.mxu0 0.0
    %264 = vmatprep.subr.mxu0 0.0
    %265 = vmatpush1.msra.mxu0 0.0
    %266 = vmatprep.subr.mxu0 0.0
    %267 = vmatpush1.msra.mxu0 0.0
    %268 = vmatprep.subr.mxu0 0.0
    %269 = vmatpush1.msra.mxu0 0.0
    %270 = vmatprep.subr.mxu0 0.0
    %271 = vmatpush1.msra.mxu0 0.0
    %272 = vmatprep.subr.mxu0 0.0
    %273 = vmatpush1.msra.mxu0 0.0
    %274 = vmatprep.subr.mxu0 0.0
    %275 = vmatpush1.msra.mxu0 0.0
    %276 = vmatprep.subr.mxu0 0.0
    %277 = vmatpush1.msra.mxu0 0.0
    %278 = vmatprep.subr.mxu0 0.0
    %279 = vmatpush1.msra.mxu0 0.0
    %280 = vmatprep.subr.mxu0 0.0
    %281 = vmatpush1.msra.mxu0 0.0
    %282 = vmatprep.subr.mxu0 0.0
    %283 = vmatpush1.msra.mxu0 0.0
    %284 = vmatprep.subr.mxu0 0.0
    %285 = vmatpush1.msra.mxu0 0.0
    %286 = vmatprep.subr.mxu0 %v207
    %287 = vmatpush1.msra.mxu0 %v206
    %288 = vmatprep.subr.mxu0 0.0
    %289 = vmatpush2.msra.mxu0 0.0
    %290 = vmatprep.subr.mxu0 0.0
    %291 = vmatpush2.msra.mxu0 0.0
    %292 = vmatprep.subr.mxu0 0.0
    %293 = vmatpush2.msra.mxu0 0.0
    %294 = vmatprep.subr.mxu0 0.0
    %295 = vmatpush2.msra.mxu0 0.0
    %296 = vmatprep.subr.mxu0 0.0
    %297 = vmatpush2.msra.mxu0 0.0
    %298 = vmatprep.subr.mxu0 0.0
    %299 = vmatpush2.msra.mxu0 0.0
    %300 = vmatprep.subr.mxu0 0.0
    %301 = vmatpush2.msra.mxu0 0.0
    %302 = vmatprep.subr.mxu0 0.0
    %303 = vmatpush2.msra.mxu0 0.0
    %304 = vmatprep.subr.mxu0 0.0
    %305 = vmatpush2.msra.mxu0 0.0
    %306 = vmatprep.subr.mxu0 0.0
    %307 = vmatpush2.msra.mxu0 0.0
    %308 = vmatprep.subr.mxu0 0.0
    %309 = vmatpush2.msra.mxu0 0.0
    %310 = vmatprep.subr.mxu0 0.0
    %311 = vmatpush2.msra.mxu0 0.0
    %312 = vmatprep.subr.mxu0 0.0
    %313 = vmatpush2.msra.mxu0 0.0
    %314 = vmatprep.subr.mxu0 0.0
    %315 = vmatpush2.msra.mxu0 0.0
    %316 = vmatprep.subr.mxu0 0.0
    %317 = vmatpush2.msra.mxu0 0.0
    %318 = vmatprep.subr.mxu0 0.0
    %319 = vmatpush2.msra.mxu0 0.0
    %320 = vmatprep.mubr.f32.mxu0 0.0
    %321 = vmatmul.mubr.f32.gmra.mxu0 %v239
    %v322 = vpop.f32.mrf.mxu0
    %v323 = vadd.f32 %v220, %v322
    %v324 = vpop.f32.mrf.mxu0
    %v325 = vadd.f32 %v224, %v324
    %326 = vmatprep.mubr.f32.mxu0 0.0
    %327 = vmatmul.mubr.f32.gmra.mxu0 %v242
    %v328 = vpop.f32.mrf.mxu0
    %v329 = vadd.f32 %v220, %v328
    %v330 = vpop.f32.mrf.mxu0
    %v331 = vadd.f32 %v224, %v330
    %332 = vmatprep.mubr.f32.mxu0 0.0
    %333 = vmatmul.mubr.f32.gmra.mxu0 %v245
    %v334 = vpop.f32.mrf.mxu0
    %v335 = vadd.f32 %v220, %v334
    %v336 = vpop.f32.mrf.mxu0
    %v337 = vadd.f32 %v224, %v336
    %338 = vmatprep.mubr.f32.mxu0 0.0
    %339 = vmatmul.mubr.f32.gmra.mxu0 %v248
    %v340 = vpop.f32.mrf.mxu0
    %v341 = vadd.f32 %v220, %v340
    %v342 = vpop.f32.mrf.mxu0
    %v343 = vadd.f32 %v224, %v342
    %344 = vmatprep.mubr.f32.mxu0 0.0
    %345 = vmatmul.mubr.f32.gmra.mxu0 %v251
    %v346 = vpop.f32.mrf.mxu0
    %v347 = vadd.f32 %v220, %v346
    %v348 = vpop.f32.mrf.mxu0
    %v349 = vadd.f32 %v224, %v348
    %350 = vmatprep.mubr.f32.mxu0 0.0
    %351 = vmatmul.mubr.f32.gmra.mxu0 %v254
    %v352 = vpop.f32.mrf.mxu0
    %v353 = vadd.f32 %v220, %v352
    %v354 = vpop.f32.mrf.mxu0
    %v355 = vadd.f32 %v224, %v354
    %356 = vdwg.mxu0
    %357 = vmatprep.subr.mxu0 0.0
    %358 = vmatpush1.msra.mxu0 0.0
    %359 = vmatprep.subr.mxu0 0.0
    %360 = vmatpush1.msra.mxu0 0.0
    %361 = vmatprep.subr.mxu0 0.0
    %362 = vmatpush1.msra.mxu0 0.0
    %363 = vmatprep.subr.mxu0 0.0
    %364 = vmatpush1.msra.mxu0 0.0
    %365 = vmatprep.subr.mxu0 0.0
    %366 = vmatpush1.msra.mxu0 0.0
    %367 = vmatprep.subr.mxu0 0.0
    %368 = vmatpush1.msra.mxu0 0.0
    %369 = vmatprep.subr.mxu0 0.0
    %370 = vmatpush1.msra.mxu0 0.0
    %371 = vmatprep.subr.mxu0 0.0
    %372 = vmatpush1.msra.mxu0 0.0
    %373 = vmatprep.subr.mxu0 0.0
    %374 = vmatpush1.msra.mxu0 0.0
    %375 = vmatprep.subr.mxu0 0.0
    %376 = vmatpush1.msra.mxu0 0.0
    %377 = vmatprep.subr.mxu0 0.0
    %378 = vmatpush1.msra.mxu0 0.0
    %379 = vmatprep.subr.mxu0 0.0
    %380 = vmatpush1.msra.mxu0 0.0
    %381 = vmatprep.subr.mxu0 0.0
    %382 = vmatpush1.msra.mxu0 0.0
    %383 = vmatprep.subr.mxu0 0.0
    %384 = vmatpush1.msra.mxu0 0.0
    %385 = vmatprep.subr.mxu0 0.0
    %386 = vmatpush1.msra.mxu0 0.0
    %387 = vmatprep.subr.mxu0 %v209
    %388 = vmatpush1.msra.mxu0 %v208
    %389 = vmatprep.subr.mxu0 0.0
    %390 = vmatpush2.msra.mxu0 0.0
    %391 = vmatprep.subr.mxu0 0.0
    %392 = vmatpush2.msra.mxu0 0.0
    %393 = vmatprep.subr.mxu0 0.0
    %394 = vmatpush2.msra.mxu0 0.0
    %395 = vmatprep.subr.mxu0 0.0
    %396 = vmatpush2.msra.mxu0 0.0
    %397 = vmatprep.subr.mxu0 0.0
    %398 = vmatpush2.msra.mxu0 0.0
    %399 = vmatprep.subr.mxu0 0.0
    %400 = vmatpush2.msra.mxu0 0.0
    %401 = vmatprep.subr.mxu0 0.0
    %402 = vmatpush2.msra.mxu0 0.0
    %403 = vmatprep.subr.mxu0 0.0
    %404 = vmatpush2.msra.mxu0 0.0
    %405 = vmatprep.subr.mxu0 0.0
    %406 = vmatpush2.msra.mxu0 0.0
    %407 = vmatprep.subr.mxu0 0.0
    %408 = vmatpush2.msra.mxu0 0.0
    %409 = vmatprep.subr.mxu0 0.0
    %410 = vmatpush2.msra.mxu0 0.0
    %411 = vmatprep.subr.mxu0 0.0
    %412 = vmatpush2.msra.mxu0 0.0
    %413 = vmatprep.subr.mxu0 0.0
    %414 = vmatpush2.msra.mxu0 0.0
    %415 = vmatprep.subr.mxu0 0.0
    %416 = vmatpush2.msra.mxu0 0.0
    %417 = vmatprep.subr.mxu0 0.0
    %418 = vmatpush2.msra.mxu0 0.0
    %419 = vmatprep.subr.mxu0 0.0
    %420 = vmatpush2.msra.mxu0 0.0
    %421 = vmatprep.mubr.f32.mxu0 0.0
    %422 = vmatmul.mubr.f32.gmra.mxu0 %v239
    %v423 = vpop.f32.mrf.mxu0
    %v424 = vadd.f32 %v228, %v423
    %v425 = vpop.f32.mrf.mxu0
    %v426 = vadd.f32 %v232, %v425
    %427 = vmatprep.mubr.f32.mxu0 0.0
    %428 = vmatmul.mubr.f32.gmra.mxu0 %v242
    %v429 = vpop.f32.mrf.mxu0
    %v430 = vadd.f32 %v228, %v429
    %v431 = vpop.f32.mrf.mxu0
    %v432 = vadd.f32 %v232, %v431
    %433 = vmatprep.mubr.f32.mxu0 0.0
    %434 = vmatmul.mubr.f32.gmra.mxu0 %v245
    %v435 = vpop.f32.mrf.mxu0
    %v436 = vadd.f32 %v228, %v435
    %v437 = vpop.f32.mrf.mxu0
    %v438 = vadd.f32 %v232, %v437
    %439 = vmatprep.mubr.f32.mxu0 0.0
    %440 = vmatmul.mubr.f32.gmra.mxu0 %v248
    %v441 = vpop.f32.mrf.mxu0
    %v442 = vadd.f32 %v228, %v441
    %v443 = vpop.f32.mrf.mxu0
    %v444 = vadd.f32 %v232, %v443
    %445 = vmatprep.mubr.f32.mxu0 0.0
    %446 = vmatmul.mubr.f32.gmra.mxu0 %v251
    %v447 = vpop.f32.mrf.mxu0
    %v448 = vadd.f32 %v228, %v447
    %v449 = vpop.f32.mrf.mxu0
    %v450 = vadd.f32 %v232, %v449
    %451 = vmatprep.mubr.f32.mxu0 0.0
    %452 = vmatmul.mubr.f32.gmra.mxu0 %v254
    %v453 = vpop.f32.mrf.mxu0
    %v454 = vadd.f32 %v228, %v453
    %v455 = vpop.f32.mrf.mxu0
    %v456 = vadd.f32 %v232, %v455
    %457 = vdwg.mxu0
    %v459 = vsel %vm237, 0.0, 0
    %461 = vmatprep.subr.mxu0 0.0
    %462 = vmatpush1.msra.mxu0 0.0
    %463 = vmatprep.subr.mxu0 0.0
    %464 = vmatpush1.msra.mxu0 0.0
    %465 = vmatprep.subr.mxu0 0.0
    %466 = vmatpush1.msra.mxu0 0.0
    %467 = vmatprep.subr.mxu0 0.0
    %468 = vmatpush1.msra.mxu0 0.0
    %469 = vmatprep.subr.mxu0 0.0
    %470 = vmatpush1.msra.mxu0 0.0
    %471 = vmatprep.subr.mxu0 0.0
    %472 = vmatpush1.msra.mxu0 0.0
    %473 = vmatprep.subr.mxu0 0.0
    %474 = vmatpush1.msra.mxu0 0.0
    %475 = vmatprep.subr.mxu0 0.0
    %476 = vmatpush1.msra.mxu0 0.0
    %477 = vmatprep.subr.mxu0 0.0
    %478 = vmatpush1.msra.mxu0 0.0
    %479 = vmatprep.subr.mxu0 0.0
    %480 = vmatpush1.msra.mxu0 0.0
    %481 = vmatprep.subr.mxu0 0.0
    %482 = vmatpush1.msra.mxu0 0.0
    %483 = vmatprep.subr.mxu0 0.0
    %484 = vmatpush1.msra.mxu0 0.0
    %485 = vmatprep.subr.mxu0 0.0
    %486 = vmatpush1.msra.mxu0 0.0
    %487 = vmatprep.subr.mxu0 0.0
    %488 = vmatpush1.msra.mxu0 0.0
    %489 = vmatprep.subr.mxu0 0.0
    %490 = vmatpush1.msra.mxu0 0.0
    %491 = vmatprep.subr.mxu0 %v211
    %492 = vmatpush1.msra.mxu0 %v210
    %493 = vmatprep.subr.mxu0 0.0
    %494 = vmatpush2.msra.mxu0 0.0
    %495 = vmatprep.subr.mxu0 0.0
    %496 = vmatpush2.msra.mxu0 0.0
    %497 = vmatprep.subr.mxu0 0.0
    %498 = vmatpush2.msra.mxu0 0.0
    %499 = vmatprep.subr.mxu0 0.0
    %500 = vmatpush2.msra.mxu0 0.0
    %501 = vmatprep.subr.mxu0 0.0
    %502 = vmatpush2.msra.mxu0 0.0
    %503 = vmatprep.subr.mxu0 0.0
    %504 = vmatpush2.msra.mxu0 0.0
    %505 = vmatprep.subr.mxu0 0.0
    %506 = vmatpush2.msra.mxu0 0.0
    %507 = vmatprep.subr.mxu0 0.0
    %508 = vmatpush2.msra.mxu0 0.0
    %509 = vmatprep.subr.mxu0 0.0
    %510 = vmatpush2.msra.mxu0 0.0
    %511 = vmatprep.subr.mxu0 0.0
    %512 = vmatpush2.msra.mxu0 0.0
    %513 = vmatprep.subr.mxu0 0.0
    %514 = vmatpush2.msra.mxu0 0.0
    %515 = vmatprep.subr.mxu0 0.0
    %516 = vmatpush2.msra.mxu0 0.0
    %517 = vmatprep.subr.mxu0 0.0
    %518 = vmatpush2.msra.mxu0 0.0
    %519 = vmatprep.subr.mxu0 0.0
    %520 = vmatpush2.msra.mxu0 0.0
    %521 = vmatprep.subr.mxu0 0.0
    %522 = vmatpush2.msra.mxu0 0.0
    %523 = vmatprep.subr.mxu0 0.0
    %524 = vmatpush2.msra.mxu0 0.0
    %525 = vmatprep.mubr.f32.mxu0 0.0
    %526 = vmatmul.mubr.f32.gmra.mxu0 %v459
    %v527 = vpop.f32.mrf.mxu0
    %v528 = vadd.f32 0.0, %v527
    %v529 = vpop.f32.mrf.mxu0
    %v530 = vadd.f32 0.0, %v529
    %531 = vdwg.mxu0
    %532 = vmatprep.subr.mxu0 0.0
    %533 = vmatpush1.msra.mxu0 0.0
    %534 = vmatprep.subr.mxu0 0.0
    %535 = vmatpush1.msra.mxu0 0.0
    %536 = vmatprep.subr.mxu0 0.0
    %537 = vmatpush1.msra.mxu0 0.0
    %538 = vmatprep.subr.mxu0 0.0
    %539 = vmatpush1.msra.mxu0 0.0
    %540 = vmatprep.subr.mxu0 0.0
    %541 = vmatpush1.msra.mxu0 0.0
    %542 = vmatprep.subr.mxu0 0.0
    %543 = vmatpush1.msra.mxu0 0.0
    %544 = vmatprep.subr.mxu0 0.0
    %545 = vmatpush1.msra.mxu0 0.0
    %546 = vmatprep.subr.mxu0 0.0
    %547 = vmatpush1.msra.mxu0 0.0
    %548 = vmatprep.subr.mxu0 0.0
    %549 = vmatpush1.msra.mxu0 0.0
    %550 = vmatprep.subr.mxu0 0.0
    %551 = vmatpush1.msra.mxu0 0.0
    %552 = vmatprep.subr.mxu0 0.0
    %553 = vmatpush1.msra.mxu0 0.0
    %554 = vmatprep.subr.mxu0 0.0
    %555 = vmatpush1.msra.mxu0 0.0
    %556 = vmatprep.subr.mxu0 0.0
    %557 = vmatpush1.msra.mxu0 0.0
    %558 = vmatprep.subr.mxu0 0.0
    %559 = vmatpush1.msra.mxu0 0.0
    %560 = vmatprep.subr.mxu0 0.0
    %561 = vmatpush1.msra.mxu0 0.0
    %562 = vmatprep.subr.mxu0 %v213
    %563 = vmatpush1.msra.mxu0 %v212
    %564 = vmatprep.subr.mxu0 0.0
    %565 = vmatpush2.msra.mxu0 0.0
    %566 = vmatprep.subr.mxu0 0.0
    %567 = vmatpush2.msra.mxu0 0.0
    %568 = vmatprep.subr.mxu0 0.0
    %569 = vmatpush2.msra.mxu0 0.0
    %570 = vmatprep.subr.mxu0 0.0
    %571 = vmatpush2.msra.mxu0 0.0
    %572 = vmatprep.subr.mxu0 0.0
    %573 = vmatpush2.msra.mxu0 0.0
    %574 = vmatprep.subr.mxu0 0.0
    %575 = vmatpush2.msra.mxu0 0.0
    %576 = vmatprep.subr.mxu0 0.0
    %577 = vmatpush2.msra.mxu0 0.0
    %578 = vmatprep.subr.mxu0 0.0
    %579 = vmatpush2.msra.mxu0 0.0
    %580 = vmatprep.subr.mxu0 0.0
    %581 = vmatpush2.msra.mxu0 0.0
    %582 = vmatprep.subr.mxu0 0.0
    %583 = vmatpush2.msra.mxu0 0.0
    %584 = vmatprep.subr.mxu0 0.0
    %585 = vmatpush2.msra.mxu0 0.0
    %586 = vmatprep.subr.mxu0 0.0
    %587 = vmatpush2.msra.mxu0 0.0
    %588 = vmatprep.subr.mxu0 0.0
    %589 = vmatpush2.msra.mxu0 0.0
    %590 = vmatprep.subr.mxu0 0.0
    %591 = vmatpush2.msra.mxu0 0.0
    %592 = vmatprep.subr.mxu0 0.0
    %593 = vmatpush2.msra.mxu0 0.0
    %594 = vmatprep.subr.mxu0 0.0
    %595 = vmatpush2.msra.mxu0 0.0
    %596 = vmatprep.mubr.f32.mxu0 0.0
    %597 = vmatmul.mubr.f32.gmra.mxu0 %v459
    %v598 = vpop.f32.mrf.mxu0
    %v599 = vadd.f32 0.0, %v598
    %v600 = vpop.f32.mrf.mxu0
    %v601 = vadd.f32 0.0, %v600
    %602 = vdwg.mxu0
    %v603 = vadd.f32 %v323, %v528
    %v604 = vadd.f32 %v325, %v530
    %v605 = vadd.f32 %v424, %v599
    %v606 = vadd.f32 %v426, %v601
    %v607 = vxor.u32 %v603, 2147483648
    %v608 = vmul.f32 %v607, 1.442695
    %v609 = vpow.pop %v608
    %v610 = vadd.f32 %v609, 1.0
    %v611 = vrcp.pop %v610
    %v612 = vmul.f32 1.0, %v611
    %v613 = vxor.u32 %v604, 2147483648
    %v614 = vmul.f32 %v613, 1.442695
    %v615 = vpow.pop %v614
    %v616 = vadd.f32 %v615, 1.0
    %v617 = vrcp.pop %v616
    %v618 = vmul.f32 1.0, %v617
    %v619 = vtanh.pop %v605
    %v620 = vxor.u32 %v606, 2147483648
    %v621 = vmul.f32 %v620, 1.442695
    %v622 = vpow.pop %v621
    %v623 = vadd.f32 %v622, 1.0
    %v624 = vrcp.pop %v623
    %v625 = vmul.f32 1.0, %v624
    %v626 = vmul.f32 %v618, 0.0
    %v627 = vmul.f32 %v612, %v619
    %v628 = vadd.f32 %v626, %v627
    %v629 = vtanh.pop %v628
    %v630 = vmul.f32 %v625, %v629
    %v632 = vsel %vm237, %v630, 0
    %634 = vmatprep.subr.mxu0 0.0
    %635 = vmatpush1.msra.mxu0 0.0
    %636 = vmatprep.subr.mxu0 0.0
    %637 = vmatpush1.msra.mxu0 0.0
    %638 = vmatprep.subr.mxu0 0.0
    %639 = vmatpush1.msra.mxu0 0.0
    %640 = vmatprep.subr.mxu0 0.0
    %641 = vmatpush1.msra.mxu0 0.0
    %642 = vmatprep.subr.mxu0 0.0
    %643 = vmatpush1.msra.mxu0 0.0
    %644 = vmatprep.subr.mxu0 0.0
    %645 = vmatpush1.msra.mxu0 0.0
    %646 = vmatprep.subr.mxu0 0.0
    %647 = vmatpush1.msra.mxu0 0.0
    %648 = vmatprep.subr.mxu0 0.0
    %649 = vmatpush1.msra.mxu0 0.0
    %650 = vmatprep.subr.mxu0 0.0
    %651 = vmatpush1.msra.mxu0 0.0
    %652 = vmatprep.subr.mxu0 0.0
    %653 = vmatpush1.msra.mxu0 0.0
    %654 = vmatprep.subr.mxu0 0.0
    %655 = vmatpush1.msra.mxu0 0.0
    %656 = vmatprep.subr.mxu0 0.0
    %657 = vmatpush1.msra.mxu0 0.0
    %658 = vmatprep.subr.mxu0 0.0
    %659 = vmatpush1.msra.mxu0 0.0
    %660 = vmatprep.subr.mxu0 0.0
    %661 = vmatpush1.msra.mxu0 0.0
    %662 = vmatprep.subr.mxu0 0.0
    %663 = vmatpush1.msra.mxu0 0.0
    %664 = vmatprep.subr.mxu0 %v211
    %665 = vmatpush1.msra.mxu0 %v210
    %666 = vmatprep.subr.mxu0 0.0
    %667 = vmatpush2.msra.mxu0 0.0
    %668 = vmatprep.subr.mxu0 0.0
    %669 = vmatpush2.msra.mxu0 0.0
    %670 = vmatprep.subr.mxu0 0.0
    %671 = vmatpush2.msra.mxu0 0.0
    %672 = vmatprep.subr.mxu0 0.0
    %673 = vmatpush2.msra.mxu0 0.0
    %674 = vmatprep.subr.mxu0 0.0
    %675 = vmatpush2.msra.mxu0 0.0
    %676 = vmatprep.subr.mxu0 0.0
    %677 = vmatpush2.msra.mxu0 0.0
    %678 = vmatprep.subr.mxu0 0.0
    %679 = vmatpush2.msra.mxu0 0.0
    %680 = vmatprep.subr.mxu0 0.0
    %681 = vmatpush2.msra.mxu0 0.0
    %682 = vmatprep.subr.mxu0 0.0
    %683 = vmatpush2.msra.mxu0 0.0
    %684 = vmatprep.subr.mxu0 0.0
    %685 = vmatpush2.msra.mxu0 0.0
    %686 = vmatprep.subr.mxu0 0.0
    %687 = vmatpush2.msra.mxu0 0.0
    %688 = vmatprep.subr.mxu0 0.0
    %689 = vmatpush2.msra.mxu0 0.0
    %690 = vmatprep.subr.mxu0 0.0
    %691 = vmatpush2.msra.mxu0 0.0
    %692 = vmatprep.subr.mxu0 0.0
    %693 = vmatpush2.msra.mxu0 0.0
    %694 = vmatprep.subr.mxu0 0.0
    %695 = vmatpush2.msra.mxu0 0.0
    %696 = vmatprep.subr.mxu0 0.0
    %697 = vmatpush2.msra.mxu0 0.0
    %698 = vmatprep.mubr.f32.mxu0 0.0
    %699 = vmatmul.mubr.f32.gmra.mxu0 %v632
    %v700 = vpop.f32.mrf.mxu0
    %v701 = vadd.f32 0.0, %v700
    %v702 = vpop.f32.mrf.mxu0
    %v703 = vadd.f32 0.0, %v702
    %704 = vdwg.mxu0
    %705 = vmatprep.subr.mxu0 0.0
    %706 = vmatpush1.msra.mxu0 0.0
    %707 = vmatprep.subr.mxu0 0.0
    %708 = vmatpush1.msra.mxu0 0.0
    %709 = vmatprep.subr.mxu0 0.0
    %710 = vmatpush1.msra.mxu0 0.0
    %711 = vmatprep.subr.mxu0 0.0
    %712 = vmatpush1.msra.mxu0 0.0
    %713 = vmatprep.subr.mxu0 0.0
    %714 = vmatpush1.msra.mxu0 0.0
    %715 = vmatprep.subr.mxu0 0.0
    %716 = vmatpush1.msra.mxu0 0.0
    %717 = vmatprep.subr.mxu0 0.0
    %718 = vmatpush1.msra.mxu0 0.0
    %719 = vmatprep.subr.mxu0 0.0
    %720 = vmatpush1.msra.mxu0 0.0
    %721 = vmatprep.subr.mxu0 0.0
    %722 = vmatpush1.msra.mxu0 0.0
    %723 = vmatprep.subr.mxu0 0.0
    %724 = vmatpush1.msra.mxu0 0.0
    %725 = vmatprep.subr.mxu0 0.0
    %726 = vmatpush1.msra.mxu0 0.0
    %727 = vmatprep.subr.mxu0 0.0
    %728 = vmatpush1.msra.mxu0 0.0
    %729 = vmatprep.subr.mxu0 0.0
    %730 = vmatpush1.msra.mxu0 0.0
    %731 = vmatprep.subr.mxu0 0.0
    %732 = vmatpush1.msra.mxu0 0.0
    %733 = vmatprep.subr.mxu0 0.0
    %734 = vmatpush1.msra.mxu0 0.0
    %735 = vmatprep.subr.mxu0 %v213
    %736 = vmatpush1.msra.mxu0 %v212
    %737 = vmatprep.subr.mxu0 0.0
    %738 = vmatpush2.msra.mxu0 0.0
    %739 = vmatprep.subr.mxu0 0.0
    %740 = vmatpush2.msra.mxu0 0.0
    %741 = vmatprep.subr.mxu0 0.0
    %742 = vmatpush2.msra.mxu0 0.0
    %743 = vmatprep.subr.mxu0 0.0
    %744 = vmatpush2.msra.mxu0 0.0
    %745 = vmatprep.subr.mxu0 0.0
    %746 = vmatpush2.msra.mxu0 0.0
    %747 = vmatprep.subr.mxu0 0.0
    %748 = vmatpush2.msra.mxu0 0.0
    %749 = vmatprep.subr.mxu0 0.0
    %750 = vmatpush2.msra.mxu0 0.0
    %751 = vmatprep.subr.mxu0 0.0
    %752 = vmatpush2.msra.mxu0 0.0
    %753 = vmatprep.subr.mxu0 0.0
    %754 = vmatpush2.msra.mxu0 0.0
    %755 = vmatprep.subr.mxu0 0.0
    %756 = vmatpush2.msra.mxu0 0.0
    %757 = vmatprep.subr.mxu0 0.0
    %758 = vmatpush2.msra.mxu0 0.0
    %759 = vmatprep.subr.mxu0 0.0
    %760 = vmatpush2.msra.mxu0 0.0
    %761 = vmatprep.subr.mxu0 0.0
    %762 = vmatpush2.msra.mxu0 0.0
    %763 = vmatprep.subr.mxu0 0.0
    %764 = vmatpush2.msra.mxu0 0.0
    %765 = vmatprep.subr.mxu0 0.0
    %766 = vmatpush2.msra.mxu0 0.0
    %767 = vmatprep.subr.mxu0 0.0
    %768 = vmatpush2.msra.mxu0 0.0
    %769 = vmatprep.mubr.f32.mxu0 0.0
    %770 = vmatmul.mubr.f32.gmra.mxu0 %v632
    %v771 = vpop.f32.mrf.mxu0
    %v772 = vadd.f32 0.0, %v771
    %v773 = vpop.f32.mrf.mxu0
    %v774 = vadd.f32 0.0, %v773
    %775 = vdwg.mxu0
    %v776 = vadd.f32 %v329, %v701
    %v777 = vadd.f32 %v331, %v703
    %v778 = vadd.f32 %v430, %v772
    %v779 = vadd.f32 %v432, %v774
    %v780 = vxor.u32 %v776, 2147483648
    %v781 = vmul.f32 %v780, 1.442695
    %v782 = vpow.pop %v781
    %v783 = vadd.f32 %v782, 1.0
    %v784 = vrcp.pop %v783
    %v785 = vmul.f32 1.0, %v784
    %v786 = vxor.u32 %v777, 2147483648
    %v787 = vmul.f32 %v786, 1.442695
    %v788 = vpow.pop %v787
    %v789 = vadd.f32 %v788, 1.0
    %v790 = vrcp.pop %v789
    %v791 = vmul.f32 1.0, %v790
    %v792 = vtanh.pop %v778
    %v793 = vxor.u32 %v779, 2147483648
    %v794 = vmul.f32 %v793, 1.442695
    %v795 = vpow.pop %v794
    %v796 = vadd.f32 %v795, 1.0
    %v797 = vrcp.pop %v796
    %v798 = vmul.f32 1.0, %v797
    %v799 = vmul.f32 %v791, %v628
    %v800 = vmul.f32 %v785, %v792
    %v801 = vadd.f32 %v799, %v800
    %v802 = vtanh.pop %v801
    %v803 = vmul.f32 %v798, %v802
    %v805 = vsel %vm237, %v803, 0
    %807 = vmatprep.subr.mxu0 0.0
    %808 = vmatpush1.msra.mxu0 0.0
    %809 = vmatprep.subr.mxu0 0.0
    %810 = vmatpush1.msra.mxu0 0.0
    %811 = vmatprep.subr.mxu0 0.0
    %812 = vmatpush1.msra.mxu0 0.0
    %813 = vmatprep.subr.mxu0 0.0
    %814 = vmatpush1.msra.mxu0 0.0
    %815 = vmatprep.subr.mxu0 0.0
    %816 = vmatpush1.msra.mxu0 0.0
    %817 = vmatprep.subr.mxu0 0.0
    %818 = vmatpush1.msra.mxu0 0.0
    %819 = vmatprep.subr.mxu0 0.0
    %820 = vmatpush1.msra.mxu0 0.0
    %821 = vmatprep.subr.mxu0 0.0
    %822 = vmatpush1.msra.mxu0 0.0
    %823 = vmatprep.subr.mxu0 0.0
    %824 = vmatpush1.msra.mxu0 0.0
    %825 = vmatprep.subr.mxu0 0.0
    %826 = vmatpush1.msra.mxu0 0.0
    %827 = vmatprep.subr.mxu0 0.0
    %828 = vmatpush1.msra.mxu0 0.0
    %829 = vmatprep.subr.mxu0 0.0
    %830 = vmatpush1.msra.mxu0 0.0
    %831 = vmatprep.subr.mxu0 0.0
    %832 = vmatpush1.msra.mxu0 0.0
    %833 = vmatprep.subr.mxu0 0.0
    %834 = vmatpush1.msra.mxu0 0.0
    %835 = vmatprep.subr.mxu0 0.0
    %836 = vmatpush1.msra.mxu0 0.0
    %837 = vmatprep.subr.mxu0 %v211
    %838 = vmatpush1.msra.mxu0 %v210
    %839 = vmatprep.subr.mxu0 0.0
    %840 = vmatpush2.msra.mxu0 0.0
    %841 = vmatprep.subr.mxu0 0.0
    %842 = vmatpush2.msra.mxu0 0.0
    %843 = vmatprep.subr.mxu0 0.0
    %844 = vmatpush2.msra.mxu0 0.0
    %845 = vmatprep.subr.mxu0 0.0
    %846 = vmatpush2.msra.mxu0 0.0
    %847 = vmatprep.subr.mxu0 0.0
    %848 = vmatpush2.msra.mxu0 0.0
    %849 = vmatprep.subr.mxu0 0.0
    %850 = vmatpush2.msra.mxu0 0.0
    %851 = vmatprep.subr.mxu0 0.0
    %852 = vmatpush2.msra.mxu0 0.0
    %853 = vmatprep.subr.mxu0 0.0
    %854 = vmatpush2.msra.mxu0 0.0
    %855 = vmatprep.subr.mxu0 0.0
    %856 = vmatpush2.msra.mxu0 0.0
    %857 = vmatprep.subr.mxu0 0.0
    %858 = vmatpush2.msra.mxu0 0.0
    %859 = vmatprep.subr.mxu0 0.0
    %860 = vmatpush2.msra.mxu0 0.0
    %861 = vmatprep.subr.mxu0 0.0
    %862 = vmatpush2.msra.mxu0 0.0
    %863 = vmatprep.subr.mxu0 0.0
    %864 = vmatpush2.msra.mxu0 0.0
    %865 = vmatprep.subr.mxu0 0.0
    %866 = vmatpush2.msra.mxu0 0.0
    %867 = vmatprep.subr.mxu0 0.0
    %868 = vmatpush2.msra.mxu0 0.0
    %869 = vmatprep.subr.mxu0 0.0
    %870 = vmatpush2.msra.mxu0 0.0
    %871 = vmatprep.mubr.f32.mxu0 0.0
    %872 = vmatmul.mubr.f32.gmra.mxu0 %v805
    %v873 = vpop.f32.mrf.mxu0
    %v874 = vadd.f32 0.0, %v873
    %v875 = vpop.f32.mrf.mxu0
    %v876 = vadd.f32 0.0, %v875
    %877 = vdwg.mxu0
    %878 = vmatprep.subr.mxu0 0.0
    %879 = vmatpush1.msra.mxu0 0.0
    %880 = vmatprep.subr.mxu0 0.0
    %881 = vmatpush1.msra.mxu0 0.0
    %882 = vmatprep.subr.mxu0 0.0
    %883 = vmatpush1.msra.mxu0 0.0
    %884 = vmatprep.subr.mxu0 0.0
    %885 = vmatpush1.msra.mxu0 0.0
    %886 = vmatprep.subr.mxu0 0.0
    %887 = vmatpush1.msra.mxu0 0.0
    %888 = vmatprep.subr.mxu0 0.0
    %889 = vmatpush1.msra.mxu0 0.0
    %890 = vmatprep.subr.mxu0 0.0
    %891 = vmatpush1.msra.mxu0 0.0
    %892 = vmatprep.subr.mxu0 0.0
    %893 = vmatpush1.msra.mxu0 0.0
    %894 = vmatprep.subr.mxu0 0.0
    %895 = vmatpush1.msra.mxu0 0.0
    %896 = vmatprep.subr.mxu0 0.0
    %897 = vmatpush1.msra.mxu0 0.0
    %898 = vmatprep.subr.mxu0 0.0
    %899 = vmatpush1.msra.mxu0 0.0
    %900 = vmatprep.subr.mxu0 0.0
    %901 = vmatpush1.msra.mxu0 0.0
    %902 = vmatprep.subr.mxu0 0.0
    %903 = vmatpush1.msra.mxu0 0.0
    %904 = vmatprep.subr.mxu0 0.0
    %905 = vmatpush1.msra.mxu0 0.0
    %906 = vmatprep.subr.mxu0 0.0
    %907 = vmatpush1.msra.mxu0 0.0
    %908 = vmatprep.subr.mxu0 %v213
    %909 = vmatpush1.msra.mxu0 %v212
    %910 = vmatprep.subr.mxu0 0.0
    %911 = vmatpush2.msra.mxu0 0.0
    %912 = vmatprep.subr.mxu0 0.0
    %913 = vmatpush2.msra.mxu0 0.0
    %914 = vmatprep.subr.mxu0 0.0
    %915 = vmatpush2.msra.mxu0 0.0
    %916 = vmatprep.subr.mxu0 0.0
    %917 = vmatpush2.msra.mxu0 0.0
    %918 = vmatprep.subr.mxu0 0.0
    %919 = vmatpush2.msra.mxu0 0.0
    %920 = vmatprep.subr.mxu0 0.0
    %921 = vmatpush2.msra.mxu0 0.0
    %922 = vmatprep.subr.mxu0 0.0
    %923 = vmatpush2.msra.mxu0 0.0
    %924 = vmatprep.subr.mxu0 0.0
    %925 = vmatpush2.msra.mxu0 0.0
    %926 = vmatprep.subr.mxu0 0.0
    %927 = vmatpush2.msra.mxu0 0.0
    %928 = vmatprep.subr.mxu0 0.0
    %929 = vmatpush2.msra.mxu0 0.0
    %930 = vmatprep.subr.mxu0 0.0
    %931 = vmatpush2.msra.mxu0 0.0
    %932 = vmatprep.subr.mxu0 0.0
    %933 = vmatpush2.msra.mxu0 0.0
    %934 = vmatprep.subr.mxu0 0.0
    %935 = vmatpush2.msra.mxu0 0.0
    %936 = vmatprep.subr.mxu0 0.0
    %937 = vmatpush2.msra.mxu0 0.0
    %938 = vmatprep.subr.mxu0 0.0
    %939 = vmatpush2.msra.mxu0 0.0
    %940 = vmatprep.subr.mxu0 0.0
    %941 = vmatpush2.msra.mxu0 0.0
    %942 = vmatprep.mubr.f32.mxu0 0.0
    %943 = vmatmul.mubr.f32.gmra.mxu0 %v805
    %v944 = vpop.f32.mrf.mxu0
    %v945 = vadd.f32 0.0, %v944
    %v946 = vpop.f32.mrf.mxu0
    %v947 = vadd.f32 0.0, %v946
    %948 = vdwg.mxu0
    %v949 = vadd.f32 %v335, %v874
    %v950 = vadd.f32 %v337, %v876
    %v951 = vadd.f32 %v436, %v945
    %v952 = vadd.f32 %v438, %v947
    %v953 = vxor.u32 %v949, 2147483648
    %v954 = vmul.f32 %v953, 1.442695
    %v955 = vpow.pop %v954
    %v956 = vadd.f32 %v955, 1.0
    %v957 = vrcp.pop %v956
    %v958 = vmul.f32 1.0, %v957
    %v959 = vxor.u32 %v950, 2147483648
    %v960 = vmul.f32 %v959, 1.442695
    %v961 = vpow.pop %v960
    %v962 = vadd.f32 %v961, 1.0
    %v963 = vrcp.pop %v962
    %v964 = vmul.f32 1.0, %v963
    %v965 = vtanh.pop %v951
    %v966 = vxor.u32 %v952, 2147483648
    %v967 = vmul.f32 %v966, 1.442695
    %v968 = vpow.pop %v967
    %v969 = vadd.f32 %v968, 1.0
    %v970 = vrcp.pop %v969
    %v971 = vmul.f32 1.0, %v970
    %v972 = vmul.f32 %v964, %v801
    %v973 = vmul.f32 %v958, %v965
    %v974 = vadd.f32 %v972, %v973
    %v975 = vtanh.pop %v974
    %v976 = vmul.f32 %v971, %v975
    %v978 = vsel %vm237, %v976, 0
    %980 = vmatprep.subr.mxu0 0.0
    %981 = vmatpush1.msra.mxu0 0.0
    %982 = vmatprep.subr.mxu0 0.0
    %983 = vmatpush1.msra.mxu0 0.0
    %984 = vmatprep.subr.mxu0 0.0
    %985 = vmatpush1.msra.mxu0 0.0
    %986 = vmatprep.subr.mxu0 0.0
    %987 = vmatpush1.msra.mxu0 0.0
    %988 = vmatprep.subr.mxu0 0.0
    %989 = vmatpush1.msra.mxu0 0.0
    %990 = vmatprep.subr.mxu0 0.0
    %991 = vmatpush1.msra.mxu0 0.0
    %992 = vmatprep.subr.mxu0 0.0
    %993 = vmatpush1.msra.mxu0 0.0
    %994 = vmatprep.subr.mxu0 0.0
    %995 = vmatpush1.msra.mxu0 0.0
    %996 = vmatprep.subr.mxu0 0.0
    %997 = vmatpush1.msra.mxu0 0.0
    %998 = vmatprep.subr.mxu0 0.0
    %999 = vmatpush1.msra.mxu0 0.0
    %1000 = vmatprep.subr.mxu0 0.0
    %1001 = vmatpush1.msra.mxu0 0.0
    %1002 = vmatprep.subr.mxu0 0.0
    %1003 = vmatpush1.msra.mxu0 0.0
    %1004 = vmatprep.subr.mxu0 0.0
    %1005 = vmatpush1.msra.mxu0 0.0
    %1006 = vmatprep.subr.mxu0 0.0
    %1007 = vmatpush1.msra.mxu0 0.0
    %1008 = vmatprep.subr.mxu0 0.0
    %1009 = vmatpush1.msra.mxu0 0.0
    %1010 = vmatprep.subr.mxu0 %v211
    %1011 = vmatpush1.msra.mxu0 %v210
    %1012 = vmatprep.subr.mxu0 0.0
    %1013 = vmatpush2.msra.mxu0 0.0
    %1014 = vmatprep.subr.mxu0 0.0
    %1015 = vmatpush2.msra.mxu0 0.0
    %1016 = vmatprep.subr.mxu0 0.0
    %1017 = vmatpush2.msra.mxu0 0.0
    %1018 = vmatprep.subr.mxu0 0.0
    %1019 = vmatpush2.msra.mxu0 0.0
    %1020 = vmatprep.subr.mxu0 0.0
    %1021 = vmatpush2.msra.mxu0 0.0
    %1022 = vmatprep.subr.mxu0 0.0
    %1023 = vmatpush2.msra.mxu0 0.0
    %1024 = vmatprep.subr.mxu0 0.0
    %1025 = vmatpush2.msra.mxu0 0.0
    %1026 = vmatprep.subr.mxu0 0.0
    %1027 = vmatpush2.msra.mxu0 0.0
    %1028 = vmatprep.subr.mxu0 0.0
    %1029 = vmatpush2.msra.mxu0 0.0
    %1030 = vmatprep.subr.mxu0 0.0
    %1031 = vmatpush2.msra.mxu0 0.0
    %1032 = vmatprep.subr.mxu0 0.0
    %1033 = vmatpush2.msra.mxu0 0.0
    %1034 = vmatprep.subr.mxu0 0.0
    %1035 = vmatpush2.msra.mxu0 0.0
    %1036 = vmatprep.subr.mxu0 0.0
    %1037 = vmatpush2.msra.mxu0 0.0
    %1038 = vmatprep.subr.mxu0 0.0
    %1039 = vmatpush2.msra.mxu0 0.0
    %1040 = vmatprep.subr.mxu0 0.0
    %1041 = vmatpush2.msra.mxu0 0.0
    %1042 = vmatprep.subr.mxu0 0.0
    %1043 = vmatpush2.msra.mxu0 0.0
    %1044 = vmatprep.mubr.f32.mxu0 0.0
    %1045 = vmatmul.mubr.f32.gmra.mxu0 %v978
    %v1046 = vpop.f32.mrf.mxu0
    %v1047 = vadd.f32 0.0, %v1046
    %v1048 = vpop.f32.mrf.mxu0
    %v1049 = vadd.f32 0.0, %v1048
    %1050 = vdwg.mxu0
    %1051 = vmatprep.subr.mxu0 0.0
    %1052 = vmatpush1.msra.mxu0 0.0
    %1053 = vmatprep.subr.mxu0 0.0
    %1054 = vmatpush1.msra.mxu0 0.0
    %1055 = vmatprep.subr.mxu0 0.0
    %1056 = vmatpush1.msra.mxu0 0.0
    %1057 = vmatprep.subr.mxu0 0.0
    %1058 = vmatpush1.msra.mxu0 0.0
    %1059 = vmatprep.subr.mxu0 0.0
    %1060 = vmatpush1.msra.mxu0 0.0
    %1061 = vmatprep.subr.mxu0 0.0
    %1062 = vmatpush1.msra.mxu0 0.0
    %1063 = vmatprep.subr.mxu0 0.0
    %1064 = vmatpush1.msra.mxu0 0.0
    %1065 = vmatprep.subr.mxu0 0.0
    %1066 = vmatpush1.msra.mxu0 0.0
    %1067 = vmatprep.subr.mxu0 0.0
    %1068 = vmatpush1.msra.mxu0 0.0
    %1069 = vmatprep.subr.mxu0 0.0
    %1070 = vmatpush1.msra.mxu0 0.0
    %1071 = vmatprep.subr.mxu0 0.0
    %1072 = vmatpush1.msra.mxu0 0.0
    %1073 = vmatprep.subr.mxu0 0.0
    %1074 = vmatpush1.msra.mxu0 0.0
    %1075 = vmatprep.subr.mxu0 0.0
    %1076 = vmatpush1.msra.mxu0 0.0
    %1077 = vmatprep.subr.mxu0 0.0
    %1078 = vmatpush1.msra.mxu0 0.0
    %1079 = vmatprep.subr.mxu0 0.0
    %1080 = vmatpush1.msra.mxu0 0.0
    %1081 = vmatprep.subr.mxu0 %v213
    %1082 = vmatpush1.msra.mxu0 %v212
    %1083 = vmatprep.subr.mxu0 0.0
    %1084 = vmatpush2.msra.mxu0 0.0
    %1085 = vmatprep.subr.mxu0 0.0
    %1086 = vmatpush2.msra.mxu0 0.0
    %1087 = vmatprep.subr.mxu0 0.0
    %1088 = vmatpush2.msra.mxu0 0.0
    %1089 = vmatprep.subr.mxu0 0.0
    %1090 = vmatpush2.msra.mxu0 0.0
    %1091 = vmatprep.subr.mxu0 0.0
    %1092 = vmatpush2.msra.mxu0 0.0
    %1093 = vmatprep.subr.mxu0 0.0
    %1094 = vmatpush2.msra.mxu0 0.0
    %1095 = vmatprep.subr.mxu0 0.0
    %1096 = vmatpush2.msra.mxu0 0.0
    %1097 = vmatprep.subr.mxu0 0.0
    %1098 = vmatpush2.msra.mxu0 0.0
    %1099 = vmatprep.subr.mxu0 0.0
    %1100 = vmatpush2.msra.mxu0 0.0
    %1101 = vmatprep.subr.mxu0 0.0
    %1102 = vmatpush2.msra.mxu0 0.0
    %1103 = vmatprep.subr.mxu0 0.0
    %1104 = vmatpush2.msra.mxu0 0.0
    %1105 = vmatprep.subr.mxu0 0.0
    %1106 = vmatpush2.msra.mxu0 0.0
    %1107 = vmatprep.subr.mxu0 0.0
    %1108 = vmatpush2.msra.mxu0 0.0
    %1109 = vmatprep.subr.mxu0 0.0
    %1110 = vmatpush2.msra.mxu0 0.0
    %1111 = vmatprep.subr.mxu0 0.0
    %1112 = vmatpush2.msra.mxu0 0.0
    %1113 = vmatprep.subr.mxu0 0.0
    %1114 = vmatpush2.msra.mxu0 0.0
    %1115 = vmatprep.mubr.f32.mxu0 0.0
    %1116 = vmatmul.mubr.f32.gmra.mxu0 %v978
    %v1117 = vpop.f32.mrf.mxu0
    %v1118 = vadd.f32 0.0, %v1117
    %v1119 = vpop.f32.mrf.mxu0
    %v1120 = vadd.f32 0.0, %v1119
    %1121 = vdwg.mxu0
    %v1122 = vadd.f32 %v341, %v1047
    %v1123 = vadd.f32 %v343, %v1049
    %v1124 = vadd.f32 %v442, %v1118
    %v1125 = vadd.f32 %v444, %v1120
    %v1126 = vxor.u32 %v1122, 2147483648
    %v1127 = vmul.f32 %v1126, 1.442695
    %v1128 = vpow.pop %v1127
    %v1129 = vadd.f32 %v1128, 1.0
    %v1130 = vrcp.pop %v1129
    %v1131 = vmul.f32 1.0, %v1130
    %v1132 = vxor.u32 %v1123, 2147483648
    %v1133 = vmul.f32 %v1132, 1.442695
    %v1134 = vpow.pop %v1133
    %v1135 = vadd.f32 %v1134, 1.0
    %v1136 = vrcp.pop %v1135
    %v1137 = vmul.f32 1.0, %v1136
    %v1138 = vtanh.pop %v1124
    %v1139 = vxor.u32 %v1125, 2147483648
    %v1140 = vmul.f32 %v1139, 1.442695
    %v1141 = vpow.pop %v1140
    %v1142 = vadd.f32 %v1141, 1.0
    %v1143 = vrcp.pop %v1142
    %v1144 = vmul.f32 1.0, %v1143
    %v1145 = vmul.f32 %v1137, %v974
    %v1146 = vmul.f32 %v1131, %v1138
    %v1147 = vadd.f32 %v1145, %v1146
    %v1148 = vtanh.pop %v1147
    %v1149 = vmul.f32 %v1144, %v1148
    %v1151 = vsel %vm237, %v1149, 0
    %1153 = vmatprep.subr.mxu0 0.0
    %1154 = vmatpush1.msra.mxu0 0.0
    %1155 = vmatprep.subr.mxu0 0.0
    %1156 = vmatpush1.msra.mxu0 0.0
    %1157 = vmatprep.subr.mxu0 0.0
    %1158 = vmatpush1.msra.mxu0 0.0
    %1159 = vmatprep.subr.mxu0 0.0
    %1160 = vmatpush1.msra.mxu0 0.0
    %1161 = vmatprep.subr.mxu0 0.0
    %1162 = vmatpush1.msra.mxu0 0.0
    %1163 = vmatprep.subr.mxu0 0.0
    %1164 = vmatpush1.msra.mxu0 0.0
    %1165 = vmatprep.subr.mxu0 0.0
    %1166 = vmatpush1.msra.mxu0 0.0
    %1167 = vmatprep.subr.mxu0 0.0
    %1168 = vmatpush1.msra.mxu0 0.0
    %1169 = vmatprep.subr.mxu0 0.0
    %1170 = vmatpush1.msra.mxu0 0.0
    %1171 = vmatprep.subr.mxu0 0.0
    %1172 = vmatpush1.msra.mxu0 0.0
    %1173 = vmatprep.subr.mxu0 0.0
    %1174 = vmatpush1.msra.mxu0 0.0
    %1175 = vmatprep.subr.mxu0 0.0
    %1176 = vmatpush1.msra.mxu0 0.0
    %1177 = vmatprep.subr.mxu0 0.0
    %1178 = vmatpush1.msra.mxu0 0.0
    %1179 = vmatprep.subr.mxu0 0.0
    %1180 = vmatpush1.msra.mxu0 0.0
    %1181 = vmatprep.subr.mxu0 0.0
    %1182 = vmatpush1.msra.mxu0 0.0
    %1183 = vmatprep.subr.mxu0 %v211
    %1184 = vmatpush1.msra.mxu0 %v210
    %1185 = vmatprep.subr.mxu0 0.0
    %1186 = vmatpush2.msra.mxu0 0.0
    %1187 = vmatprep.subr.mxu0 0.0
    %1188 = vmatpush2.msra.mxu0 0.0
    %1189 = vmatprep.subr.mxu0 0.0
    %1190 = vmatpush2.msra.mxu0 0.0
    %1191 = vmatprep.subr.mxu0 0.0
    %1192 = vmatpush2.msra.mxu0 0.0
    %1193 = vmatprep.subr.mxu0 0.0
    %1194 = vmatpush2.msra.mxu0 0.0
    %1195 = vmatprep.subr.mxu0 0.0
    %1196 = vmatpush2.msra.mxu0 0.0
    %1197 = vmatprep.subr.mxu0 0.0
    %1198 = vmatpush2.msra.mxu0 0.0
    %1199 = vmatprep.subr.mxu0 0.0
    %1200 = vmatpush2.msra.mxu0 0.0
    %1201 = vmatprep.subr.mxu0 0.0
    %1202 = vmatpush2.msra.mxu0 0.0
    %1203 = vmatprep.subr.mxu0 0.0
    %1204 = vmatpush2.msra.mxu0 0.0
    %1205 = vmatprep.subr.mxu0 0.0
    %1206 = vmatpush2.msra.mxu0 0.0
    %1207 = vmatprep.subr.mxu0 0.0
    %1208 = vmatpush2.msra.mxu0 0.0
    %1209 = vmatprep.subr.mxu0 0.0
    %1210 = vmatpush2.msra.mxu0 0.0
    %1211 = vmatprep.subr.mxu0 0.0
    %1212 = vmatpush2.msra.mxu0 0.0
    %1213 = vmatprep.subr.mxu0 0.0
    %1214 = vmatpush2.msra.mxu0 0.0
    %1215 = vmatprep.subr.mxu0 0.0
    %1216 = vmatpush2.msra.mxu0 0.0
    %1217 = vmatprep.mubr.f32.mxu0 0.0
    %1218 = vmatmul.mubr.f32.gmra.mxu0 %v1151
    %v1219 = vpop.f32.mrf.mxu0
    %v1220 = vadd.f32 0.0, %v1219
    %v1221 = vpop.f32.mrf.mxu0
    %v1222 = vadd.f32 0.0, %v1221
    %1223 = vdwg.mxu0
    %1224 = vmatprep.subr.mxu0 0.0
    %1225 = vmatpush1.msra.mxu0 0.0
    %1226 = vmatprep.subr.mxu0 0.0
    %1227 = vmatpush1.msra.mxu0 0.0
    %1228 = vmatprep.subr.mxu0 0.0
    %1229 = vmatpush1.msra.mxu0 0.0
    %1230 = vmatprep.subr.mxu0 0.0
    %1231 = vmatpush1.msra.mxu0 0.0
    %1232 = vmatprep.subr.mxu0 0.0
    %1233 = vmatpush1.msra.mxu0 0.0
    %1234 = vmatprep.subr.mxu0 0.0
    %1235 = vmatpush1.msra.mxu0 0.0
    %1236 = vmatprep.subr.mxu0 0.0
    %1237 = vmatpush1.msra.mxu0 0.0
    %1238 = vmatprep.subr.mxu0 0.0
    %1239 = vmatpush1.msra.mxu0 0.0
    %1240 = vmatprep.subr.mxu0 0.0
    %1241 = vmatpush1.msra.mxu0 0.0
    %1242 = vmatprep.subr.mxu0 0.0
    %1243 = vmatpush1.msra.mxu0 0.0
    %1244 = vmatprep.subr.mxu0 0.0
    %1245 = vmatpush1.msra.mxu0 0.0
    %1246 = vmatprep.subr.mxu0 0.0
    %1247 = vmatpush1.msra.mxu0 0.0
    %1248 = vmatprep.subr.mxu0 0.0
    %1249 = vmatpush1.msra.mxu0 0.0
    %1250 = vmatprep.subr.mxu0 0.0
    %1251 = vmatpush1.msra.mxu0 0.0
    %1252 = vmatprep.subr.mxu0 0.0
    %1253 = vmatpush1.msra.mxu0 0.0
    %1254 = vmatprep.subr.mxu0 %v213
    %1255 = vmatpush1.msra.mxu0 %v212
    %1256 = vmatprep.subr.mxu0 0.0
    %1257 = vmatpush2.msra.mxu0 0.0
    %1258 = vmatprep.subr.mxu0 0.0
    %1259 = vmatpush2.msra.mxu0 0.0
    %1260 = vmatprep.subr.mxu0 0.0
    %1261 = vmatpush2.msra.mxu0 0.0
    %1262 = vmatprep.subr.mxu0 0.0
    %1263 = vmatpush2.msra.mxu0 0.0
    %1264 = vmatprep.subr.mxu0 0.0
    %1265 = vmatpush2.msra.mxu0 0.0
    %1266 = vmatprep.subr.mxu0 0.0
    %1267 = vmatpush2.msra.mxu0 0.0
    %1268 = vmatprep.subr.mxu0 0.0
    %1269 = vmatpush2.msra.mxu0 0.0
    %1270 = vmatprep.subr.mxu0 0.0
    %1271 = vmatpush2.msra.mxu0 0.0
    %1272 = vmatprep.subr.mxu0 0.0
    %1273 = vmatpush2.msra.mxu0 0.0
    %1274 = vmatprep.subr.mxu0 0.0
    %1275 = vmatpush2.msra.mxu0 0.0
    %1276 = vmatprep.subr.mxu0 0.0
    %1277 = vmatpush2.msra.mxu0 0.0
    %1278 = vmatprep.subr.mxu0 0.0
    %1279 = vmatpush2.msra.mxu0 0.0
    %1280 = vmatprep.subr.mxu0 0.0
    %1281 = vmatpush2.msra.mxu0 0.0
    %1282 = vmatprep.subr.mxu0 0.0
    %1283 = vmatpush2.msra.mxu0 0.0
    %1284 = vmatprep.subr.mxu0 0.0
    %1285 = vmatpush2.msra.mxu0 0.0
    %1286 = vmatprep.subr.mxu0 0.0
    %1287 = vmatpush2.msra.mxu0 0.0
    %1288 = vmatprep.mubr.f32.mxu0 0.0
    %1289 = vmatmul.mubr.f32.gmra.mxu0 %v1151
    %v1290 = vpop.f32.mrf.mxu0
    %v1291 = vadd.f32 0.0, %v1290
    %v1292 = vpop.f32.mrf.mxu0
    %v1293 = vadd.f32 0.0, %v1292
    %1294 = vdwg.mxu0
    %v1295 = vadd.f32 %v347, %v1220
    %v1296 = vadd.f32 %v349, %v1222
    %v1297 = vadd.f32 %v448, %v1291
    %v1298 = vadd.f32 %v450, %v1293
    %v1299 = vxor.u32 %v1295, 2147483648
    %v1300 = vmul.f32 %v1299, 1.442695
    %v1301 = vpow.pop %v1300
    %v1302 = vadd.f32 %v1301, 1.0
    %v1303 = vrcp.pop %v1302
    %v1304 = vmul.f32 1.0, %v1303
    %v1305 = vxor.u32 %v1296, 2147483648
    %v1306 = vmul.f32 %v1305, 1.442695
    %v1307 = vpow.pop %v1306
    %v1308 = vadd.f32 %v1307, 1.0
    %v1309 = vrcp.pop %v1308
    %v1310 = vmul.f32 1.0, %v1309
    %v1311 = vtanh.pop %v1297
    %v1312 = vxor.u32 %v1298, 2147483648
    %v1313 = vmul.f32 %v1312, 1.442695
    %v1314 = vpow.pop %v1313
    %v1315 = vadd.f32 %v1314, 1.0
    %v1316 = vrcp.pop %v1315
    %v1317 = vmul.f32 1.0, %v1316
    %v1318 = vmul.f32 %v1310, %v1147
    %v1319 = vmul.f32 %v1304, %v1311
    %v1320 = vadd.f32 %v1318, %v1319
    %v1321 = vtanh.pop %v1320
    %v1322 = vmul.f32 %v1317, %v1321
    %v1324 = vsel %vm237, %v1322, 0
    %1326 = vmatprep.subr.mxu0 0.0
    %1327 = vmatpush1.msra.mxu0 0.0
    %1328 = vmatprep.subr.mxu0 0.0
    %1329 = vmatpush1.msra.mxu0 0.0
    %1330 = vmatprep.subr.mxu0 0.0
    %1331 = vmatpush1.msra.mxu0 0.0
    %1332 = vmatprep.subr.mxu0 0.0
    %1333 = vmatpush1.msra.mxu0 0.0
    %1334 = vmatprep.subr.mxu0 0.0
    %1335 = vmatpush1.msra.mxu0 0.0
    %1336 = vmatprep.subr.mxu0 0.0
    %1337 = vmatpush1.msra.mxu0 0.0
    %1338 = vmatprep.subr.mxu0 0.0
    %1339 = vmatpush1.msra.mxu0 0.0
    %1340 = vmatprep.subr.mxu0 0.0
    %1341 = vmatpush1.msra.mxu0 0.0
    %1342 = vmatprep.subr.mxu0 0.0
    %1343 = vmatpush1.msra.mxu0 0.0
    %1344 = vmatprep.subr.mxu0 0.0
    %1345 = vmatpush1.msra.mxu0 0.0
    %1346 = vmatprep.subr.mxu0 0.0
    %1347 = vmatpush1.msra.mxu0 0.0
    %1348 = vmatprep.subr.mxu0 0.0
    %1349 = vmatpush1.msra.mxu0 0.0
    %1350 = vmatprep.subr.mxu0 0.0
    %1351 = vmatpush1.msra.mxu0 0.0
    %1352 = vmatprep.subr.mxu0 0.0
    %1353 = vmatpush1.msra.mxu0 0.0
    %1354 = vmatprep.subr.mxu0 0.0
    %1355 = vmatpush1.msra.mxu0 0.0
    %1356 = vmatprep.subr.mxu0 %v211
    %1357 = vmatpush1.msra.mxu0 %v210
    %1358 = vmatprep.subr.mxu0 0.0
    %1359 = vmatpush2.msra.mxu0 0.0
    %1360 = vmatprep.subr.mxu0 0.0
    %1361 = vmatpush2.msra.mxu0 0.0
    %1362 = vmatprep.subr.mxu0 0.0
    %1363 = vmatpush2.msra.mxu0 0.0
    %1364 = vmatprep.subr.mxu0 0.0
    %1365 = vmatpush2.msra.mxu0 0.0
    %1366 = vmatprep.subr.mxu0 0.0
    %1367 = vmatpush2.msra.mxu0 0.0
    %1368 = vmatprep.subr.mxu0 0.0
    %1369 = vmatpush2.msra.mxu0 0.0
    %1370 = vmatprep.subr.mxu0 0.0
    %1371 = vmatpush2.msra.mxu0 0.0
    %1372 = vmatprep.subr.mxu0 0.0
    %1373 = vmatpush2.msra.mxu0 0.0
    %1374 = vmatprep.subr.mxu0 0.0
    %1375 = vmatpush2.msra.mxu0 0.0
    %1376 = vmatprep.subr.mxu0 0.0
    %1377 = vmatpush2.msra.mxu0 0.0
    %1378 = vmatprep.subr.mxu0 0.0
    %1379 = vmatpush2.msra.mxu0 0.0
    %1380 = vmatprep.subr.mxu0 0.0
    %1381 = vmatpush2.msra.mxu0 0.0
    %1382 = vmatprep.subr.mxu0 0.0
    %1383 = vmatpush2.msra.mxu0 0.0
    %1384 = vmatprep.subr.mxu0 0.0
    %1385 = vmatpush2.msra.mxu0 0.0
    %1386 = vmatprep.subr.mxu0 0.0
    %1387 = vmatpush2.msra.mxu0 0.0
    %1388 = vmatprep.subr.mxu0 0.0
    %1389 = vmatpush2.msra.mxu0 0.0
    %1390 = vmatprep.mubr.f32.mxu0 0.0
    %1391 = vmatmul.mubr.f32.gmra.mxu0 %v1324
    %v1392 = vpop.f32.mrf.mxu0
    %v1393 = vadd.f32 0.0, %v1392
    %v1394 = vpop.f32.mrf.mxu0
    %v1395 = vadd.f32 0.0, %v1394
    %1396 = vdwg.mxu0
    %1397 = vmatprep.subr.mxu0 0.0
    %1398 = vmatpush1.msra.mxu0 0.0
    %1399 = vmatprep.subr.mxu0 0.0
    %1400 = vmatpush1.msra.mxu0 0.0
    %1401 = vmatprep.subr.mxu0 0.0
    %1402 = vmatpush1.msra.mxu0 0.0
    %1403 = vmatprep.subr.mxu0 0.0
    %1404 = vmatpush1.msra.mxu0 0.0
    %1405 = vmatprep.subr.mxu0 0.0
    %1406 = vmatpush1.msra.mxu0 0.0
    %1407 = vmatprep.subr.mxu0 0.0
    %1408 = vmatpush1.msra.mxu0 0.0
    %1409 = vmatprep.subr.mxu0 0.0
    %1410 = vmatpush1.msra.mxu0 0.0
    %1411 = vmatprep.subr.mxu0 0.0
    %1412 = vmatpush1.msra.mxu0 0.0
    %1413 = vmatprep.subr.mxu0 0.0
    %1414 = vmatpush1.msra.mxu0 0.0
    %1415 = vmatprep.subr.mxu0 0.0
    %1416 = vmatpush1.msra.mxu0 0.0
    %1417 = vmatprep.subr.mxu0 0.0
    %1418 = vmatpush1.msra.mxu0 0.0
    %1419 = vmatprep.subr.mxu0 0.0
    %1420 = vmatpush1.msra.mxu0 0.0
    %1421 = vmatprep.subr.mxu0 0.0
    %1422 = vmatpush1.msra.mxu0 0.0
    %1423 = vmatprep.subr.mxu0 0.0
    %1424 = vmatpush1.msra.mxu0 0.0
    %1425 = vmatprep.subr.mxu0 0.0
    %1426 = vmatpush1.msra.mxu0 0.0
    %1427 = vmatprep.subr.mxu0 %v213
    %1428 = vmatpush1.msra.mxu0 %v212
    %1429 = vmatprep.subr.mxu0 0.0
    %1430 = vmatpush2.msra.mxu0 0.0
    %1431 = vmatprep.subr.mxu0 0.0
    %1432 = vmatpush2.msra.mxu0 0.0
    %1433 = vmatprep.subr.mxu0 0.0
    %1434 = vmatpush2.msra.mxu0 0.0
    %1435 = vmatprep.subr.mxu0 0.0
    %1436 = vmatpush2.msra.mxu0 0.0
    %1437 = vmatprep.subr.mxu0 0.0
    %1438 = vmatpush2.msra.mxu0 0.0
    %1439 = vmatprep.subr.mxu0 0.0
    %1440 = vmatpush2.msra.mxu0 0.0
    %1441 = vmatprep.subr.mxu0 0.0
    %1442 = vmatpush2.msra.mxu0 0.0
    %1443 = vmatprep.subr.mxu0 0.0
    %1444 = vmatpush2.msra.mxu0 0.0
    %1445 = vmatprep.subr.mxu0 0.0
    %1446 = vmatpush2.msra.mxu0 0.0
    %1447 = vmatprep.subr.mxu0 0.0
    %1448 = vmatpush2.msra.mxu0 0.0
    %1449 = vmatprep.subr.mxu0 0.0
    %1450 = vmatpush2.msra.mxu0 0.0
    %1451 = vmatprep.subr.mxu0 0.0
    %1452 = vmatpush2.msra.mxu0 0.0
    %1453 = vmatprep.subr.mxu0 0.0
    %1454 = vmatpush2.msra.mxu0 0.0
    %1455 = vmatprep.subr.mxu0 0.0
    %1456 = vmatpush2.msra.mxu0 0.0
    %1457 = vmatprep.subr.mxu0 0.0
    %1458 = vmatpush2.msra.mxu0 0.0
    %1459 = vmatprep.subr.mxu0 0.0
    %1460 = vmatpush2.msra.mxu0 0.0
    %1461 = vmatprep.mubr.f32.mxu0 0.0
    %1462 = vmatmul.mubr.f32.gmra.mxu0 %v1324
    %v1463 = vpop.f32.mrf.mxu0
    %v1464 = vadd.f32 0.0, %v1463
    %v1465 = vpop.f32.mrf.mxu0
    %v1466 = vadd.f32 0.0, %v1465
    %1467 = vdwg.mxu0
    %v1468 = vadd.f32 %v353, %v1393
    %v1469 = vadd.f32 %v355, %v1395
    %v1470 = vadd.f32 %v454, %v1464
    %v1471 = vadd.f32 %v456, %v1466
    %v1472 = vxor.u32 %v1468, 2147483648
    %v1473 = vmul.f32 %v1472, 1.442695
    %v1474 = vpow.pop %v1473
    %v1475 = vadd.f32 %v1474, 1.0
    %v1476 = vrcp.pop %v1475
    %v1477 = vmul.f32 1.0, %v1476
    %v1478 = vxor.u32 %v1469, 2147483648
    %v1479 = vmul.f32 %v1478, 1.442695
    %v1480 = vpow.pop %v1479
    %v1481 = vadd.f32 %v1480, 1.0
    %v1482 = vrcp.pop %v1481
    %v1483 = vmul.f32 1.0, %v1482
    %v1484 = vtanh.pop %v1470
    %v1485 = vxor.u32 %v1471, 2147483648
    %v1486 = vmul.f32 %v1485, 1.442695
    %v1487 = vpow.pop %v1486
    %v1488 = vadd.f32 %v1487, 1.0
    %v1489 = vrcp.pop %v1488
    %v1490 = vmul.f32 1.0, %v1489
    %v1491 = vmul.f32 %v1483, %v1320
    %v1492 = vmul.f32 %v1477, %v1484
    %v1493 = vadd.f32 %v1491, %v1492
    %v1494 = vtanh.pop %v1493
    %v1495 = vmul.f32 %v1490, %v1494
    %v1496 = vld [vmem:[#allocation16 + $0x40] sm:$0xff]
    %v1497 = vld [vmem:[#allocation16 + $0x48] sm:$0xff]
    %v1498 = vld [vmem:[#allocation16 + $0x50] sm:$0xff]
    %v1499 = vld [vmem:[#allocation16 + $0x58] sm:$0xff]
    %v1500 = vld [vmem:[#allocation16 + $0x60] sm:$0xff]
    %v1501 = vld [vmem:[#allocation16 + $0x68] sm:$0xff]
    %v1502 = vld [vmem:[#allocation16 + $0x70] sm:$0xff]
    %v1503 = vld [vmem:[#allocation16 + $0x78] sm:$0xff]
    %s1504 = scalar_lea.vmem [#allocation16], 160
    %v1505 = vld [vmem:[%s1504] ss:$8 sm:$0xf]
    %v1507 = vlaneseq
    %v1508 = vshrl.u32 %v1507, 7
    %v1509 = vsub.s32 0, %v1508
    %v1510 = vrot.slane %v1505, %v1509
    %v1511 = vlaneseq
    %v1512 = vshrl.u32 %v1511, 7
    %v1513 = vsub.s32 1, %v1512
    %v1514 = vrot.slane %v1505, %v1513
    %v1515 = vlaneseq
    %v1516 = vshrl.u32 %v1515, 7
    %v1517 = vsub.s32 2, %v1516
    %v1518 = vrot.slane %v1505, %v1517
    %v1519 = vlaneseq
    %v1520 = vshrl.u32 %v1519, 7
    %v1521 = vsub.s32 3, %v1520
    %v1522 = vrot.slane %v1505, %v1521
    %v1528 = vsel %vm237, %v1495, 0
    %1530 = vmatprep.subr.mxu0 0.0
    %1531 = vmatpush1.msra.mxu0 0.0
    %1532 = vmatprep.subr.mxu0 0.0
    %1533 = vmatpush1.msra.mxu0 0.0
    %1534 = vmatprep.subr.mxu0 0.0
    %1535 = vmatpush1.msra.mxu0 0.0
    %1536 = vmatprep.subr.mxu0 0.0
    %1537 = vmatpush1.msra.mxu0 0.0
    %1538 = vmatprep.subr.mxu0 0.0
    %1539 = vmatpush1.msra.mxu0 0.0
    %1540 = vmatprep.subr.mxu0 0.0
    %1541 = vmatpush1.msra.mxu0 0.0
    %1542 = vmatprep.subr.mxu0 0.0
    %1543 = vmatpush1.msra.mxu0 0.0
    %1544 = vmatprep.subr.mxu0 0.0
    %1545 = vmatpush1.msra.mxu0 0.0
    %1546 = vmatprep.subr.mxu0 0.0
    %1547 = vmatpush1.msra.mxu0 0.0
    %1548 = vmatprep.subr.mxu0 0.0
    %1549 = vmatpush1.msra.mxu0 0.0
    %1550 = vmatprep.subr.mxu0 0.0
    %1551 = vmatpush1.msra.mxu0 0.0
    %1552 = vmatprep.subr.mxu0 0.0
    %1553 = vmatpush1.msra.mxu0 0.0
    %1554 = vmatprep.subr.mxu0 0.0
    %1555 = vmatpush1.msra.mxu0 0.0
    %1556 = vmatprep.subr.mxu0 0.0
    %1557 = vmatpush1.msra.mxu0 0.0
    %1558 = vmatprep.subr.mxu0 0.0
    %1559 = vmatpush1.msra.mxu0 0.0
    %1560 = vmatprep.subr.mxu0 %v1497
    %1561 = vmatpush1.msra.mxu0 %v1496
    %1562 = vmatprep.subr.mxu0 0.0
    %1563 = vmatpush2.msra.mxu0 0.0
    %1564 = vmatprep.subr.mxu0 0.0
    %1565 = vmatpush2.msra.mxu0 0.0
    %1566 = vmatprep.subr.mxu0 0.0
    %1567 = vmatpush2.msra.mxu0 0.0
    %1568 = vmatprep.subr.mxu0 0.0
    %1569 = vmatpush2.msra.mxu0 0.0
    %1570 = vmatprep.subr.mxu0 0.0
    %1571 = vmatpush2.msra.mxu0 0.0
    %1572 = vmatprep.subr.mxu0 0.0
    %1573 = vmatpush2.msra.mxu0 0.0
    %1574 = vmatprep.subr.mxu0 0.0
    %1575 = vmatpush2.msra.mxu0 0.0
    %1576 = vmatprep.subr.mxu0 0.0
    %1577 = vmatpush2.msra.mxu0 0.0
    %1578 = vmatprep.subr.mxu0 0.0
    %1579 = vmatpush2.msra.mxu0 0.0
    %1580 = vmatprep.subr.mxu0 0.0
    %1581 = vmatpush2.msra.mxu0 0.0
    %1582 = vmatprep.subr.mxu0 0.0
    %1583 = vmatpush2.msra.mxu0 0.0
    %1584 = vmatprep.subr.mxu0 0.0
    %1585 = vmatpush2.msra.mxu0 0.0
    %1586 = vmatprep.subr.mxu0 0.0
    %1587 = vmatpush2.msra.mxu0 0.0
    %1588 = vmatprep.subr.mxu0 0.0
    %1589 = vmatpush2.msra.mxu0 0.0
    %1590 = vmatprep.subr.mxu0 0.0
    %1591 = vmatpush2.msra.mxu0 0.0
    %1592 = vmatprep.subr.mxu0 0.0
    %1593 = vmatpush2.msra.mxu0 0.0
    %1594 = vmatprep.mubr.f32.mxu0 0.0
    %1595 = vmatmul.mubr.f32.gmra.mxu0 %v632
    %v1596 = vpop.f32.mrf.mxu0
    %v1597 = vadd.f32 %v1510, %v1596
    %v1598 = vpop.f32.mrf.mxu0
    %v1599 = vadd.f32 %v1514, %v1598
    %1600 = vmatprep.mubr.f32.mxu0 0.0
    %1601 = vmatmul.mubr.f32.gmra.mxu0 %v805
    %v1602 = vpop.f32.mrf.mxu0
    %v1603 = vadd.f32 %v1510, %v1602
    %v1604 = vpop.f32.mrf.mxu0
    %v1605 = vadd.f32 %v1514, %v1604
    %1606 = vmatprep.mubr.f32.mxu0 0.0
    %1607 = vmatmul.mubr.f32.gmra.mxu0 %v978
    %v1608 = vpop.f32.mrf.mxu0
    %v1609 = vadd.f32 %v1510, %v1608
    %v1610 = vpop.f32.mrf.mxu0
    %v1611 = vadd.f32 %v1514, %v1610
    %1612 = vmatprep.mubr.f32.mxu0 0.0
    %1613 = vmatmul.mubr.f32.gmra.mxu0 %v1151
    %v1614 = vpop.f32.mrf.mxu0
    %v1615 = vadd.f32 %v1510, %v1614
    %v1616 = vpop.f32.mrf.mxu0
    %v1617 = vadd.f32 %v1514, %v1616
    %1618 = vmatprep.mubr.f32.mxu0 0.0
    %1619 = vmatmul.mubr.f32.gmra.mxu0 %v1324
    %v1620 = vpop.f32.mrf.mxu0
    %v1621 = vadd.f32 %v1510, %v1620
    %v1622 = vpop.f32.mrf.mxu0
    %v1623 = vadd.f32 %v1514, %v1622
    %1624 = vmatprep.mubr.f32.mxu0 0.0
    %1625 = vmatmul.mubr.f32.gmra.mxu0 %v1528
    %v1626 = vpop.f32.mrf.mxu0
    %v1627 = vadd.f32 %v1510, %v1626
    %v1628 = vpop.f32.mrf.mxu0
    %v1629 = vadd.f32 %v1514, %v1628
    %1630 = vdwg.mxu0
    %1631 = vmatprep.subr.mxu0 0.0
    %1632 = vmatpush1.msra.mxu0 0.0
    %1633 = vmatprep.subr.mxu0 0.0
    %1634 = vmatpush1.msra.mxu0 0.0
    %1635 = vmatprep.subr.mxu0 0.0
    %1636 = vmatpush1.msra.mxu0 0.0
    %1637 = vmatprep.subr.mxu0 0.0
    %1638 = vmatpush1.msra.mxu0 0.0
    %1639 = vmatprep.subr.mxu0 0.0
    %1640 = vmatpush1.msra.mxu0 0.0
    %1641 = vmatprep.subr.mxu0 0.0
    %1642 = vmatpush1.msra.mxu0 0.0
    %1643 = vmatprep.subr.mxu0 0.0
    %1644 = vmatpush1.msra.mxu0 0.0
    %1645 = vmatprep.subr.mxu0 0.0
    %1646 = vmatpush1.msra.mxu0 0.0
    %1647 = vmatprep.subr.mxu0 0.0
    %1648 = vmatpush1.msra.mxu0 0.0
    %1649 = vmatprep.subr.mxu0 0.0
    %1650 = vmatpush1.msra.mxu0 0.0
    %1651 = vmatprep.subr.mxu0 0.0
    %1652 = vmatpush1.msra.mxu0 0.0
    %1653 = vmatprep.subr.mxu0 0.0
    %1654 = vmatpush1.msra.mxu0 0.0
    %1655 = vmatprep.subr.mxu0 0.0
    %1656 = vmatpush1.msra.mxu0 0.0
    %1657 = vmatprep.subr.mxu0 0.0
    %1658 = vmatpush1.msra.mxu0 0.0
    %1659 = vmatprep.subr.mxu0 0.0
    %1660 = vmatpush1.msra.mxu0 0.0
    %1661 = vmatprep.subr.mxu0 %v1499
    %1662 = vmatpush1.msra.mxu0 %v1498
    %1663 = vmatprep.subr.mxu0 0.0
    %1664 = vmatpush2.msra.mxu0 0.0
    %1665 = vmatprep.subr.mxu0 0.0
    %1666 = vmatpush2.msra.mxu0 0.0
    %1667 = vmatprep.subr.mxu0 0.0
    %1668 = vmatpush2.msra.mxu0 0.0
    %1669 = vmatprep.subr.mxu0 0.0
    %1670 = vmatpush2.msra.mxu0 0.0
    %1671 = vmatprep.subr.mxu0 0.0
    %1672 = vmatpush2.msra.mxu0 0.0
    %1673 = vmatprep.subr.mxu0 0.0
    %1674 = vmatpush2.msra.mxu0 0.0
    %1675 = vmatprep.subr.mxu0 0.0
    %1676 = vmatpush2.msra.mxu0 0.0
    %1677 = vmatprep.subr.mxu0 0.0
    %1678 = vmatpush2.msra.mxu0 0.0
    %1679 = vmatprep.subr.mxu0 0.0
    %1680 = vmatpush2.msra.mxu0 0.0
    %1681 = vmatprep.subr.mxu0 0.0
    %1682 = vmatpush2.msra.mxu0 0.0
    %1683 = vmatprep.subr.mxu0 0.0
    %1684 = vmatpush2.msra.mxu0 0.0
    %1685 = vmatprep.subr.mxu0 0.0
    %1686 = vmatpush2.msra.mxu0 0.0
    %1687 = vmatprep.subr.mxu0 0.0
    %1688 = vmatpush2.msra.mxu0 0.0
    %1689 = vmatprep.subr.mxu0 0.0
    %1690 = vmatpush2.msra.mxu0 0.0
    %1691 = vmatprep.subr.mxu0 0.0
    %1692 = vmatpush2.msra.mxu0 0.0
    %1693 = vmatprep.subr.mxu0 0.0
    %1694 = vmatpush2.msra.mxu0 0.0
    %1695 = vmatprep.mubr.f32.mxu0 0.0
    %1696 = vmatmul.mubr.f32.gmra.mxu0 %v632
    %v1697 = vpop.f32.mrf.mxu0
    %v1698 = vadd.f32 %v1518, %v1697
    %v1699 = vpop.f32.mrf.mxu0
    %v1700 = vadd.f32 %v1522, %v1699
    %1701 = vmatprep.mubr.f32.mxu0 0.0
    %1702 = vmatmul.mubr.f32.gmra.mxu0 %v805
    %v1703 = vpop.f32.mrf.mxu0
    %v1704 = vadd.f32 %v1518, %v1703
    %v1705 = vpop.f32.mrf.mxu0
    %v1706 = vadd.f32 %v1522, %v1705
    %1707 = vmatprep.mubr.f32.mxu0 0.0
    %1708 = vmatmul.mubr.f32.gmra.mxu0 %v978
    %v1709 = vpop.f32.mrf.mxu0
    %v1710 = vadd.f32 %v1518, %v1709
    %v1711 = vpop.f32.mrf.mxu0
    %v1712 = vadd.f32 %v1522, %v1711
    %1713 = vmatprep.mubr.f32.mxu0 0.0
    %1714 = vmatmul.mubr.f32.gmra.mxu0 %v1151
    %v1715 = vpop.f32.mrf.mxu0
    %v1716 = vadd.f32 %v1518, %v1715
    %v1717 = vpop.f32.mrf.mxu0
    %v1718 = vadd.f32 %v1522, %v1717
    %1719 = vmatprep.mubr.f32.mxu0 0.0
    %1720 = vmatmul.mubr.f32.gmra.mxu0 %v1324
    %v1721 = vpop.f32.mrf.mxu0
    %v1722 = vadd.f32 %v1518, %v1721
    %v1723 = vpop.f32.mrf.mxu0
    %v1724 = vadd.f32 %v1522, %v1723
    %1725 = vmatprep.mubr.f32.mxu0 0.0
    %1726 = vmatmul.mubr.f32.gmra.mxu0 %v1528
    %v1727 = vpop.f32.mrf.mxu0
    %v1728 = vadd.f32 %v1518, %v1727
    %v1729 = vpop.f32.mrf.mxu0
    %v1730 = vadd.f32 %v1522, %v1729
    %1731 = vdwg.mxu0
    %1732 = vmatprep.subr.mxu0 0.0
    %1733 = vmatpush1.msra.mxu0 0.0
    %1734 = vmatprep.subr.mxu0 0.0
    %1735 = vmatpush1.msra.mxu0 0.0
    %1736 = vmatprep.subr.mxu0 0.0
    %1737 = vmatpush1.msra.mxu0 0.0
    %1738 = vmatprep.subr.mxu0 0.0
    %1739 = vmatpush1.msra.mxu0 0.0
    %1740 = vmatprep.subr.mxu0 0.0
    %1741 = vmatpush1.msra.mxu0 0.0
    %1742 = vmatprep.subr.mxu0 0.0
    %1743 = vmatpush1.msra.mxu0 0.0
    %1744 = vmatprep.subr.mxu0 0.0
    %1745 = vmatpush1.msra.mxu0 0.0
    %1746 = vmatprep.subr.mxu0 0.0
    %1747 = vmatpush1.msra.mxu0 0.0
    %1748 = vmatprep.subr.mxu0 0.0
    %1749 = vmatpush1.msra.mxu0 0.0
    %1750 = vmatprep.subr.mxu0 0.0
    %1751 = vmatpush1.msra.mxu0 0.0
    %1752 = vmatprep.subr.mxu0 0.0
    %1753 = vmatpush1.msra.mxu0 0.0
    %1754 = vmatprep.subr.mxu0 0.0
    %1755 = vmatpush1.msra.mxu0 0.0
    %1756 = vmatprep.subr.mxu0 0.0
    %1757 = vmatpush1.msra.mxu0 0.0
    %1758 = vmatprep.subr.mxu0 0.0
    %1759 = vmatpush1.msra.mxu0 0.0
    %1760 = vmatprep.subr.mxu0 0.0
    %1761 = vmatpush1.msra.mxu0 0.0
    %1762 = vmatprep.subr.mxu0 %v1501
    %1763 = vmatpush1.msra.mxu0 %v1500
    %1764 = vmatprep.subr.mxu0 0.0
    %1765 = vmatpush2.msra.mxu0 0.0
    %1766 = vmatprep.subr.mxu0 0.0
    %1767 = vmatpush2.msra.mxu0 0.0
    %1768 = vmatprep.subr.mxu0 0.0
    %1769 = vmatpush2.msra.mxu0 0.0
    %1770 = vmatprep.subr.mxu0 0.0
    %1771 = vmatpush2.msra.mxu0 0.0
    %1772 = vmatprep.subr.mxu0 0.0
    %1773 = vmatpush2.msra.mxu0 0.0
    %1774 = vmatprep.subr.mxu0 0.0
    %1775 = vmatpush2.msra.mxu0 0.0
    %1776 = vmatprep.subr.mxu0 0.0
    %1777 = vmatpush2.msra.mxu0 0.0
    %1778 = vmatprep.subr.mxu0 0.0
    %1779 = vmatpush2.msra.mxu0 0.0
    %1780 = vmatprep.subr.mxu0 0.0
    %1781 = vmatpush2.msra.mxu0 0.0
    %1782 = vmatprep.subr.mxu0 0.0
    %1783 = vmatpush2.msra.mxu0 0.0
    %1784 = vmatprep.subr.mxu0 0.0
    %1785 = vmatpush2.msra.mxu0 0.0
    %1786 = vmatprep.subr.mxu0 0.0
    %1787 = vmatpush2.msra.mxu0 0.0
    %1788 = vmatprep.subr.mxu0 0.0
    %1789 = vmatpush2.msra.mxu0 0.0
    %1790 = vmatprep.subr.mxu0 0.0
    %1791 = vmatpush2.msra.mxu0 0.0
    %1792 = vmatprep.subr.mxu0 0.0
    %1793 = vmatpush2.msra.mxu0 0.0
    %1794 = vmatprep.subr.mxu0 0.0
    %1795 = vmatpush2.msra.mxu0 0.0
    %1796 = vmatprep.mubr.f32.mxu0 0.0
    %1797 = vmatmul.mubr.f32.gmra.mxu0 %v459
    %v1798 = vpop.f32.mrf.mxu0
    %v1799 = vadd.f32 0.0, %v1798
    %v1800 = vpop.f32.mrf.mxu0
    %v1801 = vadd.f32 0.0, %v1800
    %1802 = vdwg.mxu0
    %1803 = vmatprep.subr.mxu0 0.0
    %1804 = vmatpush1.msra.mxu0 0.0
    %1805 = vmatprep.subr.mxu0 0.0
    %1806 = vmatpush1.msra.mxu0 0.0
    %1807 = vmatprep.subr.mxu0 0.0
    %1808 = vmatpush1.msra.mxu0 0.0
    %1809 = vmatprep.subr.mxu0 0.0
    %1810 = vmatpush1.msra.mxu0 0.0
    %1811 = vmatprep.subr.mxu0 0.0
    %1812 = vmatpush1.msra.mxu0 0.0
    %1813 = vmatprep.subr.mxu0 0.0
    %1814 = vmatpush1.msra.mxu0 0.0
    %1815 = vmatprep.subr.mxu0 0.0
    %1816 = vmatpush1.msra.mxu0 0.0
    %1817 = vmatprep.subr.mxu0 0.0
    %1818 = vmatpush1.msra.mxu0 0.0
    %1819 = vmatprep.subr.mxu0 0.0
    %1820 = vmatpush1.msra.mxu0 0.0
    %1821 = vmatprep.subr.mxu0 0.0
    %1822 = vmatpush1.msra.mxu0 0.0
    %1823 = vmatprep.subr.mxu0 0.0
    %1824 = vmatpush1.msra.mxu0 0.0
    %1825 = vmatprep.subr.mxu0 0.0
    %1826 = vmatpush1.msra.mxu0 0.0
    %1827 = vmatprep.subr.mxu0 0.0
    %1828 = vmatpush1.msra.mxu0 0.0
    %1829 = vmatprep.subr.mxu0 0.0
    %1830 = vmatpush1.msra.mxu0 0.0
    %1831 = vmatprep.subr.mxu0 0.0
    %1832 = vmatpush1.msra.mxu0 0.0
    %1833 = vmatprep.subr.mxu0 %v1503
    %1834 = vmatpush1.msra.mxu0 %v1502
    %1835 = vmatprep.subr.mxu0 0.0
    %1836 = vmatpush2.msra.mxu0 0.0
    %1837 = vmatprep.subr.mxu0 0.0
    %1838 = vmatpush2.msra.mxu0 0.0
    %1839 = vmatprep.subr.mxu0 0.0
    %1840 = vmatpush2.msra.mxu0 0.0
    %1841 = vmatprep.subr.mxu0 0.0
    %1842 = vmatpush2.msra.mxu0 0.0
    %1843 = vmatprep.subr.mxu0 0.0
    %1844 = vmatpush2.msra.mxu0 0.0
    %1845 = vmatprep.subr.mxu0 0.0
    %1846 = vmatpush2.msra.mxu0 0.0
    %1847 = vmatprep.subr.mxu0 0.0
    %1848 = vmatpush2.msra.mxu0 0.0
    %1849 = vmatprep.subr.mxu0 0.0
    %1850 = vmatpush2.msra.mxu0 0.0
    %1851 = vmatprep.subr.mxu0 0.0
    %1852 = vmatpush2.msra.mxu0 0.0
    %1853 = vmatprep.subr.mxu0 0.0
    %1854 = vmatpush2.msra.mxu0 0.0
    %1855 = vmatprep.subr.mxu0 0.0
    %1856 = vmatpush2.msra.mxu0 0.0
    %1857 = vmatprep.subr.mxu0 0.0
    %1858 = vmatpush2.msra.mxu0 0.0
    %1859 = vmatprep.subr.mxu0 0.0
    %1860 = vmatpush2.msra.mxu0 0.0
    %1861 = vmatprep.subr.mxu0 0.0
    %1862 = vmatpush2.msra.mxu0 0.0
    %1863 = vmatprep.subr.mxu0 0.0
    %1864 = vmatpush2.msra.mxu0 0.0
    %1865 = vmatprep.subr.mxu0 0.0
    %1866 = vmatpush2.msra.mxu0 0.0
    %1867 = vmatprep.mubr.f32.mxu0 0.0
    %1868 = vmatmul.mubr.f32.gmra.mxu0 %v459
    %v1869 = vpop.f32.mrf.mxu0
    %v1870 = vadd.f32 0.0, %v1869
    %v1871 = vpop.f32.mrf.mxu0
    %v1872 = vadd.f32 0.0, %v1871
    %1873 = vdwg.mxu0
    %v1874 = vadd.f32 %v1597, %v1799
    %v1875 = vadd.f32 %v1599, %v1801
    %v1876 = vadd.f32 %v1698, %v1870
    %v1877 = vadd.f32 %v1700, %v1872
    %v1878 = vxor.u32 %v1874, 2147483648
    %v1879 = vmul.f32 %v1878, 1.442695
    %v1880 = vpow.pop %v1879
    %v1881 = vadd.f32 %v1880, 1.0
    %v1882 = vrcp.pop %v1881
    %v1883 = vmul.f32 1.0, %v1882
    %v1884 = vxor.u32 %v1875, 2147483648
    %v1885 = vmul.f32 %v1884, 1.442695
    %v1886 = vpow.pop %v1885
    %v1887 = vadd.f32 %v1886, 1.0
    %v1888 = vrcp.pop %v1887
    %v1889 = vmul.f32 1.0, %v1888
    %v1890 = vtanh.pop %v1876
    %v1891 = vxor.u32 %v1877, 2147483648
    %v1892 = vmul.f32 %v1891, 1.442695
    %v1893 = vpow.pop %v1892
    %v1894 = vadd.f32 %v1893, 1.0
    %v1895 = vrcp.pop %v1894
    %v1896 = vmul.f32 1.0, %v1895
    %v1897 = vmul.f32 %v1889, 0.0
    %v1898 = vmul.f32 %v1883, %v1890
    %v1899 = vadd.f32 %v1897, %v1898
    %v1900 = vtanh.pop %v1899
    %v1901 = vmul.f32 %v1896, %v1900
    %v1903 = vsel %vm237, %v1901, 0
    %1905 = vmatprep.subr.mxu0 0.0
    %1906 = vmatpush1.msra.mxu0 0.0
    %1907 = vmatprep.subr.mxu0 0.0
    %1908 = vmatpush1.msra.mxu0 0.0
    %1909 = vmatprep.subr.mxu0 0.0
    %1910 = vmatpush1.msra.mxu0 0.0
    %1911 = vmatprep.subr.mxu0 0.0
    %1912 = vmatpush1.msra.mxu0 0.0
    %1913 = vmatprep.subr.mxu0 0.0
    %1914 = vmatpush1.msra.mxu0 0.0
    %1915 = vmatprep.subr.mxu0 0.0
    %1916 = vmatpush1.msra.mxu0 0.0
    %1917 = vmatprep.subr.mxu0 0.0
    %1918 = vmatpush1.msra.mxu0 0.0
    %1919 = vmatprep.subr.mxu0 0.0
    %1920 = vmatpush1.msra.mxu0 0.0
    %1921 = vmatprep.subr.mxu0 0.0
    %1922 = vmatpush1.msra.mxu0 0.0
    %1923 = vmatprep.subr.mxu0 0.0
    %1924 = vmatpush1.msra.mxu0 0.0
    %1925 = vmatprep.subr.mxu0 0.0
    %1926 = vmatpush1.msra.mxu0 0.0
    %1927 = vmatprep.subr.mxu0 0.0
    %1928 = vmatpush1.msra.mxu0 0.0
    %1929 = vmatprep.subr.mxu0 0.0
    %1930 = vmatpush1.msra.mxu0 0.0
    %1931 = vmatprep.subr.mxu0 0.0
    %1932 = vmatpush1.msra.mxu0 0.0
    %1933 = vmatprep.subr.mxu0 0.0
    %1934 = vmatpush1.msra.mxu0 0.0
    %1935 = vmatprep.subr.mxu0 %v1501
    %1936 = vmatpush1.msra.mxu0 %v1500
    %1937 = vmatprep.subr.mxu0 0.0
    %1938 = vmatpush2.msra.mxu0 0.0
    %1939 = vmatprep.subr.mxu0 0.0
    %1940 = vmatpush2.msra.mxu0 0.0
    %1941 = vmatprep.subr.mxu0 0.0
    %1942 = vmatpush2.msra.mxu0 0.0
    %1943 = vmatprep.subr.mxu0 0.0
    %1944 = vmatpush2.msra.mxu0 0.0
    %1945 = vmatprep.subr.mxu0 0.0
    %1946 = vmatpush2.msra.mxu0 0.0
    %1947 = vmatprep.subr.mxu0 0.0
    %1948 = vmatpush2.msra.mxu0 0.0
    %1949 = vmatprep.subr.mxu0 0.0
    %1950 = vmatpush2.msra.mxu0 0.0
    %1951 = vmatprep.subr.mxu0 0.0
    %1952 = vmatpush2.msra.mxu0 0.0
    %1953 = vmatprep.subr.mxu0 0.0
    %1954 = vmatpush2.msra.mxu0 0.0
    %1955 = vmatprep.subr.mxu0 0.0
    %1956 = vmatpush2.msra.mxu0 0.0
    %1957 = vmatprep.subr.mxu0 0.0
    %1958 = vmatpush2.msra.mxu0 0.0
    %1959 = vmatprep.subr.mxu0 0.0
    %1960 = vmatpush2.msra.mxu0 0.0
    %1961 = vmatprep.subr.mxu0 0.0
    %1962 = vmatpush2.msra.mxu0 0.0
    %1963 = vmatprep.subr.mxu0 0.0
    %1964 = vmatpush2.msra.mxu0 0.0
    %1965 = vmatprep.subr.mxu0 0.0
    %1966 = vmatpush2.msra.mxu0 0.0
    %1967 = vmatprep.subr.mxu0 0.0
    %1968 = vmatpush2.msra.mxu0 0.0
    %1969 = vmatprep.mubr.f32.mxu0 0.0
    %1970 = vmatmul.mubr.f32.gmra.mxu0 %v1903
    %v1971 = vpop.f32.mrf.mxu0
    %v1972 = vadd.f32 0.0, %v1971
    %v1973 = vpop.f32.mrf.mxu0
    %v1974 = vadd.f32 0.0, %v1973
    %1975 = vdwg.mxu0
    %1976 = vmatprep.subr.mxu0 0.0
    %1977 = vmatpush1.msra.mxu0 0.0
    %1978 = vmatprep.subr.mxu0 0.0
    %1979 = vmatpush1.msra.mxu0 0.0
    %1980 = vmatprep.subr.mxu0 0.0
    %1981 = vmatpush1.msra.mxu0 0.0
    %1982 = vmatprep.subr.mxu0 0.0
    %1983 = vmatpush1.msra.mxu0 0.0
    %1984 = vmatprep.subr.mxu0 0.0
    %1985 = vmatpush1.msra.mxu0 0.0
    %1986 = vmatprep.subr.mxu0 0.0
    %1987 = vmatpush1.msra.mxu0 0.0
    %1988 = vmatprep.subr.mxu0 0.0
    %1989 = vmatpush1.msra.mxu0 0.0
    %1990 = vmatprep.subr.mxu0 0.0
    %1991 = vmatpush1.msra.mxu0 0.0
    %1992 = vmatprep.subr.mxu0 0.0
    %1993 = vmatpush1.msra.mxu0 0.0
    %1994 = vmatprep.subr.mxu0 0.0
    %1995 = vmatpush1.msra.mxu0 0.0
    %1996 = vmatprep.subr.mxu0 0.0
    %1997 = vmatpush1.msra.mxu0 0.0
    %1998 = vmatprep.subr.mxu0 0.0
    %1999 = vmatpush1.msra.mxu0 0.0
    %2000 = vmatprep.subr.mxu0 0.0
    %2001 = vmatpush1.msra.mxu0 0.0
    %2002 = vmatprep.subr.mxu0 0.0
    %2003 = vmatpush1.msra.mxu0 0.0
    %2004 = vmatprep.subr.mxu0 0.0
    %2005 = vmatpush1.msra.mxu0 0.0
    %2006 = vmatprep.subr.mxu0 %v1503
    %2007 = vmatpush1.msra.mxu0 %v1502
    %2008 = vmatprep.subr.mxu0 0.0
    %2009 = vmatpush2.msra.mxu0 0.0
    %2010 = vmatprep.subr.mxu0 0.0
    %2011 = vmatpush2.msra.mxu0 0.0
    %2012 = vmatprep.subr.mxu0 0.0
    %2013 = vmatpush2.msra.mxu0 0.0
    %2014 = vmatprep.subr.mxu0 0.0
    %2015 = vmatpush2.msra.mxu0 0.0
    %2016 = vmatprep.subr.mxu0 0.0
    %2017 = vmatpush2.msra.mxu0 0.0
    %2018 = vmatprep.subr.mxu0 0.0
    %2019 = vmatpush2.msra.mxu0 0.0
    %2020 = vmatprep.subr.mxu0 0.0
    %2021 = vmatpush2.msra.mxu0 0.0
    %2022 = vmatprep.subr.mxu0 0.0
    %2023 = vmatpush2.msra.mxu0 0.0
    %2024 = vmatprep.subr.mxu0 0.0
    %2025 = vmatpush2.msra.mxu0 0.0
    %2026 = vmatprep.subr.mxu0 0.0
    %2027 = vmatpush2.msra.mxu0 0.0
    %2028 = vmatprep.subr.mxu0 0.0
    %2029 = vmatpush2.msra.mxu0 0.0
    %2030 = vmatprep.subr.mxu0 0.0
    %2031 = vmatpush2.msra.mxu0 0.0
    %2032 = vmatprep.subr.mxu0 0.0
    %2033 = vmatpush2.msra.mxu0 0.0
    %2034 = vmatprep.subr.mxu0 0.0
    %2035 = vmatpush2.msra.mxu0 0.0
    %2036 = vmatprep.subr.mxu0 0.0
    %2037 = vmatpush2.msra.mxu0 0.0
    %2038 = vmatprep.subr.mxu0 0.0
    %2039 = vmatpush2.msra.mxu0 0.0
    %2040 = vmatprep.mubr.f32.mxu0 0.0
    %2041 = vmatmul.mubr.f32.gmra.mxu0 %v1903
    %v2042 = vpop.f32.mrf.mxu0
    %v2043 = vadd.f32 0.0, %v2042
    %v2044 = vpop.f32.mrf.mxu0
    %v2045 = vadd.f32 0.0, %v2044
    %2046 = vdwg.mxu0
    %v2047 = vadd.f32 %v1603, %v1972
    %v2048 = vadd.f32 %v1605, %v1974
    %v2049 = vadd.f32 %v1704, %v2043
    %v2050 = vadd.f32 %v1706, %v2045
    %v2051 = vxor.u32 %v2047, 2147483648
    %v2052 = vmul.f32 %v2051, 1.442695
    %v2053 = vpow.pop %v2052
    %v2054 = vadd.f32 %v2053, 1.0
    %v2055 = vrcp.pop %v2054
    %v2056 = vmul.f32 1.0, %v2055
    %v2057 = vxor.u32 %v2048, 2147483648
    %v2058 = vmul.f32 %v2057, 1.442695
    %v2059 = vpow.pop %v2058
    %v2060 = vadd.f32 %v2059, 1.0
    %v2061 = vrcp.pop %v2060
    %v2062 = vmul.f32 1.0, %v2061
    %v2063 = vtanh.pop %v2049
    %v2064 = vxor.u32 %v2050, 2147483648
    %v2065 = vmul.f32 %v2064, 1.442695
    %v2066 = vpow.pop %v2065
    %v2067 = vadd.f32 %v2066, 1.0
    %v2068 = vrcp.pop %v2067
    %v2069 = vmul.f32 1.0, %v2068
    %v2070 = vmul.f32 %v2062, %v1899
    %v2071 = vmul.f32 %v2056, %v2063
    %v2072 = vadd.f32 %v2070, %v2071
    %v2073 = vtanh.pop %v2072
    %v2074 = vmul.f32 %v2069, %v2073
    %v2076 = vsel %vm237, %v2074, 0
    %2078 = vmatprep.subr.mxu0 0.0
    %2079 = vmatpush1.msra.mxu0 0.0
    %2080 = vmatprep.subr.mxu0 0.0
    %2081 = vmatpush1.msra.mxu0 0.0
    %2082 = vmatprep.subr.mxu0 0.0
    %2083 = vmatpush1.msra.mxu0 0.0
    %2084 = vmatprep.subr.mxu0 0.0
    %2085 = vmatpush1.msra.mxu0 0.0
    %2086 = vmatprep.subr.mxu0 0.0
    %2087 = vmatpush1.msra.mxu0 0.0
    %2088 = vmatprep.subr.mxu0 0.0
    %2089 = vmatpush1.msra.mxu0 0.0
    %2090 = vmatprep.subr.mxu0 0.0
    %2091 = vmatpush1.msra.mxu0 0.0
    %2092 = vmatprep.subr.mxu0 0.0
    %2093 = vmatpush1.msra.mxu0 0.0
    %2094 = vmatprep.subr.mxu0 0.0
    %2095 = vmatpush1.msra.mxu0 0.0
    %2096 = vmatprep.subr.mxu0 0.0
    %2097 = vmatpush1.msra.mxu0 0.0
    %2098 = vmatprep.subr.mxu0 0.0
    %2099 = vmatpush1.msra.mxu0 0.0
    %2100 = vmatprep.subr.mxu0 0.0
    %2101 = vmatpush1.msra.mxu0 0.0
    %2102 = vmatprep.subr.mxu0 0.0
    %2103 = vmatpush1.msra.mxu0 0.0
    %2104 = vmatprep.subr.mxu0 0.0
    %2105 = vmatpush1.msra.mxu0 0.0
    %2106 = vmatprep.subr.mxu0 0.0
    %2107 = vmatpush1.msra.mxu0 0.0
    %2108 = vmatprep.subr.mxu0 %v1501
    %2109 = vmatpush1.msra.mxu0 %v1500
    %2110 = vmatprep.subr.mxu0 0.0
    %2111 = vmatpush2.msra.mxu0 0.0
    %2112 = vmatprep.subr.mxu0 0.0
    %2113 = vmatpush2.msra.mxu0 0.0
    %2114 = vmatprep.subr.mxu0 0.0
    %2115 = vmatpush2.msra.mxu0 0.0
    %2116 = vmatprep.subr.mxu0 0.0
    %2117 = vmatpush2.msra.mxu0 0.0
    %2118 = vmatprep.subr.mxu0 0.0
    %2119 = vmatpush2.msra.mxu0 0.0
    %2120 = vmatprep.subr.mxu0 0.0
    %2121 = vmatpush2.msra.mxu0 0.0
    %2122 = vmatprep.subr.mxu0 0.0
    %2123 = vmatpush2.msra.mxu0 0.0
    %2124 = vmatprep.subr.mxu0 0.0
    %2125 = vmatpush2.msra.mxu0 0.0
    %2126 = vmatprep.subr.mxu0 0.0
    %2127 = vmatpush2.msra.mxu0 0.0
    %2128 = vmatprep.subr.mxu0 0.0
    %2129 = vmatpush2.msra.mxu0 0.0
    %2130 = vmatprep.subr.mxu0 0.0
    %2131 = vmatpush2.msra.mxu0 0.0
    %2132 = vmatprep.subr.mxu0 0.0
    %2133 = vmatpush2.msra.mxu0 0.0
    %2134 = vmatprep.subr.mxu0 0.0
    %2135 = vmatpush2.msra.mxu0 0.0
    %2136 = vmatprep.subr.mxu0 0.0
    %2137 = vmatpush2.msra.mxu0 0.0
    %2138 = vmatprep.subr.mxu0 0.0
    %2139 = vmatpush2.msra.mxu0 0.0
    %2140 = vmatprep.subr.mxu0 0.0
    %2141 = vmatpush2.msra.mxu0 0.0
    %2142 = vmatprep.mubr.f32.mxu0 0.0
    %2143 = vmatmul.mubr.f32.gmra.mxu0 %v2076
    %v2144 = vpop.f32.mrf.mxu0
    %v2145 = vadd.f32 0.0, %v2144
    %v2146 = vpop.f32.mrf.mxu0
    %v2147 = vadd.f32 0.0, %v2146
    %2148 = vdwg.mxu0
    %2149 = vmatprep.subr.mxu0 0.0
    %2150 = vmatpush1.msra.mxu0 0.0
    %2151 = vmatprep.subr.mxu0 0.0
    %2152 = vmatpush1.msra.mxu0 0.0
    %2153 = vmatprep.subr.mxu0 0.0
    %2154 = vmatpush1.msra.mxu0 0.0
    %2155 = vmatprep.subr.mxu0 0.0
    %2156 = vmatpush1.msra.mxu0 0.0
    %2157 = vmatprep.subr.mxu0 0.0
    %2158 = vmatpush1.msra.mxu0 0.0
    %2159 = vmatprep.subr.mxu0 0.0
    %2160 = vmatpush1.msra.mxu0 0.0
    %2161 = vmatprep.subr.mxu0 0.0
    %2162 = vmatpush1.msra.mxu0 0.0
    %2163 = vmatprep.subr.mxu0 0.0
    %2164 = vmatpush1.msra.mxu0 0.0
    %2165 = vmatprep.subr.mxu0 0.0
    %2166 = vmatpush1.msra.mxu0 0.0
    %2167 = vmatprep.subr.mxu0 0.0
    %2168 = vmatpush1.msra.mxu0 0.0
    %2169 = vmatprep.subr.mxu0 0.0
    %2170 = vmatpush1.msra.mxu0 0.0
    %2171 = vmatprep.subr.mxu0 0.0
    %2172 = vmatpush1.msra.mxu0 0.0
    %2173 = vmatprep.subr.mxu0 0.0
    %2174 = vmatpush1.msra.mxu0 0.0
    %2175 = vmatprep.subr.mxu0 0.0
    %2176 = vmatpush1.msra.mxu0 0.0
    %2177 = vmatprep.subr.mxu0 0.0
    %2178 = vmatpush1.msra.mxu0 0.0
    %2179 = vmatprep.subr.mxu0 %v1503
    %2180 = vmatpush1.msra.mxu0 %v1502
    %2181 = vmatprep.subr.mxu0 0.0
    %2182 = vmatpush2.msra.mxu0 0.0
    %2183 = vmatprep.subr.mxu0 0.0
    %2184 = vmatpush2.msra.mxu0 0.0
    %2185 = vmatprep.subr.mxu0 0.0
    %2186 = vmatpush2.msra.mxu0 0.0
    %2187 = vmatprep.subr.mxu0 0.0
    %2188 = vmatpush2.msra.mxu0 0.0
    %2189 = vmatprep.subr.mxu0 0.0
    %2190 = vmatpush2.msra.mxu0 0.0
    %2191 = vmatprep.subr.mxu0 0.0
    %2192 = vmatpush2.msra.mxu0 0.0
    %2193 = vmatprep.subr.mxu0 0.0
    %2194 = vmatpush2.msra.mxu0 0.0
    %2195 = vmatprep.subr.mxu0 0.0
    %2196 = vmatpush2.msra.mxu0 0.0
    %2197 = vmatprep.subr.mxu0 0.0
    %2198 = vmatpush2.msra.mxu0 0.0
    %2199 = vmatprep.subr.mxu0 0.0
    %2200 = vmatpush2.msra.mxu0 0.0
    %2201 = vmatprep.subr.mxu0 0.0
    %2202 = vmatpush2.msra.mxu0 0.0
    %2203 = vmatprep.subr.mxu0 0.0
    %2204 = vmatpush2.msra.mxu0 0.0
    %2205 = vmatprep.subr.mxu0 0.0
    %2206 = vmatpush2.msra.mxu0 0.0
    %2207 = vmatprep.subr.mxu0 0.0
    %2208 = vmatpush2.msra.mxu0 0.0
    %2209 = vmatprep.subr.mxu0 0.0
    %2210 = vmatpush2.msra.mxu0 0.0
    %2211 = vmatprep.subr.mxu0 0.0
    %2212 = vmatpush2.msra.mxu0 0.0
    %2213 = vmatprep.mubr.f32.mxu0 0.0
    %2214 = vmatmul.mubr.f32.gmra.mxu0 %v2076
    %v2215 = vpop.f32.mrf.mxu0
    %v2216 = vadd.f32 0.0, %v2215
    %v2217 = vpop.f32.mrf.mxu0
    %v2218 = vadd.f32 0.0, %v2217
    %2219 = vdwg.mxu0
    %v2220 = vadd.f32 %v1609, %v2145
    %v2221 = vadd.f32 %v1611, %v2147
    %v2222 = vadd.f32 %v1710, %v2216
    %v2223 = vadd.f32 %v1712, %v2218
    %v2224 = vxor.u32 %v2220, 2147483648
    %v2225 = vmul.f32 %v2224, 1.442695
    %v2226 = vpow.pop %v2225
    %v2227 = vadd.f32 %v2226, 1.0
    %v2228 = vrcp.pop %v2227
    %v2229 = vmul.f32 1.0, %v2228
    %v2230 = vxor.u32 %v2221, 2147483648
    %v2231 = vmul.f32 %v2230, 1.442695
    %v2232 = vpow.pop %v2231
    %v2233 = vadd.f32 %v2232, 1.0
    %v2234 = vrcp.pop %v2233
    %v2235 = vmul.f32 1.0, %v2234
    %v2236 = vtanh.pop %v2222
    %v2237 = vxor.u32 %v2223, 2147483648
    %v2238 = vmul.f32 %v2237, 1.442695
    %v2239 = vpow.pop %v2238
    %v2240 = vadd.f32 %v2239, 1.0
    %v2241 = vrcp.pop %v2240
    %v2242 = vmul.f32 1.0, %v2241
    %v2243 = vmul.f32 %v2235, %v2072
    %v2244 = vmul.f32 %v2229, %v2236
    %v2245 = vadd.f32 %v2243, %v2244
    %v2246 = vtanh.pop %v2245
    %v2247 = vmul.f32 %v2242, %v2246
    %v2249 = vsel %vm237, %v2247, 0
    %2251 = vmatprep.subr.mxu0 0.0
    %2252 = vmatpush1.msra.mxu0 0.0
    %2253 = vmatprep.subr.mxu0 0.0
    %2254 = vmatpush1.msra.mxu0 0.0
    %2255 = vmatprep.subr.mxu0 0.0
    %2256 = vmatpush1.msra.mxu0 0.0
    %2257 = vmatprep.subr.mxu0 0.0
    %2258 = vmatpush1.msra.mxu0 0.0
    %2259 = vmatprep.subr.mxu0 0.0
    %2260 = vmatpush1.msra.mxu0 0.0
    %2261 = vmatprep.subr.mxu0 0.0
    %2262 = vmatpush1.msra.mxu0 0.0
    %2263 = vmatprep.subr.mxu0 0.0
    %2264 = vmatpush1.msra.mxu0 0.0
    %2265 = vmatprep.subr.mxu0 0.0
    %2266 = vmatpush1.msra.mxu0 0.0
    %2267 = vmatprep.subr.mxu0 0.0
    %2268 = vmatpush1.msra.mxu0 0.0
    %2269 = vmatprep.subr.mxu0 0.0
    %2270 = vmatpush1.msra.mxu0 0.0
    %2271 = vmatprep.subr.mxu0 0.0
    %2272 = vmatpush1.msra.mxu0 0.0
    %2273 = vmatprep.subr.mxu0 0.0
    %2274 = vmatpush1.msra.mxu0 0.0
    %2275 = vmatprep.subr.mxu0 0.0
    %2276 = vmatpush1.msra.mxu0 0.0
    %2277 = vmatprep.subr.mxu0 0.0
    %2278 = vmatpush1.msra.mxu0 0.0
    %2279 = vmatprep.subr.mxu0 0.0
    %2280 = vmatpush1.msra.mxu0 0.0
    %2281 = vmatprep.subr.mxu0 %v1501
    %2282 = vmatpush1.msra.mxu0 %v1500
    %2283 = vmatprep.subr.mxu0 0.0
    %2284 = vmatpush2.msra.mxu0 0.0
    %2285 = vmatprep.subr.mxu0 0.0
    %2286 = vmatpush2.msra.mxu0 0.0
    %2287 = vmatprep.subr.mxu0 0.0
    %2288 = vmatpush2.msra.mxu0 0.0
    %2289 = vmatprep.subr.mxu0 0.0
    %2290 = vmatpush2.msra.mxu0 0.0
    %2291 = vmatprep.subr.mxu0 0.0
    %2292 = vmatpush2.msra.mxu0 0.0
    %2293 = vmatprep.subr.mxu0 0.0
    %2294 = vmatpush2.msra.mxu0 0.0
    %2295 = vmatprep.subr.mxu0 0.0
    %2296 = vmatpush2.msra.mxu0 0.0
    %2297 = vmatprep.subr.mxu0 0.0
    %2298 = vmatpush2.msra.mxu0 0.0
    %2299 = vmatprep.subr.mxu0 0.0
    %2300 = vmatpush2.msra.mxu0 0.0
    %2301 = vmatprep.subr.mxu0 0.0
    %2302 = vmatpush2.msra.mxu0 0.0
    %2303 = vmatprep.subr.mxu0 0.0
    %2304 = vmatpush2.msra.mxu0 0.0
    %2305 = vmatprep.subr.mxu0 0.0
    %2306 = vmatpush2.msra.mxu0 0.0
    %2307 = vmatprep.subr.mxu0 0.0
    %2308 = vmatpush2.msra.mxu0 0.0
    %2309 = vmatprep.subr.mxu0 0.0
    %2310 = vmatpush2.msra.mxu0 0.0
    %2311 = vmatprep.subr.mxu0 0.0
    %2312 = vmatpush2.msra.mxu0 0.0
    %2313 = vmatprep.subr.mxu0 0.0
    %2314 = vmatpush2.msra.mxu0 0.0
    %2315 = vmatprep.mubr.f32.mxu0 0.0
    %2316 = vmatmul.mubr.f32.gmra.mxu0 %v2249
    %v2317 = vpop.f32.mrf.mxu0
    %v2318 = vadd.f32 0.0, %v2317
    %v2319 = vpop.f32.mrf.mxu0
    %v2320 = vadd.f32 0.0, %v2319
    %2321 = vdwg.mxu0
    %2322 = vmatprep.subr.mxu0 0.0
    %2323 = vmatpush1.msra.mxu0 0.0
    %2324 = vmatprep.subr.mxu0 0.0
    %2325 = vmatpush1.msra.mxu0 0.0
    %2326 = vmatprep.subr.mxu0 0.0
    %2327 = vmatpush1.msra.mxu0 0.0
    %2328 = vmatprep.subr.mxu0 0.0
    %2329 = vmatpush1.msra.mxu0 0.0
    %2330 = vmatprep.subr.mxu0 0.0
    %2331 = vmatpush1.msra.mxu0 0.0
    %2332 = vmatprep.subr.mxu0 0.0
    %2333 = vmatpush1.msra.mxu0 0.0
    %2334 = vmatprep.subr.mxu0 0.0
    %2335 = vmatpush1.msra.mxu0 0.0
    %2336 = vmatprep.subr.mxu0 0.0
    %2337 = vmatpush1.msra.mxu0 0.0
    %2338 = vmatprep.subr.mxu0 0.0
    %2339 = vmatpush1.msra.mxu0 0.0
    %2340 = vmatprep.subr.mxu0 0.0
    %2341 = vmatpush1.msra.mxu0 0.0
    %2342 = vmatprep.subr.mxu0 0.0
    %2343 = vmatpush1.msra.mxu0 0.0
    %2344 = vmatprep.subr.mxu0 0.0
    %2345 = vmatpush1.msra.mxu0 0.0
    %2346 = vmatprep.subr.mxu0 0.0
    %2347 = vmatpush1.msra.mxu0 0.0
    %2348 = vmatprep.subr.mxu0 0.0
    %2349 = vmatpush1.msra.mxu0 0.0
    %2350 = vmatprep.subr.mxu0 0.0
    %2351 = vmatpush1.msra.mxu0 0.0
    %2352 = vmatprep.subr.mxu0 %v1503
    %2353 = vmatpush1.msra.mxu0 %v1502
    %2354 = vmatprep.subr.mxu0 0.0
    %2355 = vmatpush2.msra.mxu0 0.0
    %2356 = vmatprep.subr.mxu0 0.0
    %2357 = vmatpush2.msra.mxu0 0.0
    %2358 = vmatprep.subr.mxu0 0.0
    %2359 = vmatpush2.msra.mxu0 0.0
    %2360 = vmatprep.subr.mxu0 0.0
    %2361 = vmatpush2.msra.mxu0 0.0
    %2362 = vmatprep.subr.mxu0 0.0
    %2363 = vmatpush2.msra.mxu0 0.0
    %2364 = vmatprep.subr.mxu0 0.0
    %2365 = vmatpush2.msra.mxu0 0.0
    %2366 = vmatprep.subr.mxu0 0.0
    %2367 = vmatpush2.msra.mxu0 0.0
    %2368 = vmatprep.subr.mxu0 0.0
    %2369 = vmatpush2.msra.mxu0 0.0
    %2370 = vmatprep.subr.mxu0 0.0
    %2371 = vmatpush2.msra.mxu0 0.0
    %2372 = vmatprep.subr.mxu0 0.0
    %2373 = vmatpush2.msra.mxu0 0.0
    %2374 = vmatprep.subr.mxu0 0.0
    %2375 = vmatpush2.msra.mxu0 0.0
    %2376 = vmatprep.subr.mxu0 0.0
    %2377 = vmatpush2.msra.mxu0 0.0
    %2378 = vmatprep.subr.mxu0 0.0
    %2379 = vmatpush2.msra.mxu0 0.0
    %2380 = vmatprep.subr.mxu0 0.0
    %2381 = vmatpush2.msra.mxu0 0.0
    %2382 = vmatprep.subr.mxu0 0.0
    %2383 = vmatpush2.msra.mxu0 0.0
    %2384 = vmatprep.subr.mxu0 0.0
    %2385 = vmatpush2.msra.mxu0 0.0
    %2386 = vmatprep.mubr.f32.mxu0 0.0
    %2387 = vmatmul.mubr.f32.gmra.mxu0 %v2249
    %v2388 = vpop.f32.mrf.mxu0
    %v2389 = vadd.f32 0.0, %v2388
    %v2390 = vpop.f32.mrf.mxu0
    %v2391 = vadd.f32 0.0, %v2390
    %2392 = vdwg.mxu0
    %v2393 = vadd.f32 %v1615, %v2318
    %v2394 = vadd.f32 %v1617, %v2320
    %v2395 = vadd.f32 %v1716, %v2389
    %v2396 = vadd.f32 %v1718, %v2391
    %v2397 = vxor.u32 %v2393, 2147483648
    %v2398 = vmul.f32 %v2397, 1.442695
    %v2399 = vpow.pop %v2398
    %v2400 = vadd.f32 %v2399, 1.0
    %v2401 = vrcp.pop %v2400
    %v2402 = vmul.f32 1.0, %v2401
    %v2403 = vxor.u32 %v2394, 2147483648
    %v2404 = vmul.f32 %v2403, 1.442695
    %v2405 = vpow.pop %v2404
    %v2406 = vadd.f32 %v2405, 1.0
    %v2407 = vrcp.pop %v2406
    %v2408 = vmul.f32 1.0, %v2407
    %v2409 = vtanh.pop %v2395
    %v2410 = vxor.u32 %v2396, 2147483648
    %v2411 = vmul.f32 %v2410, 1.442695
    %v2412 = vpow.pop %v2411
    %v2413 = vadd.f32 %v2412, 1.0
    %v2414 = vrcp.pop %v2413
    %v2415 = vmul.f32 1.0, %v2414
    %v2416 = vmul.f32 %v2408, %v2245
    %v2417 = vmul.f32 %v2402, %v2409
    %v2418 = vadd.f32 %v2416, %v2417
    %v2419 = vtanh.pop %v2418
    %v2420 = vmul.f32 %v2415, %v2419
    %v2422 = vsel %vm237, %v2420, 0
    %2424 = vmatprep.subr.mxu0 0.0
    %2425 = vmatpush1.msra.mxu0 0.0
    %2426 = vmatprep.subr.mxu0 0.0
    %2427 = vmatpush1.msra.mxu0 0.0
    %2428 = vmatprep.subr.mxu0 0.0
    %2429 = vmatpush1.msra.mxu0 0.0
    %2430 = vmatprep.subr.mxu0 0.0
    %2431 = vmatpush1.msra.mxu0 0.0
    %2432 = vmatprep.subr.mxu0 0.0
    %2433 = vmatpush1.msra.mxu0 0.0
    %2434 = vmatprep.subr.mxu0 0.0
    %2435 = vmatpush1.msra.mxu0 0.0
    %2436 = vmatprep.subr.mxu0 0.0
    %2437 = vmatpush1.msra.mxu0 0.0
    %2438 = vmatprep.subr.mxu0 0.0
    %2439 = vmatpush1.msra.mxu0 0.0
    %2440 = vmatprep.subr.mxu0 0.0
    %2441 = vmatpush1.msra.mxu0 0.0
    %2442 = vmatprep.subr.mxu0 0.0
    %2443 = vmatpush1.msra.mxu0 0.0
    %2444 = vmatprep.subr.mxu0 0.0
    %2445 = vmatpush1.msra.mxu0 0.0
    %2446 = vmatprep.subr.mxu0 0.0
    %2447 = vmatpush1.msra.mxu0 0.0
    %2448 = vmatprep.subr.mxu0 0.0
    %2449 = vmatpush1.msra.mxu0 0.0
    %2450 = vmatprep.subr.mxu0 0.0
    %2451 = vmatpush1.msra.mxu0 0.0
    %2452 = vmatprep.subr.mxu0 0.0
    %2453 = vmatpush1.msra.mxu0 0.0
    %2454 = vmatprep.subr.mxu0 %v1501
    %2455 = vmatpush1.msra.mxu0 %v1500
    %2456 = vmatprep.subr.mxu0 0.0
    %2457 = vmatpush2.msra.mxu0 0.0
    %2458 = vmatprep.subr.mxu0 0.0
    %2459 = vmatpush2.msra.mxu0 0.0
    %2460 = vmatprep.subr.mxu0 0.0
    %2461 = vmatpush2.msra.mxu0 0.0
    %2462 = vmatprep.subr.mxu0 0.0
    %2463 = vmatpush2.msra.mxu0 0.0
    %2464 = vmatprep.subr.mxu0 0.0
    %2465 = vmatpush2.msra.mxu0 0.0
    %2466 = vmatprep.subr.mxu0 0.0
    %2467 = vmatpush2.msra.mxu0 0.0
    %2468 = vmatprep.subr.mxu0 0.0
    %2469 = vmatpush2.msra.mxu0 0.0
    %2470 = vmatprep.subr.mxu0 0.0
    %2471 = vmatpush2.msra.mxu0 0.0
    %2472 = vmatprep.subr.mxu0 0.0
    %2473 = vmatpush2.msra.mxu0 0.0
    %2474 = vmatprep.subr.mxu0 0.0
    %2475 = vmatpush2.msra.mxu0 0.0
    %2476 = vmatprep.subr.mxu0 0.0
    %2477 = vmatpush2.msra.mxu0 0.0
    %2478 = vmatprep.subr.mxu0 0.0
    %2479 = vmatpush2.msra.mxu0 0.0
    %2480 = vmatprep.subr.mxu0 0.0
    %2481 = vmatpush2.msra.mxu0 0.0
    %2482 = vmatprep.subr.mxu0 0.0
    %2483 = vmatpush2.msra.mxu0 0.0
    %2484 = vmatprep.subr.mxu0 0.0
    %2485 = vmatpush2.msra.mxu0 0.0
    %2486 = vmatprep.subr.mxu0 0.0
    %2487 = vmatpush2.msra.mxu0 0.0
    %2488 = vmatprep.mubr.f32.mxu0 0.0
    %2489 = vmatmul.mubr.f32.gmra.mxu0 %v2422
    %v2490 = vpop.f32.mrf.mxu0
    %v2491 = vadd.f32 0.0, %v2490
    %v2492 = vpop.f32.mrf.mxu0
    %v2493 = vadd.f32 0.0, %v2492
    %2494 = vdwg.mxu0
    %2495 = vmatprep.subr.mxu0 0.0
    %2496 = vmatpush1.msra.mxu0 0.0
    %2497 = vmatprep.subr.mxu0 0.0
    %2498 = vmatpush1.msra.mxu0 0.0
    %2499 = vmatprep.subr.mxu0 0.0
    %2500 = vmatpush1.msra.mxu0 0.0
    %2501 = vmatprep.subr.mxu0 0.0
    %2502 = vmatpush1.msra.mxu0 0.0
    %2503 = vmatprep.subr.mxu0 0.0
    %2504 = vmatpush1.msra.mxu0 0.0
    %2505 = vmatprep.subr.mxu0 0.0
    %2506 = vmatpush1.msra.mxu0 0.0
    %2507 = vmatprep.subr.mxu0 0.0
    %2508 = vmatpush1.msra.mxu0 0.0
    %2509 = vmatprep.subr.mxu0 0.0
    %2510 = vmatpush1.msra.mxu0 0.0
    %2511 = vmatprep.subr.mxu0 0.0
    %2512 = vmatpush1.msra.mxu0 0.0
    %2513 = vmatprep.subr.mxu0 0.0
    %2514 = vmatpush1.msra.mxu0 0.0
    %2515 = vmatprep.subr.mxu0 0.0
    %2516 = vmatpush1.msra.mxu0 0.0
    %2517 = vmatprep.subr.mxu0 0.0
    %2518 = vmatpush1.msra.mxu0 0.0
    %2519 = vmatprep.subr.mxu0 0.0
    %2520 = vmatpush1.msra.mxu0 0.0
    %2521 = vmatprep.subr.mxu0 0.0
    %2522 = vmatpush1.msra.mxu0 0.0
    %2523 = vmatprep.subr.mxu0 0.0
    %2524 = vmatpush1.msra.mxu0 0.0
    %2525 = vmatprep.subr.mxu0 %v1503
    %2526 = vmatpush1.msra.mxu0 %v1502
    %2527 = vmatprep.subr.mxu0 0.0
    %2528 = vmatpush2.msra.mxu0 0.0
    %2529 = vmatprep.subr.mxu0 0.0
    %2530 = vmatpush2.msra.mxu0 0.0
    %2531 = vmatprep.subr.mxu0 0.0
    %2532 = vmatpush2.msra.mxu0 0.0
    %2533 = vmatprep.subr.mxu0 0.0
    %2534 = vmatpush2.msra.mxu0 0.0
    %2535 = vmatprep.subr.mxu0 0.0
    %2536 = vmatpush2.msra.mxu0 0.0
    %2537 = vmatprep.subr.mxu0 0.0
    %2538 = vmatpush2.msra.mxu0 0.0
    %2539 = vmatprep.subr.mxu0 0.0
    %2540 = vmatpush2.msra.mxu0 0.0
    %2541 = vmatprep.subr.mxu0 0.0
    %2542 = vmatpush2.msra.mxu0 0.0
    %2543 = vmatprep.subr.mxu0 0.0
    %2544 = vmatpush2.msra.mxu0 0.0
    %2545 = vmatprep.subr.mxu0 0.0
    %2546 = vmatpush2.msra.mxu0 0.0
    %2547 = vmatprep.subr.mxu0 0.0
    %2548 = vmatpush2.msra.mxu0 0.0
    %2549 = vmatprep.subr.mxu0 0.0
    %2550 = vmatpush2.msra.mxu0 0.0
    %2551 = vmatprep.subr.mxu0 0.0
    %2552 = vmatpush2.msra.mxu0 0.0
    %2553 = vmatprep.subr.mxu0 0.0
    %2554 = vmatpush2.msra.mxu0 0.0
    %2555 = vmatprep.subr.mxu0 0.0
    %2556 = vmatpush2.msra.mxu0 0.0
    %2557 = vmatprep.subr.mxu0 0.0
    %2558 = vmatpush2.msra.mxu0 0.0
    %2559 = vmatprep.mubr.f32.mxu0 0.0
    %2560 = vmatmul.mubr.f32.gmra.mxu0 %v2422
    %v2561 = vpop.f32.mrf.mxu0
    %v2562 = vadd.f32 0.0, %v2561
    %v2563 = vpop.f32.mrf.mxu0
    %v2564 = vadd.f32 0.0, %v2563
    %2565 = vdwg.mxu0
    %v2566 = vadd.f32 %v1621, %v2491
    %v2567 = vadd.f32 %v1623, %v2493
    %v2568 = vadd.f32 %v1722, %v2562
    %v2569 = vadd.f32 %v1724, %v2564
    %v2570 = vxor.u32 %v2566, 2147483648
    %v2571 = vmul.f32 %v2570, 1.442695
    %v2572 = vpow.pop %v2571
    %v2573 = vadd.f32 %v2572, 1.0
    %v2574 = vrcp.pop %v2573
    %v2575 = vmul.f32 1.0, %v2574
    %v2576 = vxor.u32 %v2567, 2147483648
    %v2577 = vmul.f32 %v2576, 1.442695
    %v2578 = vpow.pop %v2577
    %v2579 = vadd.f32 %v2578, 1.0
    %v2580 = vrcp.pop %v2579
    %v2581 = vmul.f32 1.0, %v2580
    %v2582 = vtanh.pop %v2568
    %v2583 = vxor.u32 %v2569, 2147483648
    %v2584 = vmul.f32 %v2583, 1.442695
    %v2585 = vpow.pop %v2584
    %v2586 = vadd.f32 %v2585, 1.0
    %v2587 = vrcp.pop %v2586
    %v2588 = vmul.f32 1.0, %v2587
    %v2589 = vmul.f32 %v2581, %v2418
    %v2590 = vmul.f32 %v2575, %v2582
    %v2591 = vadd.f32 %v2589, %v2590
    %v2592 = vtanh.pop %v2591
    %v2593 = vmul.f32 %v2588, %v2592
    %v2595 = vsel %vm237, %v2593, 0
    %2597 = vmatprep.subr.mxu0 0.0
    %2598 = vmatpush1.msra.mxu0 0.0
    %2599 = vmatprep.subr.mxu0 0.0
    %2600 = vmatpush1.msra.mxu0 0.0
    %2601 = vmatprep.subr.mxu0 0.0
    %2602 = vmatpush1.msra.mxu0 0.0
    %2603 = vmatprep.subr.mxu0 0.0
    %2604 = vmatpush1.msra.mxu0 0.0
    %2605 = vmatprep.subr.mxu0 0.0
    %2606 = vmatpush1.msra.mxu0 0.0
    %2607 = vmatprep.subr.mxu0 0.0
    %2608 = vmatpush1.msra.mxu0 0.0
    %2609 = vmatprep.subr.mxu0 0.0
    %2610 = vmatpush1.msra.mxu0 0.0
    %2611 = vmatprep.subr.mxu0 0.0
    %2612 = vmatpush1.msra.mxu0 0.0
    %2613 = vmatprep.subr.mxu0 0.0
    %2614 = vmatpush1.msra.mxu0 0.0
    %2615 = vmatprep.subr.mxu0 0.0
    %2616 = vmatpush1.msra.mxu0 0.0
    %2617 = vmatprep.subr.mxu0 0.0
    %2618 = vmatpush1.msra.mxu0 0.0
    %2619 = vmatprep.subr.mxu0 0.0
    %2620 = vmatpush1.msra.mxu0 0.0
    %2621 = vmatprep.subr.mxu0 0.0
    %2622 = vmatpush1.msra.mxu0 0.0
    %2623 = vmatprep.subr.mxu0 0.0
    %2624 = vmatpush1.msra.mxu0 0.0
    %2625 = vmatprep.subr.mxu0 0.0
    %2626 = vmatpush1.msra.mxu0 0.0
    %2627 = vmatprep.subr.mxu0 %v1501
    %2628 = vmatpush1.msra.mxu0 %v1500
    %2629 = vmatprep.subr.mxu0 0.0
    %2630 = vmatpush2.msra.mxu0 0.0
    %2631 = vmatprep.subr.mxu0 0.0
    %2632 = vmatpush2.msra.mxu0 0.0
    %2633 = vmatprep.subr.mxu0 0.0
    %2634 = vmatpush2.msra.mxu0 0.0
    %2635 = vmatprep.subr.mxu0 0.0
    %2636 = vmatpush2.msra.mxu0 0.0
    %2637 = vmatprep.subr.mxu0 0.0
    %2638 = vmatpush2.msra.mxu0 0.0
    %2639 = vmatprep.subr.mxu0 0.0
    %2640 = vmatpush2.msra.mxu0 0.0
    %2641 = vmatprep.subr.mxu0 0.0
    %2642 = vmatpush2.msra.mxu0 0.0
    %2643 = vmatprep.subr.mxu0 0.0
    %2644 = vmatpush2.msra.mxu0 0.0
    %2645 = vmatprep.subr.mxu0 0.0
    %2646 = vmatpush2.msra.mxu0 0.0
    %2647 = vmatprep.subr.mxu0 0.0
    %2648 = vmatpush2.msra.mxu0 0.0
    %2649 = vmatprep.subr.mxu0 0.0
    %2650 = vmatpush2.msra.mxu0 0.0
    %2651 = vmatprep.subr.mxu0 0.0
    %2652 = vmatpush2.msra.mxu0 0.0
    %2653 = vmatprep.subr.mxu0 0.0
    %2654 = vmatpush2.msra.mxu0 0.0
    %2655 = vmatprep.subr.mxu0 0.0
    %2656 = vmatpush2.msra.mxu0 0.0
    %2657 = vmatprep.subr.mxu0 0.0
    %2658 = vmatpush2.msra.mxu0 0.0
    %2659 = vmatprep.subr.mxu0 0.0
    %2660 = vmatpush2.msra.mxu0 0.0
    %2661 = vmatprep.mubr.f32.mxu0 0.0
    %2662 = vmatmul.mubr.f32.gmra.mxu0 %v2595
    %v2663 = vpop.f32.mrf.mxu0
    %v2664 = vadd.f32 0.0, %v2663
    %v2665 = vpop.f32.mrf.mxu0
    %v2666 = vadd.f32 0.0, %v2665
    %2667 = vdwg.mxu0
    %2668 = vmatprep.subr.mxu0 0.0
    %2669 = vmatpush1.msra.mxu0 0.0
    %2670 = vmatprep.subr.mxu0 0.0
    %2671 = vmatpush1.msra.mxu0 0.0
    %2672 = vmatprep.subr.mxu0 0.0
    %2673 = vmatpush1.msra.mxu0 0.0
    %2674 = vmatprep.subr.mxu0 0.0
    %2675 = vmatpush1.msra.mxu0 0.0
    %2676 = vmatprep.subr.mxu0 0.0
    %2677 = vmatpush1.msra.mxu0 0.0
    %2678 = vmatprep.subr.mxu0 0.0
    %2679 = vmatpush1.msra.mxu0 0.0
    %2680 = vmatprep.subr.mxu0 0.0
    %2681 = vmatpush1.msra.mxu0 0.0
    %2682 = vmatprep.subr.mxu0 0.0
    %2683 = vmatpush1.msra.mxu0 0.0
    %2684 = vmatprep.subr.mxu0 0.0
    %2685 = vmatpush1.msra.mxu0 0.0
    %2686 = vmatprep.subr.mxu0 0.0
    %2687 = vmatpush1.msra.mxu0 0.0
    %2688 = vmatprep.subr.mxu0 0.0
    %2689 = vmatpush1.msra.mxu0 0.0
    %2690 = vmatprep.subr.mxu0 0.0
    %2691 = vmatpush1.msra.mxu0 0.0
    %2692 = vmatprep.subr.mxu0 0.0
    %2693 = vmatpush1.msra.mxu0 0.0
    %2694 = vmatprep.subr.mxu0 0.0
    %2695 = vmatpush1.msra.mxu0 0.0
    %2696 = vmatprep.subr.mxu0 0.0
    %2697 = vmatpush1.msra.mxu0 0.0
    %2698 = vmatprep.subr.mxu0 %v1503
    %2699 = vmatpush1.msra.mxu0 %v1502
    %2700 = vmatprep.subr.mxu0 0.0
    %2701 = vmatpush2.msra.mxu0 0.0
    %2702 = vmatprep.subr.mxu0 0.0
    %2703 = vmatpush2.msra.mxu0 0.0
    %2704 = vmatprep.subr.mxu0 0.0
    %2705 = vmatpush2.msra.mxu0 0.0
    %2706 = vmatprep.subr.mxu0 0.0
    %2707 = vmatpush2.msra.mxu0 0.0
    %2708 = vmatprep.subr.mxu0 0.0
    %2709 = vmatpush2.msra.mxu0 0.0
    %2710 = vmatprep.subr.mxu0 0.0
    %2711 = vmatpush2.msra.mxu0 0.0
    %2712 = vmatprep.subr.mxu0 0.0
    %2713 = vmatpush2.msra.mxu0 0.0
    %2714 = vmatprep.subr.mxu0 0.0
    %2715 = vmatpush2.msra.mxu0 0.0
    %2716 = vmatprep.subr.mxu0 0.0
    %2717 = vmatpush2.msra.mxu0 0.0
    %2718 = vmatprep.subr.mxu0 0.0
    %2719 = vmatpush2.msra.mxu0 0.0
    %2720 = vmatprep.subr.mxu0 0.0
    %2721 = vmatpush2.msra.mxu0 0.0
    %2722 = vmatprep.subr.mxu0 0.0
    %2723 = vmatpush2.msra.mxu0 0.0
    %2724 = vmatprep.subr.mxu0 0.0
    %2725 = vmatpush2.msra.mxu0 0.0
    %2726 = vmatprep.subr.mxu0 0.0
    %2727 = vmatpush2.msra.mxu0 0.0
    %2728 = vmatprep.subr.mxu0 0.0
    %2729 = vmatpush2.msra.mxu0 0.0
    %2730 = vmatprep.subr.mxu0 0.0
    %2731 = vmatpush2.msra.mxu0 0.0
    %2732 = vmatprep.mubr.f32.mxu0 0.0
    %2733 = vmatmul.mubr.f32.gmra.mxu0 %v2595
    %v2734 = vpop.f32.mrf.mxu0
    %v2735 = vadd.f32 0.0, %v2734
    %v2736 = vpop.f32.mrf.mxu0
    %v2737 = vadd.f32 0.0, %v2736
    %2738 = vdwg.mxu0
    %v2739 = vadd.f32 %v1627, %v2664
    %v2740 = vadd.f32 %v1629, %v2666
    %v2741 = vadd.f32 %v1728, %v2735
    %v2742 = vadd.f32 %v1730, %v2737
    %v2743 = vxor.u32 %v2739, 2147483648
    %v2744 = vmul.f32 %v2743, 1.442695
    %v2745 = vpow.pop %v2744
    %v2746 = vadd.f32 %v2745, 1.0
    %v2747 = vrcp.pop %v2746
    %v2748 = vmul.f32 1.0, %v2747
    %v2749 = vxor.u32 %v2740, 2147483648
    %v2750 = vmul.f32 %v2749, 1.442695
    %v2751 = vpow.pop %v2750
    %v2752 = vadd.f32 %v2751, 1.0
    %v2753 = vrcp.pop %v2752
    %v2754 = vmul.f32 1.0, %v2753
    %v2755 = vtanh.pop %v2741
    %v2756 = vxor.u32 %v2742, 2147483648
    %v2757 = vmul.f32 %v2756, 1.442695
    %v2758 = vpow.pop %v2757
    %v2759 = vadd.f32 %v2758, 1.0
    %v2760 = vrcp.pop %v2759
    %v2761 = vmul.f32 1.0, %v2760
    %v2762 = vmul.f32 %v2754, %v2591
    %v2763 = vmul.f32 %v2748, %v2755
    %v2764 = vadd.f32 %v2762, %v2763
    %v2765 = vtanh.pop %v2764
    %v2766 = vmul.f32 %v2761, %v2765
    %s2767 = smul.u32 2, 2
    %s2768 = smul.u32 %s2767, 10
    %s2769 = sshll.u32 %s2768, 4
    %2770 = dma.done [#allocation12], %s2769
    %s2771 = smul.u32 2, 1
    %s2772 = smul.u32 %s2771, 10
    %s2773 = sshll.u32 %s2772, 4
    %2774 = dma.done %s92, %s2773
    %v2775 = vld [vmem:[%s0] sm:$0xff]
    %v2776 = vpack.c.bf16 %v2775, %v2775
    %v2777 = vld [vmem:[#allocation2] sm:$0xff]
    %v2778 = vld [vmem:[#allocation2 + $0x8] sm:$0xff]
    %v2779 = vld [vmem:[#allocation2 + $0x10] sm:$0xf]
    %v2780 = vld [vmem:[#allocation2 + $0x14] sm:$0xff]
    %v2781 = vld [vmem:[#allocation2 + $0x1c] sm:$0xff]
    %v2782 = vld [vmem:[#allocation2 + $0x24] sm:$0xf]
    %v2783 = vunpack.c.l.s8.bf16 %v2777
    %v2784 = vunpack.c.h.s8.bf16 %v2777
    %v2785 = vunpack.c.l.s8.bf16 %v2778
    %v2786 = vunpack.c.h.s8.bf16 %v2778
    %v2787 = vunpack.c.l.s8.bf16 %v2779
    %v2788 = vunpack.c.l.s8.bf16 %v2780
    %v2789 = vunpack.c.h.s8.bf16 %v2780
    %v2790 = vunpack.c.l.s8.bf16 %v2781
    %v2791 = vunpack.c.h.s8.bf16 %v2781
    %v2792 = vunpack.c.l.s8.bf16 %v2782
    %v2793 = vpack.c.bf16 %v2766, %v2766
    %v2794 = vld [vmem:[#allocation3] sm:$0xff]
    %v2795 = vld [vmem:[#allocation3 + $0x8] sm:$0xff]
    %v2796 = vld [vmem:[#allocation3 + $0x10] sm:$0xf]
    %v2797 = vunpack.c.l.s8.bf16 %v2794
    %v2798 = vunpack.c.h.s8.bf16 %v2794
    %v2799 = vunpack.c.l.s8.bf16 %v2795
    %v2800 = vunpack.c.h.s8.bf16 %v2795
    %v2801 = vunpack.c.l.s8.bf16 %v2796
    %v2807 = vunpack.c.l.b16 %v2797
    %v2808 = vunpack.c.h.b16 %v2797
    %v2809 = vunpack.c.l.b16 %v2798
    %v2810 = vunpack.c.h.b16 %v2798
    %v2811 = vunpack.c.l.b16 %v2799
    %v2812 = vunpack.c.h.b16 %v2799
    %v2813 = vunpack.c.l.b16 %v2800
    %v2814 = vunpack.c.h.b16 %v2800
    %v2815 = vunpack.c.l.b16 %v2801
    %v2816 = vunpack.c.h.b16 %v2801
    %v2817 = vpack.c.b16 %v2807, %v2807
    %v2818 = vpack.c.b16 %v2808, %v2808
    %v2819 = vpack.c.b16 %v2809, %v2809
    %v2820 = vpack.c.b16 %v2810, %v2810
    %v2821 = vpack.c.b16 %v2811, %v2811
    %v2822 = vpack.c.b16 %v2812, %v2812
    %v2823 = vpack.c.b16 %v2813, %v2813
    %v2824 = vpack.c.b16 %v2814, %v2814
    %v2825 = vpack.c.b16 %v2815, %v2815
    %v2826 = vpack.c.b16 %v2816, %v2816
    %v2828 = vsel %vm237, %v2793, 0
    %vm2830 = vcmask 1043456
    %v2832 = vsel %vm2830, %v2817, 0
    %v2835 = vsel %vm2830, %v2818, 0
    %v2838 = vsel %vm2830, %v2819, 0
    %v2841 = vsel %vm2830, %v2820, 0
    %v2844 = vsel %vm2830, %v2821, 0
    %v2847 = vsel %vm2830, %v2822, 0
    %v2850 = vsel %vm2830, %v2823, 0
    %v2853 = vsel %vm2830, %v2824, 0
    %v2856 = vsel %vm2830, %v2825, 0
    %v2859 = vsel %vm2830, %v2826, 0
    %2861 = vmatprep.subr.bf16.mxu0 0
    %2862 = vmatpush1.bf16.msra.mxu0 0
    %2863 = vmatprep.subr.bf16.mxu0 0
    %2864 = vmatpush1.bf16.msra.mxu0 0
    %2865 = vmatprep.subr.bf16.mxu0 0
    %2866 = vmatpush1.bf16.msra.mxu0 0
    %2867 = vmatprep.subr.bf16.mxu0 0
    %2868 = vmatpush1.bf16.msra.mxu0 0
    %2869 = vmatprep.subr.bf16.mxu0 0
    %2870 = vmatpush1.bf16.msra.mxu0 0
    %2871 = vmatprep.subr.bf16.mxu0 0
    %2872 = vmatpush1.bf16.msra.mxu0 0
    %2873 = vmatprep.subr.bf16.mxu0 0
    %2874 = vmatpush1.bf16.msra.mxu0 0
    %2875 = vmatprep.subr.bf16.mxu0 %v2835
    %2876 = vmatpush1.bf16.msra.mxu0 %v2832
    %2877 = vmatprep.subr.bf16.mxu0 0
    %2878 = vmatpush2.bf16.msra.mxu0 0
    %2879 = vmatprep.subr.bf16.mxu0 0
    %2880 = vmatpush2.bf16.msra.mxu0 0
    %2881 = vmatprep.subr.bf16.mxu0 0
    %2882 = vmatpush2.bf16.msra.mxu0 0
    %2883 = vmatprep.subr.bf16.mxu0 0
    %2884 = vmatpush2.bf16.msra.mxu0 0
    %2885 = vmatprep.subr.bf16.mxu0 0
    %2886 = vmatpush2.bf16.msra.mxu0 0
    %2887 = vmatprep.subr.bf16.mxu0 0
    %2888 = vmatpush2.bf16.msra.mxu0 0
    %2889 = vmatprep.subr.bf16.mxu0 0
    %2890 = vmatpush2.bf16.msra.mxu0 0
    %2891 = vmatprep.subr.bf16.mxu0 0
    %2892 = vmatpush2.bf16.msra.mxu0 0
    %2893 = vmatprep.mubr.bf16.mxu0 0
    %2894 = vmatmul.mubr.bf16.gmra.mxu0 %v2828
    %v2895 = vpop.f32.mrf.mxu0
    %v2896 = vadd.f32 0.0, %v2895
    %v2897 = vpop.f32.mrf.mxu0
    %v2898 = vadd.f32 0.0, %v2897
    %v2899 = vpop.f32.mrf.mxu0
    %v2900 = vpop.f32.mrf.mxu0
    %2901 = vdwg.mxu0
    %2902 = vmatprep.subr.bf16.mxu0 0
    %2903 = vmatpush1.bf16.msra.mxu0 0
    %2904 = vmatprep.subr.bf16.mxu0 0
    %2905 = vmatpush1.bf16.msra.mxu0 0
    %2906 = vmatprep.subr.bf16.mxu0 0
    %2907 = vmatpush1.bf16.msra.mxu0 0
    %2908 = vmatprep.subr.bf16.mxu0 0
    %2909 = vmatpush1.bf16.msra.mxu0 0
    %2910 = vmatprep.subr.bf16.mxu0 0
    %2911 = vmatpush1.bf16.msra.mxu0 0
    %2912 = vmatprep.subr.bf16.mxu0 0
    %2913 = vmatpush1.bf16.msra.mxu0 0
    %2914 = vmatprep.subr.bf16.mxu0 0
    %2915 = vmatpush1.bf16.msra.mxu0 0
    %2916 = vmatprep.subr.bf16.mxu0 %v2841
    %2917 = vmatpush1.bf16.msra.mxu0 %v2838
    %2918 = vmatprep.subr.bf16.mxu0 0
    %2919 = vmatpush2.bf16.msra.mxu0 0
    %2920 = vmatprep.subr.bf16.mxu0 0
    %2921 = vmatpush2.bf16.msra.mxu0 0
    %2922 = vmatprep.subr.bf16.mxu0 0
    %2923 = vmatpush2.bf16.msra.mxu0 0
    %2924 = vmatprep.subr.bf16.mxu0 0
    %2925 = vmatpush2.bf16.msra.mxu0 0
    %2926 = vmatprep.subr.bf16.mxu0 0
    %2927 = vmatpush2.bf16.msra.mxu0 0
    %2928 = vmatprep.subr.bf16.mxu0 0
    %2929 = vmatpush2.bf16.msra.mxu0 0
    %2930 = vmatprep.subr.bf16.mxu0 0
    %2931 = vmatpush2.bf16.msra.mxu0 0
    %2932 = vmatprep.subr.bf16.mxu0 0
    %2933 = vmatpush2.bf16.msra.mxu0 0
    %2934 = vmatprep.mubr.bf16.mxu0 0
    %2935 = vmatmul.mubr.bf16.gmra.mxu0 %v2828
    %v2936 = vpop.f32.mrf.mxu0
    %v2937 = vadd.f32 0.0, %v2936
    %v2938 = vpop.f32.mrf.mxu0
    %v2939 = vadd.f32 0.0, %v2938
    %v2940 = vpop.f32.mrf.mxu0
    %v2941 = vpop.f32.mrf.mxu0
    %2942 = vdwg.mxu0
    %2943 = vmatprep.subr.bf16.mxu0 0
    %2944 = vmatpush1.bf16.msra.mxu0 0
    %2945 = vmatprep.subr.bf16.mxu0 0
    %2946 = vmatpush1.bf16.msra.mxu0 0
    %2947 = vmatprep.subr.bf16.mxu0 0
    %2948 = vmatpush1.bf16.msra.mxu0 0
    %2949 = vmatprep.subr.bf16.mxu0 0
    %2950 = vmatpush1.bf16.msra.mxu0 0
    %2951 = vmatprep.subr.bf16.mxu0 0
    %2952 = vmatpush1.bf16.msra.mxu0 0
    %2953 = vmatprep.subr.bf16.mxu0 0
    %2954 = vmatpush1.bf16.msra.mxu0 0
    %2955 = vmatprep.subr.bf16.mxu0 0
    %2956 = vmatpush1.bf16.msra.mxu0 0
    %2957 = vmatprep.subr.bf16.mxu0 %v2847
    %2958 = vmatpush1.bf16.msra.mxu0 %v2844
    %2959 = vmatprep.subr.bf16.mxu0 0
    %2960 = vmatpush2.bf16.msra.mxu0 0
    %2961 = vmatprep.subr.bf16.mxu0 0
    %2962 = vmatpush2.bf16.msra.mxu0 0
    %2963 = vmatprep.subr.bf16.mxu0 0
    %2964 = vmatpush2.bf16.msra.mxu0 0
    %2965 = vmatprep.subr.bf16.mxu0 0
    %2966 = vmatpush2.bf16.msra.mxu0 0
    %2967 = vmatprep.subr.bf16.mxu0 0
    %2968 = vmatpush2.bf16.msra.mxu0 0
    %2969 = vmatprep.subr.bf16.mxu0 0
    %2970 = vmatpush2.bf16.msra.mxu0 0
    %2971 = vmatprep.subr.bf16.mxu0 0
    %2972 = vmatpush2.bf16.msra.mxu0 0
    %2973 = vmatprep.subr.bf16.mxu0 0
    %2974 = vmatpush2.bf16.msra.mxu0 0
    %2975 = vmatprep.mubr.bf16.mxu0 0
    %2976 = vmatmul.mubr.bf16.gmra.mxu0 %v2828
    %v2977 = vpop.f32.mrf.mxu0
    %v2978 = vadd.f32 0.0, %v2977
    %v2979 = vpop.f32.mrf.mxu0
    %v2980 = vadd.f32 0.0, %v2979
    %v2981 = vpop.f32.mrf.mxu0
    %v2982 = vpop.f32.mrf.mxu0
    %2983 = vdwg.mxu0
    %2984 = vmatprep.subr.bf16.mxu0 0
    %2985 = vmatpush1.bf16.msra.mxu0 0
    %2986 = vmatprep.subr.bf16.mxu0 0
    %2987 = vmatpush1.bf16.msra.mxu0 0
    %2988 = vmatprep.subr.bf16.mxu0 0
    %2989 = vmatpush1.bf16.msra.mxu0 0
    %2990 = vmatprep.subr.bf16.mxu0 0
    %2991 = vmatpush1.bf16.msra.mxu0 0
    %2992 = vmatprep.subr.bf16.mxu0 0
    %2993 = vmatpush1.bf16.msra.mxu0 0
    %2994 = vmatprep.subr.bf16.mxu0 0
    %2995 = vmatpush1.bf16.msra.mxu0 0
    %2996 = vmatprep.subr.bf16.mxu0 0
    %2997 = vmatpush1.bf16.msra.mxu0 0
    %2998 = vmatprep.subr.bf16.mxu0 %v2853
    %2999 = vmatpush1.bf16.msra.mxu0 %v2850
    %3000 = vmatprep.subr.bf16.mxu0 0
    %3001 = vmatpush2.bf16.msra.mxu0 0
    %3002 = vmatprep.subr.bf16.mxu0 0
    %3003 = vmatpush2.bf16.msra.mxu0 0
    %3004 = vmatprep.subr.bf16.mxu0 0
    %3005 = vmatpush2.bf16.msra.mxu0 0
    %3006 = vmatprep.subr.bf16.mxu0 0
    %3007 = vmatpush2.bf16.msra.mxu0 0
    %3008 = vmatprep.subr.bf16.mxu0 0
    %3009 = vmatpush2.bf16.msra.mxu0 0
    %3010 = vmatprep.subr.bf16.mxu0 0
    %3011 = vmatpush2.bf16.msra.mxu0 0
    %3012 = vmatprep.subr.bf16.mxu0 0
    %3013 = vmatpush2.bf16.msra.mxu0 0
    %3014 = vmatprep.subr.bf16.mxu0 0
    %3015 = vmatpush2.bf16.msra.mxu0 0
    %3016 = vmatprep.mubr.bf16.mxu0 0
    %3017 = vmatmul.mubr.bf16.gmra.mxu0 %v2828
    %v3018 = vpop.f32.mrf.mxu0
    %v3019 = vadd.f32 0.0, %v3018
    %v3020 = vpop.f32.mrf.mxu0
    %v3021 = vadd.f32 0.0, %v3020
    %v3022 = vpop.f32.mrf.mxu0
    %v3023 = vpop.f32.mrf.mxu0
    %3024 = vdwg.mxu0
    %3025 = vmatprep.subr.bf16.mxu0 0
    %3026 = vmatpush1.bf16.msra.mxu0 0
    %3027 = vmatprep.subr.bf16.mxu0 0
    %3028 = vmatpush1.bf16.msra.mxu0 0
    %3029 = vmatprep.subr.bf16.mxu0 0
    %3030 = vmatpush1.bf16.msra.mxu0 0
    %3031 = vmatprep.subr.bf16.mxu0 0
    %3032 = vmatpush1.bf16.msra.mxu0 0
    %3033 = vmatprep.subr.bf16.mxu0 0
    %3034 = vmatpush1.bf16.msra.mxu0 0
    %3035 = vmatprep.subr.bf16.mxu0 0
    %3036 = vmatpush1.bf16.msra.mxu0 0
    %3037 = vmatprep.subr.bf16.mxu0 0
    %3038 = vmatpush1.bf16.msra.mxu0 0
    %3039 = vmatprep.subr.bf16.mxu0 %v2859
    %3040 = vmatpush1.bf16.msra.mxu0 %v2856
    %3041 = vmatprep.subr.bf16.mxu0 0
    %3042 = vmatpush2.bf16.msra.mxu0 0
    %3043 = vmatprep.subr.bf16.mxu0 0
    %3044 = vmatpush2.bf16.msra.mxu0 0
    %3045 = vmatprep.subr.bf16.mxu0 0
    %3046 = vmatpush2.bf16.msra.mxu0 0
    %3047 = vmatprep.subr.bf16.mxu0 0
    %3048 = vmatpush2.bf16.msra.mxu0 0
    %3049 = vmatprep.subr.bf16.mxu0 0
    %3050 = vmatpush2.bf16.msra.mxu0 0
    %3051 = vmatprep.subr.bf16.mxu0 0
    %3052 = vmatpush2.bf16.msra.mxu0 0
    %3053 = vmatprep.subr.bf16.mxu0 0
    %3054 = vmatpush2.bf16.msra.mxu0 0
    %3055 = vmatprep.subr.bf16.mxu0 0
    %3056 = vmatpush2.bf16.msra.mxu0 0
    %3057 = vmatprep.mubr.bf16.mxu0 0
    %3058 = vmatmul.mubr.bf16.gmra.mxu0 %v2828
    %v3059 = vpop.f32.mrf.mxu0
    %v3060 = vadd.f32 0.0, %v3059
    %v3061 = vpop.f32.mrf.mxu0
    %v3062 = vadd.f32 0.0, %v3061
    %v3063 = vpop.f32.mrf.mxu0
    %v3064 = vpop.f32.mrf.mxu0
    %3065 = vdwg.mxu0
    %v3076 = vunpack.c.l.b16 %v2783
    %v3077 = vunpack.c.h.b16 %v2783
    %v3078 = vunpack.c.l.b16 %v2784
    %v3079 = vunpack.c.h.b16 %v2784
    %v3080 = vunpack.c.l.b16 %v2785
    %v3081 = vunpack.c.h.b16 %v2785
    %v3082 = vunpack.c.l.b16 %v2786
    %v3083 = vunpack.c.h.b16 %v2786
    %v3084 = vunpack.c.l.b16 %v2787
    %v3085 = vunpack.c.h.b16 %v2787
    %v3086 = vunpack.c.l.b16 %v2788
    %v3087 = vunpack.c.h.b16 %v2788
    %v3088 = vunpack.c.l.b16 %v2789
    %v3089 = vunpack.c.h.b16 %v2789
    %v3090 = vunpack.c.l.b16 %v2790
    %v3091 = vunpack.c.h.b16 %v2790
    %v3092 = vunpack.c.l.b16 %v2791
    %v3093 = vunpack.c.h.b16 %v2791
    %v3094 = vunpack.c.l.b16 %v2792
    %v3095 = vunpack.c.h.b16 %v2792
    %v3096 = vpack.c.b16 %v3086, %v3076
    %v3097 = vpack.c.b16 %v3087, %v3077
    %v3098 = vpack.c.b16 %v3088, %v3078
    %v3099 = vpack.c.b16 %v3089, %v3079
    %v3100 = vpack.c.b16 %v3090, %v3080
    %v3101 = vpack.c.b16 %v3091, %v3081
    %v3102 = vpack.c.b16 %v3092, %v3082
    %v3103 = vpack.c.b16 %v3093, %v3083
    %v3104 = vpack.c.b16 %v3094, %v3084
    %v3105 = vpack.c.b16 %v3095, %v3085
    %vm3116 = vcmask 130048
    %v3118 = vsel %vm3116, %v2776, 0
    %3120 = vmatprep.subr.bf16.mxu0 0
    %3121 = vmatpush1.bf16.msra.mxu0 0
    %3122 = vmatprep.subr.bf16.mxu0 0
    %3123 = vmatpush1.bf16.msra.mxu0 0
    %3124 = vmatprep.subr.bf16.mxu0 0
    %3125 = vmatpush1.bf16.msra.mxu0 0
    %3126 = vmatprep.subr.bf16.mxu0 0
    %3127 = vmatpush1.bf16.msra.mxu0 0
    %3128 = vmatprep.subr.bf16.mxu0 0
    %3129 = vmatpush1.bf16.msra.mxu0 0
    %3130 = vmatprep.subr.bf16.mxu0 0
    %3131 = vmatpush1.bf16.msra.mxu0 0
    %3132 = vmatprep.subr.bf16.mxu0 0
    %3133 = vmatpush1.bf16.msra.mxu0 0
    %3134 = vmatprep.subr.bf16.mxu0 %v3097
    %3135 = vmatpush1.bf16.msra.mxu0 %v3096
    %3136 = vmatprep.subr.bf16.mxu0 0
    %3137 = vmatpush2.bf16.msra.mxu0 0
    %3138 = vmatprep.subr.bf16.mxu0 0
    %3139 = vmatpush2.bf16.msra.mxu0 0
    %3140 = vmatprep.subr.bf16.mxu0 0
    %3141 = vmatpush2.bf16.msra.mxu0 0
    %3142 = vmatprep.subr.bf16.mxu0 0
    %3143 = vmatpush2.bf16.msra.mxu0 0
    %3144 = vmatprep.subr.bf16.mxu0 0
    %3145 = vmatpush2.bf16.msra.mxu0 0
    %3146 = vmatprep.subr.bf16.mxu0 0
    %3147 = vmatpush2.bf16.msra.mxu0 0
    %3148 = vmatprep.subr.bf16.mxu0 0
    %3149 = vmatpush2.bf16.msra.mxu0 0
    %3150 = vmatprep.subr.bf16.mxu0 0
    %3151 = vmatpush2.bf16.msra.mxu0 0
    %3152 = vmatprep.mubr.bf16.mxu0 0
    %3153 = vmatmul.mubr.bf16.gmra.mxu0 %v3118
    %v3154 = vpop.f32.mrf.mxu0
    %v3155 = vadd.f32 %v2896, %v3154
    %v3156 = vpop.f32.mrf.mxu0
    %v3157 = vadd.f32 %v2898, %v3156
    %v3158 = vpop.f32.mrf.mxu0
    %v3159 = vpop.f32.mrf.mxu0
    %3160 = vdwg.mxu0
    %3161 = vmatprep.subr.bf16.mxu0 0
    %3162 = vmatpush1.bf16.msra.mxu0 0
    %3163 = vmatprep.subr.bf16.mxu0 0
    %3164 = vmatpush1.bf16.msra.mxu0 0
    %3165 = vmatprep.subr.bf16.mxu0 0
    %3166 = vmatpush1.bf16.msra.mxu0 0
    %3167 = vmatprep.subr.bf16.mxu0 0
    %3168 = vmatpush1.bf16.msra.mxu0 0
    %3169 = vmatprep.subr.bf16.mxu0 0
    %3170 = vmatpush1.bf16.msra.mxu0 0
    %3171 = vmatprep.subr.bf16.mxu0 0
    %3172 = vmatpush1.bf16.msra.mxu0 0
    %3173 = vmatprep.subr.bf16.mxu0 0
    %3174 = vmatpush1.bf16.msra.mxu0 0
    %3175 = vmatprep.subr.bf16.mxu0 %v3099
    %3176 = vmatpush1.bf16.msra.mxu0 %v3098
    %3177 = vmatprep.subr.bf16.mxu0 0
    %3178 = vmatpush2.bf16.msra.mxu0 0
    %3179 = vmatprep.subr.bf16.mxu0 0
    %3180 = vmatpush2.bf16.msra.mxu0 0
    %3181 = vmatprep.subr.bf16.mxu0 0
    %3182 = vmatpush2.bf16.msra.mxu0 0
    %3183 = vmatprep.subr.bf16.mxu0 0
    %3184 = vmatpush2.bf16.msra.mxu0 0
    %3185 = vmatprep.subr.bf16.mxu0 0
    %3186 = vmatpush2.bf16.msra.mxu0 0
    %3187 = vmatprep.subr.bf16.mxu0 0
    %3188 = vmatpush2.bf16.msra.mxu0 0
    %3189 = vmatprep.subr.bf16.mxu0 0
    %3190 = vmatpush2.bf16.msra.mxu0 0
    %3191 = vmatprep.subr.bf16.mxu0 0
    %3192 = vmatpush2.bf16.msra.mxu0 0
    %3193 = vmatprep.mubr.bf16.mxu0 0
    %3194 = vmatmul.mubr.bf16.gmra.mxu0 %v3118
    %v3195 = vpop.f32.mrf.mxu0
    %v3196 = vadd.f32 %v2937, %v3195
    %v3197 = vpop.f32.mrf.mxu0
    %v3198 = vadd.f32 %v2939, %v3197
    %v3199 = vpop.f32.mrf.mxu0
    %v3200 = vpop.f32.mrf.mxu0
    %3201 = vdwg.mxu0
    %3202 = vmatprep.subr.bf16.mxu0 0
    %3203 = vmatpush1.bf16.msra.mxu0 0
    %3204 = vmatprep.subr.bf16.mxu0 0
    %3205 = vmatpush1.bf16.msra.mxu0 0
    %3206 = vmatprep.subr.bf16.mxu0 0
    %3207 = vmatpush1.bf16.msra.mxu0 0
    %3208 = vmatprep.subr.bf16.mxu0 0
    %3209 = vmatpush1.bf16.msra.mxu0 0
    %3210 = vmatprep.subr.bf16.mxu0 0
    %3211 = vmatpush1.bf16.msra.mxu0 0
    %3212 = vmatprep.subr.bf16.mxu0 0
    %3213 = vmatpush1.bf16.msra.mxu0 0
    %3214 = vmatprep.subr.bf16.mxu0 0
    %3215 = vmatpush1.bf16.msra.mxu0 0
    %3216 = vmatprep.subr.bf16.mxu0 %v3101
    %3217 = vmatpush1.bf16.msra.mxu0 %v3100
    %3218 = vmatprep.subr.bf16.mxu0 0
    %3219 = vmatpush2.bf16.msra.mxu0 0
    %3220 = vmatprep.subr.bf16.mxu0 0
    %3221 = vmatpush2.bf16.msra.mxu0 0
    %3222 = vmatprep.subr.bf16.mxu0 0
    %3223 = vmatpush2.bf16.msra.mxu0 0
    %3224 = vmatprep.subr.bf16.mxu0 0
    %3225 = vmatpush2.bf16.msra.mxu0 0
    %3226 = vmatprep.subr.bf16.mxu0 0
    %3227 = vmatpush2.bf16.msra.mxu0 0
    %3228 = vmatprep.subr.bf16.mxu0 0
    %3229 = vmatpush2.bf16.msra.mxu0 0
    %3230 = vmatprep.subr.bf16.mxu0 0
    %3231 = vmatpush2.bf16.msra.mxu0 0
    %3232 = vmatprep.subr.bf16.mxu0 0
    %3233 = vmatpush2.bf16.msra.mxu0 0
    %3234 = vmatprep.mubr.bf16.mxu0 0
    %3235 = vmatmul.mubr.bf16.gmra.mxu0 %v3118
    %v3236 = vpop.f32.mrf.mxu0
    %v3237 = vadd.f32 %v2978, %v3236
    %v3238 = vpop.f32.mrf.mxu0
    %v3239 = vadd.f32 %v2980, %v3238
    %v3240 = vpop.f32.mrf.mxu0
    %v3241 = vpop.f32.mrf.mxu0
    %3242 = vdwg.mxu0
    %3243 = vmatprep.subr.bf16.mxu0 0
    %3244 = vmatpush1.bf16.msra.mxu0 0
    %3245 = vmatprep.subr.bf16.mxu0 0
    %3246 = vmatpush1.bf16.msra.mxu0 0
    %3247 = vmatprep.subr.bf16.mxu0 0
    %3248 = vmatpush1.bf16.msra.mxu0 0
    %3249 = vmatprep.subr.bf16.mxu0 0
    %3250 = vmatpush1.bf16.msra.mxu0 0
    %3251 = vmatprep.subr.bf16.mxu0 0
    %3252 = vmatpush1.bf16.msra.mxu0 0
    %3253 = vmatprep.subr.bf16.mxu0 0
    %3254 = vmatpush1.bf16.msra.mxu0 0
    %3255 = vmatprep.subr.bf16.mxu0 0
    %3256 = vmatpush1.bf16.msra.mxu0 0
    %3257 = vmatprep.subr.bf16.mxu0 %v3103
    %3258 = vmatpush1.bf16.msra.mxu0 %v3102
    %3259 = vmatprep.subr.bf16.mxu0 0
    %3260 = vmatpush2.bf16.msra.mxu0 0
    %3261 = vmatprep.subr.bf16.mxu0 0
    %3262 = vmatpush2.bf16.msra.mxu0 0
    %3263 = vmatprep.subr.bf16.mxu0 0
    %3264 = vmatpush2.bf16.msra.mxu0 0
    %3265 = vmatprep.subr.bf16.mxu0 0
    %3266 = vmatpush2.bf16.msra.mxu0 0
    %3267 = vmatprep.subr.bf16.mxu0 0
    %3268 = vmatpush2.bf16.msra.mxu0 0
    %3269 = vmatprep.subr.bf16.mxu0 0
    %3270 = vmatpush2.bf16.msra.mxu0 0
    %3271 = vmatprep.subr.bf16.mxu0 0
    %3272 = vmatpush2.bf16.msra.mxu0 0
    %3273 = vmatprep.subr.bf16.mxu0 0
    %3274 = vmatpush2.bf16.msra.mxu0 0
    %3275 = vmatprep.mubr.bf16.mxu0 0
    %3276 = vmatmul.mubr.bf16.gmra.mxu0 %v3118
    %v3277 = vpop.f32.mrf.mxu0
    %v3278 = vadd.f32 %v3019, %v3277
    %v3279 = vpop.f32.mrf.mxu0
    %v3280 = vadd.f32 %v3021, %v3279
    %v3281 = vpop.f32.mrf.mxu0
    %v3282 = vpop.f32.mrf.mxu0
    %3283 = vdwg.mxu0
    %3284 = vmatprep.subr.bf16.mxu0 0
    %3285 = vmatpush1.bf16.msra.mxu0 0
    %3286 = vmatprep.subr.bf16.mxu0 0
    %3287 = vmatpush1.bf16.msra.mxu0 0
    %3288 = vmatprep.subr.bf16.mxu0 0
    %3289 = vmatpush1.bf16.msra.mxu0 0
    %3290 = vmatprep.subr.bf16.mxu0 0
    %3291 = vmatpush1.bf16.msra.mxu0 0
    %3292 = vmatprep.subr.bf16.mxu0 0
    %3293 = vmatpush1.bf16.msra.mxu0 0
    %3294 = vmatprep.subr.bf16.mxu0 0
    %3295 = vmatpush1.bf16.msra.mxu0 0
    %3296 = vmatprep.subr.bf16.mxu0 0
    %3297 = vmatpush1.bf16.msra.mxu0 0
    %3298 = vmatprep.subr.bf16.mxu0 %v3105
    %3299 = vmatpush1.bf16.msra.mxu0 %v3104
    %3300 = vmatprep.subr.bf16.mxu0 0
    %3301 = vmatpush2.bf16.msra.mxu0 0
    %3302 = vmatprep.subr.bf16.mxu0 0
    %3303 = vmatpush2.bf16.msra.mxu0 0
    %3304 = vmatprep.subr.bf16.mxu0 0
    %3305 = vmatpush2.bf16.msra.mxu0 0
    %3306 = vmatprep.subr.bf16.mxu0 0
    %3307 = vmatpush2.bf16.msra.mxu0 0
    %3308 = vmatprep.subr.bf16.mxu0 0
    %3309 = vmatpush2.bf16.msra.mxu0 0
    %3310 = vmatprep.subr.bf16.mxu0 0
    %3311 = vmatpush2.bf16.msra.mxu0 0
    %3312 = vmatprep.subr.bf16.mxu0 0
    %3313 = vmatpush2.bf16.msra.mxu0 0
    %3314 = vmatprep.subr.bf16.mxu0 0
    %3315 = vmatpush2.bf16.msra.mxu0 0
    %3316 = vmatprep.mubr.bf16.mxu0 0
    %3317 = vmatmul.mubr.bf16.gmra.mxu0 %v3118
    %v3318 = vpop.f32.mrf.mxu0
    %v3319 = vadd.f32 %v3060, %v3318
    %v3320 = vpop.f32.mrf.mxu0
    %v3321 = vadd.f32 %v3062, %v3320
    %v3322 = vpop.f32.mrf.mxu0
    %v3323 = vpop.f32.mrf.mxu0
    %3324 = vdwg.mxu0
    %s3325 = scalar_lea.vmem [#allocation17], 1
    %v3326 = vld [vmem:[%s3325] ss:$8 sm:$0xf]
    %v3327 = vld [vmem:[%s3325] ss:$8 sm:$0xf0]
    %v3328 = vor.u32 %v3326, %v3327
    %s3329 = scalar_lea.vmem [#allocation17], 65
    %v3330 = vld [vmem:[%s3329] ss:$8 sm:$0x3]
    %v3331 = vld [vmem:[#allocation17] ss:$8 sm:$0xf]
    %v3332 = vld [vmem:[#allocation17] ss:$8 sm:$0xf0]
    %v3333 = vor.u32 %v3331, %v3332
    %s3334 = scalar_lea.vmem [#allocation17], 64
    %v3335 = vld [vmem:[%s3334] ss:$8 sm:$0x3]
    %v3338 = vlaneseq
    %v3339 = vshrl.u32 %v3338, 7
    %v3340 = vsub.s32 0, %v3339
    %v3341 = vrot.slane %v3328, %v3340
    %v3342 = vlaneseq
    %v3343 = vshrl.u32 %v3342, 7
    %v3344 = vsub.s32 1, %v3343
    %v3345 = vrot.slane %v3328, %v3344
    %v3346 = vlaneseq
    %v3347 = vshrl.u32 %v3346, 7
    %v3348 = vsub.s32 2, %v3347
    %v3349 = vrot.slane %v3328, %v3348
    %v3350 = vlaneseq
    %v3351 = vshrl.u32 %v3350, 7
    %v3352 = vsub.s32 3, %v3351
    %v3353 = vrot.slane %v3328, %v3352
    %v3354 = vlaneseq
    %v3355 = vshrl.u32 %v3354, 7
    %v3356 = vsub.s32 4, %v3355
    %v3357 = vrot.slane %v3328, %v3356
    %v3358 = vlaneseq
    %v3359 = vshrl.u32 %v3358, 7
    %v3360 = vsub.s32 5, %v3359
    %v3361 = vrot.slane %v3328, %v3360
    %v3362 = vlaneseq
    %v3363 = vshrl.u32 %v3362, 7
    %v3364 = vsub.s32 6, %v3363
    %v3365 = vrot.slane %v3328, %v3364
    %v3366 = vlaneseq
    %v3367 = vshrl.u32 %v3366, 7
    %v3368 = vsub.s32 7, %v3367
    %v3369 = vrot.slane %v3328, %v3368
    %v3370 = vlaneseq
    %v3371 = vshrl.u32 %v3370, 7
    %v3372 = vsub.s32 0, %v3371
    %v3373 = vrot.slane %v3330, %v3372
    %v3374 = vlaneseq
    %v3375 = vshrl.u32 %v3374, 7
    %v3376 = vsub.s32 1, %v3375
    %v3377 = vrot.slane %v3330, %v3376
    %v3388 = vmul.f32 %v3155, %v3341
    %v3389 = vmul.f32 %v3157, %v3345
    %v3390 = vmul.f32 %v3196, %v3349
    %v3391 = vmul.f32 %v3198, %v3353
    %v3392 = vmul.f32 %v3237, %v3357
    %v3393 = vmul.f32 %v3239, %v3361
    %v3394 = vmul.f32 %v3278, %v3365
    %v3395 = vmul.f32 %v3280, %v3369
    %v3396 = vmul.f32 %v3319, %v3373
    %v3397 = vmul.f32 %v3321, %v3377
    %v3400 = vlaneseq
    %v3401 = vshrl.u32 %v3400, 7
    %v3402 = vsub.s32 0, %v3401
    %v3403 = vrot.slane %v3333, %v3402
    %v3404 = vlaneseq
    %v3405 = vshrl.u32 %v3404, 7
    %v3406 = vsub.s32 1, %v3405
    %v3407 = vrot.slane %v3333, %v3406
    %v3408 = vlaneseq
    %v3409 = vshrl.u32 %v3408, 7
    %v3410 = vsub.s32 2, %v3409
    %v3411 = vrot.slane %v3333, %v3410
    %v3412 = vlaneseq
    %v3413 = vshrl.u32 %v3412, 7
    %v3414 = vsub.s32 3, %v3413
    %v3415 = vrot.slane %v3333, %v3414
    %v3416 = vlaneseq
    %v3417 = vshrl.u32 %v3416, 7
    %v3418 = vsub.s32 4, %v3417
    %v3419 = vrot.slane %v3333, %v3418
    %v3420 = vlaneseq
    %v3421 = vshrl.u32 %v3420, 7
    %v3422 = vsub.s32 5, %v3421
    %v3423 = vrot.slane %v3333, %v3422
    %v3424 = vlaneseq
    %v3425 = vshrl.u32 %v3424, 7
    %v3426 = vsub.s32 6, %v3425
    %v3427 = vrot.slane %v3333, %v3426
    %v3428 = vlaneseq
    %v3429 = vshrl.u32 %v3428, 7
    %v3430 = vsub.s32 7, %v3429
    %v3431 = vrot.slane %v3333, %v3430
    %v3432 = vlaneseq
    %v3433 = vshrl.u32 %v3432, 7
    %v3434 = vsub.s32 0, %v3433
    %v3435 = vrot.slane %v3335, %v3434
    %v3436 = vlaneseq
    %v3437 = vshrl.u32 %v3436, 7
    %v3438 = vsub.s32 1, %v3437
    %v3439 = vrot.slane %v3335, %v3438
    %v3450 = vadd.f32 %v3388, %v3403
    %v3451 = vadd.f32 %v3389, %v3407
    %v3452 = vadd.f32 %v3390, %v3411
    %v3453 = vadd.f32 %v3391, %v3415
    %v3454 = vadd.f32 %v3392, %v3419
    %v3455 = vadd.f32 %v3393, %v3423
    %v3456 = vadd.f32 %v3394, %v3427
    %v3457 = vadd.f32 %v3395, %v3431
    %v3458 = vadd.f32 %v3396, %v3435
    %v3459 = vadd.f32 %v3397, %v3439
    %vm3460 = vcmp.gt.f32.partialorder %v3450, 0.0
    %vm3461 = vcmp.gt.f32.partialorder %v3451, 0.0
    %vm3462 = vcmp.gt.f32.partialorder %v3452, 0.0
    %vm3463 = vcmp.gt.f32.partialorder %v3453, 0.0
    %vm3464 = vcmp.gt.f32.partialorder %v3454, 0.0
    %vm3465 = vcmp.gt.f32.partialorder %v3455, 0.0
    %vm3466 = vcmp.gt.f32.partialorder %v3456, 0.0
    %vm3467 = vcmp.gt.f32.partialorder %v3457, 0.0
    %vm3468 = vcmp.gt.f32.partialorder %v3458, 0.0
    %vm3469 = vcmp.gt.f32.partialorder %v3459, 0.0
    %v3470 = vstv %s70
    %v3471 = vmul.f32 %v3470, %v3450
    %v3472 = vmul.f32 %v3470, %v3451
    %v3473 = vmul.f32 %v3470, %v3452
    %v3474 = vmul.f32 %v3470, %v3453
    %v3475 = vmul.f32 %v3470, %v3454
    %v3476 = vmul.f32 %v3470, %v3455
    %v3477 = vmul.f32 %v3470, %v3456
    %v3478 = vmul.f32 %v3470, %v3457
    %v3479 = vmul.f32 %v3470, %v3458
    %v3480 = vmul.f32 %v3470, %v3459
    %v3481 = vsel %vm3460, %v3450, %v3471
    %v3482 = vsel %vm3461, %v3451, %v3472
    %v3483 = vsel %vm3462, %v3452, %v3473
    %v3484 = vsel %vm3463, %v3453, %v3474
    %v3485 = vsel %vm3464, %v3454, %v3475
    %v3486 = vsel %vm3465, %v3455, %v3476
    %v3487 = vsel %vm3466, %v3456, %v3477
    %v3488 = vsel %vm3467, %v3457, %v3478
    %v3489 = vsel %vm3468, %v3458, %v3479
    %v3490 = vsel %vm3469, %v3459, %v3480
    %v3491 = vpack.c.bf16 %v3481, %v3481
    %v3492 = vpack.c.bf16 %v3482, %v3482
    %v3493 = vpack.c.bf16 %v3483, %v3483
    %v3494 = vpack.c.bf16 %v3484, %v3484
    %v3495 = vpack.c.bf16 %v3485, %v3485
    %v3496 = vpack.c.bf16 %v3486, %v3486
    %v3497 = vpack.c.bf16 %v3487, %v3487
    %v3498 = vpack.c.bf16 %v3488, %v3488
    %v3499 = vpack.c.bf16 %v3489, %v3489
    %v3500 = vpack.c.bf16 %v3490, %v3490
    %s3501 = smul.u32 2, 160
    %s3502 = smul.u32 %s3501, 8
    %s3503 = sshll.u32 %s3502, 4
    %3504 = dma.done %s104, %s3503
    %v3505 = vld [vmem:[#allocation4] sm:$0xff]
    %v3506 = vld [vmem:[#allocation4 + $0x8] sm:$0xff]
    %v3507 = vld [vmem:[#allocation4 + $0x10] sm:$0xff]
    %v3508 = vld [vmem:[#allocation4 + $0x18] sm:$0xff]
    %v3509 = vld [vmem:[#allocation4 + $0x20] sm:$0xff]
    %v3510 = vld [vmem:[#allocation4 + $0x28] sm:$0xff]
    %v3511 = vld [vmem:[#allocation4 + $0x30] sm:$0xff]
    %v3512 = vld [vmem:[#allocation4 + $0x38] sm:$0xff]
    %v3513 = vld [vmem:[#allocation4 + $0x40] sm:$0xff]
    %v3514 = vld [vmem:[#allocation4 + $0x48] sm:$0xff]
    %v3515 = vld [vmem:[#allocation4 + $0x50] sm:$0xff]
    %v3516 = vld [vmem:[#allocation4 + $0x58] sm:$0xff]
    %v3517 = vld [vmem:[#allocation4 + $0x60] sm:$0xff]
    %v3518 = vld [vmem:[#allocation4 + $0x68] sm:$0xff]
    %v3519 = vld [vmem:[#allocation4 + $0x70] sm:$0xff]
    %v3520 = vld [vmem:[#allocation4 + $0x78] sm:$0xff]
    %v3521 = vld [vmem:[#allocation4 + $0x80] sm:$0xff]
    %v3522 = vld [vmem:[#allocation4 + $0x88] sm:$0xff]
    %v3523 = vld [vmem:[#allocation4 + $0x90] sm:$0xff]
    %v3524 = vld [vmem:[#allocation4 + $0x98] sm:$0xff]
    %v3525 = vld [vmem:[#allocation4 + $0xa0] sm:$0xff]
    %v3526 = vld [vmem:[#allocation4 + $0xa8] sm:$0xff]
    %v3527 = vld [vmem:[#allocation4 + $0xb0] sm:$0xff]
    %v3528 = vld [vmem:[#allocation4 + $0xb8] sm:$0xff]
    %v3529 = vld [vmem:[#allocation4 + $0xc0] sm:$0xff]
    %v3530 = vld [vmem:[#allocation4 + $0xc8] sm:$0xff]
    %v3531 = vld [vmem:[#allocation4 + $0xd0] sm:$0xff]
    %v3532 = vld [vmem:[#allocation4 + $0xd8] sm:$0xff]
    %v3533 = vld [vmem:[#allocation4 + $0xe0] sm:$0xff]
    %v3534 = vld [vmem:[#allocation4 + $0xe8] sm:$0xff]
    %v3535 = vld [vmem:[#allocation4 + $0xf0] sm:$0xff]
    %v3536 = vld [vmem:[#allocation4 + $0xf8] sm:$0xff]
    %v3537 = vld [vmem:[#allocation4 + $0x100] sm:$0xff]
    %v3538 = vld [vmem:[#allocation4 + $0x108] sm:$0xff]
    %v3539 = vld [vmem:[#allocation4 + $0x110] sm:$0xff]
    %v3540 = vld [vmem:[#allocation4 + $0x118] sm:$0xff]
    %v3541 = vld [vmem:[#allocation4 + $0x120] sm:$0xff]
    %v3542 = vld [vmem:[#allocation4 + $0x128] sm:$0xff]
    %v3543 = vld [vmem:[#allocation4 + $0x130] sm:$0xff]
    %v3544 = vld [vmem:[#allocation4 + $0x138] sm:$0xff]
    %v3545 = vld [vmem:[#allocation4 + $0x140] sm:$0xff]
    %v3546 = vld [vmem:[#allocation4 + $0x148] sm:$0xff]
    %v3547 = vld [vmem:[#allocation4 + $0x150] sm:$0xff]
    %v3548 = vld [vmem:[#allocation4 + $0x158] sm:$0xff]
    %v3549 = vld [vmem:[#allocation4 + $0x160] sm:$0xff]
    %v3550 = vld [vmem:[#allocation4 + $0x168] sm:$0xff]
    %v3551 = vld [vmem:[#allocation4 + $0x170] sm:$0xff]
    %v3552 = vld [vmem:[#allocation4 + $0x178] sm:$0xff]
    %v3553 = vld [vmem:[#allocation4 + $0x180] sm:$0xff]
    %v3554 = vld [vmem:[#allocation4 + $0x188] sm:$0xff]
    %v3555 = vld [vmem:[#allocation4 + $0x190] sm:$0xff]
    %v3556 = vld [vmem:[#allocation4 + $0x198] sm:$0xff]
    %v3557 = vld [vmem:[#allocation4 + $0x1a0] sm:$0xff]
    %v3558 = vld [vmem:[#allocation4 + $0x1a8] sm:$0xff]
    %v3559 = vld [vmem:[#allocation4 + $0x1b0] sm:$0xff]
    %v3560 = vld [vmem:[#allocation4 + $0x1b8] sm:$0xff]
    %v3561 = vld [vmem:[#allocation4 + $0x1c0] sm:$0xff]
    %v3562 = vld [vmem:[#allocation4 + $0x1c8] sm:$0xff]
    %v3563 = vld [vmem:[#allocation4 + $0x1d0] sm:$0xff]
    %v3564 = vld [vmem:[#allocation4 + $0x1d8] sm:$0xff]
    %v3565 = vld [vmem:[#allocation4 + $0x1e0] sm:$0xff]
    %v3566 = vld [vmem:[#allocation4 + $0x1e8] sm:$0xff]
    %v3567 = vld [vmem:[#allocation4 + $0x1f0] sm:$0xff]
    %v3568 = vld [vmem:[#allocation4 + $0x1f8] sm:$0xff]
    %v3569 = vld [vmem:[#allocation4 + $0x200] sm:$0xff]
    %v3570 = vld [vmem:[#allocation4 + $0x208] sm:$0xff]
    %v3571 = vld [vmem:[#allocation4 + $0x210] sm:$0xff]
    %v3572 = vld [vmem:[#allocation4 + $0x218] sm:$0xff]
    %v3573 = vld [vmem:[#allocation4 + $0x220] sm:$0xff]
    %v3574 = vld [vmem:[#allocation4 + $0x228] sm:$0xff]
    %v3575 = vld [vmem:[#allocation4 + $0x230] sm:$0xff]
    %v3576 = vld [vmem:[#allocation4 + $0x238] sm:$0xff]
    %v3577 = vld [vmem:[#allocation4 + $0x240] sm:$0xff]
    %v3578 = vld [vmem:[#allocation4 + $0x248] sm:$0xff]
    %v3579 = vld [vmem:[#allocation4 + $0x250] sm:$0xff]
    %v3580 = vld [vmem:[#allocation4 + $0x258] sm:$0xff]
    %v3581 = vld [vmem:[#allocation4 + $0x260] sm:$0xff]
    %v3582 = vld [vmem:[#allocation4 + $0x268] sm:$0xff]
    %v3583 = vld [vmem:[#allocation4 + $0x270] sm:$0xff]
    %v3584 = vld [vmem:[#allocation4 + $0x278] sm:$0xff]
    %v3585 = vld [vmem:[#allocation4 + $0x280] sm:$0xff]
    %v3586 = vld [vmem:[#allocation4 + $0x288] sm:$0xff]
    %v3587 = vld [vmem:[#allocation4 + $0x290] sm:$0xff]
    %v3588 = vld [vmem:[#allocation4 + $0x298] sm:$0xff]
    %v3589 = vld [vmem:[#allocation4 + $0x2a0] sm:$0xff]
    %v3590 = vld [vmem:[#allocation4 + $0x2a8] sm:$0xff]
    %v3591 = vld [vmem:[#allocation4 + $0x2b0] sm:$0xff]
    %v3592 = vld [vmem:[#allocation4 + $0x2b8] sm:$0xff]
    %v3593 = vld [vmem:[#allocation4 + $0x2c0] sm:$0xff]
    %v3594 = vld [vmem:[#allocation4 + $0x2c8] sm:$0xff]
    %v3595 = vld [vmem:[#allocation4 + $0x2d0] sm:$0xff]
    %v3596 = vld [vmem:[#allocation4 + $0x2d8] sm:$0xff]
    %v3597 = vld [vmem:[#allocation4 + $0x2e0] sm:$0xff]
    %v3598 = vld [vmem:[#allocation4 + $0x2e8] sm:$0xff]
    %v3599 = vld [vmem:[#allocation4 + $0x2f0] sm:$0xff]
    %v3600 = vld [vmem:[#allocation4 + $0x2f8] sm:$0xff]
    %v3601 = vld [vmem:[#allocation4 + $0x300] sm:$0xff]
    %v3602 = vld [vmem:[#allocation4 + $0x308] sm:$0xff]
    %v3603 = vld [vmem:[#allocation4 + $0x310] sm:$0xff]
    %v3604 = vld [vmem:[#allocation4 + $0x318] sm:$0xff]
    %v3605 = vld [vmem:[#allocation4 + $0x320] sm:$0xff]
    %v3606 = vld [vmem:[#allocation4 + $0x328] sm:$0xff]
    %v3607 = vld [vmem:[#allocation4 + $0x330] sm:$0xff]
    %v3608 = vld [vmem:[#allocation4 + $0x338] sm:$0xff]
    %v3609 = vld [vmem:[#allocation4 + $0x340] sm:$0xff]
    %v3610 = vld [vmem:[#allocation4 + $0x348] sm:$0xff]
    %v3611 = vld [vmem:[#allocation4 + $0x350] sm:$0xff]
    %v3612 = vld [vmem:[#allocation4 + $0x358] sm:$0xff]
    %v3613 = vld [vmem:[#allocation4 + $0x360] sm:$0xff]
    %v3614 = vld [vmem:[#allocation4 + $0x368] sm:$0xff]
    %v3615 = vld [vmem:[#allocation4 + $0x370] sm:$0xff]
    %v3616 = vld [vmem:[#allocation4 + $0x378] sm:$0xff]
    %v3617 = vld [vmem:[#allocation4 + $0x380] sm:$0xff]
    %v3618 = vld [vmem:[#allocation4 + $0x388] sm:$0xff]
    %v3619 = vld [vmem:[#allocation4 + $0x390] sm:$0xff]
    %v3620 = vld [vmem:[#allocation4 + $0x398] sm:$0xff]
    %v3621 = vld [vmem:[#allocation4 + $0x3a0] sm:$0xff]
    %v3622 = vld [vmem:[#allocation4 + $0x3a8] sm:$0xff]
    %v3623 = vld [vmem:[#allocation4 + $0x3b0] sm:$0xff]
    %v3624 = vld [vmem:[#allocation4 + $0x3b8] sm:$0xff]
    %v3625 = vld [vmem:[#allocation4 + $0x3c0] sm:$0xff]
    %v3626 = vld [vmem:[#allocation4 + $0x3c8] sm:$0xff]
    %v3627 = vld [vmem:[#allocation4 + $0x3d0] sm:$0xff]
    %v3628 = vld [vmem:[#allocation4 + $0x3d8] sm:$0xff]
    %v3629 = vld [vmem:[#allocation4 + $0x3e0] sm:$0xff]
    %v3630 = vld [vmem:[#allocation4 + $0x3e8] sm:$0xff]
    %v3631 = vld [vmem:[#allocation4 + $0x3f0] sm:$0xff]
    %v3632 = vld [vmem:[#allocation4 + $0x3f8] sm:$0xff]
    %v3633 = vld [vmem:[#allocation4 + $0x400] sm:$0xff]
    %v3634 = vld [vmem:[#allocation4 + $0x408] sm:$0xff]
    %v3635 = vld [vmem:[#allocation4 + $0x410] sm:$0xff]
    %v3636 = vld [vmem:[#allocation4 + $0x418] sm:$0xff]
    %v3637 = vld [vmem:[#allocation4 + $0x420] sm:$0xff]
    %v3638 = vld [vmem:[#allocation4 + $0x428] sm:$0xff]
    %v3639 = vld [vmem:[#allocation4 + $0x430] sm:$0xff]
    %v3640 = vld [vmem:[#allocation4 + $0x438] sm:$0xff]
    %v3641 = vld [vmem:[#allocation4 + $0x440] sm:$0xff]
    %v3642 = vld [vmem:[#allocation4 + $0x448] sm:$0xff]
    %v3643 = vld [vmem:[#allocation4 + $0x450] sm:$0xff]
    %v3644 = vld [vmem:[#allocation4 + $0x458] sm:$0xff]
    %v3645 = vld [vmem:[#allocation4 + $0x460] sm:$0xff]
    %v3646 = vld [vmem:[#allocation4 + $0x468] sm:$0xff]
    %v3647 = vld [vmem:[#allocation4 + $0x470] sm:$0xff]
    %v3648 = vld [vmem:[#allocation4 + $0x478] sm:$0xff]
    %v3649 = vld [vmem:[#allocation4 + $0x480] sm:$0xff]
    %v3650 = vld [vmem:[#allocation4 + $0x488] sm:$0xff]
    %v3651 = vld [vmem:[#allocation4 + $0x490] sm:$0xff]
    %v3652 = vld [vmem:[#allocation4 + $0x498] sm:$0xff]
    %v3653 = vld [vmem:[#allocation4 + $0x4a0] sm:$0xff]
    %v3654 = vld [vmem:[#allocation4 + $0x4a8] sm:$0xff]
    %v3655 = vld [vmem:[#allocation4 + $0x4b0] sm:$0xff]
    %v3656 = vld [vmem:[#allocation4 + $0x4b8] sm:$0xff]
    %v3657 = vld [vmem:[#allocation4 + $0x4c0] sm:$0xff]
    %v3658 = vld [vmem:[#allocation4 + $0x4c8] sm:$0xff]
    %v3659 = vld [vmem:[#allocation4 + $0x4d0] sm:$0xff]
    %v3660 = vld [vmem:[#allocation4 + $0x4d8] sm:$0xff]
    %v3661 = vld [vmem:[#allocation4 + $0x4e0] sm:$0xff]
    %v3662 = vld [vmem:[#allocation4 + $0x4e8] sm:$0xff]
    %v3663 = vld [vmem:[#allocation4 + $0x4f0] sm:$0xff]
    %v3664 = vld [vmem:[#allocation4 + $0x4f8] sm:$0xff]
    %v3665 = vld [vmem:[#allocation4 + $0x500] sm:$0xff]
    %v3666 = vld [vmem:[#allocation4 + $0x508] sm:$0xff]
    %v3667 = vld [vmem:[#allocation4 + $0x510] sm:$0xff]
    %v3668 = vld [vmem:[#allocation4 + $0x518] sm:$0xff]
    %v3669 = vld [vmem:[#allocation4 + $0x520] sm:$0xff]
    %v3670 = vld [vmem:[#allocation4 + $0x528] sm:$0xff]
    %v3671 = vld [vmem:[#allocation4 + $0x530] sm:$0xff]
    %v3672 = vld [vmem:[#allocation4 + $0x538] sm:$0xff]
    %v3673 = vld [vmem:[#allocation4 + $0x540] sm:$0xff]
    %v3674 = vld [vmem:[#allocation4 + $0x548] sm:$0xff]
    %v3675 = vld [vmem:[#allocation4 + $0x550] sm:$0xff]
    %v3676 = vld [vmem:[#allocation4 + $0x558] sm:$0xff]
    %v3677 = vld [vmem:[#allocation4 + $0x560] sm:$0xff]
    %v3678 = vld [vmem:[#allocation4 + $0x568] sm:$0xff]
    %v3679 = vld [vmem:[#allocation4 + $0x570] sm:$0xff]
    %v3680 = vld [vmem:[#allocation4 + $0x578] sm:$0xff]
    %v3681 = vld [vmem:[#allocation4 + $0x580] sm:$0xff]
    %v3682 = vld [vmem:[#allocation4 + $0x588] sm:$0xff]
    %v3683 = vld [vmem:[#allocation4 + $0x590] sm:$0xff]
    %v3684 = vld [vmem:[#allocation4 + $0x598] sm:$0xff]
    %v3685 = vld [vmem:[#allocation4 + $0x5a0] sm:$0xff]
    %v3686 = vld [vmem:[#allocation4 + $0x5a8] sm:$0xff]
    %v3687 = vld [vmem:[#allocation4 + $0x5b0] sm:$0xff]
    %v3688 = vld [vmem:[#allocation4 + $0x5b8] sm:$0xff]
    %v3689 = vld [vmem:[#allocation4 + $0x5c0] sm:$0xff]
    %v3690 = vld [vmem:[#allocation4 + $0x5c8] sm:$0xff]
    %v3691 = vld [vmem:[#allocation4 + $0x5d0] sm:$0xff]
    %v3692 = vld [vmem:[#allocation4 + $0x5d8] sm:$0xff]
    %v3693 = vld [vmem:[#allocation4 + $0x5e0] sm:$0xff]
    %v3694 = vld [vmem:[#allocation4 + $0x5e8] sm:$0xff]
    %v3695 = vld [vmem:[#allocation4 + $0x5f0] sm:$0xff]
    %v3696 = vld [vmem:[#allocation4 + $0x5f8] sm:$0xff]
    %v3697 = vld [vmem:[#allocation4 + $0x600] sm:$0xff]
    %v3698 = vld [vmem:[#allocation4 + $0x608] sm:$0xff]
    %v3699 = vld [vmem:[#allocation4 + $0x610] sm:$0xff]
    %v3700 = vld [vmem:[#allocation4 + $0x618] sm:$0xff]
    %v3701 = vld [vmem:[#allocation4 + $0x620] sm:$0xff]
    %v3702 = vld [vmem:[#allocation4 + $0x628] sm:$0xff]
    %v3703 = vld [vmem:[#allocation4 + $0x630] sm:$0xff]
    %v3704 = vld [vmem:[#allocation4 + $0x638] sm:$0xff]
    %v3705 = vld [vmem:[#allocation4 + $0x640] sm:$0xff]
    %v3706 = vld [vmem:[#allocation4 + $0x648] sm:$0xff]
    %v3707 = vld [vmem:[#allocation4 + $0x650] sm:$0xff]
    %v3708 = vld [vmem:[#allocation4 + $0x658] sm:$0xff]
    %v3709 = vld [vmem:[#allocation4 + $0x660] sm:$0xff]
    %v3710 = vld [vmem:[#allocation4 + $0x668] sm:$0xff]
    %v3711 = vld [vmem:[#allocation4 + $0x670] sm:$0xff]
    %v3712 = vld [vmem:[#allocation4 + $0x678] sm:$0xff]
    %v3713 = vld [vmem:[#allocation4 + $0x680] sm:$0xff]
    %v3714 = vld [vmem:[#allocation4 + $0x688] sm:$0xff]
    %v3715 = vld [vmem:[#allocation4 + $0x690] sm:$0xff]
    %v3716 = vld [vmem:[#allocation4 + $0x698] sm:$0xff]
    %v3717 = vld [vmem:[#allocation4 + $0x6a0] sm:$0xff]
    %v3718 = vld [vmem:[#allocation4 + $0x6a8] sm:$0xff]
    %v3719 = vld [vmem:[#allocation4 + $0x6b0] sm:$0xff]
    %v3720 = vld [vmem:[#allocation4 + $0x6b8] sm:$0xff]
    %v3721 = vld [vmem:[#allocation4 + $0x6c0] sm:$0xff]
    %v3722 = vld [vmem:[#allocation4 + $0x6c8] sm:$0xff]
    %v3723 = vld [vmem:[#allocation4 + $0x6d0] sm:$0xff]
    %v3724 = vld [vmem:[#allocation4 + $0x6d8] sm:$0xff]
    %v3725 = vld [vmem:[#allocation4 + $0x6e0] sm:$0xff]
    %v3726 = vld [vmem:[#allocation4 + $0x6e8] sm:$0xff]
    %v3727 = vld [vmem:[#allocation4 + $0x6f0] sm:$0xff]
    %v3728 = vld [vmem:[#allocation4 + $0x6f8] sm:$0xff]
    %v3729 = vld [vmem:[#allocation4 + $0x700] sm:$0xff]
    %v3730 = vld [vmem:[#allocation4 + $0x708] sm:$0xff]
    %v3731 = vld [vmem:[#allocation4 + $0x710] sm:$0xff]
    %v3732 = vld [vmem:[#allocation4 + $0x718] sm:$0xff]
    %v3733 = vld [vmem:[#allocation4 + $0x720] sm:$0xff]
    %v3734 = vld [vmem:[#allocation4 + $0x728] sm:$0xff]
    %v3735 = vld [vmem:[#allocation4 + $0x730] sm:$0xff]
    %v3736 = vld [vmem:[#allocation4 + $0x738] sm:$0xff]
    %v3737 = vld [vmem:[#allocation4 + $0x740] sm:$0xff]
    %v3738 = vld [vmem:[#allocation4 + $0x748] sm:$0xff]
    %v3739 = vld [vmem:[#allocation4 + $0x750] sm:$0xff]
    %v3740 = vld [vmem:[#allocation4 + $0x758] sm:$0xff]
    %v3741 = vld [vmem:[#allocation4 + $0x760] sm:$0xff]
    %v3742 = vld [vmem:[#allocation4 + $0x768] sm:$0xff]
    %v3743 = vld [vmem:[#allocation4 + $0x770] sm:$0xff]
    %v3744 = vld [vmem:[#allocation4 + $0x778] sm:$0xff]
    %v3745 = vld [vmem:[#allocation4 + $0x780] sm:$0xff]
    %v3746 = vld [vmem:[#allocation4 + $0x788] sm:$0xff]
    %v3747 = vld [vmem:[#allocation4 + $0x790] sm:$0xff]
    %v3748 = vld [vmem:[#allocation4 + $0x798] sm:$0xff]
    %v3749 = vld [vmem:[#allocation4 + $0x7a0] sm:$0xff]
    %v3750 = vld [vmem:[#allocation4 + $0x7a8] sm:$0xff]
    %v3751 = vld [vmem:[#allocation4 + $0x7b0] sm:$0xff]
    %v3752 = vld [vmem:[#allocation4 + $0x7b8] sm:$0xff]
    %v3753 = vld [vmem:[#allocation4 + $0x7c0] sm:$0xff]
    %v3754 = vld [vmem:[#allocation4 + $0x7c8] sm:$0xff]
    %v3755 = vld [vmem:[#allocation4 + $0x7d0] sm:$0xff]
    %v3756 = vld [vmem:[#allocation4 + $0x7d8] sm:$0xff]
    %v3757 = vld [vmem:[#allocation4 + $0x7e0] sm:$0xff]
    %v3758 = vld [vmem:[#allocation4 + $0x7e8] sm:$0xff]
    %v3759 = vld [vmem:[#allocation4 + $0x7f0] sm:$0xff]
    %v3760 = vld [vmem:[#allocation4 + $0x7f8] sm:$0xff]
    %v3761 = vld [vmem:[#allocation4 + $0x800] sm:$0xff]
    %v3762 = vld [vmem:[#allocation4 + $0x808] sm:$0xff]
    %v3763 = vld [vmem:[#allocation4 + $0x810] sm:$0xff]
    %v3764 = vld [vmem:[#allocation4 + $0x818] sm:$0xff]
    %v3765 = vld [vmem:[#allocation4 + $0x820] sm:$0xff]
    %v3766 = vld [vmem:[#allocation4 + $0x828] sm:$0xff]
    %v3767 = vld [vmem:[#allocation4 + $0x830] sm:$0xff]
    %v3768 = vld [vmem:[#allocation4 + $0x838] sm:$0xff]
    %v3769 = vld [vmem:[#allocation4 + $0x840] sm:$0xff]
    %v3770 = vld [vmem:[#allocation4 + $0x848] sm:$0xff]
    %v3771 = vld [vmem:[#allocation4 + $0x850] sm:$0xff]
    %v3772 = vld [vmem:[#allocation4 + $0x858] sm:$0xff]
    %v3773 = vld [vmem:[#allocation4 + $0x860] sm:$0xff]
    %v3774 = vld [vmem:[#allocation4 + $0x868] sm:$0xff]
    %v3775 = vld [vmem:[#allocation4 + $0x870] sm:$0xff]
    %v3776 = vld [vmem:[#allocation4 + $0x878] sm:$0xff]
    %v3777 = vld [vmem:[#allocation4 + $0x880] sm:$0xff]
    %v3778 = vld [vmem:[#allocation4 + $0x888] sm:$0xff]
    %v3779 = vld [vmem:[#allocation4 + $0x890] sm:$0xff]
    %v3780 = vld [vmem:[#allocation4 + $0x898] sm:$0xff]
    %v3781 = vld [vmem:[#allocation4 + $0x8a0] sm:$0xff]
    %v3782 = vld [vmem:[#allocation4 + $0x8a8] sm:$0xff]
    %v3783 = vld [vmem:[#allocation4 + $0x8b0] sm:$0xff]
    %v3784 = vld [vmem:[#allocation4 + $0x8b8] sm:$0xff]
    %v3785 = vld [vmem:[#allocation4 + $0x8c0] sm:$0xff]
    %v3786 = vld [vmem:[#allocation4 + $0x8c8] sm:$0xff]
    %v3787 = vld [vmem:[#allocation4 + $0x8d0] sm:$0xff]
    %v3788 = vld [vmem:[#allocation4 + $0x8d8] sm:$0xff]
    %v3789 = vld [vmem:[#allocation4 + $0x8e0] sm:$0xff]
    %v3790 = vld [vmem:[#allocation4 + $0x8e8] sm:$0xff]
    %v3791 = vld [vmem:[#allocation4 + $0x8f0] sm:$0xff]
    %v3792 = vld [vmem:[#allocation4 + $0x8f8] sm:$0xff]
    %v3793 = vld [vmem:[#allocation4 + $0x900] sm:$0xff]
    %v3794 = vld [vmem:[#allocation4 + $0x908] sm:$0xff]
    %v3795 = vld [vmem:[#allocation4 + $0x910] sm:$0xff]
    %v3796 = vld [vmem:[#allocation4 + $0x918] sm:$0xff]
    %v3797 = vld [vmem:[#allocation4 + $0x920] sm:$0xff]
    %v3798 = vld [vmem:[#allocation4 + $0x928] sm:$0xff]
    %v3799 = vld [vmem:[#allocation4 + $0x930] sm:$0xff]
    %v3800 = vld [vmem:[#allocation4 + $0x938] sm:$0xff]
    %v3801 = vld [vmem:[#allocation4 + $0x940] sm:$0xff]
    %v3802 = vld [vmem:[#allocation4 + $0x948] sm:$0xff]
    %v3803 = vld [vmem:[#allocation4 + $0x950] sm:$0xff]
    %v3804 = vld [vmem:[#allocation4 + $0x958] sm:$0xff]
    %v3805 = vld [vmem:[#allocation4 + $0x960] sm:$0xff]
    %v3806 = vld [vmem:[#allocation4 + $0x968] sm:$0xff]
    %v3807 = vld [vmem:[#allocation4 + $0x970] sm:$0xff]
    %v3808 = vld [vmem:[#allocation4 + $0x978] sm:$0xff]
    %v3809 = vld [vmem:[#allocation4 + $0x980] sm:$0xff]
    %v3810 = vld [vmem:[#allocation4 + $0x988] sm:$0xff]
    %v3811 = vld [vmem:[#allocation4 + $0x990] sm:$0xff]
    %v3812 = vld [vmem:[#allocation4 + $0x998] sm:$0xff]
    %v3813 = vld [vmem:[#allocation4 + $0x9a0] sm:$0xff]
    %v3814 = vld [vmem:[#allocation4 + $0x9a8] sm:$0xff]
    %v3815 = vld [vmem:[#allocation4 + $0x9b0] sm:$0xff]
    %v3816 = vld [vmem:[#allocation4 + $0x9b8] sm:$0xff]
    %v3817 = vld [vmem:[#allocation4 + $0x9c0] sm:$0xff]
    %v3818 = vld [vmem:[#allocation4 + $0x9c8] sm:$0xff]
    %v3819 = vld [vmem:[#allocation4 + $0x9d0] sm:$0xff]
    %v3820 = vld [vmem:[#allocation4 + $0x9d8] sm:$0xff]
    %v3821 = vld [vmem:[#allocation4 + $0x9e0] sm:$0xff]
    %v3822 = vld [vmem:[#allocation4 + $0x9e8] sm:$0xff]
    %v3823 = vld [vmem:[#allocation4 + $0x9f0] sm:$0xff]
    %v3824 = vld [vmem:[#allocation4 + $0x9f8] sm:$0xff]
    %v3825 = vunpack.c.l.s8.bf16 %v3505
    %v3826 = vunpack.c.l.s8.bf16 %v3506
    %v3827 = vunpack.c.l.s8.bf16 %v3507
    %v3828 = vunpack.c.l.s8.bf16 %v3508
    %v3829 = vunpack.c.l.s8.bf16 %v3509
    %v3830 = vunpack.c.l.s8.bf16 %v3510
    %v3831 = vunpack.c.l.s8.bf16 %v3511
    %v3832 = vunpack.c.l.s8.bf16 %v3512
    %v3833 = vunpack.c.h.s8.bf16 %v3505
    %v3834 = vunpack.c.h.s8.bf16 %v3506
    %v3835 = vunpack.c.h.s8.bf16 %v3507
    %v3836 = vunpack.c.h.s8.bf16 %v3508
    %v3837 = vunpack.c.h.s8.bf16 %v3509
    %v3838 = vunpack.c.h.s8.bf16 %v3510
    %v3839 = vunpack.c.h.s8.bf16 %v3511
    %v3840 = vunpack.c.h.s8.bf16 %v3512
    %v3841 = vunpack.c.l.s8.bf16 %v3513
    %v3842 = vunpack.c.l.s8.bf16 %v3514
    %v3843 = vunpack.c.l.s8.bf16 %v3515
    %v3844 = vunpack.c.l.s8.bf16 %v3516
    %v3845 = vunpack.c.l.s8.bf16 %v3517
    %v3846 = vunpack.c.l.s8.bf16 %v3518
    %v3847 = vunpack.c.l.s8.bf16 %v3519
    %v3848 = vunpack.c.l.s8.bf16 %v3520
    %v3849 = vunpack.c.h.s8.bf16 %v3513
    %v3850 = vunpack.c.h.s8.bf16 %v3514
    %v3851 = vunpack.c.h.s8.bf16 %v3515
    %v3852 = vunpack.c.h.s8.bf16 %v3516
    %v3853 = vunpack.c.h.s8.bf16 %v3517
    %v3854 = vunpack.c.h.s8.bf16 %v3518
    %v3855 = vunpack.c.h.s8.bf16 %v3519
    %v3856 = vunpack.c.h.s8.bf16 %v3520
    %v3857 = vunpack.c.l.s8.bf16 %v3521
    %v3858 = vunpack.c.l.s8.bf16 %v3522
    %v3859 = vunpack.c.l.s8.bf16 %v3523
    %v3860 = vunpack.c.l.s8.bf16 %v3524
    %v3861 = vunpack.c.l.s8.bf16 %v3525
    %v3862 = vunpack.c.l.s8.bf16 %v3526
    %v3863 = vunpack.c.l.s8.bf16 %v3527
    %v3864 = vunpack.c.l.s8.bf16 %v3528
    %v3865 = vunpack.c.h.s8.bf16 %v3521
    %v3866 = vunpack.c.h.s8.bf16 %v3522
    %v3867 = vunpack.c.h.s8.bf16 %v3523
    %v3868 = vunpack.c.h.s8.bf16 %v3524
    %v3869 = vunpack.c.h.s8.bf16 %v3525
    %v3870 = vunpack.c.h.s8.bf16 %v3526
    %v3871 = vunpack.c.h.s8.bf16 %v3527
    %v3872 = vunpack.c.h.s8.bf16 %v3528
    %v3873 = vunpack.c.l.s8.bf16 %v3529
    %v3874 = vunpack.c.l.s8.bf16 %v3530
    %v3875 = vunpack.c.l.s8.bf16 %v3531
    %v3876 = vunpack.c.l.s8.bf16 %v3532
    %v3877 = vunpack.c.l.s8.bf16 %v3533
    %v3878 = vunpack.c.l.s8.bf16 %v3534
    %v3879 = vunpack.c.l.s8.bf16 %v3535
    %v3880 = vunpack.c.l.s8.bf16 %v3536
    %v3881 = vunpack.c.h.s8.bf16 %v3529
    %v3882 = vunpack.c.h.s8.bf16 %v3530
    %v3883 = vunpack.c.h.s8.bf16 %v3531
    %v3884 = vunpack.c.h.s8.bf16 %v3532
    %v3885 = vunpack.c.h.s8.bf16 %v3533
    %v3886 = vunpack.c.h.s8.bf16 %v3534
    %v3887 = vunpack.c.h.s8.bf16 %v3535
    %v3888 = vunpack.c.h.s8.bf16 %v3536
    %v3889 = vunpack.c.l.s8.bf16 %v3537
    %v3890 = vunpack.c.l.s8.bf16 %v3538
    %v3891 = vunpack.c.l.s8.bf16 %v3539
    %v3892 = vunpack.c.l.s8.bf16 %v3540
    %v3893 = vunpack.c.l.s8.bf16 %v3541
    %v3894 = vunpack.c.l.s8.bf16 %v3542
    %v3895 = vunpack.c.l.s8.bf16 %v3543
    %v3896 = vunpack.c.l.s8.bf16 %v3544
    %v3897 = vunpack.c.h.s8.bf16 %v3537
    %v3898 = vunpack.c.h.s8.bf16 %v3538
    %v3899 = vunpack.c.h.s8.bf16 %v3539
    %v3900 = vunpack.c.h.s8.bf16 %v3540
    %v3901 = vunpack.c.h.s8.bf16 %v3541
    %v3902 = vunpack.c.h.s8.bf16 %v3542
    %v3903 = vunpack.c.h.s8.bf16 %v3543
    %v3904 = vunpack.c.h.s8.bf16 %v3544
    %v3905 = vunpack.c.l.s8.bf16 %v3545
    %v3906 = vunpack.c.l.s8.bf16 %v3546
    %v3907 = vunpack.c.l.s8.bf16 %v3547
    %v3908 = vunpack.c.l.s8.bf16 %v3548
    %v3909 = vunpack.c.l.s8.bf16 %v3549
    %v3910 = vunpack.c.l.s8.bf16 %v3550
    %v3911 = vunpack.c.l.s8.bf16 %v3551
    %v3912 = vunpack.c.l.s8.bf16 %v3552
    %v3913 = vunpack.c.h.s8.bf16 %v3545
    %v3914 = vunpack.c.h.s8.bf16 %v3546
    %v3915 = vunpack.c.h.s8.bf16 %v3547
    %v3916 = vunpack.c.h.s8.bf16 %v3548
    %v3917 = vunpack.c.h.s8.bf16 %v3549
    %v3918 = vunpack.c.h.s8.bf16 %v3550
    %v3919 = vunpack.c.h.s8.bf16 %v3551
    %v3920 = vunpack.c.h.s8.bf16 %v3552
    %v3921 = vunpack.c.l.s8.bf16 %v3553
    %v3922 = vunpack.c.l.s8.bf16 %v3554
    %v3923 = vunpack.c.l.s8.bf16 %v3555
    %v3924 = vunpack.c.l.s8.bf16 %v3556
    %v3925 = vunpack.c.l.s8.bf16 %v3557
    %v3926 = vunpack.c.l.s8.bf16 %v3558
    %v3927 = vunpack.c.l.s8.bf16 %v3559
    %v3928 = vunpack.c.l.s8.bf16 %v3560
    %v3929 = vunpack.c.h.s8.bf16 %v3553
    %v3930 = vunpack.c.h.s8.bf16 %v3554
    %v3931 = vunpack.c.h.s8.bf16 %v3555
    %v3932 = vunpack.c.h.s8.bf16 %v3556
    %v3933 = vunpack.c.h.s8.bf16 %v3557
    %v3934 = vunpack.c.h.s8.bf16 %v3558
    %v3935 = vunpack.c.h.s8.bf16 %v3559
    %v3936 = vunpack.c.h.s8.bf16 %v3560
    %v3937 = vunpack.c.l.s8.bf16 %v3561
    %v3938 = vunpack.c.l.s8.bf16 %v3562
    %v3939 = vunpack.c.l.s8.bf16 %v3563
    %v3940 = vunpack.c.l.s8.bf16 %v3564
    %v3941 = vunpack.c.l.s8.bf16 %v3565
    %v3942 = vunpack.c.l.s8.bf16 %v3566
    %v3943 = vunpack.c.l.s8.bf16 %v3567
    %v3944 = vunpack.c.l.s8.bf16 %v3568
    %v3945 = vunpack.c.h.s8.bf16 %v3561
    %v3946 = vunpack.c.h.s8.bf16 %v3562
    %v3947 = vunpack.c.h.s8.bf16 %v3563
    %v3948 = vunpack.c.h.s8.bf16 %v3564
    %v3949 = vunpack.c.h.s8.bf16 %v3565
    %v3950 = vunpack.c.h.s8.bf16 %v3566
    %v3951 = vunpack.c.h.s8.bf16 %v3567
    %v3952 = vunpack.c.h.s8.bf16 %v3568
    %v3953 = vunpack.c.l.s8.bf16 %v3569
    %v3954 = vunpack.c.l.s8.bf16 %v3570
    %v3955 = vunpack.c.l.s8.bf16 %v3571
    %v3956 = vunpack.c.l.s8.bf16 %v3572
    %v3957 = vunpack.c.l.s8.bf16 %v3573
    %v3958 = vunpack.c.l.s8.bf16 %v3574
    %v3959 = vunpack.c.l.s8.bf16 %v3575
    %v3960 = vunpack.c.l.s8.bf16 %v3576
    %v3961 = vunpack.c.h.s8.bf16 %v3569
    %v3962 = vunpack.c.h.s8.bf16 %v3570
    %v3963 = vunpack.c.h.s8.bf16 %v3571
    %v3964 = vunpack.c.h.s8.bf16 %v3572
    %v3965 = vunpack.c.h.s8.bf16 %v3573
    %v3966 = vunpack.c.h.s8.bf16 %v3574
    %v3967 = vunpack.c.h.s8.bf16 %v3575
    %v3968 = vunpack.c.h.s8.bf16 %v3576
    %v3969 = vunpack.c.l.s8.bf16 %v3577
    %v3970 = vunpack.c.l.s8.bf16 %v3578
    %v3971 = vunpack.c.l.s8.bf16 %v3579
    %v3972 = vunpack.c.l.s8.bf16 %v3580
    %v3973 = vunpack.c.l.s8.bf16 %v3581
    %v3974 = vunpack.c.l.s8.bf16 %v3582
    %v3975 = vunpack.c.l.s8.bf16 %v3583
    %v3976 = vunpack.c.l.s8.bf16 %v3584
    %v3977 = vunpack.c.h.s8.bf16 %v3577
    %v3978 = vunpack.c.h.s8.bf16 %v3578
    %v3979 = vunpack.c.h.s8.bf16 %v3579
    %v3980 = vunpack.c.h.s8.bf16 %v3580
    %v3981 = vunpack.c.h.s8.bf16 %v3581
    %v3982 = vunpack.c.h.s8.bf16 %v3582
    %v3983 = vunpack.c.h.s8.bf16 %v3583
    %v3984 = vunpack.c.h.s8.bf16 %v3584
    %v3985 = vunpack.c.l.s8.bf16 %v3585
    %v3986 = vunpack.c.l.s8.bf16 %v3586
    %v3987 = vunpack.c.l.s8.bf16 %v3587
    %v3988 = vunpack.c.l.s8.bf16 %v3588
    %v3989 = vunpack.c.l.s8.bf16 %v3589
    %v3990 = vunpack.c.l.s8.bf16 %v3590
    %v3991 = vunpack.c.l.s8.bf16 %v3591
    %v3992 = vunpack.c.l.s8.bf16 %v3592
    %v3993 = vunpack.c.h.s8.bf16 %v3585
    %v3994 = vunpack.c.h.s8.bf16 %v3586
    %v3995 = vunpack.c.h.s8.bf16 %v3587
    %v3996 = vunpack.c.h.s8.bf16 %v3588
    %v3997 = vunpack.c.h.s8.bf16 %v3589
    %v3998 = vunpack.c.h.s8.bf16 %v3590
    %v3999 = vunpack.c.h.s8.bf16 %v3591
    %v4000 = vunpack.c.h.s8.bf16 %v3592
    %v4001 = vunpack.c.l.s8.bf16 %v3593
    %v4002 = vunpack.c.l.s8.bf16 %v3594
    %v4003 = vunpack.c.l.s8.bf16 %v3595
    %v4004 = vunpack.c.l.s8.bf16 %v3596
    %v4005 = vunpack.c.l.s8.bf16 %v3597
    %v4006 = vunpack.c.l.s8.bf16 %v3598
    %v4007 = vunpack.c.l.s8.bf16 %v3599
    %v4008 = vunpack.c.l.s8.bf16 %v3600
    %v4009 = vunpack.c.h.s8.bf16 %v3593
    %v4010 = vunpack.c.h.s8.bf16 %v3594
    %v4011 = vunpack.c.h.s8.bf16 %v3595
    %v4012 = vunpack.c.h.s8.bf16 %v3596
    %v4013 = vunpack.c.h.s8.bf16 %v3597
    %v4014 = vunpack.c.h.s8.bf16 %v3598
    %v4015 = vunpack.c.h.s8.bf16 %v3599
    %v4016 = vunpack.c.h.s8.bf16 %v3600
    %v4017 = vunpack.c.l.s8.bf16 %v3601
    %v4018 = vunpack.c.l.s8.bf16 %v3602
    %v4019 = vunpack.c.l.s8.bf16 %v3603
    %v4020 = vunpack.c.l.s8.bf16 %v3604
    %v4021 = vunpack.c.l.s8.bf16 %v3605
    %v4022 = vunpack.c.l.s8.bf16 %v3606
    %v4023 = vunpack.c.l.s8.bf16 %v3607
    %v4024 = vunpack.c.l.s8.bf16 %v3608
    %v4025 = vunpack.c.h.s8.bf16 %v3601
    %v4026 = vunpack.c.h.s8.bf16 %v3602
    %v4027 = vunpack.c.h.s8.bf16 %v3603
    %v4028 = vunpack.c.h.s8.bf16 %v3604
    %v4029 = vunpack.c.h.s8.bf16 %v3605
    %v4030 = vunpack.c.h.s8.bf16 %v3606
    %v4031 = vunpack.c.h.s8.bf16 %v3607
    %v4032 = vunpack.c.h.s8.bf16 %v3608
    %v4033 = vunpack.c.l.s8.bf16 %v3609
    %v4034 = vunpack.c.l.s8.bf16 %v3610
    %v4035 = vunpack.c.l.s8.bf16 %v3611
    %v4036 = vunpack.c.l.s8.bf16 %v3612
    %v4037 = vunpack.c.l.s8.bf16 %v3613
    %v4038 = vunpack.c.l.s8.bf16 %v3614
    %v4039 = vunpack.c.l.s8.bf16 %v3615
    %v4040 = vunpack.c.l.s8.bf16 %v3616
    %v4041 = vunpack.c.h.s8.bf16 %v3609
    %v4042 = vunpack.c.h.s8.bf16 %v3610
    %v4043 = vunpack.c.h.s8.bf16 %v3611
    %v4044 = vunpack.c.h.s8.bf16 %v3612
    %v4045 = vunpack.c.h.s8.bf16 %v3613
    %v4046 = vunpack.c.h.s8.bf16 %v3614
    %v4047 = vunpack.c.h.s8.bf16 %v3615
    %v4048 = vunpack.c.h.s8.bf16 %v3616
    %v4049 = vunpack.c.l.s8.bf16 %v3617
    %v4050 = vunpack.c.l.s8.bf16 %v3618
    %v4051 = vunpack.c.l.s8.bf16 %v3619
    %v4052 = vunpack.c.l.s8.bf16 %v3620
    %v4053 = vunpack.c.l.s8.bf16 %v3621
    %v4054 = vunpack.c.l.s8.bf16 %v3622
    %v4055 = vunpack.c.l.s8.bf16 %v3623
    %v4056 = vunpack.c.l.s8.bf16 %v3624
    %v4057 = vunpack.c.h.s8.bf16 %v3617
    %v4058 = vunpack.c.h.s8.bf16 %v3618
    %v4059 = vunpack.c.h.s8.bf16 %v3619
    %v4060 = vunpack.c.h.s8.bf16 %v3620
    %v4061 = vunpack.c.h.s8.bf16 %v3621
    %v4062 = vunpack.c.h.s8.bf16 %v3622
    %v4063 = vunpack.c.h.s8.bf16 %v3623
    %v4064 = vunpack.c.h.s8.bf16 %v3624
    %v4065 = vunpack.c.l.s8.bf16 %v3625
    %v4066 = vunpack.c.l.s8.bf16 %v3626
    %v4067 = vunpack.c.l.s8.bf16 %v3627
    %v4068 = vunpack.c.l.s8.bf16 %v3628
    %v4069 = vunpack.c.l.s8.bf16 %v3629
    %v4070 = vunpack.c.l.s8.bf16 %v3630
    %v4071 = vunpack.c.l.s8.bf16 %v3631
    %v4072 = vunpack.c.l.s8.bf16 %v3632
    %v4073 = vunpack.c.h.s8.bf16 %v3625
    %v4074 = vunpack.c.h.s8.bf16 %v3626
    %v4075 = vunpack.c.h.s8.bf16 %v3627
    %v4076 = vunpack.c.h.s8.bf16 %v3628
    %v4077 = vunpack.c.h.s8.bf16 %v3629
    %v4078 = vunpack.c.h.s8.bf16 %v3630
    %v4079 = vunpack.c.h.s8.bf16 %v3631
    %v4080 = vunpack.c.h.s8.bf16 %v3632
    %v4081 = vunpack.c.l.s8.bf16 %v3633
    %v4082 = vunpack.c.l.s8.bf16 %v3634
    %v4083 = vunpack.c.l.s8.bf16 %v3635
    %v4084 = vunpack.c.l.s8.bf16 %v3636
    %v4085 = vunpack.c.l.s8.bf16 %v3637
    %v4086 = vunpack.c.l.s8.bf16 %v3638
    %v4087 = vunpack.c.l.s8.bf16 %v3639
    %v4088 = vunpack.c.l.s8.bf16 %v3640
    %v4089 = vunpack.c.h.s8.bf16 %v3633
    %v4090 = vunpack.c.h.s8.bf16 %v3634
    %v4091 = vunpack.c.h.s8.bf16 %v3635
    %v4092 = vunpack.c.h.s8.bf16 %v3636
    %v4093 = vunpack.c.h.s8.bf16 %v3637
    %v4094 = vunpack.c.h.s8.bf16 %v3638
    %v4095 = vunpack.c.h.s8.bf16 %v3639
    %v4096 = vunpack.c.h.s8.bf16 %v3640
    %v4097 = vunpack.c.l.s8.bf16 %v3641
    %v4098 = vunpack.c.l.s8.bf16 %v3642
    %v4099 = vunpack.c.l.s8.bf16 %v3643
    %v4100 = vunpack.c.l.s8.bf16 %v3644
    %v4101 = vunpack.c.l.s8.bf16 %v3645
    %v4102 = vunpack.c.l.s8.bf16 %v3646
    %v4103 = vunpack.c.l.s8.bf16 %v3647
    %v4104 = vunpack.c.l.s8.bf16 %v3648
    %v4105 = vunpack.c.h.s8.bf16 %v3641
    %v4106 = vunpack.c.h.s8.bf16 %v3642
    %v4107 = vunpack.c.h.s8.bf16 %v3643
    %v4108 = vunpack.c.h.s8.bf16 %v3644
    %v4109 = vunpack.c.h.s8.bf16 %v3645
    %v4110 = vunpack.c.h.s8.bf16 %v3646
    %v4111 = vunpack.c.h.s8.bf16 %v3647
    %v4112 = vunpack.c.h.s8.bf16 %v3648
    %v4113 = vunpack.c.l.s8.bf16 %v3649
    %v4114 = vunpack.c.l.s8.bf16 %v3650
    %v4115 = vunpack.c.l.s8.bf16 %v3651
    %v4116 = vunpack.c.l.s8.bf16 %v3652
    %v4117 = vunpack.c.l.s8.bf16 %v3653
    %v4118 = vunpack.c.l.s8.bf16 %v3654
    %v4119 = vunpack.c.l.s8.bf16 %v3655
    %v4120 = vunpack.c.l.s8.bf16 %v3656
    %v4121 = vunpack.c.h.s8.bf16 %v3649
    %v4122 = vunpack.c.h.s8.bf16 %v3650
    %v4123 = vunpack.c.h.s8.bf16 %v3651
    %v4124 = vunpack.c.h.s8.bf16 %v3652
    %v4125 = vunpack.c.h.s8.bf16 %v3653
    %v4126 = vunpack.c.h.s8.bf16 %v3654
    %v4127 = vunpack.c.h.s8.bf16 %v3655
    %v4128 = vunpack.c.h.s8.bf16 %v3656
    %v4129 = vunpack.c.l.s8.bf16 %v3657
    %v4130 = vunpack.c.l.s8.bf16 %v3658
    %v4131 = vunpack.c.l.s8.bf16 %v3659
    %v4132 = vunpack.c.l.s8.bf16 %v3660
    %v4133 = vunpack.c.l.s8.bf16 %v3661
    %v4134 = vunpack.c.l.s8.bf16 %v3662
    %v4135 = vunpack.c.l.s8.bf16 %v3663
    %v4136 = vunpack.c.l.s8.bf16 %v3664
    %v4137 = vunpack.c.h.s8.bf16 %v3657
    %v4138 = vunpack.c.h.s8.bf16 %v3658
    %v4139 = vunpack.c.h.s8.bf16 %v3659
    %v4140 = vunpack.c.h.s8.bf16 %v3660
    %v4141 = vunpack.c.h.s8.bf16 %v3661
    %v4142 = vunpack.c.h.s8.bf16 %v3662
    %v4143 = vunpack.c.h.s8.bf16 %v3663
    %v4144 = vunpack.c.h.s8.bf16 %v3664
    %v4145 = vunpack.c.l.s8.bf16 %v3665
    %v4146 = vunpack.c.l.s8.bf16 %v3666
    %v4147 = vunpack.c.l.s8.bf16 %v3667
    %v4148 = vunpack.c.l.s8.bf16 %v3668
    %v4149 = vunpack.c.l.s8.bf16 %v3669
    %v4150 = vunpack.c.l.s8.bf16 %v3670
    %v4151 = vunpack.c.l.s8.bf16 %v3671
    %v4152 = vunpack.c.l.s8.bf16 %v3672
    %v4153 = vunpack.c.h.s8.bf16 %v3665
    %v4154 = vunpack.c.h.s8.bf16 %v3666
    %v4155 = vunpack.c.h.s8.bf16 %v3667
    %v4156 = vunpack.c.h.s8.bf16 %v3668
    %v4157 = vunpack.c.h.s8.bf16 %v3669
    %v4158 = vunpack.c.h.s8.bf16 %v3670
    %v4159 = vunpack.c.h.s8.bf16 %v3671
    %v4160 = vunpack.c.h.s8.bf16 %v3672
    %v4161 = vunpack.c.l.s8.bf16 %v3673
    %v4162 = vunpack.c.l.s8.bf16 %v3674
    %v4163 = vunpack.c.l.s8.bf16 %v3675
    %v4164 = vunpack.c.l.s8.bf16 %v3676
    %v4165 = vunpack.c.l.s8.bf16 %v3677
    %v4166 = vunpack.c.l.s8.bf16 %v3678
    %v4167 = vunpack.c.l.s8.bf16 %v3679
    %v4168 = vunpack.c.l.s8.bf16 %v3680
    %v4169 = vunpack.c.h.s8.bf16 %v3673
    %v4170 = vunpack.c.h.s8.bf16 %v3674
    %v4171 = vunpack.c.h.s8.bf16 %v3675
    %v4172 = vunpack.c.h.s8.bf16 %v3676
    %v4173 = vunpack.c.h.s8.bf16 %v3677
    %v4174 = vunpack.c.h.s8.bf16 %v3678
    %v4175 = vunpack.c.h.s8.bf16 %v3679
    %v4176 = vunpack.c.h.s8.bf16 %v3680
    %v4177 = vunpack.c.l.s8.bf16 %v3681
    %v4178 = vunpack.c.l.s8.bf16 %v3682
    %v4179 = vunpack.c.l.s8.bf16 %v3683
    %v4180 = vunpack.c.l.s8.bf16 %v3684
    %v4181 = vunpack.c.l.s8.bf16 %v3685
    %v4182 = vunpack.c.l.s8.bf16 %v3686
    %v4183 = vunpack.c.l.s8.bf16 %v3687
    %v4184 = vunpack.c.l.s8.bf16 %v3688
    %v4185 = vunpack.c.h.s8.bf16 %v3681
    %v4186 = vunpack.c.h.s8.bf16 %v3682
    %v4187 = vunpack.c.h.s8.bf16 %v3683
    %v4188 = vunpack.c.h.s8.bf16 %v3684
    %v4189 = vunpack.c.h.s8.bf16 %v3685
    %v4190 = vunpack.c.h.s8.bf16 %v3686
    %v4191 = vunpack.c.h.s8.bf16 %v3687
    %v4192 = vunpack.c.h.s8.bf16 %v3688
    %v4193 = vunpack.c.l.s8.bf16 %v3689
    %v4194 = vunpack.c.l.s8.bf16 %v3690
    %v4195 = vunpack.c.l.s8.bf16 %v3691
    %v4196 = vunpack.c.l.s8.bf16 %v3692
    %v4197 = vunpack.c.l.s8.bf16 %v3693
    %v4198 = vunpack.c.l.s8.bf16 %v3694
    %v4199 = vunpack.c.l.s8.bf16 %v3695
    %v4200 = vunpack.c.l.s8.bf16 %v3696
    %v4201 = vunpack.c.h.s8.bf16 %v3689
    %v4202 = vunpack.c.h.s8.bf16 %v3690
    %v4203 = vunpack.c.h.s8.bf16 %v3691
    %v4204 = vunpack.c.h.s8.bf16 %v3692
    %v4205 = vunpack.c.h.s8.bf16 %v3693
    %v4206 = vunpack.c.h.s8.bf16 %v3694
    %v4207 = vunpack.c.h.s8.bf16 %v3695
    %v4208 = vunpack.c.h.s8.bf16 %v3696
    %v4209 = vunpack.c.l.s8.bf16 %v3697
    %v4210 = vunpack.c.l.s8.bf16 %v3698
    %v4211 = vunpack.c.l.s8.bf16 %v3699
    %v4212 = vunpack.c.l.s8.bf16 %v3700
    %v4213 = vunpack.c.l.s8.bf16 %v3701
    %v4214 = vunpack.c.l.s8.bf16 %v3702
    %v4215 = vunpack.c.l.s8.bf16 %v3703
    %v4216 = vunpack.c.l.s8.bf16 %v3704
    %v4217 = vunpack.c.h.s8.bf16 %v3697
    %v4218 = vunpack.c.h.s8.bf16 %v3698
    %v4219 = vunpack.c.h.s8.bf16 %v3699
    %v4220 = vunpack.c.h.s8.bf16 %v3700
    %v4221 = vunpack.c.h.s8.bf16 %v3701
    %v4222 = vunpack.c.h.s8.bf16 %v3702
    %v4223 = vunpack.c.h.s8.bf16 %v3703
    %v4224 = vunpack.c.h.s8.bf16 %v3704
    %v4225 = vunpack.c.l.s8.bf16 %v3705
    %v4226 = vunpack.c.l.s8.bf16 %v3706
    %v4227 = vunpack.c.l.s8.bf16 %v3707
    %v4228 = vunpack.c.l.s8.bf16 %v3708
    %v4229 = vunpack.c.l.s8.bf16 %v3709
    %v4230 = vunpack.c.l.s8.bf16 %v3710
    %v4231 = vunpack.c.l.s8.bf16 %v3711
    %v4232 = vunpack.c.l.s8.bf16 %v3712
    %v4233 = vunpack.c.h.s8.bf16 %v3705
    %v4234 = vunpack.c.h.s8.bf16 %v3706
    %v4235 = vunpack.c.h.s8.bf16 %v3707
    %v4236 = vunpack.c.h.s8.bf16 %v3708
    %v4237 = vunpack.c.h.s8.bf16 %v3709
    %v4238 = vunpack.c.h.s8.bf16 %v3710
    %v4239 = vunpack.c.h.s8.bf16 %v3711
    %v4240 = vunpack.c.h.s8.bf16 %v3712
    %v4241 = vunpack.c.l.s8.bf16 %v3713
    %v4242 = vunpack.c.l.s8.bf16 %v3714
    %v4243 = vunpack.c.l.s8.bf16 %v3715
    %v4244 = vunpack.c.l.s8.bf16 %v3716
    %v4245 = vunpack.c.l.s8.bf16 %v3717
    %v4246 = vunpack.c.l.s8.bf16 %v3718
    %v4247 = vunpack.c.l.s8.bf16 %v3719
    %v4248 = vunpack.c.l.s8.bf16 %v3720
    %v4249 = vunpack.c.h.s8.bf16 %v3713
    %v4250 = vunpack.c.h.s8.bf16 %v3714
    %v4251 = vunpack.c.h.s8.bf16 %v3715
    %v4252 = vunpack.c.h.s8.bf16 %v3716
    %v4253 = vunpack.c.h.s8.bf16 %v3717
    %v4254 = vunpack.c.h.s8.bf16 %v3718
    %v4255 = vunpack.c.h.s8.bf16 %v3719
    %v4256 = vunpack.c.h.s8.bf16 %v3720
    %v4257 = vunpack.c.l.s8.bf16 %v3721
    %v4258 = vunpack.c.l.s8.bf16 %v3722
    %v4259 = vunpack.c.l.s8.bf16 %v3723
    %v4260 = vunpack.c.l.s8.bf16 %v3724
    %v4261 = vunpack.c.l.s8.bf16 %v3725
    %v4262 = vunpack.c.l.s8.bf16 %v3726
    %v4263 = vunpack.c.l.s8.bf16 %v3727
    %v4264 = vunpack.c.l.s8.bf16 %v3728
    %v4265 = vunpack.c.h.s8.bf16 %v3721
    %v4266 = vunpack.c.h.s8.bf16 %v3722
    %v4267 = vunpack.c.h.s8.bf16 %v3723
    %v4268 = vunpack.c.h.s8.bf16 %v3724
    %v4269 = vunpack.c.h.s8.bf16 %v3725
    %v4270 = vunpack.c.h.s8.bf16 %v3726
    %v4271 = vunpack.c.h.s8.bf16 %v3727
    %v4272 = vunpack.c.h.s8.bf16 %v3728
    %v4273 = vunpack.c.l.s8.bf16 %v3729
    %v4274 = vunpack.c.l.s8.bf16 %v3730
    %v4275 = vunpack.c.l.s8.bf16 %v3731
    %v4276 = vunpack.c.l.s8.bf16 %v3732
    %v4277 = vunpack.c.l.s8.bf16 %v3733
    %v4278 = vunpack.c.l.s8.bf16 %v3734
    %v4279 = vunpack.c.l.s8.bf16 %v3735
    %v4280 = vunpack.c.l.s8.bf16 %v3736
    %v4281 = vunpack.c.h.s8.bf16 %v3729
    %v4282 = vunpack.c.h.s8.bf16 %v3730
    %v4283 = vunpack.c.h.s8.bf16 %v3731
    %v4284 = vunpack.c.h.s8.bf16 %v3732
    %v4285 = vunpack.c.h.s8.bf16 %v3733
    %v4286 = vunpack.c.h.s8.bf16 %v3734
    %v4287 = vunpack.c.h.s8.bf16 %v3735
    %v4288 = vunpack.c.h.s8.bf16 %v3736
    %v4289 = vunpack.c.l.s8.bf16 %v3737
    %v4290 = vunpack.c.l.s8.bf16 %v3738
    %v4291 = vunpack.c.l.s8.bf16 %v3739
    %v4292 = vunpack.c.l.s8.bf16 %v3740
    %v4293 = vunpack.c.l.s8.bf16 %v3741
    %v4294 = vunpack.c.l.s8.bf16 %v3742
    %v4295 = vunpack.c.l.s8.bf16 %v3743
    %v4296 = vunpack.c.l.s8.bf16 %v3744
    %v4297 = vunpack.c.h.s8.bf16 %v3737
    %v4298 = vunpack.c.h.s8.bf16 %v3738
    %v4299 = vunpack.c.h.s8.bf16 %v3739
    %v4300 = vunpack.c.h.s8.bf16 %v3740
    %v4301 = vunpack.c.h.s8.bf16 %v3741
    %v4302 = vunpack.c.h.s8.bf16 %v3742
    %v4303 = vunpack.c.h.s8.bf16 %v3743
    %v4304 = vunpack.c.h.s8.bf16 %v3744
    %v4305 = vunpack.c.l.s8.bf16 %v3745
    %v4306 = vunpack.c.l.s8.bf16 %v3746
    %v4307 = vunpack.c.l.s8.bf16 %v3747
    %v4308 = vunpack.c.l.s8.bf16 %v3748
    %v4309 = vunpack.c.l.s8.bf16 %v3749
    %v4310 = vunpack.c.l.s8.bf16 %v3750
    %v4311 = vunpack.c.l.s8.bf16 %v3751
    %v4312 = vunpack.c.l.s8.bf16 %v3752
    %v4313 = vunpack.c.h.s8.bf16 %v3745
    %v4314 = vunpack.c.h.s8.bf16 %v3746
    %v4315 = vunpack.c.h.s8.bf16 %v3747
    %v4316 = vunpack.c.h.s8.bf16 %v3748
    %v4317 = vunpack.c.h.s8.bf16 %v3749
    %v4318 = vunpack.c.h.s8.bf16 %v3750
    %v4319 = vunpack.c.h.s8.bf16 %v3751
    %v4320 = vunpack.c.h.s8.bf16 %v3752
    %v4321 = vunpack.c.l.s8.bf16 %v3753
    %v4322 = vunpack.c.l.s8.bf16 %v3754
    %v4323 = vunpack.c.l.s8.bf16 %v3755
    %v4324 = vunpack.c.l.s8.bf16 %v3756
    %v4325 = vunpack.c.l.s8.bf16 %v3757
    %v4326 = vunpack.c.l.s8.bf16 %v3758
    %v4327 = vunpack.c.l.s8.bf16 %v3759
    %v4328 = vunpack.c.l.s8.bf16 %v3760
    %v4329 = vunpack.c.h.s8.bf16 %v3753
    %v4330 = vunpack.c.h.s8.bf16 %v3754
    %v4331 = vunpack.c.h.s8.bf16 %v3755
    %v4332 = vunpack.c.h.s8.bf16 %v3756
    %v4333 = vunpack.c.h.s8.bf16 %v3757
    %v4334 = vunpack.c.h.s8.bf16 %v3758
    %v4335 = vunpack.c.h.s8.bf16 %v3759
    %v4336 = vunpack.c.h.s8.bf16 %v3760
    %v4337 = vunpack.c.l.s8.bf16 %v3761
    %v4338 = vunpack.c.l.s8.bf16 %v3762
    %v4339 = vunpack.c.l.s8.bf16 %v3763
    %v4340 = vunpack.c.l.s8.bf16 %v3764
    %v4341 = vunpack.c.l.s8.bf16 %v3765
    %v4342 = vunpack.c.l.s8.bf16 %v3766
    %v4343 = vunpack.c.l.s8.bf16 %v3767
    %v4344 = vunpack.c.l.s8.bf16 %v3768
    %v4345 = vunpack.c.h.s8.bf16 %v3761
    %v4346 = vunpack.c.h.s8.bf16 %v3762
    %v4347 = vunpack.c.h.s8.bf16 %v3763
    %v4348 = vunpack.c.h.s8.bf16 %v3764
    %v4349 = vunpack.c.h.s8.bf16 %v3765
    %v4350 = vunpack.c.h.s8.bf16 %v3766
    %v4351 = vunpack.c.h.s8.bf16 %v3767
    %v4352 = vunpack.c.h.s8.bf16 %v3768
    %v4353 = vunpack.c.l.s8.bf16 %v3769
    %v4354 = vunpack.c.l.s8.bf16 %v3770
    %v4355 = vunpack.c.l.s8.bf16 %v3771
    %v4356 = vunpack.c.l.s8.bf16 %v3772
    %v4357 = vunpack.c.l.s8.bf16 %v3773
    %v4358 = vunpack.c.l.s8.bf16 %v3774
    %v4359 = vunpack.c.l.s8.bf16 %v3775
    %v4360 = vunpack.c.l.s8.bf16 %v3776
    %v4361 = vunpack.c.h.s8.bf16 %v3769
    %v4362 = vunpack.c.h.s8.bf16 %v3770
    %v4363 = vunpack.c.h.s8.bf16 %v3771
    %v4364 = vunpack.c.h.s8.bf16 %v3772
    %v4365 = vunpack.c.h.s8.bf16 %v3773
    %v4366 = vunpack.c.h.s8.bf16 %v3774
    %v4367 = vunpack.c.h.s8.bf16 %v3775
    %v4368 = vunpack.c.h.s8.bf16 %v3776
    %v4369 = vunpack.c.l.s8.bf16 %v3777
    %v4370 = vunpack.c.l.s8.bf16 %v3778
    %v4371 = vunpack.c.l.s8.bf16 %v3779
    %v4372 = vunpack.c.l.s8.bf16 %v3780
    %v4373 = vunpack.c.l.s8.bf16 %v3781
    %v4374 = vunpack.c.l.s8.bf16 %v3782
    %v4375 = vunpack.c.l.s8.bf16 %v3783
    %v4376 = vunpack.c.l.s8.bf16 %v3784
    %v4377 = vunpack.c.h.s8.bf16 %v3777
    %v4378 = vunpack.c.h.s8.bf16 %v3778
    %v4379 = vunpack.c.h.s8.bf16 %v3779
    %v4380 = vunpack.c.h.s8.bf16 %v3780
    %v4381 = vunpack.c.h.s8.bf16 %v3781
    %v4382 = vunpack.c.h.s8.bf16 %v3782
    %v4383 = vunpack.c.h.s8.bf16 %v3783
    %v4384 = vunpack.c.h.s8.bf16 %v3784
    %v4385 = vunpack.c.l.s8.bf16 %v3785
    %v4386 = vunpack.c.l.s8.bf16 %v3786
    %v4387 = vunpack.c.l.s8.bf16 %v3787
    %v4388 = vunpack.c.l.s8.bf16 %v3788
    %v4389 = vunpack.c.l.s8.bf16 %v3789
    %v4390 = vunpack.c.l.s8.bf16 %v3790
    %v4391 = vunpack.c.l.s8.bf16 %v3791
    %v4392 = vunpack.c.l.s8.bf16 %v3792
    %v4393 = vunpack.c.h.s8.bf16 %v3785
    %v4394 = vunpack.c.h.s8.bf16 %v3786
    %v4395 = vunpack.c.h.s8.bf16 %v3787
    %v4396 = vunpack.c.h.s8.bf16 %v3788
    %v4397 = vunpack.c.h.s8.bf16 %v3789
    %v4398 = vunpack.c.h.s8.bf16 %v3790
    %v4399 = vunpack.c.h.s8.bf16 %v3791
    %v4400 = vunpack.c.h.s8.bf16 %v3792
    %v4401 = vunpack.c.l.s8.bf16 %v3793
    %v4402 = vunpack.c.l.s8.bf16 %v3794
    %v4403 = vunpack.c.l.s8.bf16 %v3795
    %v4404 = vunpack.c.l.s8.bf16 %v3796
    %v4405 = vunpack.c.l.s8.bf16 %v3797
    %v4406 = vunpack.c.l.s8.bf16 %v3798
    %v4407 = vunpack.c.l.s8.bf16 %v3799
    %v4408 = vunpack.c.l.s8.bf16 %v3800
    %v4409 = vunpack.c.h.s8.bf16 %v3793
    %v4410 = vunpack.c.h.s8.bf16 %v3794
    %v4411 = vunpack.c.h.s8.bf16 %v3795
    %v4412 = vunpack.c.h.s8.bf16 %v3796
    %v4413 = vunpack.c.h.s8.bf16 %v3797
    %v4414 = vunpack.c.h.s8.bf16 %v3798
    %v4415 = vunpack.c.h.s8.bf16 %v3799
    %v4416 = vunpack.c.h.s8.bf16 %v3800
    %v4417 = vunpack.c.l.s8.bf16 %v3801
    %v4418 = vunpack.c.l.s8.bf16 %v3802
    %v4419 = vunpack.c.l.s8.bf16 %v3803
    %v4420 = vunpack.c.l.s8.bf16 %v3804
    %v4421 = vunpack.c.l.s8.bf16 %v3805
    %v4422 = vunpack.c.l.s8.bf16 %v3806
    %v4423 = vunpack.c.l.s8.bf16 %v3807
    %v4424 = vunpack.c.l.s8.bf16 %v3808
    %v4425 = vunpack.c.h.s8.bf16 %v3801
    %v4426 = vunpack.c.h.s8.bf16 %v3802
    %v4427 = vunpack.c.h.s8.bf16 %v3803
    %v4428 = vunpack.c.h.s8.bf16 %v3804
    %v4429 = vunpack.c.h.s8.bf16 %v3805
    %v4430 = vunpack.c.h.s8.bf16 %v3806
    %v4431 = vunpack.c.h.s8.bf16 %v3807
    %v4432 = vunpack.c.h.s8.bf16 %v3808
    %v4433 = vunpack.c.l.s8.bf16 %v3809
    %v4434 = vunpack.c.l.s8.bf16 %v3810
    %v4435 = vunpack.c.l.s8.bf16 %v3811
    %v4436 = vunpack.c.l.s8.bf16 %v3812
    %v4437 = vunpack.c.l.s8.bf16 %v3813
    %v4438 = vunpack.c.l.s8.bf16 %v3814
    %v4439 = vunpack.c.l.s8.bf16 %v3815
    %v4440 = vunpack.c.l.s8.bf16 %v3816
    %v4441 = vunpack.c.h.s8.bf16 %v3809
    %v4442 = vunpack.c.h.s8.bf16 %v3810
    %v4443 = vunpack.c.h.s8.bf16 %v3811
    %v4444 = vunpack.c.h.s8.bf16 %v3812
    %v4445 = vunpack.c.h.s8.bf16 %v3813
    %v4446 = vunpack.c.h.s8.bf16 %v3814
    %v4447 = vunpack.c.h.s8.bf16 %v3815
    %v4448 = vunpack.c.h.s8.bf16 %v3816
    %v4449 = vunpack.c.l.s8.bf16 %v3817
    %v4450 = vunpack.c.l.s8.bf16 %v3818
    %v4451 = vunpack.c.l.s8.bf16 %v3819
    %v4452 = vunpack.c.l.s8.bf16 %v3820
    %v4453 = vunpack.c.l.s8.bf16 %v3821
    %v4454 = vunpack.c.l.s8.bf16 %v3822
    %v4455 = vunpack.c.l.s8.bf16 %v3823
    %v4456 = vunpack.c.l.s8.bf16 %v3824
    %v4457 = vunpack.c.h.s8.bf16 %v3817
    %v4458 = vunpack.c.h.s8.bf16 %v3818
    %v4459 = vunpack.c.h.s8.bf16 %v3819
    %v4460 = vunpack.c.h.s8.bf16 %v3820
    %v4461 = vunpack.c.h.s8.bf16 %v3821
    %v4462 = vunpack.c.h.s8.bf16 %v3822
    %v4463 = vunpack.c.h.s8.bf16 %v3823
    %v4464 = vunpack.c.h.s8.bf16 %v3824
    %4465 = vmatprep.subr.bf16.mxu0 %v3882
    %4466 = vmatpush1.bf16.msra.mxu0 %v3881
    %4467 = vmatprep.subr.bf16.mxu0 %v3874
    %4468 = vmatpush1.bf16.msra.mxu0 %v3873
    %4469 = vmatprep.subr.bf16.mxu0 %v3866
    %4470 = vmatpush1.bf16.msra.mxu0 %v3865
    %4471 = vmatprep.subr.bf16.mxu0 %v3858
    %4472 = vmatpush1.bf16.msra.mxu0 %v3857
    %4473 = vmatprep.subr.bf16.mxu0 %v3850
    %4474 = vmatpush1.bf16.msra.mxu0 %v3849
    %4475 = vmatprep.subr.bf16.mxu0 %v3842
    %4476 = vmatpush1.bf16.msra.mxu0 %v3841
    %4477 = vmatprep.subr.bf16.mxu0 %v3834
    %4478 = vmatpush1.bf16.msra.mxu0 %v3833
    %4479 = vmatprep.subr.bf16.mxu0 %v3826
    %4480 = vmatpush1.bf16.msra.mxu0 %v3825
    %4481 = vmatprep.subr.bf16.mxu0 %v3946
    %4482 = vmatpush2.bf16.msra.mxu0 %v3945
    %4483 = vmatprep.subr.bf16.mxu0 %v3938
    %4484 = vmatpush2.bf16.msra.mxu0 %v3937
    %4485 = vmatprep.subr.bf16.mxu0 %v3930
    %4486 = vmatpush2.bf16.msra.mxu0 %v3929
    %4487 = vmatprep.subr.bf16.mxu0 %v3922
    %4488 = vmatpush2.bf16.msra.mxu0 %v3921
    %4489 = vmatprep.subr.bf16.mxu0 %v3914
    %4490 = vmatpush2.bf16.msra.mxu0 %v3913
    %4491 = vmatprep.subr.bf16.mxu0 %v3906
    %4492 = vmatpush2.bf16.msra.mxu0 %v3905
    %4493 = vmatprep.subr.bf16.mxu0 %v3898
    %4494 = vmatpush2.bf16.msra.mxu0 %v3897
    %4495 = vmatprep.subr.bf16.mxu0 %v3890
    %4496 = vmatpush2.bf16.msra.mxu0 %v3889
    %4497 = vmatprep.mubr.bf16.mxu0 %v3492
    %4498 = vmatmul.mubr.bf16.gmra.mxu0 %v3491
    %v4499 = vpop.f32.mrf.mxu0
    %v4500 = vadd.f32 0.0, %v4499
    %v4501 = vpop.f32.mrf.mxu0
    %v4502 = vadd.f32 0.0, %v4501
    %v4503 = vpop.f32.mrf.mxu0
    %v4504 = vpop.f32.mrf.mxu0
    %4505 = vdwg.mxu0
    %4506 = vmatprep.subr.bf16.mxu0 %v4010
    %4507 = vmatpush1.bf16.msra.mxu0 %v4009
    %4508 = vmatprep.subr.bf16.mxu0 %v4002
    %4509 = vmatpush1.bf16.msra.mxu0 %v4001
    %4510 = vmatprep.subr.bf16.mxu0 %v3994
    %4511 = vmatpush1.bf16.msra.mxu0 %v3993
    %4512 = vmatprep.subr.bf16.mxu0 %v3986
    %4513 = vmatpush1.bf16.msra.mxu0 %v3985
    %4514 = vmatprep.subr.bf16.mxu0 %v3978
    %4515 = vmatpush1.bf16.msra.mxu0 %v3977
    %4516 = vmatprep.subr.bf16.mxu0 %v3970
    %4517 = vmatpush1.bf16.msra.mxu0 %v3969
    %4518 = vmatprep.subr.bf16.mxu0 %v3962
    %4519 = vmatpush1.bf16.msra.mxu0 %v3961
    %4520 = vmatprep.subr.bf16.mxu0 %v3954
    %4521 = vmatpush1.bf16.msra.mxu0 %v3953
    %4522 = vmatprep.subr.bf16.mxu0 %v4074
    %4523 = vmatpush2.bf16.msra.mxu0 %v4073
    %4524 = vmatprep.subr.bf16.mxu0 %v4066
    %4525 = vmatpush2.bf16.msra.mxu0 %v4065
    %4526 = vmatprep.subr.bf16.mxu0 %v4058
    %4527 = vmatpush2.bf16.msra.mxu0 %v4057
    %4528 = vmatprep.subr.bf16.mxu0 %v4050
    %4529 = vmatpush2.bf16.msra.mxu0 %v4049
    %4530 = vmatprep.subr.bf16.mxu0 %v4042
    %4531 = vmatpush2.bf16.msra.mxu0 %v4041
    %4532 = vmatprep.subr.bf16.mxu0 %v4034
    %4533 = vmatpush2.bf16.msra.mxu0 %v4033
    %4534 = vmatprep.subr.bf16.mxu0 %v4026
    %4535 = vmatpush2.bf16.msra.mxu0 %v4025
    %4536 = vmatprep.subr.bf16.mxu0 %v4018
    %4537 = vmatpush2.bf16.msra.mxu0 %v4017
    %4538 = vmatprep.mubr.bf16.mxu0 %v3494
    %4539 = vmatmul.mubr.bf16.gmra.mxu0 %v3493
    %v4540 = vpop.f32.mrf.mxu0
    %v4541 = vadd.f32 %v4500, %v4540
    %v4542 = vpop.f32.mrf.mxu0
    %v4543 = vadd.f32 %v4502, %v4542
    %v4544 = vpop.f32.mrf.mxu0
    %v4545 = vpop.f32.mrf.mxu0
    %4546 = vdwg.mxu0
    %4547 = vmatprep.subr.bf16.mxu0 %v4138
    %4548 = vmatpush1.bf16.msra.mxu0 %v4137
    %4549 = vmatprep.subr.bf16.mxu0 %v4130
    %4550 = vmatpush1.bf16.msra.mxu0 %v4129
    %4551 = vmatprep.subr.bf16.mxu0 %v4122
    %4552 = vmatpush1.bf16.msra.mxu0 %v4121
    %4553 = vmatprep.subr.bf16.mxu0 %v4114
    %4554 = vmatpush1.bf16.msra.mxu0 %v4113
    %4555 = vmatprep.subr.bf16.mxu0 %v4106
    %4556 = vmatpush1.bf16.msra.mxu0 %v4105
    %4557 = vmatprep.subr.bf16.mxu0 %v4098
    %4558 = vmatpush1.bf16.msra.mxu0 %v4097
    %4559 = vmatprep.subr.bf16.mxu0 %v4090
    %4560 = vmatpush1.bf16.msra.mxu0 %v4089
    %4561 = vmatprep.subr.bf16.mxu0 %v4082
    %4562 = vmatpush1.bf16.msra.mxu0 %v4081
    %4563 = vmatprep.subr.bf16.mxu0 %v4202
    %4564 = vmatpush2.bf16.msra.mxu0 %v4201
    %4565 = vmatprep.subr.bf16.mxu0 %v4194
    %4566 = vmatpush2.bf16.msra.mxu0 %v4193
    %4567 = vmatprep.subr.bf16.mxu0 %v4186
    %4568 = vmatpush2.bf16.msra.mxu0 %v4185
    %4569 = vmatprep.subr.bf16.mxu0 %v4178
    %4570 = vmatpush2.bf16.msra.mxu0 %v4177
    %4571 = vmatprep.subr.bf16.mxu0 %v4170
    %4572 = vmatpush2.bf16.msra.mxu0 %v4169
    %4573 = vmatprep.subr.bf16.mxu0 %v4162
    %4574 = vmatpush2.bf16.msra.mxu0 %v4161
    %4575 = vmatprep.subr.bf16.mxu0 %v4154
    %4576 = vmatpush2.bf16.msra.mxu0 %v4153
    %4577 = vmatprep.subr.bf16.mxu0 %v4146
    %4578 = vmatpush2.bf16.msra.mxu0 %v4145
    %4579 = vmatprep.mubr.bf16.mxu0 %v3496
    %4580 = vmatmul.mubr.bf16.gmra.mxu0 %v3495
    %v4581 = vpop.f32.mrf.mxu0
    %v4582 = vadd.f32 %v4541, %v4581
    %v4583 = vpop.f32.mrf.mxu0
    %v4584 = vadd.f32 %v4543, %v4583
    %v4585 = vpop.f32.mrf.mxu0
    %v4586 = vpop.f32.mrf.mxu0
    %4587 = vdwg.mxu0
    %4588 = vmatprep.subr.bf16.mxu0 %v4266
    %4589 = vmatpush1.bf16.msra.mxu0 %v4265
    %4590 = vmatprep.subr.bf16.mxu0 %v4258
    %4591 = vmatpush1.bf16.msra.mxu0 %v4257
    %4592 = vmatprep.subr.bf16.mxu0 %v4250
    %4593 = vmatpush1.bf16.msra.mxu0 %v4249
    %4594 = vmatprep.subr.bf16.mxu0 %v4242
    %4595 = vmatpush1.bf16.msra.mxu0 %v4241
    %4596 = vmatprep.subr.bf16.mxu0 %v4234
    %4597 = vmatpush1.bf16.msra.mxu0 %v4233
    %4598 = vmatprep.subr.bf16.mxu0 %v4226
    %4599 = vmatpush1.bf16.msra.mxu0 %v4225
    %4600 = vmatprep.subr.bf16.mxu0 %v4218
    %4601 = vmatpush1.bf16.msra.mxu0 %v4217
    %4602 = vmatprep.subr.bf16.mxu0 %v4210
    %4603 = vmatpush1.bf16.msra.mxu0 %v4209
    %4604 = vmatprep.subr.bf16.mxu0 %v4330
    %4605 = vmatpush2.bf16.msra.mxu0 %v4329
    %4606 = vmatprep.subr.bf16.mxu0 %v4322
    %4607 = vmatpush2.bf16.msra.mxu0 %v4321
    %4608 = vmatprep.subr.bf16.mxu0 %v4314
    %4609 = vmatpush2.bf16.msra.mxu0 %v4313
    %4610 = vmatprep.subr.bf16.mxu0 %v4306
    %4611 = vmatpush2.bf16.msra.mxu0 %v4305
    %4612 = vmatprep.subr.bf16.mxu0 %v4298
    %4613 = vmatpush2.bf16.msra.mxu0 %v4297
    %4614 = vmatprep.subr.bf16.mxu0 %v4290
    %4615 = vmatpush2.bf16.msra.mxu0 %v4289
    %4616 = vmatprep.subr.bf16.mxu0 %v4282
    %4617 = vmatpush2.bf16.msra.mxu0 %v4281
    %4618 = vmatprep.subr.bf16.mxu0 %v4274
    %4619 = vmatpush2.bf16.msra.mxu0 %v4273
    %4620 = vmatprep.mubr.bf16.mxu0 %v3498
    %4621 = vmatmul.mubr.bf16.gmra.mxu0 %v3497
    %v4622 = vpop.f32.mrf.mxu0
    %v4623 = vadd.f32 %v4582, %v4622
    %v4624 = vpop.f32.mrf.mxu0
    %v4625 = vadd.f32 %v4584, %v4624
    %v4626 = vpop.f32.mrf.mxu0
    %v4627 = vpop.f32.mrf.mxu0
    %4628 = vdwg.mxu0
    %4629 = vmatprep.subr.bf16.mxu0 %v4394
    %4630 = vmatpush1.bf16.msra.mxu0 %v4393
    %4631 = vmatprep.subr.bf16.mxu0 %v4386
    %4632 = vmatpush1.bf16.msra.mxu0 %v4385
    %4633 = vmatprep.subr.bf16.mxu0 %v4378
    %4634 = vmatpush1.bf16.msra.mxu0 %v4377
    %4635 = vmatprep.subr.bf16.mxu0 %v4370
    %4636 = vmatpush1.bf16.msra.mxu0 %v4369
    %4637 = vmatprep.subr.bf16.mxu0 %v4362
    %4638 = vmatpush1.bf16.msra.mxu0 %v4361
    %4639 = vmatprep.subr.bf16.mxu0 %v4354
    %4640 = vmatpush1.bf16.msra.mxu0 %v4353
    %4641 = vmatprep.subr.bf16.mxu0 %v4346
    %4642 = vmatpush1.bf16.msra.mxu0 %v4345
    %4643 = vmatprep.subr.bf16.mxu0 %v4338
    %4644 = vmatpush1.bf16.msra.mxu0 %v4337
    %4645 = vmatprep.subr.bf16.mxu0 %v4458
    %4646 = vmatpush2.bf16.msra.mxu0 %v4457
    %4647 = vmatprep.subr.bf16.mxu0 %v4450
    %4648 = vmatpush2.bf16.msra.mxu0 %v4449
    %4649 = vmatprep.subr.bf16.mxu0 %v4442
    %4650 = vmatpush2.bf16.msra.mxu0 %v4441
    %4651 = vmatprep.subr.bf16.mxu0 %v4434
    %4652 = vmatpush2.bf16.msra.mxu0 %v4433
    %4653 = vmatprep.subr.bf16.mxu0 %v4426
    %4654 = vmatpush2.bf16.msra.mxu0 %v4425
    %4655 = vmatprep.subr.bf16.mxu0 %v4418
    %4656 = vmatpush2.bf16.msra.mxu0 %v4417
    %4657 = vmatprep.subr.bf16.mxu0 %v4410
    %4658 = vmatpush2.bf16.msra.mxu0 %v4409
    %4659 = vmatprep.subr.bf16.mxu0 %v4402
    %4660 = vmatpush2.bf16.msra.mxu0 %v4401
    %4661 = vmatprep.mubr.bf16.mxu0 %v3500
    %4662 = vmatmul.mubr.bf16.gmra.mxu0 %v3499
    %v4663 = vpop.f32.mrf.mxu0
    %v4664 = vadd.f32 %v4623, %v4663
    %v4665 = vpop.f32.mrf.mxu0
    %v4666 = vadd.f32 %v4625, %v4665
    %v4667 = vpop.f32.mrf.mxu0
    %v4668 = vpop.f32.mrf.mxu0
    %4669 = vdwg.mxu0
    %4670 = vmatprep.subr.bf16.mxu0 %v3884
    %4671 = vmatpush1.bf16.msra.mxu0 %v3883
    %4672 = vmatprep.subr.bf16.mxu0 %v3876
    %4673 = vmatpush1.bf16.msra.mxu0 %v3875
    %4674 = vmatprep.subr.bf16.mxu0 %v3868
    %4675 = vmatpush1.bf16.msra.mxu0 %v3867
    %4676 = vmatprep.subr.bf16.mxu0 %v3860
    %4677 = vmatpush1.bf16.msra.mxu0 %v3859
    %4678 = vmatprep.subr.bf16.mxu0 %v3852
    %4679 = vmatpush1.bf16.msra.mxu0 %v3851
    %4680 = vmatprep.subr.bf16.mxu0 %v3844
    %4681 = vmatpush1.bf16.msra.mxu0 %v3843
    %4682 = vmatprep.subr.bf16.mxu0 %v3836
    %4683 = vmatpush1.bf16.msra.mxu0 %v3835
    %4684 = vmatprep.subr.bf16.mxu0 %v3828
    %4685 = vmatpush1.bf16.msra.mxu0 %v3827
    %4686 = vmatprep.subr.bf16.mxu0 %v3948
    %4687 = vmatpush2.bf16.msra.mxu0 %v3947
    %4688 = vmatprep.subr.bf16.mxu0 %v3940
    %4689 = vmatpush2.bf16.msra.mxu0 %v3939
    %4690 = vmatprep.subr.bf16.mxu0 %v3932
    %4691 = vmatpush2.bf16.msra.mxu0 %v3931
    %4692 = vmatprep.subr.bf16.mxu0 %v3924
    %4693 = vmatpush2.bf16.msra.mxu0 %v3923
    %4694 = vmatprep.subr.bf16.mxu0 %v3916
    %4695 = vmatpush2.bf16.msra.mxu0 %v3915
    %4696 = vmatprep.subr.bf16.mxu0 %v3908
    %4697 = vmatpush2.bf16.msra.mxu0 %v3907
    %4698 = vmatprep.subr.bf16.mxu0 %v3900
    %4699 = vmatpush2.bf16.msra.mxu0 %v3899
    %4700 = vmatprep.subr.bf16.mxu0 %v3892
    %4701 = vmatpush2.bf16.msra.mxu0 %v3891
    %4702 = vmatprep.mubr.bf16.mxu0 %v3492
    %4703 = vmatmul.mubr.bf16.gmra.mxu0 %v3491
    %v4704 = vpop.f32.mrf.mxu0
    %v4705 = vadd.f32 0.0, %v4704
    %v4706 = vpop.f32.mrf.mxu0
    %v4707 = vadd.f32 0.0, %v4706
    %v4708 = vpop.f32.mrf.mxu0
    %v4709 = vpop.f32.mrf.mxu0
    %4710 = vdwg.mxu0
    %4711 = vmatprep.subr.bf16.mxu0 %v4012
    %4712 = vmatpush1.bf16.msra.mxu0 %v4011
    %4713 = vmatprep.subr.bf16.mxu0 %v4004
    %4714 = vmatpush1.bf16.msra.mxu0 %v4003
    %4715 = vmatprep.subr.bf16.mxu0 %v3996
    %4716 = vmatpush1.bf16.msra.mxu0 %v3995
    %4717 = vmatprep.subr.bf16.mxu0 %v3988
    %4718 = vmatpush1.bf16.msra.mxu0 %v3987
    %4719 = vmatprep.subr.bf16.mxu0 %v3980
    %4720 = vmatpush1.bf16.msra.mxu0 %v3979
    %4721 = vmatprep.subr.bf16.mxu0 %v3972
    %4722 = vmatpush1.bf16.msra.mxu0 %v3971
    %4723 = vmatprep.subr.bf16.mxu0 %v3964
    %4724 = vmatpush1.bf16.msra.mxu0 %v3963
    %4725 = vmatprep.subr.bf16.mxu0 %v3956
    %4726 = vmatpush1.bf16.msra.mxu0 %v3955
    %4727 = vmatprep.subr.bf16.mxu0 %v4076
    %4728 = vmatpush2.bf16.msra.mxu0 %v4075
    %4729 = vmatprep.subr.bf16.mxu0 %v4068
    %4730 = vmatpush2.bf16.msra.mxu0 %v4067
    %4731 = vmatprep.subr.bf16.mxu0 %v4060
    %4732 = vmatpush2.bf16.msra.mxu0 %v4059
    %4733 = vmatprep.subr.bf16.mxu0 %v4052
    %4734 = vmatpush2.bf16.msra.mxu0 %v4051
    %4735 = vmatprep.subr.bf16.mxu0 %v4044
    %4736 = vmatpush2.bf16.msra.mxu0 %v4043
    %4737 = vmatprep.subr.bf16.mxu0 %v4036
    %4738 = vmatpush2.bf16.msra.mxu0 %v4035
    %4739 = vmatprep.subr.bf16.mxu0 %v4028
    %4740 = vmatpush2.bf16.msra.mxu0 %v4027
    %4741 = vmatprep.subr.bf16.mxu0 %v4020
    %4742 = vmatpush2.bf16.msra.mxu0 %v4019
    %4743 = vmatprep.mubr.bf16.mxu0 %v3494
    %4744 = vmatmul.mubr.bf16.gmra.mxu0 %v3493
    %v4745 = vpop.f32.mrf.mxu0
    %v4746 = vadd.f32 %v4705, %v4745
    %v4747 = vpop.f32.mrf.mxu0
    %v4748 = vadd.f32 %v4707, %v4747
    %v4749 = vpop.f32.mrf.mxu0
    %v4750 = vpop.f32.mrf.mxu0
    %4751 = vdwg.mxu0
    %4752 = vmatprep.subr.bf16.mxu0 %v4140
    %4753 = vmatpush1.bf16.msra.mxu0 %v4139
    %4754 = vmatprep.subr.bf16.mxu0 %v4132
    %4755 = vmatpush1.bf16.msra.mxu0 %v4131
    %4756 = vmatprep.subr.bf16.mxu0 %v4124
    %4757 = vmatpush1.bf16.msra.mxu0 %v4123
    %4758 = vmatprep.subr.bf16.mxu0 %v4116
    %4759 = vmatpush1.bf16.msra.mxu0 %v4115
    %4760 = vmatprep.subr.bf16.mxu0 %v4108
    %4761 = vmatpush1.bf16.msra.mxu0 %v4107
    %4762 = vmatprep.subr.bf16.mxu0 %v4100
    %4763 = vmatpush1.bf16.msra.mxu0 %v4099
    %4764 = vmatprep.subr.bf16.mxu0 %v4092
    %4765 = vmatpush1.bf16.msra.mxu0 %v4091
    %4766 = vmatprep.subr.bf16.mxu0 %v4084
    %4767 = vmatpush1.bf16.msra.mxu0 %v4083
    %4768 = vmatprep.subr.bf16.mxu0 %v4204
    %4769 = vmatpush2.bf16.msra.mxu0 %v4203
    %4770 = vmatprep.subr.bf16.mxu0 %v4196
    %4771 = vmatpush2.bf16.msra.mxu0 %v4195
    %4772 = vmatprep.subr.bf16.mxu0 %v4188
    %4773 = vmatpush2.bf16.msra.mxu0 %v4187
    %4774 = vmatprep.subr.bf16.mxu0 %v4180
    %4775 = vmatpush2.bf16.msra.mxu0 %v4179
    %4776 = vmatprep.subr.bf16.mxu0 %v4172
    %4777 = vmatpush2.bf16.msra.mxu0 %v4171
    %4778 = vmatprep.subr.bf16.mxu0 %v4164
    %4779 = vmatpush2.bf16.msra.mxu0 %v4163
    %4780 = vmatprep.subr.bf16.mxu0 %v4156
    %4781 = vmatpush2.bf16.msra.mxu0 %v4155
    %4782 = vmatprep.subr.bf16.mxu0 %v4148
    %4783 = vmatpush2.bf16.msra.mxu0 %v4147
    %4784 = vmatprep.mubr.bf16.mxu0 %v3496
    %4785 = vmatmul.mubr.bf16.gmra.mxu0 %v3495
    %v4786 = vpop.f32.mrf.mxu0
    %v4787 = vadd.f32 %v4746, %v4786
    %v4788 = vpop.f32.mrf.mxu0
    %v4789 = vadd.f32 %v4748, %v4788
    %v4790 = vpop.f32.mrf.mxu0
    %v4791 = vpop.f32.mrf.mxu0
    %4792 = vdwg.mxu0
    %4793 = vmatprep.subr.bf16.mxu0 %v4268
    %4794 = vmatpush1.bf16.msra.mxu0 %v4267
    %4795 = vmatprep.subr.bf16.mxu0 %v4260
    %4796 = vmatpush1.bf16.msra.mxu0 %v4259
    %4797 = vmatprep.subr.bf16.mxu0 %v4252
    %4798 = vmatpush1.bf16.msra.mxu0 %v4251
    %4799 = vmatprep.subr.bf16.mxu0 %v4244
    %4800 = vmatpush1.bf16.msra.mxu0 %v4243
    %4801 = vmatprep.subr.bf16.mxu0 %v4236
    %4802 = vmatpush1.bf16.msra.mxu0 %v4235
    %4803 = vmatprep.subr.bf16.mxu0 %v4228
    %4804 = vmatpush1.bf16.msra.mxu0 %v4227
    %4805 = vmatprep.subr.bf16.mxu0 %v4220
    %4806 = vmatpush1.bf16.msra.mxu0 %v4219
    %4807 = vmatprep.subr.bf16.mxu0 %v4212
    %4808 = vmatpush1.bf16.msra.mxu0 %v4211
    %4809 = vmatprep.subr.bf16.mxu0 %v4332
    %4810 = vmatpush2.bf16.msra.mxu0 %v4331
    %4811 = vmatprep.subr.bf16.mxu0 %v4324
    %4812 = vmatpush2.bf16.msra.mxu0 %v4323
    %4813 = vmatprep.subr.bf16.mxu0 %v4316
    %4814 = vmatpush2.bf16.msra.mxu0 %v4315
    %4815 = vmatprep.subr.bf16.mxu0 %v4308
    %4816 = vmatpush2.bf16.msra.mxu0 %v4307
    %4817 = vmatprep.subr.bf16.mxu0 %v4300
    %4818 = vmatpush2.bf16.msra.mxu0 %v4299
    %4819 = vmatprep.subr.bf16.mxu0 %v4292
    %4820 = vmatpush2.bf16.msra.mxu0 %v4291
    %4821 = vmatprep.subr.bf16.mxu0 %v4284
    %4822 = vmatpush2.bf16.msra.mxu0 %v4283
    %4823 = vmatprep.subr.bf16.mxu0 %v4276
    %4824 = vmatpush2.bf16.msra.mxu0 %v4275
    %4825 = vmatprep.mubr.bf16.mxu0 %v3498
    %4826 = vmatmul.mubr.bf16.gmra.mxu0 %v3497
    %v4827 = vpop.f32.mrf.mxu0
    %v4828 = vadd.f32 %v4787, %v4827
    %v4829 = vpop.f32.mrf.mxu0
    %v4830 = vadd.f32 %v4789, %v4829
    %v4831 = vpop.f32.mrf.mxu0
    %v4832 = vpop.f32.mrf.mxu0
    %4833 = vdwg.mxu0
    %4834 = vmatprep.subr.bf16.mxu0 %v4396
    %4835 = vmatpush1.bf16.msra.mxu0 %v4395
    %4836 = vmatprep.subr.bf16.mxu0 %v4388
    %4837 = vmatpush1.bf16.msra.mxu0 %v4387
    %4838 = vmatprep.subr.bf16.mxu0 %v4380
    %4839 = vmatpush1.bf16.msra.mxu0 %v4379
    %4840 = vmatprep.subr.bf16.mxu0 %v4372
    %4841 = vmatpush1.bf16.msra.mxu0 %v4371
    %4842 = vmatprep.subr.bf16.mxu0 %v4364
    %4843 = vmatpush1.bf16.msra.mxu0 %v4363
    %4844 = vmatprep.subr.bf16.mxu0 %v4356
    %4845 = vmatpush1.bf16.msra.mxu0 %v4355
    %4846 = vmatprep.subr.bf16.mxu0 %v4348
    %4847 = vmatpush1.bf16.msra.mxu0 %v4347
    %4848 = vmatprep.subr.bf16.mxu0 %v4340
    %4849 = vmatpush1.bf16.msra.mxu0 %v4339
    %4850 = vmatprep.subr.bf16.mxu0 %v4460
    %4851 = vmatpush2.bf16.msra.mxu0 %v4459
    %4852 = vmatprep.subr.bf16.mxu0 %v4452
    %4853 = vmatpush2.bf16.msra.mxu0 %v4451
    %4854 = vmatprep.subr.bf16.mxu0 %v4444
    %4855 = vmatpush2.bf16.msra.mxu0 %v4443
    %4856 = vmatprep.subr.bf16.mxu0 %v4436
    %4857 = vmatpush2.bf16.msra.mxu0 %v4435
    %4858 = vmatprep.subr.bf16.mxu0 %v4428
    %4859 = vmatpush2.bf16.msra.mxu0 %v4427
    %4860 = vmatprep.subr.bf16.mxu0 %v4420
    %4861 = vmatpush2.bf16.msra.mxu0 %v4419
    %4862 = vmatprep.subr.bf16.mxu0 %v4412
    %4863 = vmatpush2.bf16.msra.mxu0 %v4411
    %4864 = vmatprep.subr.bf16.mxu0 %v4404
    %4865 = vmatpush2.bf16.msra.mxu0 %v4403
    %4866 = vmatprep.mubr.bf16.mxu0 %v3500
    %4867 = vmatmul.mubr.bf16.gmra.mxu0 %v3499
    %v4868 = vpop.f32.mrf.mxu0
    %v4869 = vadd.f32 %v4828, %v4868
    %v4870 = vpop.f32.mrf.mxu0
    %v4871 = vadd.f32 %v4830, %v4870
    %v4872 = vpop.f32.mrf.mxu0
    %v4873 = vpop.f32.mrf.mxu0
    %4874 = vdwg.mxu0
    %4875 = vmatprep.subr.bf16.mxu0 %v3886
    %4876 = vmatpush1.bf16.msra.mxu0 %v3885
    %4877 = vmatprep.subr.bf16.mxu0 %v3878
    %4878 = vmatpush1.bf16.msra.mxu0 %v3877
    %4879 = vmatprep.subr.bf16.mxu0 %v3870
    %4880 = vmatpush1.bf16.msra.mxu0 %v3869
    %4881 = vmatprep.subr.bf16.mxu0 %v3862
    %4882 = vmatpush1.bf16.msra.mxu0 %v3861
    %4883 = vmatprep.subr.bf16.mxu0 %v3854
    %4884 = vmatpush1.bf16.msra.mxu0 %v3853
    %4885 = vmatprep.subr.bf16.mxu0 %v3846
    %4886 = vmatpush1.bf16.msra.mxu0 %v3845
    %4887 = vmatprep.subr.bf16.mxu0 %v3838
    %4888 = vmatpush1.bf16.msra.mxu0 %v3837
    %4889 = vmatprep.subr.bf16.mxu0 %v3830
    %4890 = vmatpush1.bf16.msra.mxu0 %v3829
    %4891 = vmatprep.subr.bf16.mxu0 %v3950
    %4892 = vmatpush2.bf16.msra.mxu0 %v3949
    %4893 = vmatprep.subr.bf16.mxu0 %v3942
    %4894 = vmatpush2.bf16.msra.mxu0 %v3941
    %4895 = vmatprep.subr.bf16.mxu0 %v3934
    %4896 = vmatpush2.bf16.msra.mxu0 %v3933
    %4897 = vmatprep.subr.bf16.mxu0 %v3926
    %4898 = vmatpush2.bf16.msra.mxu0 %v3925
    %4899 = vmatprep.subr.bf16.mxu0 %v3918
    %4900 = vmatpush2.bf16.msra.mxu0 %v3917
    %4901 = vmatprep.subr.bf16.mxu0 %v3910
    %4902 = vmatpush2.bf16.msra.mxu0 %v3909
    %4903 = vmatprep.subr.bf16.mxu0 %v3902
    %4904 = vmatpush2.bf16.msra.mxu0 %v3901
    %4905 = vmatprep.subr.bf16.mxu0 %v3894
    %4906 = vmatpush2.bf16.msra.mxu0 %v3893
    %4907 = vmatprep.mubr.bf16.mxu0 %v3492
    %4908 = vmatmul.mubr.bf16.gmra.mxu0 %v3491
    %v4909 = vpop.f32.mrf.mxu0
    %v4910 = vadd.f32 0.0, %v4909
    %v4911 = vpop.f32.mrf.mxu0
    %v4912 = vadd.f32 0.0, %v4911
    %v4913 = vpop.f32.mrf.mxu0
    %v4914 = vpop.f32.mrf.mxu0
    %4915 = vdwg.mxu0
    %4916 = vmatprep.subr.bf16.mxu0 %v4014
    %4917 = vmatpush1.bf16.msra.mxu0 %v4013
    %4918 = vmatprep.subr.bf16.mxu0 %v4006
    %4919 = vmatpush1.bf16.msra.mxu0 %v4005
    %4920 = vmatprep.subr.bf16.mxu0 %v3998
    %4921 = vmatpush1.bf16.msra.mxu0 %v3997
    %4922 = vmatprep.subr.bf16.mxu0 %v3990
    %4923 = vmatpush1.bf16.msra.mxu0 %v3989
    %4924 = vmatprep.subr.bf16.mxu0 %v3982
    %4925 = vmatpush1.bf16.msra.mxu0 %v3981
    %4926 = vmatprep.subr.bf16.mxu0 %v3974
    %4927 = vmatpush1.bf16.msra.mxu0 %v3973
    %4928 = vmatprep.subr.bf16.mxu0 %v3966
    %4929 = vmatpush1.bf16.msra.mxu0 %v3965
    %4930 = vmatprep.subr.bf16.mxu0 %v3958
    %4931 = vmatpush1.bf16.msra.mxu0 %v3957
    %4932 = vmatprep.subr.bf16.mxu0 %v4078
    %4933 = vmatpush2.bf16.msra.mxu0 %v4077
    %4934 = vmatprep.subr.bf16.mxu0 %v4070
    %4935 = vmatpush2.bf16.msra.mxu0 %v4069
    %4936 = vmatprep.subr.bf16.mxu0 %v4062
    %4937 = vmatpush2.bf16.msra.mxu0 %v4061
    %4938 = vmatprep.subr.bf16.mxu0 %v4054
    %4939 = vmatpush2.bf16.msra.mxu0 %v4053
    %4940 = vmatprep.subr.bf16.mxu0 %v4046
    %4941 = vmatpush2.bf16.msra.mxu0 %v4045
    %4942 = vmatprep.subr.bf16.mxu0 %v4038
    %4943 = vmatpush2.bf16.msra.mxu0 %v4037
    %4944 = vmatprep.subr.bf16.mxu0 %v4030
    %4945 = vmatpush2.bf16.msra.mxu0 %v4029
    %4946 = vmatprep.subr.bf16.mxu0 %v4022
    %4947 = vmatpush2.bf16.msra.mxu0 %v4021
    %4948 = vmatprep.mubr.bf16.mxu0 %v3494
    %4949 = vmatmul.mubr.bf16.gmra.mxu0 %v3493
    %v4950 = vpop.f32.mrf.mxu0
    %v4951 = vadd.f32 %v4910, %v4950
    %v4952 = vpop.f32.mrf.mxu0
    %v4953 = vadd.f32 %v4912, %v4952
    %v4954 = vpop.f32.mrf.mxu0
    %v4955 = vpop.f32.mrf.mxu0
    %4956 = vdwg.mxu0
    %4957 = vmatprep.subr.bf16.mxu0 %v4142
    %4958 = vmatpush1.bf16.msra.mxu0 %v4141
    %4959 = vmatprep.subr.bf16.mxu0 %v4134
    %4960 = vmatpush1.bf16.msra.mxu0 %v4133
    %4961 = vmatprep.subr.bf16.mxu0 %v4126
    %4962 = vmatpush1.bf16.msra.mxu0 %v4125
    %4963 = vmatprep.subr.bf16.mxu0 %v4118
    %4964 = vmatpush1.bf16.msra.mxu0 %v4117
    %4965 = vmatprep.subr.bf16.mxu0 %v4110
    %4966 = vmatpush1.bf16.msra.mxu0 %v4109
    %4967 = vmatprep.subr.bf16.mxu0 %v4102
    %4968 = vmatpush1.bf16.msra.mxu0 %v4101
    %4969 = vmatprep.subr.bf16.mxu0 %v4094
    %4970 = vmatpush1.bf16.msra.mxu0 %v4093
    %4971 = vmatprep.subr.bf16.mxu0 %v4086
    %4972 = vmatpush1.bf16.msra.mxu0 %v4085
    %4973 = vmatprep.subr.bf16.mxu0 %v4206
    %4974 = vmatpush2.bf16.msra.mxu0 %v4205
    %4975 = vmatprep.subr.bf16.mxu0 %v4198
    %4976 = vmatpush2.bf16.msra.mxu0 %v4197
    %4977 = vmatprep.subr.bf16.mxu0 %v4190
    %4978 = vmatpush2.bf16.msra.mxu0 %v4189
    %4979 = vmatprep.subr.bf16.mxu0 %v4182
    %4980 = vmatpush2.bf16.msra.mxu0 %v4181
    %4981 = vmatprep.subr.bf16.mxu0 %v4174
    %4982 = vmatpush2.bf16.msra.mxu0 %v4173
    %4983 = vmatprep.subr.bf16.mxu0 %v4166
    %4984 = vmatpush2.bf16.msra.mxu0 %v4165
    %4985 = vmatprep.subr.bf16.mxu0 %v4158
    %4986 = vmatpush2.bf16.msra.mxu0 %v4157
    %4987 = vmatprep.subr.bf16.mxu0 %v4150
    %4988 = vmatpush2.bf16.msra.mxu0 %v4149
    %4989 = vmatprep.mubr.bf16.mxu0 %v3496
    %4990 = vmatmul.mubr.bf16.gmra.mxu0 %v3495
    %v4991 = vpop.f32.mrf.mxu0
    %v4992 = vadd.f32 %v4951, %v4991
    %v4993 = vpop.f32.mrf.mxu0
    %v4994 = vadd.f32 %v4953, %v4993
    %v4995 = vpop.f32.mrf.mxu0
    %v4996 = vpop.f32.mrf.mxu0
    %4997 = vdwg.mxu0
    %4998 = vmatprep.subr.bf16.mxu0 %v4270
    %4999 = vmatpush1.bf16.msra.mxu0 %v4269
    %5000 = vmatprep.subr.bf16.mxu0 %v4262
    %5001 = vmatpush1.bf16.msra.mxu0 %v4261
    %5002 = vmatprep.subr.bf16.mxu0 %v4254
    %5003 = vmatpush1.bf16.msra.mxu0 %v4253
    %5004 = vmatprep.subr.bf16.mxu0 %v4246
    %5005 = vmatpush1.bf16.msra.mxu0 %v4245
    %5006 = vmatprep.subr.bf16.mxu0 %v4238
    %5007 = vmatpush1.bf16.msra.mxu0 %v4237
    %5008 = vmatprep.subr.bf16.mxu0 %v4230
    %5009 = vmatpush1.bf16.msra.mxu0 %v4229
    %5010 = vmatprep.subr.bf16.mxu0 %v4222
    %5011 = vmatpush1.bf16.msra.mxu0 %v4221
    %5012 = vmatprep.subr.bf16.mxu0 %v4214
    %5013 = vmatpush1.bf16.msra.mxu0 %v4213
    %5014 = vmatprep.subr.bf16.mxu0 %v4334
    %5015 = vmatpush2.bf16.msra.mxu0 %v4333
    %5016 = vmatprep.subr.bf16.mxu0 %v4326
    %5017 = vmatpush2.bf16.msra.mxu0 %v4325
    %5018 = vmatprep.subr.bf16.mxu0 %v4318
    %5019 = vmatpush2.bf16.msra.mxu0 %v4317
    %5020 = vmatprep.subr.bf16.mxu0 %v4310
    %5021 = vmatpush2.bf16.msra.mxu0 %v4309
    %5022 = vmatprep.subr.bf16.mxu0 %v4302
    %5023 = vmatpush2.bf16.msra.mxu0 %v4301
    %5024 = vmatprep.subr.bf16.mxu0 %v4294
    %5025 = vmatpush2.bf16.msra.mxu0 %v4293
    %5026 = vmatprep.subr.bf16.mxu0 %v4286
    %5027 = vmatpush2.bf16.msra.mxu0 %v4285
    %5028 = vmatprep.subr.bf16.mxu0 %v4278
    %5029 = vmatpush2.bf16.msra.mxu0 %v4277
    %5030 = vmatprep.mubr.bf16.mxu0 %v3498
    %5031 = vmatmul.mubr.bf16.gmra.mxu0 %v3497
    %v5032 = vpop.f32.mrf.mxu0
    %v5033 = vadd.f32 %v4992, %v5032
    %v5034 = vpop.f32.mrf.mxu0
    %v5035 = vadd.f32 %v4994, %v5034
    %v5036 = vpop.f32.mrf.mxu0
    %v5037 = vpop.f32.mrf.mxu0
    %5038 = vdwg.mxu0
    %5039 = vmatprep.subr.bf16.mxu0 %v4398
    %5040 = vmatpush1.bf16.msra.mxu0 %v4397
    %5041 = vmatprep.subr.bf16.mxu0 %v4390
    %5042 = vmatpush1.bf16.msra.mxu0 %v4389
    %5043 = vmatprep.subr.bf16.mxu0 %v4382
    %5044 = vmatpush1.bf16.msra.mxu0 %v4381
    %5045 = vmatprep.subr.bf16.mxu0 %v4374
    %5046 = vmatpush1.bf16.msra.mxu0 %v4373
    %5047 = vmatprep.subr.bf16.mxu0 %v4366
    %5048 = vmatpush1.bf16.msra.mxu0 %v4365
    %5049 = vmatprep.subr.bf16.mxu0 %v4358
    %5050 = vmatpush1.bf16.msra.mxu0 %v4357
    %5051 = vmatprep.subr.bf16.mxu0 %v4350
    %5052 = vmatpush1.bf16.msra.mxu0 %v4349
    %5053 = vmatprep.subr.bf16.mxu0 %v4342
    %5054 = vmatpush1.bf16.msra.mxu0 %v4341
    %5055 = vmatprep.subr.bf16.mxu0 %v4462
    %5056 = vmatpush2.bf16.msra.mxu0 %v4461
    %5057 = vmatprep.subr.bf16.mxu0 %v4454
    %5058 = vmatpush2.bf16.msra.mxu0 %v4453
    %5059 = vmatprep.subr.bf16.mxu0 %v4446
    %5060 = vmatpush2.bf16.msra.mxu0 %v4445
    %5061 = vmatprep.subr.bf16.mxu0 %v4438
    %5062 = vmatpush2.bf16.msra.mxu0 %v4437
    %5063 = vmatprep.subr.bf16.mxu0 %v4430
    %5064 = vmatpush2.bf16.msra.mxu0 %v4429
    %5065 = vmatprep.subr.bf16.mxu0 %v4422
    %5066 = vmatpush2.bf16.msra.mxu0 %v4421
    %5067 = vmatprep.subr.bf16.mxu0 %v4414
    %5068 = vmatpush2.bf16.msra.mxu0 %v4413
    %5069 = vmatprep.subr.bf16.mxu0 %v4406
    %5070 = vmatpush2.bf16.msra.mxu0 %v4405
    %5071 = vmatprep.mubr.bf16.mxu0 %v3500
    %5072 = vmatmul.mubr.bf16.gmra.mxu0 %v3499
    %v5073 = vpop.f32.mrf.mxu0
    %v5074 = vadd.f32 %v5033, %v5073
    %v5075 = vpop.f32.mrf.mxu0
    %v5076 = vadd.f32 %v5035, %v5075
    %v5077 = vpop.f32.mrf.mxu0
    %v5078 = vpop.f32.mrf.mxu0
    %5079 = vdwg.mxu0
    %5080 = vmatprep.subr.bf16.mxu0 %v3888
    %5081 = vmatpush1.bf16.msra.mxu0 %v3887
    %5082 = vmatprep.subr.bf16.mxu0 %v3880
    %5083 = vmatpush1.bf16.msra.mxu0 %v3879
    %5084 = vmatprep.subr.bf16.mxu0 %v3872
    %5085 = vmatpush1.bf16.msra.mxu0 %v3871
    %5086 = vmatprep.subr.bf16.mxu0 %v3864
    %5087 = vmatpush1.bf16.msra.mxu0 %v3863
    %5088 = vmatprep.subr.bf16.mxu0 %v3856
    %5089 = vmatpush1.bf16.msra.mxu0 %v3855
    %5090 = vmatprep.subr.bf16.mxu0 %v3848
    %5091 = vmatpush1.bf16.msra.mxu0 %v3847
    %5092 = vmatprep.subr.bf16.mxu0 %v3840
    %5093 = vmatpush1.bf16.msra.mxu0 %v3839
    %5094 = vmatprep.subr.bf16.mxu0 %v3832
    %5095 = vmatpush1.bf16.msra.mxu0 %v3831
    %5096 = vmatprep.subr.bf16.mxu0 %v3952
    %5097 = vmatpush2.bf16.msra.mxu0 %v3951
    %5098 = vmatprep.subr.bf16.mxu0 %v3944
    %5099 = vmatpush2.bf16.msra.mxu0 %v3943
    %5100 = vmatprep.subr.bf16.mxu0 %v3936
    %5101 = vmatpush2.bf16.msra.mxu0 %v3935
    %5102 = vmatprep.subr.bf16.mxu0 %v3928
    %5103 = vmatpush2.bf16.msra.mxu0 %v3927
    %5104 = vmatprep.subr.bf16.mxu0 %v3920
    %5105 = vmatpush2.bf16.msra.mxu0 %v3919
    %5106 = vmatprep.subr.bf16.mxu0 %v3912
    %5107 = vmatpush2.bf16.msra.mxu0 %v3911
    %5108 = vmatprep.subr.bf16.mxu0 %v3904
    %5109 = vmatpush2.bf16.msra.mxu0 %v3903
    %5110 = vmatprep.subr.bf16.mxu0 %v3896
    %5111 = vmatpush2.bf16.msra.mxu0 %v3895
    %5112 = vmatprep.mubr.bf16.mxu0 %v3492
    %5113 = vmatmul.mubr.bf16.gmra.mxu0 %v3491
    %v5114 = vpop.f32.mrf.mxu0
    %v5115 = vadd.f32 0.0, %v5114
    %v5116 = vpop.f32.mrf.mxu0
    %v5117 = vadd.f32 0.0, %v5116
    %v5118 = vpop.f32.mrf.mxu0
    %v5119 = vpop.f32.mrf.mxu0
    %5120 = vdwg.mxu0
    %5121 = vmatprep.subr.bf16.mxu0 %v4016
    %5122 = vmatpush1.bf16.msra.mxu0 %v4015
    %5123 = vmatprep.subr.bf16.mxu0 %v4008
    %5124 = vmatpush1.bf16.msra.mxu0 %v4007
    %5125 = vmatprep.subr.bf16.mxu0 %v4000
    %5126 = vmatpush1.bf16.msra.mxu0 %v3999
    %5127 = vmatprep.subr.bf16.mxu0 %v3992
    %5128 = vmatpush1.bf16.msra.mxu0 %v3991
    %5129 = vmatprep.subr.bf16.mxu0 %v3984
    %5130 = vmatpush1.bf16.msra.mxu0 %v3983
    %5131 = vmatprep.subr.bf16.mxu0 %v3976
    %5132 = vmatpush1.bf16.msra.mxu0 %v3975
    %5133 = vmatprep.subr.bf16.mxu0 %v3968
    %5134 = vmatpush1.bf16.msra.mxu0 %v3967
    %5135 = vmatprep.subr.bf16.mxu0 %v3960
    %5136 = vmatpush1.bf16.msra.mxu0 %v3959
    %5137 = vmatprep.subr.bf16.mxu0 %v4080
    %5138 = vmatpush2.bf16.msra.mxu0 %v4079
    %5139 = vmatprep.subr.bf16.mxu0 %v4072
    %5140 = vmatpush2.bf16.msra.mxu0 %v4071
    %5141 = vmatprep.subr.bf16.mxu0 %v4064
    %5142 = vmatpush2.bf16.msra.mxu0 %v4063
    %5143 = vmatprep.subr.bf16.mxu0 %v4056
    %5144 = vmatpush2.bf16.msra.mxu0 %v4055
    %5145 = vmatprep.subr.bf16.mxu0 %v4048
    %5146 = vmatpush2.bf16.msra.mxu0 %v4047
    %5147 = vmatprep.subr.bf16.mxu0 %v4040
    %5148 = vmatpush2.bf16.msra.mxu0 %v4039
    %5149 = vmatprep.subr.bf16.mxu0 %v4032
    %5150 = vmatpush2.bf16.msra.mxu0 %v4031
    %5151 = vmatprep.subr.bf16.mxu0 %v4024
    %5152 = vmatpush2.bf16.msra.mxu0 %v4023
    %5153 = vmatprep.mubr.bf16.mxu0 %v3494
    %5154 = vmatmul.mubr.bf16.gmra.mxu0 %v3493
    %v5155 = vpop.f32.mrf.mxu0
    %v5156 = vadd.f32 %v5115, %v5155
    %v5157 = vpop.f32.mrf.mxu0
    %v5158 = vadd.f32 %v5117, %v5157
    %v5159 = vpop.f32.mrf.mxu0
    %v5160 = vpop.f32.mrf.mxu0
    %5161 = vdwg.mxu0
    %5162 = vmatprep.subr.bf16.mxu0 %v4144
    %5163 = vmatpush1.bf16.msra.mxu0 %v4143
    %5164 = vmatprep.subr.bf16.mxu0 %v4136
    %5165 = vmatpush1.bf16.msra.mxu0 %v4135
    %5166 = vmatprep.subr.bf16.mxu0 %v4128
    %5167 = vmatpush1.bf16.msra.mxu0 %v4127
    %5168 = vmatprep.subr.bf16.mxu0 %v4120
    %5169 = vmatpush1.bf16.msra.mxu0 %v4119
    %5170 = vmatprep.subr.bf16.mxu0 %v4112
    %5171 = vmatpush1.bf16.msra.mxu0 %v4111
    %5172 = vmatprep.subr.bf16.mxu0 %v4104
    %5173 = vmatpush1.bf16.msra.mxu0 %v4103
    %5174 = vmatprep.subr.bf16.mxu0 %v4096
    %5175 = vmatpush1.bf16.msra.mxu0 %v4095
    %5176 = vmatprep.subr.bf16.mxu0 %v4088
    %5177 = vmatpush1.bf16.msra.mxu0 %v4087
    %5178 = vmatprep.subr.bf16.mxu0 %v4208
    %5179 = vmatpush2.bf16.msra.mxu0 %v4207
    %5180 = vmatprep.subr.bf16.mxu0 %v4200
    %5181 = vmatpush2.bf16.msra.mxu0 %v4199
    %5182 = vmatprep.subr.bf16.mxu0 %v4192
    %5183 = vmatpush2.bf16.msra.mxu0 %v4191
    %5184 = vmatprep.subr.bf16.mxu0 %v4184
    %5185 = vmatpush2.bf16.msra.mxu0 %v4183
    %5186 = vmatprep.subr.bf16.mxu0 %v4176
    %5187 = vmatpush2.bf16.msra.mxu0 %v4175
    %5188 = vmatprep.subr.bf16.mxu0 %v4168
    %5189 = vmatpush2.bf16.msra.mxu0 %v4167
    %5190 = vmatprep.subr.bf16.mxu0 %v4160
    %5191 = vmatpush2.bf16.msra.mxu0 %v4159
    %5192 = vmatprep.subr.bf16.mxu0 %v4152
    %5193 = vmatpush2.bf16.msra.mxu0 %v4151
    %5194 = vmatprep.mubr.bf16.mxu0 %v3496
    %5195 = vmatmul.mubr.bf16.gmra.mxu0 %v3495
    %v5196 = vpop.f32.mrf.mxu0
    %v5197 = vadd.f32 %v5156, %v5196
    %v5198 = vpop.f32.mrf.mxu0
    %v5199 = vadd.f32 %v5158, %v5198
    %v5200 = vpop.f32.mrf.mxu0
    %v5201 = vpop.f32.mrf.mxu0
    %5202 = vdwg.mxu0
    %5203 = vmatprep.subr.bf16.mxu0 %v4272
    %5204 = vmatpush1.bf16.msra.mxu0 %v4271
    %5205 = vmatprep.subr.bf16.mxu0 %v4264
    %5206 = vmatpush1.bf16.msra.mxu0 %v4263
    %5207 = vmatprep.subr.bf16.mxu0 %v4256
    %5208 = vmatpush1.bf16.msra.mxu0 %v4255
    %5209 = vmatprep.subr.bf16.mxu0 %v4248
    %5210 = vmatpush1.bf16.msra.mxu0 %v4247
    %5211 = vmatprep.subr.bf16.mxu0 %v4240
    %5212 = vmatpush1.bf16.msra.mxu0 %v4239
    %5213 = vmatprep.subr.bf16.mxu0 %v4232
    %5214 = vmatpush1.bf16.msra.mxu0 %v4231
    %5215 = vmatprep.subr.bf16.mxu0 %v4224
    %5216 = vmatpush1.bf16.msra.mxu0 %v4223
    %5217 = vmatprep.subr.bf16.mxu0 %v4216
    %5218 = vmatpush1.bf16.msra.mxu0 %v4215
    %5219 = vmatprep.subr.bf16.mxu0 %v4336
    %5220 = vmatpush2.bf16.msra.mxu0 %v4335
    %5221 = vmatprep.subr.bf16.mxu0 %v4328
    %5222 = vmatpush2.bf16.msra.mxu0 %v4327
    %5223 = vmatprep.subr.bf16.mxu0 %v4320
    %5224 = vmatpush2.bf16.msra.mxu0 %v4319
    %5225 = vmatprep.subr.bf16.mxu0 %v4312
    %5226 = vmatpush2.bf16.msra.mxu0 %v4311
    %5227 = vmatprep.subr.bf16.mxu0 %v4304
    %5228 = vmatpush2.bf16.msra.mxu0 %v4303
    %5229 = vmatprep.subr.bf16.mxu0 %v4296
    %5230 = vmatpush2.bf16.msra.mxu0 %v4295
    %5231 = vmatprep.subr.bf16.mxu0 %v4288
    %5232 = vmatpush2.bf16.msra.mxu0 %v4287
    %5233 = vmatprep.subr.bf16.mxu0 %v4280
    %5234 = vmatpush2.bf16.msra.mxu0 %v4279
    %5235 = vmatprep.mubr.bf16.mxu0 %v3498
    %5236 = vmatmul.mubr.bf16.gmra.mxu0 %v3497
    %v5237 = vpop.f32.mrf.mxu0
    %v5238 = vadd.f32 %v5197, %v5237
    %v5239 = vpop.f32.mrf.mxu0
    %v5240 = vadd.f32 %v5199, %v5239
    %v5241 = vpop.f32.mrf.mxu0
    %v5242 = vpop.f32.mrf.mxu0
    %5243 = vdwg.mxu0
    %5244 = vmatprep.subr.bf16.mxu0 %v4400
    %5245 = vmatpush1.bf16.msra.mxu0 %v4399
    %5246 = vmatprep.subr.bf16.mxu0 %v4392
    %5247 = vmatpush1.bf16.msra.mxu0 %v4391
    %5248 = vmatprep.subr.bf16.mxu0 %v4384
    %5249 = vmatpush1.bf16.msra.mxu0 %v4383
    %5250 = vmatprep.subr.bf16.mxu0 %v4376
    %5251 = vmatpush1.bf16.msra.mxu0 %v4375
    %5252 = vmatprep.subr.bf16.mxu0 %v4368
    %5253 = vmatpush1.bf16.msra.mxu0 %v4367
    %5254 = vmatprep.subr.bf16.mxu0 %v4360
    %5255 = vmatpush1.bf16.msra.mxu0 %v4359
    %5256 = vmatprep.subr.bf16.mxu0 %v4352
    %5257 = vmatpush1.bf16.msra.mxu0 %v4351
    %5258 = vmatprep.subr.bf16.mxu0 %v4344
    %5259 = vmatpush1.bf16.msra.mxu0 %v4343
    %5260 = vmatprep.subr.bf16.mxu0 %v4464
    %5261 = vmatpush2.bf16.msra.mxu0 %v4463
    %5262 = vmatprep.subr.bf16.mxu0 %v4456
    %5263 = vmatpush2.bf16.msra.mxu0 %v4455
    %5264 = vmatprep.subr.bf16.mxu0 %v4448
    %5265 = vmatpush2.bf16.msra.mxu0 %v4447
    %5266 = vmatprep.subr.bf16.mxu0 %v4440
    %5267 = vmatpush2.bf16.msra.mxu0 %v4439
    %5268 = vmatprep.subr.bf16.mxu0 %v4432
    %5269 = vmatpush2.bf16.msra.mxu0 %v4431
    %5270 = vmatprep.subr.bf16.mxu0 %v4424
    %5271 = vmatpush2.bf16.msra.mxu0 %v4423
    %5272 = vmatprep.subr.bf16.mxu0 %v4416
    %5273 = vmatpush2.bf16.msra.mxu0 %v4415
    %5274 = vmatprep.subr.bf16.mxu0 %v4408
    %5275 = vmatpush2.bf16.msra.mxu0 %v4407
    %5276 = vmatprep.mubr.bf16.mxu0 %v3500
    %5277 = vmatmul.mubr.bf16.gmra.mxu0 %v3499
    %v5278 = vpop.f32.mrf.mxu0
    %v5279 = vadd.f32 %v5238, %v5278
    %v5280 = vpop.f32.mrf.mxu0
    %v5281 = vadd.f32 %v5240, %v5280
    %v5282 = vpop.f32.mrf.mxu0
    %v5283 = vpop.f32.mrf.mxu0
    %5284 = vdwg.mxu0
    %s5285 = scalar_lea.vmem [#allocation17], 3
    %v5286 = vld [vmem:[%s5285] ss:$8 sm:$0xf]
    %v5287 = vld [vmem:[%s5285] ss:$8 sm:$0xf0]
    %v5288 = vor.u32 %v5286, %v5287
    %s5289 = scalar_lea.vmem [#allocation17], 2
    %v5290 = vld [vmem:[%s5289] ss:$8 sm:$0xf]
    %v5291 = vld [vmem:[%s5289] ss:$8 sm:$0xf0]
    %v5292 = vor.u32 %v5290, %v5291
    %v5294 = vlaneseq
    %v5295 = vshrl.u32 %v5294, 7
    %v5296 = vsub.s32 0, %v5295
    %v5297 = vrot.slane %v5288, %v5296
    %v5298 = vlaneseq
    %v5299 = vshrl.u32 %v5298, 7
    %v5300 = vsub.s32 1, %v5299
    %v5301 = vrot.slane %v5288, %v5300
    %v5302 = vlaneseq
    %v5303 = vshrl.u32 %v5302, 7
    %v5304 = vsub.s32 2, %v5303
    %v5305 = vrot.slane %v5288, %v5304
    %v5306 = vlaneseq
    %v5307 = vshrl.u32 %v5306, 7
    %v5308 = vsub.s32 3, %v5307
    %v5309 = vrot.slane %v5288, %v5308
    %v5310 = vlaneseq
    %v5311 = vshrl.u32 %v5310, 7
    %v5312 = vsub.s32 4, %v5311
    %v5313 = vrot.slane %v5288, %v5312
    %v5314 = vlaneseq
    %v5315 = vshrl.u32 %v5314, 7
    %v5316 = vsub.s32 5, %v5315
    %v5317 = vrot.slane %v5288, %v5316
    %v5318 = vlaneseq
    %v5319 = vshrl.u32 %v5318, 7
    %v5320 = vsub.s32 6, %v5319
    %v5321 = vrot.slane %v5288, %v5320
    %v5322 = vlaneseq
    %v5323 = vshrl.u32 %v5322, 7
    %v5324 = vsub.s32 7, %v5323
    %v5325 = vrot.slane %v5288, %v5324
    %v5334 = vmul.f32 %v4664, %v5297
    %v5335 = vmul.f32 %v4666, %v5301
    %v5336 = vmul.f32 %v4869, %v5305
    %v5337 = vmul.f32 %v4871, %v5309
    %v5338 = vmul.f32 %v5074, %v5313
    %v5339 = vmul.f32 %v5076, %v5317
    %v5340 = vmul.f32 %v5279, %v5321
    %v5341 = vmul.f32 %v5281, %v5325
    %v5343 = vlaneseq
    %v5344 = vshrl.u32 %v5343, 7
    %v5345 = vsub.s32 0, %v5344
    %v5346 = vrot.slane %v5292, %v5345
    %v5347 = vlaneseq
    %v5348 = vshrl.u32 %v5347, 7
    %v5349 = vsub.s32 1, %v5348
    %v5350 = vrot.slane %v5292, %v5349
    %v5351 = vlaneseq
    %v5352 = vshrl.u32 %v5351, 7
    %v5353 = vsub.s32 2, %v5352
    %v5354 = vrot.slane %v5292, %v5353
    %v5355 = vlaneseq
    %v5356 = vshrl.u32 %v5355, 7
    %v5357 = vsub.s32 3, %v5356
    %v5358 = vrot.slane %v5292, %v5357
    %v5359 = vlaneseq
    %v5360 = vshrl.u32 %v5359, 7
    %v5361 = vsub.s32 4, %v5360
    %v5362 = vrot.slane %v5292, %v5361
    %v5363 = vlaneseq
    %v5364 = vshrl.u32 %v5363, 7
    %v5365 = vsub.s32 5, %v5364
    %v5366 = vrot.slane %v5292, %v5365
    %v5367 = vlaneseq
    %v5368 = vshrl.u32 %v5367, 7
    %v5369 = vsub.s32 6, %v5368
    %v5370 = vrot.slane %v5292, %v5369
    %v5371 = vlaneseq
    %v5372 = vshrl.u32 %v5371, 7
    %v5373 = vsub.s32 7, %v5372
    %v5374 = vrot.slane %v5292, %v5373
    %v5383 = vadd.f32 %v5334, %v5346
    %v5384 = vadd.f32 %v5335, %v5350
    %v5385 = vadd.f32 %v5336, %v5354
    %v5386 = vadd.f32 %v5337, %v5358
    %v5387 = vadd.f32 %v5338, %v5362
    %v5388 = vadd.f32 %v5339, %v5366
    %v5389 = vadd.f32 %v5340, %v5370
    %v5390 = vadd.f32 %v5341, %v5374
    %vm5391 = vcmp.gt.f32.partialorder %v5383, 0.0
    %vm5392 = vcmp.gt.f32.partialorder %v5384, 0.0
    %vm5393 = vcmp.gt.f32.partialorder %v5385, 0.0
    %vm5394 = vcmp.gt.f32.partialorder %v5386, 0.0
    %vm5395 = vcmp.gt.f32.partialorder %v5387, 0.0
    %vm5396 = vcmp.gt.f32.partialorder %v5388, 0.0
    %vm5397 = vcmp.gt.f32.partialorder %v5389, 0.0
    %vm5398 = vcmp.gt.f32.partialorder %v5390, 0.0
    %v5399 = vstv %s71
    %v5400 = vmul.f32 %v5399, %v5383
    %v5401 = vmul.f32 %v5399, %v5384
    %v5402 = vmul.f32 %v5399, %v5385
    %v5403 = vmul.f32 %v5399, %v5386
    %v5404 = vmul.f32 %v5399, %v5387
    %v5405 = vmul.f32 %v5399, %v5388
    %v5406 = vmul.f32 %v5399, %v5389
    %v5407 = vmul.f32 %v5399, %v5390
    %v5408 = vsel %vm5391, %v5383, %v5400
    %v5409 = vsel %vm5392, %v5384, %v5401
    %v5410 = vsel %vm5393, %v5385, %v5402
    %v5411 = vsel %vm5394, %v5386, %v5403
    %v5412 = vsel %vm5395, %v5387, %v5404
    %v5413 = vsel %vm5396, %v5388, %v5405
    %v5414 = vsel %vm5397, %v5389, %v5406
    %v5415 = vsel %vm5398, %v5390, %v5407
    %v5416 = vpack.c.bf16 %v5408, %v5408
    %v5417 = vpack.c.bf16 %v5409, %v5409
    %v5418 = vpack.c.bf16 %v5410, %v5410
    %v5419 = vpack.c.bf16 %v5411, %v5411
    %v5420 = vpack.c.bf16 %v5412, %v5412
    %v5421 = vpack.c.bf16 %v5413, %v5413
    %v5422 = vpack.c.bf16 %v5414, %v5414
    %v5423 = vpack.c.bf16 %v5415, %v5415
    %s5424 = smul.u32 2, 128
    %s5425 = smul.u32 %s5424, 7
    %s5426 = sshll.u32 %s5425, 4
    %5427 = dma.done %s116, %s5426
    %v5428 = vld [vmem:[#allocation5] sm:$0xff]
    %v5429 = vld [vmem:[#allocation5 + $0x8] sm:$0xff]
    %v5430 = vld [vmem:[#allocation5 + $0x10] sm:$0xff]
    %v5431 = vld [vmem:[#allocation5 + $0x18] sm:$0xff]
    %v5432 = vld [vmem:[#allocation5 + $0x20] sm:$0xff]
    %v5433 = vld [vmem:[#allocation5 + $0x28] sm:$0xff]
    %v5434 = vld [vmem:[#allocation5 + $0x30] sm:$0xff]
    %v5435 = vld [vmem:[#allocation5 + $0x38] sm:$0xff]
    %v5436 = vld [vmem:[#allocation5 + $0x40] sm:$0xff]
    %v5437 = vld [vmem:[#allocation5 + $0x48] sm:$0xff]
    %v5438 = vld [vmem:[#allocation5 + $0x50] sm:$0xff]
    %v5439 = vld [vmem:[#allocation5 + $0x58] sm:$0xff]
    %v5440 = vld [vmem:[#allocation5 + $0x60] sm:$0xff]
    %v5441 = vld [vmem:[#allocation5 + $0x68] sm:$0xff]
    %v5442 = vld [vmem:[#allocation5 + $0x70] sm:$0xff]
    %v5443 = vld [vmem:[#allocation5 + $0x78] sm:$0xff]
    %v5444 = vld [vmem:[#allocation5 + $0x80] sm:$0xff]
    %v5445 = vld [vmem:[#allocation5 + $0x88] sm:$0xff]
    %v5446 = vld [vmem:[#allocation5 + $0x90] sm:$0xff]
    %v5447 = vld [vmem:[#allocation5 + $0x98] sm:$0xff]
    %v5448 = vld [vmem:[#allocation5 + $0xa0] sm:$0xff]
    %v5449 = vld [vmem:[#allocation5 + $0xa8] sm:$0xff]
    %v5450 = vld [vmem:[#allocation5 + $0xb0] sm:$0xff]
    %v5451 = vld [vmem:[#allocation5 + $0xb8] sm:$0xff]
    %v5452 = vld [vmem:[#allocation5 + $0xc0] sm:$0xff]
    %v5453 = vld [vmem:[#allocation5 + $0xc8] sm:$0xff]
    %v5454 = vld [vmem:[#allocation5 + $0xd0] sm:$0xff]
    %v5455 = vld [vmem:[#allocation5 + $0xd8] sm:$0xff]
    %v5456 = vld [vmem:[#allocation5 + $0xe0] sm:$0xff]
    %v5457 = vld [vmem:[#allocation5 + $0xe8] sm:$0xff]
    %v5458 = vld [vmem:[#allocation5 + $0xf0] sm:$0xff]
    %v5459 = vld [vmem:[#allocation5 + $0xf8] sm:$0xff]
    %v5460 = vld [vmem:[#allocation5 + $0x100] sm:$0xff]
    %v5461 = vld [vmem:[#allocation5 + $0x108] sm:$0xff]
    %v5462 = vld [vmem:[#allocation5 + $0x110] sm:$0xff]
    %v5463 = vld [vmem:[#allocation5 + $0x118] sm:$0xff]
    %v5464 = vld [vmem:[#allocation5 + $0x120] sm:$0xff]
    %v5465 = vld [vmem:[#allocation5 + $0x128] sm:$0xff]
    %v5466 = vld [vmem:[#allocation5 + $0x130] sm:$0xff]
    %v5467 = vld [vmem:[#allocation5 + $0x138] sm:$0xff]
    %v5468 = vld [vmem:[#allocation5 + $0x140] sm:$0xff]
    %v5469 = vld [vmem:[#allocation5 + $0x148] sm:$0xff]
    %v5470 = vld [vmem:[#allocation5 + $0x150] sm:$0xff]
    %v5471 = vld [vmem:[#allocation5 + $0x158] sm:$0xff]
    %v5472 = vld [vmem:[#allocation5 + $0x160] sm:$0xff]
    %v5473 = vld [vmem:[#allocation5 + $0x168] sm:$0xff]
    %v5474 = vld [vmem:[#allocation5 + $0x170] sm:$0xff]
    %v5475 = vld [vmem:[#allocation5 + $0x178] sm:$0xff]
    %v5476 = vld [vmem:[#allocation5 + $0x180] sm:$0xff]
    %v5477 = vld [vmem:[#allocation5 + $0x188] sm:$0xff]
    %v5478 = vld [vmem:[#allocation5 + $0x190] sm:$0xff]
    %v5479 = vld [vmem:[#allocation5 + $0x198] sm:$0xff]
    %v5480 = vld [vmem:[#allocation5 + $0x1a0] sm:$0xff]
    %v5481 = vld [vmem:[#allocation5 + $0x1a8] sm:$0xff]
    %v5482 = vld [vmem:[#allocation5 + $0x1b0] sm:$0xff]
    %v5483 = vld [vmem:[#allocation5 + $0x1b8] sm:$0xff]
    %v5484 = vld [vmem:[#allocation5 + $0x1c0] sm:$0xff]
    %v5485 = vld [vmem:[#allocation5 + $0x1c8] sm:$0xff]
    %v5486 = vld [vmem:[#allocation5 + $0x1d0] sm:$0xff]
    %v5487 = vld [vmem:[#allocation5 + $0x1d8] sm:$0xff]
    %v5488 = vld [vmem:[#allocation5 + $0x1e0] sm:$0xff]
    %v5489 = vld [vmem:[#allocation5 + $0x1e8] sm:$0xff]
    %v5490 = vld [vmem:[#allocation5 + $0x1f0] sm:$0xff]
    %v5491 = vld [vmem:[#allocation5 + $0x1f8] sm:$0xff]
    %v5492 = vld [vmem:[#allocation5 + $0x200] sm:$0xff]
    %v5493 = vld [vmem:[#allocation5 + $0x208] sm:$0xff]
    %v5494 = vld [vmem:[#allocation5 + $0x210] sm:$0xff]
    %v5495 = vld [vmem:[#allocation5 + $0x218] sm:$0xff]
    %v5496 = vld [vmem:[#allocation5 + $0x220] sm:$0xff]
    %v5497 = vld [vmem:[#allocation5 + $0x228] sm:$0xff]
    %v5498 = vld [vmem:[#allocation5 + $0x230] sm:$0xff]
    %v5499 = vld [vmem:[#allocation5 + $0x238] sm:$0xff]
    %v5500 = vld [vmem:[#allocation5 + $0x240] sm:$0xff]
    %v5501 = vld [vmem:[#allocation5 + $0x248] sm:$0xff]
    %v5502 = vld [vmem:[#allocation5 + $0x250] sm:$0xff]
    %v5503 = vld [vmem:[#allocation5 + $0x258] sm:$0xff]
    %v5504 = vld [vmem:[#allocation5 + $0x260] sm:$0xff]
    %v5505 = vld [vmem:[#allocation5 + $0x268] sm:$0xff]
    %v5506 = vld [vmem:[#allocation5 + $0x270] sm:$0xff]
    %v5507 = vld [vmem:[#allocation5 + $0x278] sm:$0xff]
    %v5508 = vld [vmem:[#allocation5 + $0x280] sm:$0xff]
    %v5509 = vld [vmem:[#allocation5 + $0x288] sm:$0xff]
    %v5510 = vld [vmem:[#allocation5 + $0x290] sm:$0xff]
    %v5511 = vld [vmem:[#allocation5 + $0x298] sm:$0xff]
    %v5512 = vld [vmem:[#allocation5 + $0x2a0] sm:$0xff]
    %v5513 = vld [vmem:[#allocation5 + $0x2a8] sm:$0xff]
    %v5514 = vld [vmem:[#allocation5 + $0x2b0] sm:$0xff]
    %v5515 = vld [vmem:[#allocation5 + $0x2b8] sm:$0xff]
    %v5516 = vld [vmem:[#allocation5 + $0x2c0] sm:$0xff]
    %v5517 = vld [vmem:[#allocation5 + $0x2c8] sm:$0xff]
    %v5518 = vld [vmem:[#allocation5 + $0x2d0] sm:$0xff]
    %v5519 = vld [vmem:[#allocation5 + $0x2d8] sm:$0xff]
    %v5520 = vld [vmem:[#allocation5 + $0x2e0] sm:$0xff]
    %v5521 = vld [vmem:[#allocation5 + $0x2e8] sm:$0xff]
    %v5522 = vld [vmem:[#allocation5 + $0x2f0] sm:$0xff]
    %v5523 = vld [vmem:[#allocation5 + $0x2f8] sm:$0xff]
    %v5524 = vld [vmem:[#allocation5 + $0x300] sm:$0xff]
    %v5525 = vld [vmem:[#allocation5 + $0x308] sm:$0xff]
    %v5526 = vld [vmem:[#allocation5 + $0x310] sm:$0xff]
    %v5527 = vld [vmem:[#allocation5 + $0x318] sm:$0xff]
    %v5528 = vld [vmem:[#allocation5 + $0x320] sm:$0xff]
    %v5529 = vld [vmem:[#allocation5 + $0x328] sm:$0xff]
    %v5530 = vld [vmem:[#allocation5 + $0x330] sm:$0xff]
    %v5531 = vld [vmem:[#allocation5 + $0x338] sm:$0xff]
    %v5532 = vld [vmem:[#allocation5 + $0x340] sm:$0xff]
    %v5533 = vld [vmem:[#allocation5 + $0x348] sm:$0xff]
    %v5534 = vld [vmem:[#allocation5 + $0x350] sm:$0xff]
    %v5535 = vld [vmem:[#allocation5 + $0x358] sm:$0xff]
    %v5536 = vld [vmem:[#allocation5 + $0x360] sm:$0xff]
    %v5537 = vld [vmem:[#allocation5 + $0x368] sm:$0xff]
    %v5538 = vld [vmem:[#allocation5 + $0x370] sm:$0xff]
    %v5539 = vld [vmem:[#allocation5 + $0x378] sm:$0xff]
    %v5540 = vld [vmem:[#allocation5 + $0x380] sm:$0xff]
    %v5541 = vld [vmem:[#allocation5 + $0x388] sm:$0xff]
    %v5542 = vld [vmem:[#allocation5 + $0x390] sm:$0xff]
    %v5543 = vld [vmem:[#allocation5 + $0x398] sm:$0xff]
    %v5544 = vld [vmem:[#allocation5 + $0x3a0] sm:$0xff]
    %v5545 = vld [vmem:[#allocation5 + $0x3a8] sm:$0xff]
    %v5546 = vld [vmem:[#allocation5 + $0x3b0] sm:$0xff]
    %v5547 = vld [vmem:[#allocation5 + $0x3b8] sm:$0xff]
    %v5548 = vld [vmem:[#allocation5 + $0x3c0] sm:$0xff]
    %v5549 = vld [vmem:[#allocation5 + $0x3c8] sm:$0xff]
    %v5550 = vld [vmem:[#allocation5 + $0x3d0] sm:$0xff]
    %v5551 = vld [vmem:[#allocation5 + $0x3d8] sm:$0xff]
    %v5552 = vld [vmem:[#allocation5 + $0x3e0] sm:$0xff]
    %v5553 = vld [vmem:[#allocation5 + $0x3e8] sm:$0xff]
    %v5554 = vld [vmem:[#allocation5 + $0x3f0] sm:$0xff]
    %v5555 = vld [vmem:[#allocation5 + $0x3f8] sm:$0xff]
    %v5556 = vld [vmem:[#allocation5 + $0x400] sm:$0xff]
    %v5557 = vld [vmem:[#allocation5 + $0x408] sm:$0xff]
    %v5558 = vld [vmem:[#allocation5 + $0x410] sm:$0xff]
    %v5559 = vld [vmem:[#allocation5 + $0x418] sm:$0xff]
    %v5560 = vld [vmem:[#allocation5 + $0x420] sm:$0xff]
    %v5561 = vld [vmem:[#allocation5 + $0x428] sm:$0xff]
    %v5562 = vld [vmem:[#allocation5 + $0x430] sm:$0xff]
    %v5563 = vld [vmem:[#allocation5 + $0x438] sm:$0xff]
    %v5564 = vld [vmem:[#allocation5 + $0x440] sm:$0xff]
    %v5565 = vld [vmem:[#allocation5 + $0x448] sm:$0xff]
    %v5566 = vld [vmem:[#allocation5 + $0x450] sm:$0xff]
    %v5567 = vld [vmem:[#allocation5 + $0x458] sm:$0xff]
    %v5568 = vld [vmem:[#allocation5 + $0x460] sm:$0xff]
    %v5569 = vld [vmem:[#allocation5 + $0x468] sm:$0xff]
    %v5570 = vld [vmem:[#allocation5 + $0x470] sm:$0xff]
    %v5571 = vld [vmem:[#allocation5 + $0x478] sm:$0xff]
    %v5572 = vld [vmem:[#allocation5 + $0x480] sm:$0xff]
    %v5573 = vld [vmem:[#allocation5 + $0x488] sm:$0xff]
    %v5574 = vld [vmem:[#allocation5 + $0x490] sm:$0xff]
    %v5575 = vld [vmem:[#allocation5 + $0x498] sm:$0xff]
    %v5576 = vld [vmem:[#allocation5 + $0x4a0] sm:$0xff]
    %v5577 = vld [vmem:[#allocation5 + $0x4a8] sm:$0xff]
    %v5578 = vld [vmem:[#allocation5 + $0x4b0] sm:$0xff]
    %v5579 = vld [vmem:[#allocation5 + $0x4b8] sm:$0xff]
    %v5580 = vld [vmem:[#allocation5 + $0x4c0] sm:$0xff]
    %v5581 = vld [vmem:[#allocation5 + $0x4c8] sm:$0xff]
    %v5582 = vld [vmem:[#allocation5 + $0x4d0] sm:$0xff]
    %v5583 = vld [vmem:[#allocation5 + $0x4d8] sm:$0xff]
    %v5584 = vld [vmem:[#allocation5 + $0x4e0] sm:$0xff]
    %v5585 = vld [vmem:[#allocation5 + $0x4e8] sm:$0xff]
    %v5586 = vld [vmem:[#allocation5 + $0x4f0] sm:$0xff]
    %v5587 = vld [vmem:[#allocation5 + $0x4f8] sm:$0xff]
    %v5588 = vld [vmem:[#allocation5 + $0x500] sm:$0xff]
    %v5589 = vld [vmem:[#allocation5 + $0x508] sm:$0xff]
    %v5590 = vld [vmem:[#allocation5 + $0x510] sm:$0xff]
    %v5591 = vld [vmem:[#allocation5 + $0x518] sm:$0xff]
    %v5592 = vld [vmem:[#allocation5 + $0x520] sm:$0xff]
    %v5593 = vld [vmem:[#allocation5 + $0x528] sm:$0xff]
    %v5594 = vld [vmem:[#allocation5 + $0x530] sm:$0xff]
    %v5595 = vld [vmem:[#allocation5 + $0x538] sm:$0xff]
    %v5596 = vld [vmem:[#allocation5 + $0x540] sm:$0xff]
    %v5597 = vld [vmem:[#allocation5 + $0x548] sm:$0xff]
    %v5598 = vld [vmem:[#allocation5 + $0x550] sm:$0xff]
    %v5599 = vld [vmem:[#allocation5 + $0x558] sm:$0xff]
    %v5600 = vld [vmem:[#allocation5 + $0x560] sm:$0xff]
    %v5601 = vld [vmem:[#allocation5 + $0x568] sm:$0xff]
    %v5602 = vld [vmem:[#allocation5 + $0x570] sm:$0xff]
    %v5603 = vld [vmem:[#allocation5 + $0x578] sm:$0xff]
    %v5604 = vld [vmem:[#allocation5 + $0x580] sm:$0xff]
    %v5605 = vld [vmem:[#allocation5 + $0x588] sm:$0xff]
    %v5606 = vld [vmem:[#allocation5 + $0x590] sm:$0xff]
    %v5607 = vld [vmem:[#allocation5 + $0x598] sm:$0xff]
    %v5608 = vld [vmem:[#allocation5 + $0x5a0] sm:$0xff]
    %v5609 = vld [vmem:[#allocation5 + $0x5a8] sm:$0xff]
    %v5610 = vld [vmem:[#allocation5 + $0x5b0] sm:$0xff]
    %v5611 = vld [vmem:[#allocation5 + $0x5b8] sm:$0xff]
    %v5612 = vld [vmem:[#allocation5 + $0x5c0] sm:$0xff]
    %v5613 = vld [vmem:[#allocation5 + $0x5c8] sm:$0xff]
    %v5614 = vld [vmem:[#allocation5 + $0x5d0] sm:$0xff]
    %v5615 = vld [vmem:[#allocation5 + $0x5d8] sm:$0xff]
    %v5616 = vld [vmem:[#allocation5 + $0x5e0] sm:$0xff]
    %v5617 = vld [vmem:[#allocation5 + $0x5e8] sm:$0xff]
    %v5618 = vld [vmem:[#allocation5 + $0x5f0] sm:$0xff]
    %v5619 = vld [vmem:[#allocation5 + $0x5f8] sm:$0xff]
    %v5620 = vld [vmem:[#allocation5 + $0x600] sm:$0xff]
    %v5621 = vld [vmem:[#allocation5 + $0x608] sm:$0xff]
    %v5622 = vld [vmem:[#allocation5 + $0x610] sm:$0xff]
    %v5623 = vld [vmem:[#allocation5 + $0x618] sm:$0xff]
    %v5624 = vld [vmem:[#allocation5 + $0x620] sm:$0xff]
    %v5625 = vld [vmem:[#allocation5 + $0x628] sm:$0xff]
    %v5626 = vld [vmem:[#allocation5 + $0x630] sm:$0xff]
    %v5627 = vld [vmem:[#allocation5 + $0x638] sm:$0xff]
    %v5628 = vld [vmem:[#allocation5 + $0x640] sm:$0xff]
    %v5629 = vld [vmem:[#allocation5 + $0x648] sm:$0xff]
    %v5630 = vld [vmem:[#allocation5 + $0x650] sm:$0xff]
    %v5631 = vld [vmem:[#allocation5 + $0x658] sm:$0xff]
    %v5632 = vld [vmem:[#allocation5 + $0x660] sm:$0xff]
    %v5633 = vld [vmem:[#allocation5 + $0x668] sm:$0xff]
    %v5634 = vld [vmem:[#allocation5 + $0x670] sm:$0xff]
    %v5635 = vld [vmem:[#allocation5 + $0x678] sm:$0xff]
    %v5636 = vld [vmem:[#allocation5 + $0x680] sm:$0xff]
    %v5637 = vld [vmem:[#allocation5 + $0x688] sm:$0xff]
    %v5638 = vld [vmem:[#allocation5 + $0x690] sm:$0xff]
    %v5639 = vld [vmem:[#allocation5 + $0x698] sm:$0xff]
    %v5640 = vld [vmem:[#allocation5 + $0x6a0] sm:$0xff]
    %v5641 = vld [vmem:[#allocation5 + $0x6a8] sm:$0xff]
    %v5642 = vld [vmem:[#allocation5 + $0x6b0] sm:$0xff]
    %v5643 = vld [vmem:[#allocation5 + $0x6b8] sm:$0xff]
    %v5644 = vld [vmem:[#allocation5 + $0x6c0] sm:$0xff]
    %v5645 = vld [vmem:[#allocation5 + $0x6c8] sm:$0xff]
    %v5646 = vld [vmem:[#allocation5 + $0x6d0] sm:$0xff]
    %v5647 = vld [vmem:[#allocation5 + $0x6d8] sm:$0xff]
    %v5648 = vld [vmem:[#allocation5 + $0x6e0] sm:$0xff]
    %v5649 = vld [vmem:[#allocation5 + $0x6e8] sm:$0xff]
    %v5650 = vld [vmem:[#allocation5 + $0x6f0] sm:$0xff]
    %v5651 = vld [vmem:[#allocation5 + $0x6f8] sm:$0xff]
    %v5652 = vunpack.c.l.s8.bf16 %v5428
    %v5653 = vunpack.c.l.s8.bf16 %v5429
    %v5654 = vunpack.c.l.s8.bf16 %v5430
    %v5655 = vunpack.c.l.s8.bf16 %v5431
    %v5656 = vunpack.c.l.s8.bf16 %v5432
    %v5657 = vunpack.c.l.s8.bf16 %v5433
    %v5658 = vunpack.c.l.s8.bf16 %v5434
    %v5659 = vunpack.c.h.s8.bf16 %v5428
    %v5660 = vunpack.c.h.s8.bf16 %v5429
    %v5661 = vunpack.c.h.s8.bf16 %v5430
    %v5662 = vunpack.c.h.s8.bf16 %v5431
    %v5663 = vunpack.c.h.s8.bf16 %v5432
    %v5664 = vunpack.c.h.s8.bf16 %v5433
    %v5665 = vunpack.c.h.s8.bf16 %v5434
    %v5666 = vunpack.c.l.s8.bf16 %v5435
    %v5667 = vunpack.c.l.s8.bf16 %v5436
    %v5668 = vunpack.c.l.s8.bf16 %v5437
    %v5669 = vunpack.c.l.s8.bf16 %v5438
    %v5670 = vunpack.c.l.s8.bf16 %v5439
    %v5671 = vunpack.c.l.s8.bf16 %v5440
    %v5672 = vunpack.c.l.s8.bf16 %v5441
    %v5673 = vunpack.c.h.s8.bf16 %v5435
    %v5674 = vunpack.c.h.s8.bf16 %v5436
    %v5675 = vunpack.c.h.s8.bf16 %v5437
    %v5676 = vunpack.c.h.s8.bf16 %v5438
    %v5677 = vunpack.c.h.s8.bf16 %v5439
    %v5678 = vunpack.c.h.s8.bf16 %v5440
    %v5679 = vunpack.c.h.s8.bf16 %v5441
    %v5680 = vunpack.c.l.s8.bf16 %v5442
    %v5681 = vunpack.c.l.s8.bf16 %v5443
    %v5682 = vunpack.c.l.s8.bf16 %v5444
    %v5683 = vunpack.c.l.s8.bf16 %v5445
    %v5684 = vunpack.c.l.s8.bf16 %v5446
    %v5685 = vunpack.c.l.s8.bf16 %v5447
    %v5686 = vunpack.c.l.s8.bf16 %v5448
    %v5687 = vunpack.c.h.s8.bf16 %v5442
    %v5688 = vunpack.c.h.s8.bf16 %v5443
    %v5689 = vunpack.c.h.s8.bf16 %v5444
    %v5690 = vunpack.c.h.s8.bf16 %v5445
    %v5691 = vunpack.c.h.s8.bf16 %v5446
    %v5692 = vunpack.c.h.s8.bf16 %v5447
    %v5693 = vunpack.c.h.s8.bf16 %v5448
    %v5694 = vunpack.c.l.s8.bf16 %v5449
    %v5695 = vunpack.c.l.s8.bf16 %v5450
    %v5696 = vunpack.c.l.s8.bf16 %v5451
    %v5697 = vunpack.c.l.s8.bf16 %v5452
    %v5698 = vunpack.c.l.s8.bf16 %v5453
    %v5699 = vunpack.c.l.s8.bf16 %v5454
    %v5700 = vunpack.c.l.s8.bf16 %v5455
    %v5701 = vunpack.c.h.s8.bf16 %v5449
    %v5702 = vunpack.c.h.s8.bf16 %v5450
    %v5703 = vunpack.c.h.s8.bf16 %v5451
    %v5704 = vunpack.c.h.s8.bf16 %v5452
    %v5705 = vunpack.c.h.s8.bf16 %v5453
    %v5706 = vunpack.c.h.s8.bf16 %v5454
    %v5707 = vunpack.c.h.s8.bf16 %v5455
    %v5708 = vunpack.c.l.s8.bf16 %v5456
    %v5709 = vunpack.c.l.s8.bf16 %v5457
    %v5710 = vunpack.c.l.s8.bf16 %v5458
    %v5711 = vunpack.c.l.s8.bf16 %v5459
    %v5712 = vunpack.c.l.s8.bf16 %v5460
    %v5713 = vunpack.c.l.s8.bf16 %v5461
    %v5714 = vunpack.c.l.s8.bf16 %v5462
    %v5715 = vunpack.c.h.s8.bf16 %v5456
    %v5716 = vunpack.c.h.s8.bf16 %v5457
    %v5717 = vunpack.c.h.s8.bf16 %v5458
    %v5718 = vunpack.c.h.s8.bf16 %v5459
    %v5719 = vunpack.c.h.s8.bf16 %v5460
    %v5720 = vunpack.c.h.s8.bf16 %v5461
    %v5721 = vunpack.c.h.s8.bf16 %v5462
    %v5722 = vunpack.c.l.s8.bf16 %v5463
    %v5723 = vunpack.c.l.s8.bf16 %v5464
    %v5724 = vunpack.c.l.s8.bf16 %v5465
    %v5725 = vunpack.c.l.s8.bf16 %v5466
    %v5726 = vunpack.c.l.s8.bf16 %v5467
    %v5727 = vunpack.c.l.s8.bf16 %v5468
    %v5728 = vunpack.c.l.s8.bf16 %v5469
    %v5729 = vunpack.c.h.s8.bf16 %v5463
    %v5730 = vunpack.c.h.s8.bf16 %v5464
    %v5731 = vunpack.c.h.s8.bf16 %v5465
    %v5732 = vunpack.c.h.s8.bf16 %v5466
    %v5733 = vunpack.c.h.s8.bf16 %v5467
    %v5734 = vunpack.c.h.s8.bf16 %v5468
    %v5735 = vunpack.c.h.s8.bf16 %v5469
    %v5736 = vunpack.c.l.s8.bf16 %v5470
    %v5737 = vunpack.c.l.s8.bf16 %v5471
    %v5738 = vunpack.c.l.s8.bf16 %v5472
    %v5739 = vunpack.c.l.s8.bf16 %v5473
    %v5740 = vunpack.c.l.s8.bf16 %v5474
    %v5741 = vunpack.c.l.s8.bf16 %v5475
    %v5742 = vunpack.c.l.s8.bf16 %v5476
    %v5743 = vunpack.c.h.s8.bf16 %v5470
    %v5744 = vunpack.c.h.s8.bf16 %v5471
    %v5745 = vunpack.c.h.s8.bf16 %v5472
    %v5746 = vunpack.c.h.s8.bf16 %v5473
    %v5747 = vunpack.c.h.s8.bf16 %v5474
    %v5748 = vunpack.c.h.s8.bf16 %v5475
    %v5749 = vunpack.c.h.s8.bf16 %v5476
    %v5750 = vunpack.c.l.s8.bf16 %v5477
    %v5751 = vunpack.c.l.s8.bf16 %v5478
    %v5752 = vunpack.c.l.s8.bf16 %v5479
    %v5753 = vunpack.c.l.s8.bf16 %v5480
    %v5754 = vunpack.c.l.s8.bf16 %v5481
    %v5755 = vunpack.c.l.s8.bf16 %v5482
    %v5756 = vunpack.c.l.s8.bf16 %v5483
    %v5757 = vunpack.c.h.s8.bf16 %v5477
    %v5758 = vunpack.c.h.s8.bf16 %v5478
    %v5759 = vunpack.c.h.s8.bf16 %v5479
    %v5760 = vunpack.c.h.s8.bf16 %v5480
    %v5761 = vunpack.c.h.s8.bf16 %v5481
    %v5762 = vunpack.c.h.s8.bf16 %v5482
    %v5763 = vunpack.c.h.s8.bf16 %v5483
    %v5764 = vunpack.c.l.s8.bf16 %v5484
    %v5765 = vunpack.c.l.s8.bf16 %v5485
    %v5766 = vunpack.c.l.s8.bf16 %v5486
    %v5767 = vunpack.c.l.s8.bf16 %v5487
    %v5768 = vunpack.c.l.s8.bf16 %v5488
    %v5769 = vunpack.c.l.s8.bf16 %v5489
    %v5770 = vunpack.c.l.s8.bf16 %v5490
    %v5771 = vunpack.c.h.s8.bf16 %v5484
    %v5772 = vunpack.c.h.s8.bf16 %v5485
    %v5773 = vunpack.c.h.s8.bf16 %v5486
    %v5774 = vunpack.c.h.s8.bf16 %v5487
    %v5775 = vunpack.c.h.s8.bf16 %v5488
    %v5776 = vunpack.c.h.s8.bf16 %v5489
    %v5777 = vunpack.c.h.s8.bf16 %v5490
    %v5778 = vunpack.c.l.s8.bf16 %v5491
    %v5779 = vunpack.c.l.s8.bf16 %v5492
    %v5780 = vunpack.c.l.s8.bf16 %v5493
    %v5781 = vunpack.c.l.s8.bf16 %v5494
    %v5782 = vunpack.c.l.s8.bf16 %v5495
    %v5783 = vunpack.c.l.s8.bf16 %v5496
    %v5784 = vunpack.c.l.s8.bf16 %v5497
    %v5785 = vunpack.c.h.s8.bf16 %v5491
    %v5786 = vunpack.c.h.s8.bf16 %v5492
    %v5787 = vunpack.c.h.s8.bf16 %v5493
    %v5788 = vunpack.c.h.s8.bf16 %v5494
    %v5789 = vunpack.c.h.s8.bf16 %v5495
    %v5790 = vunpack.c.h.s8.bf16 %v5496
    %v5791 = vunpack.c.h.s8.bf16 %v5497
    %v5792 = vunpack.c.l.s8.bf16 %v5498
    %v5793 = vunpack.c.l.s8.bf16 %v5499
    %v5794 = vunpack.c.l.s8.bf16 %v5500
    %v5795 = vunpack.c.l.s8.bf16 %v5501
    %v5796 = vunpack.c.l.s8.bf16 %v5502
    %v5797 = vunpack.c.l.s8.bf16 %v5503
    %v5798 = vunpack.c.l.s8.bf16 %v5504
    %v5799 = vunpack.c.h.s8.bf16 %v5498
    %v5800 = vunpack.c.h.s8.bf16 %v5499
    %v5801 = vunpack.c.h.s8.bf16 %v5500
    %v5802 = vunpack.c.h.s8.bf16 %v5501
    %v5803 = vunpack.c.h.s8.bf16 %v5502
    %v5804 = vunpack.c.h.s8.bf16 %v5503
    %v5805 = vunpack.c.h.s8.bf16 %v5504
    %v5806 = vunpack.c.l.s8.bf16 %v5505
    %v5807 = vunpack.c.l.s8.bf16 %v5506
    %v5808 = vunpack.c.l.s8.bf16 %v5507
    %v5809 = vunpack.c.l.s8.bf16 %v5508
    %v5810 = vunpack.c.l.s8.bf16 %v5509
    %v5811 = vunpack.c.l.s8.bf16 %v5510
    %v5812 = vunpack.c.l.s8.bf16 %v5511
    %v5813 = vunpack.c.h.s8.bf16 %v5505
    %v5814 = vunpack.c.h.s8.bf16 %v5506
    %v5815 = vunpack.c.h.s8.bf16 %v5507
    %v5816 = vunpack.c.h.s8.bf16 %v5508
    %v5817 = vunpack.c.h.s8.bf16 %v5509
    %v5818 = vunpack.c.h.s8.bf16 %v5510
    %v5819 = vunpack.c.h.s8.bf16 %v5511
    %v5820 = vunpack.c.l.s8.bf16 %v5512
    %v5821 = vunpack.c.l.s8.bf16 %v5513
    %v5822 = vunpack.c.l.s8.bf16 %v5514
    %v5823 = vunpack.c.l.s8.bf16 %v5515
    %v5824 = vunpack.c.l.s8.bf16 %v5516
    %v5825 = vunpack.c.l.s8.bf16 %v5517
    %v5826 = vunpack.c.l.s8.bf16 %v5518
    %v5827 = vunpack.c.h.s8.bf16 %v5512
    %v5828 = vunpack.c.h.s8.bf16 %v5513
    %v5829 = vunpack.c.h.s8.bf16 %v5514
    %v5830 = vunpack.c.h.s8.bf16 %v5515
    %v5831 = vunpack.c.h.s8.bf16 %v5516
    %v5832 = vunpack.c.h.s8.bf16 %v5517
    %v5833 = vunpack.c.h.s8.bf16 %v5518
    %v5834 = vunpack.c.l.s8.bf16 %v5519
    %v5835 = vunpack.c.l.s8.bf16 %v5520
    %v5836 = vunpack.c.l.s8.bf16 %v5521
    %v5837 = vunpack.c.l.s8.bf16 %v5522
    %v5838 = vunpack.c.l.s8.bf16 %v5523
    %v5839 = vunpack.c.l.s8.bf16 %v5524
    %v5840 = vunpack.c.l.s8.bf16 %v5525
    %v5841 = vunpack.c.h.s8.bf16 %v5519
    %v5842 = vunpack.c.h.s8.bf16 %v5520
    %v5843 = vunpack.c.h.s8.bf16 %v5521
    %v5844 = vunpack.c.h.s8.bf16 %v5522
    %v5845 = vunpack.c.h.s8.bf16 %v5523
    %v5846 = vunpack.c.h.s8.bf16 %v5524
    %v5847 = vunpack.c.h.s8.bf16 %v5525
    %v5848 = vunpack.c.l.s8.bf16 %v5526
    %v5849 = vunpack.c.l.s8.bf16 %v5527
    %v5850 = vunpack.c.l.s8.bf16 %v5528
    %v5851 = vunpack.c.l.s8.bf16 %v5529
    %v5852 = vunpack.c.l.s8.bf16 %v5530
    %v5853 = vunpack.c.l.s8.bf16 %v5531
    %v5854 = vunpack.c.l.s8.bf16 %v5532
    %v5855 = vunpack.c.h.s8.bf16 %v5526
    %v5856 = vunpack.c.h.s8.bf16 %v5527
    %v5857 = vunpack.c.h.s8.bf16 %v5528
    %v5858 = vunpack.c.h.s8.bf16 %v5529
    %v5859 = vunpack.c.h.s8.bf16 %v5530
    %v5860 = vunpack.c.h.s8.bf16 %v5531
    %v5861 = vunpack.c.h.s8.bf16 %v5532
    %v5862 = vunpack.c.l.s8.bf16 %v5533
    %v5863 = vunpack.c.l.s8.bf16 %v5534
    %v5864 = vunpack.c.l.s8.bf16 %v5535
    %v5865 = vunpack.c.l.s8.bf16 %v5536
    %v5866 = vunpack.c.l.s8.bf16 %v5537
    %v5867 = vunpack.c.l.s8.bf16 %v5538
    %v5868 = vunpack.c.l.s8.bf16 %v5539
    %v5869 = vunpack.c.h.s8.bf16 %v5533
    %v5870 = vunpack.c.h.s8.bf16 %v5534
    %v5871 = vunpack.c.h.s8.bf16 %v5535
    %v5872 = vunpack.c.h.s8.bf16 %v5536
    %v5873 = vunpack.c.h.s8.bf16 %v5537
    %v5874 = vunpack.c.h.s8.bf16 %v5538
    %v5875 = vunpack.c.h.s8.bf16 %v5539
    %v5876 = vunpack.c.l.s8.bf16 %v5540
    %v5877 = vunpack.c.l.s8.bf16 %v5541
    %v5878 = vunpack.c.l.s8.bf16 %v5542
    %v5879 = vunpack.c.l.s8.bf16 %v5543
    %v5880 = vunpack.c.l.s8.bf16 %v5544
    %v5881 = vunpack.c.l.s8.bf16 %v5545
    %v5882 = vunpack.c.l.s8.bf16 %v5546
    %v5883 = vunpack.c.h.s8.bf16 %v5540
    %v5884 = vunpack.c.h.s8.bf16 %v5541
    %v5885 = vunpack.c.h.s8.bf16 %v5542
    %v5886 = vunpack.c.h.s8.bf16 %v5543
    %v5887 = vunpack.c.h.s8.bf16 %v5544
    %v5888 = vunpack.c.h.s8.bf16 %v5545
    %v5889 = vunpack.c.h.s8.bf16 %v5546
    %v5890 = vunpack.c.l.s8.bf16 %v5547
    %v5891 = vunpack.c.l.s8.bf16 %v5548
    %v5892 = vunpack.c.l.s8.bf16 %v5549
    %v5893 = vunpack.c.l.s8.bf16 %v5550
    %v5894 = vunpack.c.l.s8.bf16 %v5551
    %v5895 = vunpack.c.l.s8.bf16 %v5552
    %v5896 = vunpack.c.l.s8.bf16 %v5553
    %v5897 = vunpack.c.h.s8.bf16 %v5547
    %v5898 = vunpack.c.h.s8.bf16 %v5548
    %v5899 = vunpack.c.h.s8.bf16 %v5549
    %v5900 = vunpack.c.h.s8.bf16 %v5550
    %v5901 = vunpack.c.h.s8.bf16 %v5551
    %v5902 = vunpack.c.h.s8.bf16 %v5552
    %v5903 = vunpack.c.h.s8.bf16 %v5553
    %v5904 = vunpack.c.l.s8.bf16 %v5554
    %v5905 = vunpack.c.l.s8.bf16 %v5555
    %v5906 = vunpack.c.l.s8.bf16 %v5556
    %v5907 = vunpack.c.l.s8.bf16 %v5557
    %v5908 = vunpack.c.l.s8.bf16 %v5558
    %v5909 = vunpack.c.l.s8.bf16 %v5559
    %v5910 = vunpack.c.l.s8.bf16 %v5560
    %v5911 = vunpack.c.h.s8.bf16 %v5554
    %v5912 = vunpack.c.h.s8.bf16 %v5555
    %v5913 = vunpack.c.h.s8.bf16 %v5556
    %v5914 = vunpack.c.h.s8.bf16 %v5557
    %v5915 = vunpack.c.h.s8.bf16 %v5558
    %v5916 = vunpack.c.h.s8.bf16 %v5559
    %v5917 = vunpack.c.h.s8.bf16 %v5560
    %v5918 = vunpack.c.l.s8.bf16 %v5561
    %v5919 = vunpack.c.l.s8.bf16 %v5562
    %v5920 = vunpack.c.l.s8.bf16 %v5563
    %v5921 = vunpack.c.l.s8.bf16 %v5564
    %v5922 = vunpack.c.l.s8.bf16 %v5565
    %v5923 = vunpack.c.l.s8.bf16 %v5566
    %v5924 = vunpack.c.l.s8.bf16 %v5567
    %v5925 = vunpack.c.h.s8.bf16 %v5561
    %v5926 = vunpack.c.h.s8.bf16 %v5562
    %v5927 = vunpack.c.h.s8.bf16 %v5563
    %v5928 = vunpack.c.h.s8.bf16 %v5564
    %v5929 = vunpack.c.h.s8.bf16 %v5565
    %v5930 = vunpack.c.h.s8.bf16 %v5566
    %v5931 = vunpack.c.h.s8.bf16 %v5567
    %v5932 = vunpack.c.l.s8.bf16 %v5568
    %v5933 = vunpack.c.l.s8.bf16 %v5569
    %v5934 = vunpack.c.l.s8.bf16 %v5570
    %v5935 = vunpack.c.l.s8.bf16 %v5571
    %v5936 = vunpack.c.l.s8.bf16 %v5572
    %v5937 = vunpack.c.l.s8.bf16 %v5573
    %v5938 = vunpack.c.l.s8.bf16 %v5574
    %v5939 = vunpack.c.h.s8.bf16 %v5568
    %v5940 = vunpack.c.h.s8.bf16 %v5569
    %v5941 = vunpack.c.h.s8.bf16 %v5570
    %v5942 = vunpack.c.h.s8.bf16 %v5571
    %v5943 = vunpack.c.h.s8.bf16 %v5572
    %v5944 = vunpack.c.h.s8.bf16 %v5573
    %v5945 = vunpack.c.h.s8.bf16 %v5574
    %v5946 = vunpack.c.l.s8.bf16 %v5575
    %v5947 = vunpack.c.l.s8.bf16 %v5576
    %v5948 = vunpack.c.l.s8.bf16 %v5577
    %v5949 = vunpack.c.l.s8.bf16 %v5578
    %v5950 = vunpack.c.l.s8.bf16 %v5579
    %v5951 = vunpack.c.l.s8.bf16 %v5580
    %v5952 = vunpack.c.l.s8.bf16 %v5581
    %v5953 = vunpack.c.h.s8.bf16 %v5575
    %v5954 = vunpack.c.h.s8.bf16 %v5576
    %v5955 = vunpack.c.h.s8.bf16 %v5577
    %v5956 = vunpack.c.h.s8.bf16 %v5578
    %v5957 = vunpack.c.h.s8.bf16 %v5579
    %v5958 = vunpack.c.h.s8.bf16 %v5580
    %v5959 = vunpack.c.h.s8.bf16 %v5581
    %v5960 = vunpack.c.l.s8.bf16 %v5582
    %v5961 = vunpack.c.l.s8.bf16 %v5583
    %v5962 = vunpack.c.l.s8.bf16 %v5584
    %v5963 = vunpack.c.l.s8.bf16 %v5585
    %v5964 = vunpack.c.l.s8.bf16 %v5586
    %v5965 = vunpack.c.l.s8.bf16 %v5587
    %v5966 = vunpack.c.l.s8.bf16 %v5588
    %v5967 = vunpack.c.h.s8.bf16 %v5582
    %v5968 = vunpack.c.h.s8.bf16 %v5583
    %v5969 = vunpack.c.h.s8.bf16 %v5584
    %v5970 = vunpack.c.h.s8.bf16 %v5585
    %v5971 = vunpack.c.h.s8.bf16 %v5586
    %v5972 = vunpack.c.h.s8.bf16 %v5587
    %v5973 = vunpack.c.h.s8.bf16 %v5588
    %v5974 = vunpack.c.l.s8.bf16 %v5589
    %v5975 = vunpack.c.l.s8.bf16 %v5590
    %v5976 = vunpack.c.l.s8.bf16 %v5591
    %v5977 = vunpack.c.l.s8.bf16 %v5592
    %v5978 = vunpack.c.l.s8.bf16 %v5593
    %v5979 = vunpack.c.l.s8.bf16 %v5594
    %v5980 = vunpack.c.l.s8.bf16 %v5595
    %v5981 = vunpack.c.h.s8.bf16 %v5589
    %v5982 = vunpack.c.h.s8.bf16 %v5590
    %v5983 = vunpack.c.h.s8.bf16 %v5591
    %v5984 = vunpack.c.h.s8.bf16 %v5592
    %v5985 = vunpack.c.h.s8.bf16 %v5593
    %v5986 = vunpack.c.h.s8.bf16 %v5594
    %v5987 = vunpack.c.h.s8.bf16 %v5595
    %v5988 = vunpack.c.l.s8.bf16 %v5596
    %v5989 = vunpack.c.l.s8.bf16 %v5597
    %v5990 = vunpack.c.l.s8.bf16 %v5598
    %v5991 = vunpack.c.l.s8.bf16 %v5599
    %v5992 = vunpack.c.l.s8.bf16 %v5600
    %v5993 = vunpack.c.l.s8.bf16 %v5601
    %v5994 = vunpack.c.l.s8.bf16 %v5602
    %v5995 = vunpack.c.h.s8.bf16 %v5596
    %v5996 = vunpack.c.h.s8.bf16 %v5597
    %v5997 = vunpack.c.h.s8.bf16 %v5598
    %v5998 = vunpack.c.h.s8.bf16 %v5599
    %v5999 = vunpack.c.h.s8.bf16 %v5600
    %v6000 = vunpack.c.h.s8.bf16 %v5601
    %v6001 = vunpack.c.h.s8.bf16 %v5602
    %v6002 = vunpack.c.l.s8.bf16 %v5603
    %v6003 = vunpack.c.l.s8.bf16 %v5604
    %v6004 = vunpack.c.l.s8.bf16 %v5605
    %v6005 = vunpack.c.l.s8.bf16 %v5606
    %v6006 = vunpack.c.l.s8.bf16 %v5607
    %v6007 = vunpack.c.l.s8.bf16 %v5608
    %v6008 = vunpack.c.l.s8.bf16 %v5609
    %v6009 = vunpack.c.h.s8.bf16 %v5603
    %v6010 = vunpack.c.h.s8.bf16 %v5604
    %v6011 = vunpack.c.h.s8.bf16 %v5605
    %v6012 = vunpack.c.h.s8.bf16 %v5606
    %v6013 = vunpack.c.h.s8.bf16 %v5607
    %v6014 = vunpack.c.h.s8.bf16 %v5608
    %v6015 = vunpack.c.h.s8.bf16 %v5609
    %v6016 = vunpack.c.l.s8.bf16 %v5610
    %v6017 = vunpack.c.l.s8.bf16 %v5611
    %v6018 = vunpack.c.l.s8.bf16 %v5612
    %v6019 = vunpack.c.l.s8.bf16 %v5613
    %v6020 = vunpack.c.l.s8.bf16 %v5614
    %v6021 = vunpack.c.l.s8.bf16 %v5615
    %v6022 = vunpack.c.l.s8.bf16 %v5616
    %v6023 = vunpack.c.h.s8.bf16 %v5610
    %v6024 = vunpack.c.h.s8.bf16 %v5611
    %v6025 = vunpack.c.h.s8.bf16 %v5612
    %v6026 = vunpack.c.h.s8.bf16 %v5613
    %v6027 = vunpack.c.h.s8.bf16 %v5614
    %v6028 = vunpack.c.h.s8.bf16 %v5615
    %v6029 = vunpack.c.h.s8.bf16 %v5616
    %v6030 = vunpack.c.l.s8.bf16 %v5617
    %v6031 = vunpack.c.l.s8.bf16 %v5618
    %v6032 = vunpack.c.l.s8.bf16 %v5619
    %v6033 = vunpack.c.l.s8.bf16 %v5620
    %v6034 = vunpack.c.l.s8.bf16 %v5621
    %v6035 = vunpack.c.l.s8.bf16 %v5622
    %v6036 = vunpack.c.l.s8.bf16 %v5623
    %v6037 = vunpack.c.h.s8.bf16 %v5617
    %v6038 = vunpack.c.h.s8.bf16 %v5618
    %v6039 = vunpack.c.h.s8.bf16 %v5619
    %v6040 = vunpack.c.h.s8.bf16 %v5620
    %v6041 = vunpack.c.h.s8.bf16 %v5621
    %v6042 = vunpack.c.h.s8.bf16 %v5622
    %v6043 = vunpack.c.h.s8.bf16 %v5623
    %v6044 = vunpack.c.l.s8.bf16 %v5624
    %v6045 = vunpack.c.l.s8.bf16 %v5625
    %v6046 = vunpack.c.l.s8.bf16 %v5626
    %v6047 = vunpack.c.l.s8.bf16 %v5627
    %v6048 = vunpack.c.l.s8.bf16 %v5628
    %v6049 = vunpack.c.l.s8.bf16 %v5629
    %v6050 = vunpack.c.l.s8.bf16 %v5630
    %v6051 = vunpack.c.h.s8.bf16 %v5624
    %v6052 = vunpack.c.h.s8.bf16 %v5625
    %v6053 = vunpack.c.h.s8.bf16 %v5626
    %v6054 = vunpack.c.h.s8.bf16 %v5627
    %v6055 = vunpack.c.h.s8.bf16 %v5628
    %v6056 = vunpack.c.h.s8.bf16 %v5629
    %v6057 = vunpack.c.h.s8.bf16 %v5630
    %v6058 = vunpack.c.l.s8.bf16 %v5631
    %v6059 = vunpack.c.l.s8.bf16 %v5632
    %v6060 = vunpack.c.l.s8.bf16 %v5633
    %v6061 = vunpack.c.l.s8.bf16 %v5634
    %v6062 = vunpack.c.l.s8.bf16 %v5635
    %v6063 = vunpack.c.l.s8.bf16 %v5636
    %v6064 = vunpack.c.l.s8.bf16 %v5637
    %v6065 = vunpack.c.h.s8.bf16 %v5631
    %v6066 = vunpack.c.h.s8.bf16 %v5632
    %v6067 = vunpack.c.h.s8.bf16 %v5633
    %v6068 = vunpack.c.h.s8.bf16 %v5634
    %v6069 = vunpack.c.h.s8.bf16 %v5635
    %v6070 = vunpack.c.h.s8.bf16 %v5636
    %v6071 = vunpack.c.h.s8.bf16 %v5637
    %v6072 = vunpack.c.l.s8.bf16 %v5638
    %v6073 = vunpack.c.l.s8.bf16 %v5639
    %v6074 = vunpack.c.l.s8.bf16 %v5640
    %v6075 = vunpack.c.l.s8.bf16 %v5641
    %v6076 = vunpack.c.l.s8.bf16 %v5642
    %v6077 = vunpack.c.l.s8.bf16 %v5643
    %v6078 = vunpack.c.l.s8.bf16 %v5644
    %v6079 = vunpack.c.h.s8.bf16 %v5638
    %v6080 = vunpack.c.h.s8.bf16 %v5639
    %v6081 = vunpack.c.h.s8.bf16 %v5640
    %v6082 = vunpack.c.h.s8.bf16 %v5641
    %v6083 = vunpack.c.h.s8.bf16 %v5642
    %v6084 = vunpack.c.h.s8.bf16 %v5643
    %v6085 = vunpack.c.h.s8.bf16 %v5644
    %v6086 = vunpack.c.l.s8.bf16 %v5645
    %v6087 = vunpack.c.l.s8.bf16 %v5646
    %v6088 = vunpack.c.l.s8.bf16 %v5647
    %v6089 = vunpack.c.l.s8.bf16 %v5648
    %v6090 = vunpack.c.l.s8.bf16 %v5649
    %v6091 = vunpack.c.l.s8.bf16 %v5650
    %v6092 = vunpack.c.l.s8.bf16 %v5651
    %v6093 = vunpack.c.h.s8.bf16 %v5645
    %v6094 = vunpack.c.h.s8.bf16 %v5646
    %v6095 = vunpack.c.h.s8.bf16 %v5647
    %v6096 = vunpack.c.h.s8.bf16 %v5648
    %v6097 = vunpack.c.h.s8.bf16 %v5649
    %v6098 = vunpack.c.h.s8.bf16 %v5650
    %v6099 = vunpack.c.h.s8.bf16 %v5651
    %6100 = vmatprep.subr.bf16.mxu0 %v5702
    %6101 = vmatpush1.bf16.msra.mxu0 %v5701
    %6102 = vmatprep.subr.bf16.mxu0 %v5695
    %6103 = vmatpush1.bf16.msra.mxu0 %v5694
    %6104 = vmatprep.subr.bf16.mxu0 %v5688
    %6105 = vmatpush1.bf16.msra.mxu0 %v5687
    %6106 = vmatprep.subr.bf16.mxu0 %v5681
    %6107 = vmatpush1.bf16.msra.mxu0 %v5680
    %6108 = vmatprep.subr.bf16.mxu0 %v5674
    %6109 = vmatpush1.bf16.msra.mxu0 %v5673
    %6110 = vmatprep.subr.bf16.mxu0 %v5667
    %6111 = vmatpush1.bf16.msra.mxu0 %v5666
    %6112 = vmatprep.subr.bf16.mxu0 %v5660
    %6113 = vmatpush1.bf16.msra.mxu0 %v5659
    %6114 = vmatprep.subr.bf16.mxu0 %v5653
    %6115 = vmatpush1.bf16.msra.mxu0 %v5652
    %6116 = vmatprep.subr.bf16.mxu0 %v5758
    %6117 = vmatpush2.bf16.msra.mxu0 %v5757
    %6118 = vmatprep.subr.bf16.mxu0 %v5751
    %6119 = vmatpush2.bf16.msra.mxu0 %v5750
    %6120 = vmatprep.subr.bf16.mxu0 %v5744
    %6121 = vmatpush2.bf16.msra.mxu0 %v5743
    %6122 = vmatprep.subr.bf16.mxu0 %v5737
    %6123 = vmatpush2.bf16.msra.mxu0 %v5736
    %6124 = vmatprep.subr.bf16.mxu0 %v5730
    %6125 = vmatpush2.bf16.msra.mxu0 %v5729
    %6126 = vmatprep.subr.bf16.mxu0 %v5723
    %6127 = vmatpush2.bf16.msra.mxu0 %v5722
    %6128 = vmatprep.subr.bf16.mxu0 %v5716
    %6129 = vmatpush2.bf16.msra.mxu0 %v5715
    %6130 = vmatprep.subr.bf16.mxu0 %v5709
    %6131 = vmatpush2.bf16.msra.mxu0 %v5708
    %6132 = vmatprep.mubr.bf16.mxu0 %v5417
    %6133 = vmatmul.mubr.bf16.gmra.mxu0 %v5416
    %v6134 = vpop.f32.mrf.mxu0
    %v6135 = vadd.f32 0.0, %v6134
    %v6136 = vpop.f32.mrf.mxu0
    %v6137 = vadd.f32 0.0, %v6136
    %v6138 = vpop.f32.mrf.mxu0
    %v6139 = vpop.f32.mrf.mxu0
    %6140 = vdwg.mxu0
    %6141 = vmatprep.subr.bf16.mxu0 %v5814
    %6142 = vmatpush1.bf16.msra.mxu0 %v5813
    %6143 = vmatprep.subr.bf16.mxu0 %v5807
    %6144 = vmatpush1.bf16.msra.mxu0 %v5806
    %6145 = vmatprep.subr.bf16.mxu0 %v5800
    %6146 = vmatpush1.bf16.msra.mxu0 %v5799
    %6147 = vmatprep.subr.bf16.mxu0 %v5793
    %6148 = vmatpush1.bf16.msra.mxu0 %v5792
    %6149 = vmatprep.subr.bf16.mxu0 %v5786
    %6150 = vmatpush1.bf16.msra.mxu0 %v5785
    %6151 = vmatprep.subr.bf16.mxu0 %v5779
    %6152 = vmatpush1.bf16.msra.mxu0 %v5778
    %6153 = vmatprep.subr.bf16.mxu0 %v5772
    %6154 = vmatpush1.bf16.msra.mxu0 %v5771
    %6155 = vmatprep.subr.bf16.mxu0 %v5765
    %6156 = vmatpush1.bf16.msra.mxu0 %v5764
    %6157 = vmatprep.subr.bf16.mxu0 %v5870
    %6158 = vmatpush2.bf16.msra.mxu0 %v5869
    %6159 = vmatprep.subr.bf16.mxu0 %v5863
    %6160 = vmatpush2.bf16.msra.mxu0 %v5862
    %6161 = vmatprep.subr.bf16.mxu0 %v5856
    %6162 = vmatpush2.bf16.msra.mxu0 %v5855
    %6163 = vmatprep.subr.bf16.mxu0 %v5849
    %6164 = vmatpush2.bf16.msra.mxu0 %v5848
    %6165 = vmatprep.subr.bf16.mxu0 %v5842
    %6166 = vmatpush2.bf16.msra.mxu0 %v5841
    %6167 = vmatprep.subr.bf16.mxu0 %v5835
    %6168 = vmatpush2.bf16.msra.mxu0 %v5834
    %6169 = vmatprep.subr.bf16.mxu0 %v5828
    %6170 = vmatpush2.bf16.msra.mxu0 %v5827
    %6171 = vmatprep.subr.bf16.mxu0 %v5821
    %6172 = vmatpush2.bf16.msra.mxu0 %v5820
    %6173 = vmatprep.mubr.bf16.mxu0 %v5419
    %6174 = vmatmul.mubr.bf16.gmra.mxu0 %v5418
    %v6175 = vpop.f32.mrf.mxu0
    %v6176 = vadd.f32 %v6135, %v6175
    %v6177 = vpop.f32.mrf.mxu0
    %v6178 = vadd.f32 %v6137, %v6177
    %v6179 = vpop.f32.mrf.mxu0
    %v6180 = vpop.f32.mrf.mxu0
    %6181 = vdwg.mxu0
    %6182 = vmatprep.subr.bf16.mxu0 %v5926
    %6183 = vmatpush1.bf16.msra.mxu0 %v5925
    %6184 = vmatprep.subr.bf16.mxu0 %v5919
    %6185 = vmatpush1.bf16.msra.mxu0 %v5918
    %6186 = vmatprep.subr.bf16.mxu0 %v5912
    %6187 = vmatpush1.bf16.msra.mxu0 %v5911
    %6188 = vmatprep.subr.bf16.mxu0 %v5905
    %6189 = vmatpush1.bf16.msra.mxu0 %v5904
    %6190 = vmatprep.subr.bf16.mxu0 %v5898
    %6191 = vmatpush1.bf16.msra.mxu0 %v5897
    %6192 = vmatprep.subr.bf16.mxu0 %v5891
    %6193 = vmatpush1.bf16.msra.mxu0 %v5890
    %6194 = vmatprep.subr.bf16.mxu0 %v5884
    %6195 = vmatpush1.bf16.msra.mxu0 %v5883
    %6196 = vmatprep.subr.bf16.mxu0 %v5877
    %6197 = vmatpush1.bf16.msra.mxu0 %v5876
    %6198 = vmatprep.subr.bf16.mxu0 %v5982
    %6199 = vmatpush2.bf16.msra.mxu0 %v5981
    %6200 = vmatprep.subr.bf16.mxu0 %v5975
    %6201 = vmatpush2.bf16.msra.mxu0 %v5974
    %6202 = vmatprep.subr.bf16.mxu0 %v5968
    %6203 = vmatpush2.bf16.msra.mxu0 %v5967
    %6204 = vmatprep.subr.bf16.mxu0 %v5961
    %6205 = vmatpush2.bf16.msra.mxu0 %v5960
    %6206 = vmatprep.subr.bf16.mxu0 %v5954
    %6207 = vmatpush2.bf16.msra.mxu0 %v5953
    %6208 = vmatprep.subr.bf16.mxu0 %v5947
    %6209 = vmatpush2.bf16.msra.mxu0 %v5946
    %6210 = vmatprep.subr.bf16.mxu0 %v5940
    %6211 = vmatpush2.bf16.msra.mxu0 %v5939
    %6212 = vmatprep.subr.bf16.mxu0 %v5933
    %6213 = vmatpush2.bf16.msra.mxu0 %v5932
    %6214 = vmatprep.mubr.bf16.mxu0 %v5421
    %6215 = vmatmul.mubr.bf16.gmra.mxu0 %v5420
    %v6216 = vpop.f32.mrf.mxu0
    %v6217 = vadd.f32 %v6176, %v6216
    %v6218 = vpop.f32.mrf.mxu0
    %v6219 = vadd.f32 %v6178, %v6218
    %v6220 = vpop.f32.mrf.mxu0
    %v6221 = vpop.f32.mrf.mxu0
    %6222 = vdwg.mxu0
    %6223 = vmatprep.subr.bf16.mxu0 %v6038
    %6224 = vmatpush1.bf16.msra.mxu0 %v6037
    %6225 = vmatprep.subr.bf16.mxu0 %v6031
    %6226 = vmatpush1.bf16.msra.mxu0 %v6030
    %6227 = vmatprep.subr.bf16.mxu0 %v6024
    %6228 = vmatpush1.bf16.msra.mxu0 %v6023
    %6229 = vmatprep.subr.bf16.mxu0 %v6017
    %6230 = vmatpush1.bf16.msra.mxu0 %v6016
    %6231 = vmatprep.subr.bf16.mxu0 %v6010
    %6232 = vmatpush1.bf16.msra.mxu0 %v6009
    %6233 = vmatprep.subr.bf16.mxu0 %v6003
    %6234 = vmatpush1.bf16.msra.mxu0 %v6002
    %6235 = vmatprep.subr.bf16.mxu0 %v5996
    %6236 = vmatpush1.bf16.msra.mxu0 %v5995
    %6237 = vmatprep.subr.bf16.mxu0 %v5989
    %6238 = vmatpush1.bf16.msra.mxu0 %v5988
    %6239 = vmatprep.subr.bf16.mxu0 %v6094
    %6240 = vmatpush2.bf16.msra.mxu0 %v6093
    %6241 = vmatprep.subr.bf16.mxu0 %v6087
    %6242 = vmatpush2.bf16.msra.mxu0 %v6086
    %6243 = vmatprep.subr.bf16.mxu0 %v6080
    %6244 = vmatpush2.bf16.msra.mxu0 %v6079
    %6245 = vmatprep.subr.bf16.mxu0 %v6073
    %6246 = vmatpush2.bf16.msra.mxu0 %v6072
    %6247 = vmatprep.subr.bf16.mxu0 %v6066
    %6248 = vmatpush2.bf16.msra.mxu0 %v6065
    %6249 = vmatprep.subr.bf16.mxu0 %v6059
    %6250 = vmatpush2.bf16.msra.mxu0 %v6058
    %6251 = vmatprep.subr.bf16.mxu0 %v6052
    %6252 = vmatpush2.bf16.msra.mxu0 %v6051
    %6253 = vmatprep.subr.bf16.mxu0 %v6045
    %6254 = vmatpush2.bf16.msra.mxu0 %v6044
    %6255 = vmatprep.mubr.bf16.mxu0 %v5423
    %6256 = vmatmul.mubr.bf16.gmra.mxu0 %v5422
    %v6257 = vpop.f32.mrf.mxu0
    %v6258 = vadd.f32 %v6217, %v6257
    %v6259 = vpop.f32.mrf.mxu0
    %v6260 = vadd.f32 %v6219, %v6259
    %v6261 = vpop.f32.mrf.mxu0
    %v6262 = vpop.f32.mrf.mxu0
    %6263 = vdwg.mxu0
    %6264 = vmatprep.subr.bf16.mxu0 %v5704
    %6265 = vmatpush1.bf16.msra.mxu0 %v5703
    %6266 = vmatprep.subr.bf16.mxu0 %v5697
    %6267 = vmatpush1.bf16.msra.mxu0 %v5696
    %6268 = vmatprep.subr.bf16.mxu0 %v5690
    %6269 = vmatpush1.bf16.msra.mxu0 %v5689
    %6270 = vmatprep.subr.bf16.mxu0 %v5683
    %6271 = vmatpush1.bf16.msra.mxu0 %v5682
    %6272 = vmatprep.subr.bf16.mxu0 %v5676
    %6273 = vmatpush1.bf16.msra.mxu0 %v5675
    %6274 = vmatprep.subr.bf16.mxu0 %v5669
    %6275 = vmatpush1.bf16.msra.mxu0 %v5668
    %6276 = vmatprep.subr.bf16.mxu0 %v5662
    %6277 = vmatpush1.bf16.msra.mxu0 %v5661
    %6278 = vmatprep.subr.bf16.mxu0 %v5655
    %6279 = vmatpush1.bf16.msra.mxu0 %v5654
    %6280 = vmatprep.subr.bf16.mxu0 %v5760
    %6281 = vmatpush2.bf16.msra.mxu0 %v5759
    %6282 = vmatprep.subr.bf16.mxu0 %v5753
    %6283 = vmatpush2.bf16.msra.mxu0 %v5752
    %6284 = vmatprep.subr.bf16.mxu0 %v5746
    %6285 = vmatpush2.bf16.msra.mxu0 %v5745
    %6286 = vmatprep.subr.bf16.mxu0 %v5739
    %6287 = vmatpush2.bf16.msra.mxu0 %v5738
    %6288 = vmatprep.subr.bf16.mxu0 %v5732
    %6289 = vmatpush2.bf16.msra.mxu0 %v5731
    %6290 = vmatprep.subr.bf16.mxu0 %v5725
    %6291 = vmatpush2.bf16.msra.mxu0 %v5724
    %6292 = vmatprep.subr.bf16.mxu0 %v5718
    %6293 = vmatpush2.bf16.msra.mxu0 %v5717
    %6294 = vmatprep.subr.bf16.mxu0 %v5711
    %6295 = vmatpush2.bf16.msra.mxu0 %v5710
    %6296 = vmatprep.mubr.bf16.mxu0 %v5417
    %6297 = vmatmul.mubr.bf16.gmra.mxu0 %v5416
    %v6298 = vpop.f32.mrf.mxu0
    %v6299 = vadd.f32 0.0, %v6298
    %v6300 = vpop.f32.mrf.mxu0
    %v6301 = vadd.f32 0.0, %v6300
    %v6302 = vpop.f32.mrf.mxu0
    %v6303 = vpop.f32.mrf.mxu0
    %6304 = vdwg.mxu0
    %6305 = vmatprep.subr.bf16.mxu0 %v5816
    %6306 = vmatpush1.bf16.msra.mxu0 %v5815
    %6307 = vmatprep.subr.bf16.mxu0 %v5809
    %6308 = vmatpush1.bf16.msra.mxu0 %v5808
    %6309 = vmatprep.subr.bf16.mxu0 %v5802
    %6310 = vmatpush1.bf16.msra.mxu0 %v5801
    %6311 = vmatprep.subr.bf16.mxu0 %v5795
    %6312 = vmatpush1.bf16.msra.mxu0 %v5794
    %6313 = vmatprep.subr.bf16.mxu0 %v5788
    %6314 = vmatpush1.bf16.msra.mxu0 %v5787
    %6315 = vmatprep.subr.bf16.mxu0 %v5781
    %6316 = vmatpush1.bf16.msra.mxu0 %v5780
    %6317 = vmatprep.subr.bf16.mxu0 %v5774
    %6318 = vmatpush1.bf16.msra.mxu0 %v5773
    %6319 = vmatprep.subr.bf16.mxu0 %v5767
    %6320 = vmatpush1.bf16.msra.mxu0 %v5766
    %6321 = vmatprep.subr.bf16.mxu0 %v5872
    %6322 = vmatpush2.bf16.msra.mxu0 %v5871
    %6323 = vmatprep.subr.bf16.mxu0 %v5865
    %6324 = vmatpush2.bf16.msra.mxu0 %v5864
    %6325 = vmatprep.subr.bf16.mxu0 %v5858
    %6326 = vmatpush2.bf16.msra.mxu0 %v5857
    %6327 = vmatprep.subr.bf16.mxu0 %v5851
    %6328 = vmatpush2.bf16.msra.mxu0 %v5850
    %6329 = vmatprep.subr.bf16.mxu0 %v5844
    %6330 = vmatpush2.bf16.msra.mxu0 %v5843
    %6331 = vmatprep.subr.bf16.mxu0 %v5837
    %6332 = vmatpush2.bf16.msra.mxu0 %v5836
    %6333 = vmatprep.subr.bf16.mxu0 %v5830
    %6334 = vmatpush2.bf16.msra.mxu0 %v5829
    %6335 = vmatprep.subr.bf16.mxu0 %v5823
    %6336 = vmatpush2.bf16.msra.mxu0 %v5822
    %6337 = vmatprep.mubr.bf16.mxu0 %v5419
    %6338 = vmatmul.mubr.bf16.gmra.mxu0 %v5418
    %v6339 = vpop.f32.mrf.mxu0
    %v6340 = vadd.f32 %v6299, %v6339
    %v6341 = vpop.f32.mrf.mxu0
    %v6342 = vadd.f32 %v6301, %v6341
    %v6343 = vpop.f32.mrf.mxu0
    %v6344 = vpop.f32.mrf.mxu0
    %6345 = vdwg.mxu0
    %6346 = vmatprep.subr.bf16.mxu0 %v5928
    %6347 = vmatpush1.bf16.msra.mxu0 %v5927
    %6348 = vmatprep.subr.bf16.mxu0 %v5921
    %6349 = vmatpush1.bf16.msra.mxu0 %v5920
    %6350 = vmatprep.subr.bf16.mxu0 %v5914
    %6351 = vmatpush1.bf16.msra.mxu0 %v5913
    %6352 = vmatprep.subr.bf16.mxu0 %v5907
    %6353 = vmatpush1.bf16.msra.mxu0 %v5906
    %6354 = vmatprep.subr.bf16.mxu0 %v5900
    %6355 = vmatpush1.bf16.msra.mxu0 %v5899
    %6356 = vmatprep.subr.bf16.mxu0 %v5893
    %6357 = vmatpush1.bf16.msra.mxu0 %v5892
    %6358 = vmatprep.subr.bf16.mxu0 %v5886
    %6359 = vmatpush1.bf16.msra.mxu0 %v5885
    %6360 = vmatprep.subr.bf16.mxu0 %v5879
    %6361 = vmatpush1.bf16.msra.mxu0 %v5878
    %6362 = vmatprep.subr.bf16.mxu0 %v5984
    %6363 = vmatpush2.bf16.msra.mxu0 %v5983
    %6364 = vmatprep.subr.bf16.mxu0 %v5977
    %6365 = vmatpush2.bf16.msra.mxu0 %v5976
    %6366 = vmatprep.subr.bf16.mxu0 %v5970
    %6367 = vmatpush2.bf16.msra.mxu0 %v5969
    %6368 = vmatprep.subr.bf16.mxu0 %v5963
    %6369 = vmatpush2.bf16.msra.mxu0 %v5962
    %6370 = vmatprep.subr.bf16.mxu0 %v5956
    %6371 = vmatpush2.bf16.msra.mxu0 %v5955
    %6372 = vmatprep.subr.bf16.mxu0 %v5949
    %6373 = vmatpush2.bf16.msra.mxu0 %v5948
    %6374 = vmatprep.subr.bf16.mxu0 %v5942
    %6375 = vmatpush2.bf16.msra.mxu0 %v5941
    %6376 = vmatprep.subr.bf16.mxu0 %v5935
    %6377 = vmatpush2.bf16.msra.mxu0 %v5934
    %6378 = vmatprep.mubr.bf16.mxu0 %v5421
    %6379 = vmatmul.mubr.bf16.gmra.mxu0 %v5420
    %v6380 = vpop.f32.mrf.mxu0
    %v6381 = vadd.f32 %v6340, %v6380
    %v6382 = vpop.f32.mrf.mxu0
    %v6383 = vadd.f32 %v6342, %v6382
    %v6384 = vpop.f32.mrf.mxu0
    %v6385 = vpop.f32.mrf.mxu0
    %6386 = vdwg.mxu0
    %6387 = vmatprep.subr.bf16.mxu0 %v6040
    %6388 = vmatpush1.bf16.msra.mxu0 %v6039
    %6389 = vmatprep.subr.bf16.mxu0 %v6033
    %6390 = vmatpush1.bf16.msra.mxu0 %v6032
    %6391 = vmatprep.subr.bf16.mxu0 %v6026
    %6392 = vmatpush1.bf16.msra.mxu0 %v6025
    %6393 = vmatprep.subr.bf16.mxu0 %v6019
    %6394 = vmatpush1.bf16.msra.mxu0 %v6018
    %6395 = vmatprep.subr.bf16.mxu0 %v6012
    %6396 = vmatpush1.bf16.msra.mxu0 %v6011
    %6397 = vmatprep.subr.bf16.mxu0 %v6005
    %6398 = vmatpush1.bf16.msra.mxu0 %v6004
    %6399 = vmatprep.subr.bf16.mxu0 %v5998
    %6400 = vmatpush1.bf16.msra.mxu0 %v5997
    %6401 = vmatprep.subr.bf16.mxu0 %v5991
    %6402 = vmatpush1.bf16.msra.mxu0 %v5990
    %6403 = vmatprep.subr.bf16.mxu0 %v6096
    %6404 = vmatpush2.bf16.msra.mxu0 %v6095
    %6405 = vmatprep.subr.bf16.mxu0 %v6089
    %6406 = vmatpush2.bf16.msra.mxu0 %v6088
    %6407 = vmatprep.subr.bf16.mxu0 %v6082
    %6408 = vmatpush2.bf16.msra.mxu0 %v6081
    %6409 = vmatprep.subr.bf16.mxu0 %v6075
    %6410 = vmatpush2.bf16.msra.mxu0 %v6074
    %6411 = vmatprep.subr.bf16.mxu0 %v6068
    %6412 = vmatpush2.bf16.msra.mxu0 %v6067
    %6413 = vmatprep.subr.bf16.mxu0 %v6061
    %6414 = vmatpush2.bf16.msra.mxu0 %v6060
    %6415 = vmatprep.subr.bf16.mxu0 %v6054
    %6416 = vmatpush2.bf16.msra.mxu0 %v6053
    %6417 = vmatprep.subr.bf16.mxu0 %v6047
    %6418 = vmatpush2.bf16.msra.mxu0 %v6046
    %6419 = vmatprep.mubr.bf16.mxu0 %v5423
    %6420 = vmatmul.mubr.bf16.gmra.mxu0 %v5422
    %v6421 = vpop.f32.mrf.mxu0
    %v6422 = vadd.f32 %v6381, %v6421
    %v6423 = vpop.f32.mrf.mxu0
    %v6424 = vadd.f32 %v6383, %v6423
    %v6425 = vpop.f32.mrf.mxu0
    %v6426 = vpop.f32.mrf.mxu0
    %6427 = vdwg.mxu0
    %6428 = vmatprep.subr.bf16.mxu0 %v5706
    %6429 = vmatpush1.bf16.msra.mxu0 %v5705
    %6430 = vmatprep.subr.bf16.mxu0 %v5699
    %6431 = vmatpush1.bf16.msra.mxu0 %v5698
    %6432 = vmatprep.subr.bf16.mxu0 %v5692
    %6433 = vmatpush1.bf16.msra.mxu0 %v5691
    %6434 = vmatprep.subr.bf16.mxu0 %v5685
    %6435 = vmatpush1.bf16.msra.mxu0 %v5684
    %6436 = vmatprep.subr.bf16.mxu0 %v5678
    %6437 = vmatpush1.bf16.msra.mxu0 %v5677
    %6438 = vmatprep.subr.bf16.mxu0 %v5671
    %6439 = vmatpush1.bf16.msra.mxu0 %v5670
    %6440 = vmatprep.subr.bf16.mxu0 %v5664
    %6441 = vmatpush1.bf16.msra.mxu0 %v5663
    %6442 = vmatprep.subr.bf16.mxu0 %v5657
    %6443 = vmatpush1.bf16.msra.mxu0 %v5656
    %6444 = vmatprep.subr.bf16.mxu0 %v5762
    %6445 = vmatpush2.bf16.msra.mxu0 %v5761
    %6446 = vmatprep.subr.bf16.mxu0 %v5755
    %6447 = vmatpush2.bf16.msra.mxu0 %v5754
    %6448 = vmatprep.subr.bf16.mxu0 %v5748
    %6449 = vmatpush2.bf16.msra.mxu0 %v5747
    %6450 = vmatprep.subr.bf16.mxu0 %v5741
    %6451 = vmatpush2.bf16.msra.mxu0 %v5740
    %6452 = vmatprep.subr.bf16.mxu0 %v5734
    %6453 = vmatpush2.bf16.msra.mxu0 %v5733
    %6454 = vmatprep.subr.bf16.mxu0 %v5727
    %6455 = vmatpush2.bf16.msra.mxu0 %v5726
    %6456 = vmatprep.subr.bf16.mxu0 %v5720
    %6457 = vmatpush2.bf16.msra.mxu0 %v5719
    %6458 = vmatprep.subr.bf16.mxu0 %v5713
    %6459 = vmatpush2.bf16.msra.mxu0 %v5712
    %6460 = vmatprep.mubr.bf16.mxu0 %v5417
    %6461 = vmatmul.mubr.bf16.gmra.mxu0 %v5416
    %v6462 = vpop.f32.mrf.mxu0
    %v6463 = vadd.f32 0.0, %v6462
    %v6464 = vpop.f32.mrf.mxu0
    %v6465 = vadd.f32 0.0, %v6464
    %v6466 = vpop.f32.mrf.mxu0
    %v6467 = vpop.f32.mrf.mxu0
    %6468 = vdwg.mxu0
    %6469 = vmatprep.subr.bf16.mxu0 %v5818
    %6470 = vmatpush1.bf16.msra.mxu0 %v5817
    %6471 = vmatprep.subr.bf16.mxu0 %v5811
    %6472 = vmatpush1.bf16.msra.mxu0 %v5810
    %6473 = vmatprep.subr.bf16.mxu0 %v5804
    %6474 = vmatpush1.bf16.msra.mxu0 %v5803
    %6475 = vmatprep.subr.bf16.mxu0 %v5797
    %6476 = vmatpush1.bf16.msra.mxu0 %v5796
    %6477 = vmatprep.subr.bf16.mxu0 %v5790
    %6478 = vmatpush1.bf16.msra.mxu0 %v5789
    %6479 = vmatprep.subr.bf16.mxu0 %v5783
    %6480 = vmatpush1.bf16.msra.mxu0 %v5782
    %6481 = vmatprep.subr.bf16.mxu0 %v5776
    %6482 = vmatpush1.bf16.msra.mxu0 %v5775
    %6483 = vmatprep.subr.bf16.mxu0 %v5769
    %6484 = vmatpush1.bf16.msra.mxu0 %v5768
    %6485 = vmatprep.subr.bf16.mxu0 %v5874
    %6486 = vmatpush2.bf16.msra.mxu0 %v5873
    %6487 = vmatprep.subr.bf16.mxu0 %v5867
    %6488 = vmatpush2.bf16.msra.mxu0 %v5866
    %6489 = vmatprep.subr.bf16.mxu0 %v5860
    %6490 = vmatpush2.bf16.msra.mxu0 %v5859
    %6491 = vmatprep.subr.bf16.mxu0 %v5853
    %6492 = vmatpush2.bf16.msra.mxu0 %v5852
    %6493 = vmatprep.subr.bf16.mxu0 %v5846
    %6494 = vmatpush2.bf16.msra.mxu0 %v5845
    %6495 = vmatprep.subr.bf16.mxu0 %v5839
    %6496 = vmatpush2.bf16.msra.mxu0 %v5838
    %6497 = vmatprep.subr.bf16.mxu0 %v5832
    %6498 = vmatpush2.bf16.msra.mxu0 %v5831
    %6499 = vmatprep.subr.bf16.mxu0 %v5825
    %6500 = vmatpush2.bf16.msra.mxu0 %v5824
    %6501 = vmatprep.mubr.bf16.mxu0 %v5419
    %6502 = vmatmul.mubr.bf16.gmra.mxu0 %v5418
    %v6503 = vpop.f32.mrf.mxu0
    %v6504 = vadd.f32 %v6463, %v6503
    %v6505 = vpop.f32.mrf.mxu0
    %v6506 = vadd.f32 %v6465, %v6505
    %v6507 = vpop.f32.mrf.mxu0
    %v6508 = vpop.f32.mrf.mxu0
    %6509 = vdwg.mxu0
    %6510 = vmatprep.subr.bf16.mxu0 %v5930
    %6511 = vmatpush1.bf16.msra.mxu0 %v5929
    %6512 = vmatprep.subr.bf16.mxu0 %v5923
    %6513 = vmatpush1.bf16.msra.mxu0 %v5922
    %6514 = vmatprep.subr.bf16.mxu0 %v5916
    %6515 = vmatpush1.bf16.msra.mxu0 %v5915
    %6516 = vmatprep.subr.bf16.mxu0 %v5909
    %6517 = vmatpush1.bf16.msra.mxu0 %v5908
    %6518 = vmatprep.subr.bf16.mxu0 %v5902
    %6519 = vmatpush1.bf16.msra.mxu0 %v5901
    %6520 = vmatprep.subr.bf16.mxu0 %v5895
    %6521 = vmatpush1.bf16.msra.mxu0 %v5894
    %6522 = vmatprep.subr.bf16.mxu0 %v5888
    %6523 = vmatpush1.bf16.msra.mxu0 %v5887
    %6524 = vmatprep.subr.bf16.mxu0 %v5881
    %6525 = vmatpush1.bf16.msra.mxu0 %v5880
    %6526 = vmatprep.subr.bf16.mxu0 %v5986
    %6527 = vmatpush2.bf16.msra.mxu0 %v5985
    %6528 = vmatprep.subr.bf16.mxu0 %v5979
    %6529 = vmatpush2.bf16.msra.mxu0 %v5978
    %6530 = vmatprep.subr.bf16.mxu0 %v5972
    %6531 = vmatpush2.bf16.msra.mxu0 %v5971
    %6532 = vmatprep.subr.bf16.mxu0 %v5965
    %6533 = vmatpush2.bf16.msra.mxu0 %v5964
    %6534 = vmatprep.subr.bf16.mxu0 %v5958
    %6535 = vmatpush2.bf16.msra.mxu0 %v5957
    %6536 = vmatprep.subr.bf16.mxu0 %v5951
    %6537 = vmatpush2.bf16.msra.mxu0 %v5950
    %6538 = vmatprep.subr.bf16.mxu0 %v5944
    %6539 = vmatpush2.bf16.msra.mxu0 %v5943
    %6540 = vmatprep.subr.bf16.mxu0 %v5937
    %6541 = vmatpush2.bf16.msra.mxu0 %v5936
    %6542 = vmatprep.mubr.bf16.mxu0 %v5421
    %6543 = vmatmul.mubr.bf16.gmra.mxu0 %v5420
    %v6544 = vpop.f32.mrf.mxu0
    %v6545 = vadd.f32 %v6504, %v6544
    %v6546 = vpop.f32.mrf.mxu0
    %v6547 = vadd.f32 %v6506, %v6546
    %v6548 = vpop.f32.mrf.mxu0
    %v6549 = vpop.f32.mrf.mxu0
    %6550 = vdwg.mxu0
    %6551 = vmatprep.subr.bf16.mxu0 %v6042
    %6552 = vmatpush1.bf16.msra.mxu0 %v6041
    %6553 = vmatprep.subr.bf16.mxu0 %v6035
    %6554 = vmatpush1.bf16.msra.mxu0 %v6034
    %6555 = vmatprep.subr.bf16.mxu0 %v6028
    %6556 = vmatpush1.bf16.msra.mxu0 %v6027
    %6557 = vmatprep.subr.bf16.mxu0 %v6021
    %6558 = vmatpush1.bf16.msra.mxu0 %v6020
    %6559 = vmatprep.subr.bf16.mxu0 %v6014
    %6560 = vmatpush1.bf16.msra.mxu0 %v6013
    %6561 = vmatprep.subr.bf16.mxu0 %v6007
    %6562 = vmatpush1.bf16.msra.mxu0 %v6006
    %6563 = vmatprep.subr.bf16.mxu0 %v6000
    %6564 = vmatpush1.bf16.msra.mxu0 %v5999
    %6565 = vmatprep.subr.bf16.mxu0 %v5993
    %6566 = vmatpush1.bf16.msra.mxu0 %v5992
    %6567 = vmatprep.subr.bf16.mxu0 %v6098
    %6568 = vmatpush2.bf16.msra.mxu0 %v6097
    %6569 = vmatprep.subr.bf16.mxu0 %v6091
    %6570 = vmatpush2.bf16.msra.mxu0 %v6090
    %6571 = vmatprep.subr.bf16.mxu0 %v6084
    %6572 = vmatpush2.bf16.msra.mxu0 %v6083
    %6573 = vmatprep.subr.bf16.mxu0 %v6077
    %6574 = vmatpush2.bf16.msra.mxu0 %v6076
    %6575 = vmatprep.subr.bf16.mxu0 %v6070
    %6576 = vmatpush2.bf16.msra.mxu0 %v6069
    %6577 = vmatprep.subr.bf16.mxu0 %v6063
    %6578 = vmatpush2.bf16.msra.mxu0 %v6062
    %6579 = vmatprep.subr.bf16.mxu0 %v6056
    %6580 = vmatpush2.bf16.msra.mxu0 %v6055
    %6581 = vmatprep.subr.bf16.mxu0 %v6049
    %6582 = vmatpush2.bf16.msra.mxu0 %v6048
    %6583 = vmatprep.mubr.bf16.mxu0 %v5423
    %6584 = vmatmul.mubr.bf16.gmra.mxu0 %v5422
    %v6585 = vpop.f32.mrf.mxu0
    %v6586 = vadd.f32 %v6545, %v6585
    %v6587 = vpop.f32.mrf.mxu0
    %v6588 = vadd.f32 %v6547, %v6587
    %v6589 = vpop.f32.mrf.mxu0
    %v6590 = vpop.f32.mrf.mxu0
    %6591 = vdwg.mxu0
    %6592 = vmatprep.subr.bf16.mxu0 0
    %6593 = vmatpush1.bf16.msra.mxu0 %v5707
    %6594 = vmatprep.subr.bf16.mxu0 0
    %6595 = vmatpush1.bf16.msra.mxu0 %v5700
    %6596 = vmatprep.subr.bf16.mxu0 0
    %6597 = vmatpush1.bf16.msra.mxu0 %v5693
    %6598 = vmatprep.subr.bf16.mxu0 0
    %6599 = vmatpush1.bf16.msra.mxu0 %v5686
    %6600 = vmatprep.subr.bf16.mxu0 0
    %6601 = vmatpush1.bf16.msra.mxu0 %v5679
    %6602 = vmatprep.subr.bf16.mxu0 0
    %6603 = vmatpush1.bf16.msra.mxu0 %v5672
    %6604 = vmatprep.subr.bf16.mxu0 0
    %6605 = vmatpush1.bf16.msra.mxu0 %v5665
    %6606 = vmatprep.subr.bf16.mxu0 0
    %6607 = vmatpush1.bf16.msra.mxu0 %v5658
    %6608 = vmatprep.subr.bf16.mxu0 0
    %6609 = vmatpush2.bf16.msra.mxu0 %v5763
    %6610 = vmatprep.subr.bf16.mxu0 0
    %6611 = vmatpush2.bf16.msra.mxu0 %v5756
    %6612 = vmatprep.subr.bf16.mxu0 0
    %6613 = vmatpush2.bf16.msra.mxu0 %v5749
    %6614 = vmatprep.subr.bf16.mxu0 0
    %6615 = vmatpush2.bf16.msra.mxu0 %v5742
    %6616 = vmatprep.subr.bf16.mxu0 0
    %6617 = vmatpush2.bf16.msra.mxu0 %v5735
    %6618 = vmatprep.subr.bf16.mxu0 0
    %6619 = vmatpush2.bf16.msra.mxu0 %v5728
    %6620 = vmatprep.subr.bf16.mxu0 0
    %6621 = vmatpush2.bf16.msra.mxu0 %v5721
    %6622 = vmatprep.subr.bf16.mxu0 0
    %6623 = vmatpush2.bf16.msra.mxu0 %v5714
    %6624 = vmatprep.mubr.bf16.mxu0 %v5417
    %6625 = vmatmul.mubr.bf16.gmra.mxu0 %v5416
    %v6626 = vpop.f32.mrf.mxu0
    %v6627 = vadd.f32 0.0, %v6626
    %v6628 = vpop.f32.mrf.mxu0
    %v6629 = vpop.f32.mrf.mxu0
    %v6630 = vpop.f32.mrf.mxu0
    %6631 = vdwg.mxu0
    %6632 = vmatprep.subr.bf16.mxu0 0
    %6633 = vmatpush1.bf16.msra.mxu0 %v5819
    %6634 = vmatprep.subr.bf16.mxu0 0
    %6635 = vmatpush1.bf16.msra.mxu0 %v5812
    %6636 = vmatprep.subr.bf16.mxu0 0
    %6637 = vmatpush1.bf16.msra.mxu0 %v5805
    %6638 = vmatprep.subr.bf16.mxu0 0
    %6639 = vmatpush1.bf16.msra.mxu0 %v5798
    %6640 = vmatprep.subr.bf16.mxu0 0
    %6641 = vmatpush1.bf16.msra.mxu0 %v5791
    %6642 = vmatprep.subr.bf16.mxu0 0
    %6643 = vmatpush1.bf16.msra.mxu0 %v5784
    %6644 = vmatprep.subr.bf16.mxu0 0
    %6645 = vmatpush1.bf16.msra.mxu0 %v5777
    %6646 = vmatprep.subr.bf16.mxu0 0
    %6647 = vmatpush1.bf16.msra.mxu0 %v5770
    %6648 = vmatprep.subr.bf16.mxu0 0
    %6649 = vmatpush2.bf16.msra.mxu0 %v5875
    %6650 = vmatprep.subr.bf16.mxu0 0
    %6651 = vmatpush2.bf16.msra.mxu0 %v5868
    %6652 = vmatprep.subr.bf16.mxu0 0
    %6653 = vmatpush2.bf16.msra.mxu0 %v5861
    %6654 = vmatprep.subr.bf16.mxu0 0
    %6655 = vmatpush2.bf16.msra.mxu0 %v5854
    %6656 = vmatprep.subr.bf16.mxu0 0
    %6657 = vmatpush2.bf16.msra.mxu0 %v5847
    %6658 = vmatprep.subr.bf16.mxu0 0
    %6659 = vmatpush2.bf16.msra.mxu0 %v5840
    %6660 = vmatprep.subr.bf16.mxu0 0
    %6661 = vmatpush2.bf16.msra.mxu0 %v5833
    %6662 = vmatprep.subr.bf16.mxu0 0
    %6663 = vmatpush2.bf16.msra.mxu0 %v5826
    %6664 = vmatprep.mubr.bf16.mxu0 %v5419
    %6665 = vmatmul.mubr.bf16.gmra.mxu0 %v5418
    %v6666 = vpop.f32.mrf.mxu0
    %v6667 = vadd.f32 %v6627, %v6666
    %v6668 = vpop.f32.mrf.mxu0
    %v6669 = vpop.f32.mrf.mxu0
    %v6670 = vpop.f32.mrf.mxu0
    %6671 = vdwg.mxu0
    %6672 = vmatprep.subr.bf16.mxu0 0
    %6673 = vmatpush1.bf16.msra.mxu0 %v5931
    %6674 = vmatprep.subr.bf16.mxu0 0
    %6675 = vmatpush1.bf16.msra.mxu0 %v5924
    %6676 = vmatprep.subr.bf16.mxu0 0
    %6677 = vmatpush1.bf16.msra.mxu0 %v5917
    %6678 = vmatprep.subr.bf16.mxu0 0
    %6679 = vmatpush1.bf16.msra.mxu0 %v5910
    %6680 = vmatprep.subr.bf16.mxu0 0
    %6681 = vmatpush1.bf16.msra.mxu0 %v5903
    %6682 = vmatprep.subr.bf16.mxu0 0
    %6683 = vmatpush1.bf16.msra.mxu0 %v5896
    %6684 = vmatprep.subr.bf16.mxu0 0
    %6685 = vmatpush1.bf16.msra.mxu0 %v5889
    %6686 = vmatprep.subr.bf16.mxu0 0
    %6687 = vmatpush1.bf16.msra.mxu0 %v5882
    %6688 = vmatprep.subr.bf16.mxu0 0
    %6689 = vmatpush2.bf16.msra.mxu0 %v5987
    %6690 = vmatprep.subr.bf16.mxu0 0
    %6691 = vmatpush2.bf16.msra.mxu0 %v5980
    %6692 = vmatprep.subr.bf16.mxu0 0
    %6693 = vmatpush2.bf16.msra.mxu0 %v5973
    %6694 = vmatprep.subr.bf16.mxu0 0
    %6695 = vmatpush2.bf16.msra.mxu0 %v5966
    %6696 = vmatprep.subr.bf16.mxu0 0
    %6697 = vmatpush2.bf16.msra.mxu0 %v5959
    %6698 = vmatprep.subr.bf16.mxu0 0
    %6699 = vmatpush2.bf16.msra.mxu0 %v5952
    %6700 = vmatprep.subr.bf16.mxu0 0
    %6701 = vmatpush2.bf16.msra.mxu0 %v5945
    %6702 = vmatprep.subr.bf16.mxu0 0
    %6703 = vmatpush2.bf16.msra.mxu0 %v5938
    %6704 = vmatprep.mubr.bf16.mxu0 %v5421
    %6705 = vmatmul.mubr.bf16.gmra.mxu0 %v5420
    %v6706 = vpop.f32.mrf.mxu0
    %v6707 = vadd.f32 %v6667, %v6706
    %v6708 = vpop.f32.mrf.mxu0
    %v6709 = vpop.f32.mrf.mxu0
    %v6710 = vpop.f32.mrf.mxu0
    %6711 = vdwg.mxu0
    %6712 = vmatprep.subr.bf16.mxu0 0
    %6713 = vmatpush1.bf16.msra.mxu0 %v6043
    %6714 = vmatprep.subr.bf16.mxu0 0
    %6715 = vmatpush1.bf16.msra.mxu0 %v6036
    %6716 = vmatprep.subr.bf16.mxu0 0
    %6717 = vmatpush1.bf16.msra.mxu0 %v6029
    %6718 = vmatprep.subr.bf16.mxu0 0
    %6719 = vmatpush1.bf16.msra.mxu0 %v6022
    %6720 = vmatprep.subr.bf16.mxu0 0
    %6721 = vmatpush1.bf16.msra.mxu0 %v6015
    %6722 = vmatprep.subr.bf16.mxu0 0
    %6723 = vmatpush1.bf16.msra.mxu0 %v6008
    %6724 = vmatprep.subr.bf16.mxu0 0
    %6725 = vmatpush1.bf16.msra.mxu0 %v6001
    %6726 = vmatprep.subr.bf16.mxu0 0
    %6727 = vmatpush1.bf16.msra.mxu0 %v5994
    %6728 = vmatprep.subr.bf16.mxu0 0
    %6729 = vmatpush2.bf16.msra.mxu0 %v6099
    %6730 = vmatprep.subr.bf16.mxu0 0
    %6731 = vmatpush2.bf16.msra.mxu0 %v6092
    %6732 = vmatprep.subr.bf16.mxu0 0
    %6733 = vmatpush2.bf16.msra.mxu0 %v6085
    %6734 = vmatprep.subr.bf16.mxu0 0
    %6735 = vmatpush2.bf16.msra.mxu0 %v6078
    %6736 = vmatprep.subr.bf16.mxu0 0
    %6737 = vmatpush2.bf16.msra.mxu0 %v6071
    %6738 = vmatprep.subr.bf16.mxu0 0
    %6739 = vmatpush2.bf16.msra.mxu0 %v6064
    %6740 = vmatprep.subr.bf16.mxu0 0
    %6741 = vmatpush2.bf16.msra.mxu0 %v6057
    %6742 = vmatprep.subr.bf16.mxu0 0
    %6743 = vmatpush2.bf16.msra.mxu0 %v6050
    %6744 = vmatprep.mubr.bf16.mxu0 %v5423
    %6745 = vmatmul.mubr.bf16.gmra.mxu0 %v5422
    %v6746 = vpop.f32.mrf.mxu0
    %v6747 = vadd.f32 %v6707, %v6746
    %v6748 = vpop.f32.mrf.mxu0
    %v6749 = vpop.f32.mrf.mxu0
    %v6750 = vpop.f32.mrf.mxu0
    %6751 = vdwg.mxu0
    %s6752 = scalar_lea.vmem [#allocation17], 5
    %v6753 = vld [vmem:[%s6752] ss:$8 sm:$0xf]
    %v6754 = vld [vmem:[%s6752] ss:$8 sm:$0xf0]
    %v6755 = vor.u32 %v6753, %v6754
    %s6756 = scalar_lea.vmem [#allocation17], 4
    %v6757 = vld [vmem:[%s6756] ss:$8 sm:$0xf]
    %v6758 = vld [vmem:[%s6756] ss:$8 sm:$0xf0]
    %v6759 = vor.u32 %v6757, %v6758
    %v6761 = vlaneseq
    %v6762 = vshrl.u32 %v6761, 7
    %v6763 = vsub.s32 0, %v6762
    %v6764 = vrot.slane %v6755, %v6763
    %v6765 = vlaneseq
    %v6766 = vshrl.u32 %v6765, 7
    %v6767 = vsub.s32 1, %v6766
    %v6768 = vrot.slane %v6755, %v6767
    %v6769 = vlaneseq
    %v6770 = vshrl.u32 %v6769, 7
    %v6771 = vsub.s32 2, %v6770
    %v6772 = vrot.slane %v6755, %v6771
    %v6773 = vlaneseq
    %v6774 = vshrl.u32 %v6773, 7
    %v6775 = vsub.s32 3, %v6774
    %v6776 = vrot.slane %v6755, %v6775
    %v6777 = vlaneseq
    %v6778 = vshrl.u32 %v6777, 7
    %v6779 = vsub.s32 4, %v6778
    %v6780 = vrot.slane %v6755, %v6779
    %v6781 = vlaneseq
    %v6782 = vshrl.u32 %v6781, 7
    %v6783 = vsub.s32 5, %v6782
    %v6784 = vrot.slane %v6755, %v6783
    %v6785 = vlaneseq
    %v6786 = vshrl.u32 %v6785, 7
    %v6787 = vsub.s32 6, %v6786
    %v6788 = vrot.slane %v6755, %v6787
    %v6796 = vmul.f32 %v6258, %v6764
    %v6797 = vmul.f32 %v6260, %v6768
    %v6798 = vmul.f32 %v6422, %v6772
    %v6799 = vmul.f32 %v6424, %v6776
    %v6800 = vmul.f32 %v6586, %v6780
    %v6801 = vmul.f32 %v6588, %v6784
    %v6802 = vmul.f32 %v6747, %v6788
    %v6804 = vlaneseq
    %v6805 = vshrl.u32 %v6804, 7
    %v6806 = vsub.s32 0, %v6805
    %v6807 = vrot.slane %v6759, %v6806
    %v6808 = vlaneseq
    %v6809 = vshrl.u32 %v6808, 7
    %v6810 = vsub.s32 1, %v6809
    %v6811 = vrot.slane %v6759, %v6810
    %v6812 = vlaneseq
    %v6813 = vshrl.u32 %v6812, 7
    %v6814 = vsub.s32 2, %v6813
    %v6815 = vrot.slane %v6759, %v6814
    %v6816 = vlaneseq
    %v6817 = vshrl.u32 %v6816, 7
    %v6818 = vsub.s32 3, %v6817
    %v6819 = vrot.slane %v6759, %v6818
    %v6820 = vlaneseq
    %v6821 = vshrl.u32 %v6820, 7
    %v6822 = vsub.s32 4, %v6821
    %v6823 = vrot.slane %v6759, %v6822
    %v6824 = vlaneseq
    %v6825 = vshrl.u32 %v6824, 7
    %v6826 = vsub.s32 5, %v6825
    %v6827 = vrot.slane %v6759, %v6826
    %v6828 = vlaneseq
    %v6829 = vshrl.u32 %v6828, 7
    %v6830 = vsub.s32 6, %v6829
    %v6831 = vrot.slane %v6759, %v6830
    %v6839 = vadd.f32 %v6796, %v6807
    %v6840 = vadd.f32 %v6797, %v6811
    %v6841 = vadd.f32 %v6798, %v6815
    %v6842 = vadd.f32 %v6799, %v6819
    %v6843 = vadd.f32 %v6800, %v6823
    %v6844 = vadd.f32 %v6801, %v6827
    %v6845 = vadd.f32 %v6802, %v6831
    %vm6846 = vcmp.gt.f32.partialorder %v6839, 0.0
    %vm6847 = vcmp.gt.f32.partialorder %v6840, 0.0
    %vm6848 = vcmp.gt.f32.partialorder %v6841, 0.0
    %vm6849 = vcmp.gt.f32.partialorder %v6842, 0.0
    %vm6850 = vcmp.gt.f32.partialorder %v6843, 0.0
    %vm6851 = vcmp.gt.f32.partialorder %v6844, 0.0
    %vm6852 = vcmp.gt.f32.partialorder %v6845, 0.0
    %v6853 = vstv %s72
    %v6854 = vmul.f32 %v6853, %v6839
    %v6855 = vmul.f32 %v6853, %v6840
    %v6856 = vmul.f32 %v6853, %v6841
    %v6857 = vmul.f32 %v6853, %v6842
    %v6858 = vmul.f32 %v6853, %v6843
    %v6859 = vmul.f32 %v6853, %v6844
    %v6860 = vmul.f32 %v6853, %v6845
    %v6861 = vsel %vm6846, %v6839, %v6854
    %v6862 = vsel %vm6847, %v6840, %v6855
    %v6863 = vsel %vm6848, %v6841, %v6856
    %v6864 = vsel %vm6849, %v6842, %v6857
    %v6865 = vsel %vm6850, %v6843, %v6858
    %v6866 = vsel %vm6851, %v6844, %v6859
    %v6867 = vsel %vm6852, %v6845, %v6860
    %v6868 = vpack.c.bf16 %v6861, %v6861
    %v6869 = vpack.c.bf16 %v6862, %v6862
    %v6870 = vpack.c.bf16 %v6863, %v6863
    %v6871 = vpack.c.bf16 %v6864, %v6864
    %v6872 = vpack.c.bf16 %v6865, %v6865
    %v6873 = vpack.c.bf16 %v6866, %v6866
    %v6874 = vpack.c.bf16 %v6867, %v6867
    %s6875 = smul.u32 2, 112
    %s6876 = smul.u32 %s6875, 6
    %s6877 = sshll.u32 %s6876, 4
    %6878 = dma.done %s128, %s6877
    %v6879 = vld [vmem:[#allocation6] sm:$0xff]
    %v6880 = vld [vmem:[#allocation6 + $0x8] sm:$0xff]
    %v6881 = vld [vmem:[#allocation6 + $0x10] sm:$0xff]
    %v6882 = vld [vmem:[#allocation6 + $0x18] sm:$0xff]
    %v6883 = vld [vmem:[#allocation6 + $0x20] sm:$0xff]
    %v6884 = vld [vmem:[#allocation6 + $0x28] sm:$0xff]
    %v6885 = vld [vmem:[#allocation6 + $0x30] sm:$0xff]
    %v6886 = vld [vmem:[#allocation6 + $0x38] sm:$0xff]
    %v6887 = vld [vmem:[#allocation6 + $0x40] sm:$0xff]
    %v6888 = vld [vmem:[#allocation6 + $0x48] sm:$0xff]
    %v6889 = vld [vmem:[#allocation6 + $0x50] sm:$0xff]
    %v6890 = vld [vmem:[#allocation6 + $0x58] sm:$0xff]
    %v6891 = vld [vmem:[#allocation6 + $0x60] sm:$0xff]
    %v6892 = vld [vmem:[#allocation6 + $0x68] sm:$0xff]
    %v6893 = vld [vmem:[#allocation6 + $0x70] sm:$0xff]
    %v6894 = vld [vmem:[#allocation6 + $0x78] sm:$0xff]
    %v6895 = vld [vmem:[#allocation6 + $0x80] sm:$0xff]
    %v6896 = vld [vmem:[#allocation6 + $0x88] sm:$0xff]
    %v6897 = vld [vmem:[#allocation6 + $0x90] sm:$0xff]
    %v6898 = vld [vmem:[#allocation6 + $0x98] sm:$0xff]
    %v6899 = vld [vmem:[#allocation6 + $0xa0] sm:$0xff]
    %v6900 = vld [vmem:[#allocation6 + $0xa8] sm:$0xff]
    %v6901 = vld [vmem:[#allocation6 + $0xb0] sm:$0xff]
    %v6902 = vld [vmem:[#allocation6 + $0xb8] sm:$0xff]
    %v6903 = vld [vmem:[#allocation6 + $0xc0] sm:$0xff]
    %v6904 = vld [vmem:[#allocation6 + $0xc8] sm:$0xff]
    %v6905 = vld [vmem:[#allocation6 + $0xd0] sm:$0xff]
    %v6906 = vld [vmem:[#allocation6 + $0xd8] sm:$0xff]
    %v6907 = vld [vmem:[#allocation6 + $0xe0] sm:$0xff]
    %v6908 = vld [vmem:[#allocation6 + $0xe8] sm:$0xff]
    %v6909 = vld [vmem:[#allocation6 + $0xf0] sm:$0xff]
    %v6910 = vld [vmem:[#allocation6 + $0xf8] sm:$0xff]
    %v6911 = vld [vmem:[#allocation6 + $0x100] sm:$0xff]
    %v6912 = vld [vmem:[#allocation6 + $0x108] sm:$0xff]
    %v6913 = vld [vmem:[#allocation6 + $0x110] sm:$0xff]
    %v6914 = vld [vmem:[#allocation6 + $0x118] sm:$0xff]
    %v6915 = vld [vmem:[#allocation6 + $0x120] sm:$0xff]
    %v6916 = vld [vmem:[#allocation6 + $0x128] sm:$0xff]
    %v6917 = vld [vmem:[#allocation6 + $0x130] sm:$0xff]
    %v6918 = vld [vmem:[#allocation6 + $0x138] sm:$0xff]
    %v6919 = vld [vmem:[#allocation6 + $0x140] sm:$0xff]
    %v6920 = vld [vmem:[#allocation6 + $0x148] sm:$0xff]
    %v6921 = vld [vmem:[#allocation6 + $0x150] sm:$0xff]
    %v6922 = vld [vmem:[#allocation6 + $0x158] sm:$0xff]
    %v6923 = vld [vmem:[#allocation6 + $0x160] sm:$0xff]
    %v6924 = vld [vmem:[#allocation6 + $0x168] sm:$0xff]
    %v6925 = vld [vmem:[#allocation6 + $0x170] sm:$0xff]
    %v6926 = vld [vmem:[#allocation6 + $0x178] sm:$0xff]
    %v6927 = vld [vmem:[#allocation6 + $0x180] sm:$0xff]
    %v6928 = vld [vmem:[#allocation6 + $0x188] sm:$0xff]
    %v6929 = vld [vmem:[#allocation6 + $0x190] sm:$0xff]
    %v6930 = vld [vmem:[#allocation6 + $0x198] sm:$0xff]
    %v6931 = vld [vmem:[#allocation6 + $0x1a0] sm:$0xff]
    %v6932 = vld [vmem:[#allocation6 + $0x1a8] sm:$0xff]
    %v6933 = vld [vmem:[#allocation6 + $0x1b0] sm:$0xff]
    %v6934 = vld [vmem:[#allocation6 + $0x1b8] sm:$0xff]
    %v6935 = vld [vmem:[#allocation6 + $0x1c0] sm:$0xff]
    %v6936 = vld [vmem:[#allocation6 + $0x1c8] sm:$0xff]
    %v6937 = vld [vmem:[#allocation6 + $0x1d0] sm:$0xff]
    %v6938 = vld [vmem:[#allocation6 + $0x1d8] sm:$0xff]
    %v6939 = vld [vmem:[#allocation6 + $0x1e0] sm:$0xff]
    %v6940 = vld [vmem:[#allocation6 + $0x1e8] sm:$0xff]
    %v6941 = vld [vmem:[#allocation6 + $0x1f0] sm:$0xff]
    %v6942 = vld [vmem:[#allocation6 + $0x1f8] sm:$0xff]
    %v6943 = vld [vmem:[#allocation6 + $0x200] sm:$0xff]
    %v6944 = vld [vmem:[#allocation6 + $0x208] sm:$0xff]
    %v6945 = vld [vmem:[#allocation6 + $0x210] sm:$0xff]
    %v6946 = vld [vmem:[#allocation6 + $0x218] sm:$0xff]
    %v6947 = vld [vmem:[#allocation6 + $0x220] sm:$0xff]
    %v6948 = vld [vmem:[#allocation6 + $0x228] sm:$0xff]
    %v6949 = vld [vmem:[#allocation6 + $0x230] sm:$0xff]
    %v6950 = vld [vmem:[#allocation6 + $0x238] sm:$0xff]
    %v6951 = vld [vmem:[#allocation6 + $0x240] sm:$0xff]
    %v6952 = vld [vmem:[#allocation6 + $0x248] sm:$0xff]
    %v6953 = vld [vmem:[#allocation6 + $0x250] sm:$0xff]
    %v6954 = vld [vmem:[#allocation6 + $0x258] sm:$0xff]
    %v6955 = vld [vmem:[#allocation6 + $0x260] sm:$0xff]
    %v6956 = vld [vmem:[#allocation6 + $0x268] sm:$0xff]
    %v6957 = vld [vmem:[#allocation6 + $0x270] sm:$0xff]
    %v6958 = vld [vmem:[#allocation6 + $0x278] sm:$0xff]
    %v6959 = vld [vmem:[#allocation6 + $0x280] sm:$0xff]
    %v6960 = vld [vmem:[#allocation6 + $0x288] sm:$0xff]
    %v6961 = vld [vmem:[#allocation6 + $0x290] sm:$0xff]
    %v6962 = vld [vmem:[#allocation6 + $0x298] sm:$0xff]
    %v6963 = vld [vmem:[#allocation6 + $0x2a0] sm:$0xff]
    %v6964 = vld [vmem:[#allocation6 + $0x2a8] sm:$0xff]
    %v6965 = vld [vmem:[#allocation6 + $0x2b0] sm:$0xff]
    %v6966 = vld [vmem:[#allocation6 + $0x2b8] sm:$0xff]
    %v6967 = vld [vmem:[#allocation6 + $0x2c0] sm:$0xff]
    %v6968 = vld [vmem:[#allocation6 + $0x2c8] sm:$0xff]
    %v6969 = vld [vmem:[#allocation6 + $0x2d0] sm:$0xff]
    %v6970 = vld [vmem:[#allocation6 + $0x2d8] sm:$0xff]
    %v6971 = vld [vmem:[#allocation6 + $0x2e0] sm:$0xff]
    %v6972 = vld [vmem:[#allocation6 + $0x2e8] sm:$0xff]
    %v6973 = vld [vmem:[#allocation6 + $0x2f0] sm:$0xff]
    %v6974 = vld [vmem:[#allocation6 + $0x2f8] sm:$0xff]
    %v6975 = vld [vmem:[#allocation6 + $0x300] sm:$0xff]
    %v6976 = vld [vmem:[#allocation6 + $0x308] sm:$0xff]
    %v6977 = vld [vmem:[#allocation6 + $0x310] sm:$0xff]
    %v6978 = vld [vmem:[#allocation6 + $0x318] sm:$0xff]
    %v6979 = vld [vmem:[#allocation6 + $0x320] sm:$0xff]
    %v6980 = vld [vmem:[#allocation6 + $0x328] sm:$0xff]
    %v6981 = vld [vmem:[#allocation6 + $0x330] sm:$0xff]
    %v6982 = vld [vmem:[#allocation6 + $0x338] sm:$0xff]
    %v6983 = vld [vmem:[#allocation6 + $0x340] sm:$0xff]
    %v6984 = vld [vmem:[#allocation6 + $0x348] sm:$0xff]
    %v6985 = vld [vmem:[#allocation6 + $0x350] sm:$0xff]
    %v6986 = vld [vmem:[#allocation6 + $0x358] sm:$0xff]
    %v6987 = vld [vmem:[#allocation6 + $0x360] sm:$0xff]
    %v6988 = vld [vmem:[#allocation6 + $0x368] sm:$0xff]
    %v6989 = vld [vmem:[#allocation6 + $0x370] sm:$0xff]
    %v6990 = vld [vmem:[#allocation6 + $0x378] sm:$0xff]
    %v6991 = vld [vmem:[#allocation6 + $0x380] sm:$0xff]
    %v6992 = vld [vmem:[#allocation6 + $0x388] sm:$0xff]
    %v6993 = vld [vmem:[#allocation6 + $0x390] sm:$0xff]
    %v6994 = vld [vmem:[#allocation6 + $0x398] sm:$0xff]
    %v6995 = vld [vmem:[#allocation6 + $0x3a0] sm:$0xff]
    %v6996 = vld [vmem:[#allocation6 + $0x3a8] sm:$0xff]
    %v6997 = vld [vmem:[#allocation6 + $0x3b0] sm:$0xff]
    %v6998 = vld [vmem:[#allocation6 + $0x3b8] sm:$0xff]
    %v6999 = vld [vmem:[#allocation6 + $0x3c0] sm:$0xff]
    %v7000 = vld [vmem:[#allocation6 + $0x3c8] sm:$0xff]
    %v7001 = vld [vmem:[#allocation6 + $0x3d0] sm:$0xff]
    %v7002 = vld [vmem:[#allocation6 + $0x3d8] sm:$0xff]
    %v7003 = vld [vmem:[#allocation6 + $0x3e0] sm:$0xff]
    %v7004 = vld [vmem:[#allocation6 + $0x3e8] sm:$0xff]
    %v7005 = vld [vmem:[#allocation6 + $0x3f0] sm:$0xff]
    %v7006 = vld [vmem:[#allocation6 + $0x3f8] sm:$0xff]
    %v7007 = vld [vmem:[#allocation6 + $0x400] sm:$0xff]
    %v7008 = vld [vmem:[#allocation6 + $0x408] sm:$0xff]
    %v7009 = vld [vmem:[#allocation6 + $0x410] sm:$0xff]
    %v7010 = vld [vmem:[#allocation6 + $0x418] sm:$0xff]
    %v7011 = vld [vmem:[#allocation6 + $0x420] sm:$0xff]
    %v7012 = vld [vmem:[#allocation6 + $0x428] sm:$0xff]
    %v7013 = vld [vmem:[#allocation6 + $0x430] sm:$0xff]
    %v7014 = vld [vmem:[#allocation6 + $0x438] sm:$0xff]
    %v7015 = vld [vmem:[#allocation6 + $0x440] sm:$0xff]
    %v7016 = vld [vmem:[#allocation6 + $0x448] sm:$0xff]
    %v7017 = vld [vmem:[#allocation6 + $0x450] sm:$0xff]
    %v7018 = vld [vmem:[#allocation6 + $0x458] sm:$0xff]
    %v7019 = vld [vmem:[#allocation6 + $0x460] sm:$0xff]
    %v7020 = vld [vmem:[#allocation6 + $0x468] sm:$0xff]
    %v7021 = vld [vmem:[#allocation6 + $0x470] sm:$0xff]
    %v7022 = vld [vmem:[#allocation6 + $0x478] sm:$0xff]
    %v7023 = vld [vmem:[#allocation6 + $0x480] sm:$0xff]
    %v7024 = vld [vmem:[#allocation6 + $0x488] sm:$0xff]
    %v7025 = vld [vmem:[#allocation6 + $0x490] sm:$0xff]
    %v7026 = vld [vmem:[#allocation6 + $0x498] sm:$0xff]
    %v7027 = vld [vmem:[#allocation6 + $0x4a0] sm:$0xff]
    %v7028 = vld [vmem:[#allocation6 + $0x4a8] sm:$0xff]
    %v7029 = vld [vmem:[#allocation6 + $0x4b0] sm:$0xff]
    %v7030 = vld [vmem:[#allocation6 + $0x4b8] sm:$0xff]
    %v7031 = vld [vmem:[#allocation6 + $0x4c0] sm:$0xff]
    %v7032 = vld [vmem:[#allocation6 + $0x4c8] sm:$0xff]
    %v7033 = vld [vmem:[#allocation6 + $0x4d0] sm:$0xff]
    %v7034 = vld [vmem:[#allocation6 + $0x4d8] sm:$0xff]
    %v7035 = vld [vmem:[#allocation6 + $0x4e0] sm:$0xff]
    %v7036 = vld [vmem:[#allocation6 + $0x4e8] sm:$0xff]
    %v7037 = vld [vmem:[#allocation6 + $0x4f0] sm:$0xff]
    %v7038 = vld [vmem:[#allocation6 + $0x4f8] sm:$0xff]
    %v7039 = vld [vmem:[#allocation6 + $0x500] sm:$0xff]
    %v7040 = vld [vmem:[#allocation6 + $0x508] sm:$0xff]
    %v7041 = vld [vmem:[#allocation6 + $0x510] sm:$0xff]
    %v7042 = vld [vmem:[#allocation6 + $0x518] sm:$0xff]
    %v7043 = vld [vmem:[#allocation6 + $0x520] sm:$0xff]
    %v7044 = vld [vmem:[#allocation6 + $0x528] sm:$0xff]
    %v7045 = vld [vmem:[#allocation6 + $0x530] sm:$0xff]
    %v7046 = vld [vmem:[#allocation6 + $0x538] sm:$0xff]
    %v7047 = vunpack.c.l.s8.bf16 %v6879
    %v7048 = vunpack.c.l.s8.bf16 %v6880
    %v7049 = vunpack.c.l.s8.bf16 %v6881
    %v7050 = vunpack.c.l.s8.bf16 %v6882
    %v7051 = vunpack.c.l.s8.bf16 %v6883
    %v7052 = vunpack.c.l.s8.bf16 %v6884
    %v7053 = vunpack.c.h.s8.bf16 %v6879
    %v7054 = vunpack.c.h.s8.bf16 %v6880
    %v7055 = vunpack.c.h.s8.bf16 %v6881
    %v7056 = vunpack.c.h.s8.bf16 %v6882
    %v7057 = vunpack.c.h.s8.bf16 %v6883
    %v7058 = vunpack.c.h.s8.bf16 %v6884
    %v7059 = vunpack.c.l.s8.bf16 %v6885
    %v7060 = vunpack.c.l.s8.bf16 %v6886
    %v7061 = vunpack.c.l.s8.bf16 %v6887
    %v7062 = vunpack.c.l.s8.bf16 %v6888
    %v7063 = vunpack.c.l.s8.bf16 %v6889
    %v7064 = vunpack.c.l.s8.bf16 %v6890
    %v7065 = vunpack.c.h.s8.bf16 %v6885
    %v7066 = vunpack.c.h.s8.bf16 %v6886
    %v7067 = vunpack.c.h.s8.bf16 %v6887
    %v7068 = vunpack.c.h.s8.bf16 %v6888
    %v7069 = vunpack.c.h.s8.bf16 %v6889
    %v7070 = vunpack.c.h.s8.bf16 %v6890
    %v7071 = vunpack.c.l.s8.bf16 %v6891
    %v7072 = vunpack.c.l.s8.bf16 %v6892
    %v7073 = vunpack.c.l.s8.bf16 %v6893
    %v7074 = vunpack.c.l.s8.bf16 %v6894
    %v7075 = vunpack.c.l.s8.bf16 %v6895
    %v7076 = vunpack.c.l.s8.bf16 %v6896
    %v7077 = vunpack.c.h.s8.bf16 %v6891
    %v7078 = vunpack.c.h.s8.bf16 %v6892
    %v7079 = vunpack.c.h.s8.bf16 %v6893
    %v7080 = vunpack.c.h.s8.bf16 %v6894
    %v7081 = vunpack.c.h.s8.bf16 %v6895
    %v7082 = vunpack.c.h.s8.bf16 %v6896
    %v7083 = vunpack.c.l.s8.bf16 %v6897
    %v7084 = vunpack.c.l.s8.bf16 %v6898
    %v7085 = vunpack.c.l.s8.bf16 %v6899
    %v7086 = vunpack.c.l.s8.bf16 %v6900
    %v7087 = vunpack.c.l.s8.bf16 %v6901
    %v7088 = vunpack.c.l.s8.bf16 %v6902
    %v7089 = vunpack.c.h.s8.bf16 %v6897
    %v7090 = vunpack.c.h.s8.bf16 %v6898
    %v7091 = vunpack.c.h.s8.bf16 %v6899
    %v7092 = vunpack.c.h.s8.bf16 %v6900
    %v7093 = vunpack.c.h.s8.bf16 %v6901
    %v7094 = vunpack.c.h.s8.bf16 %v6902
    %v7095 = vunpack.c.l.s8.bf16 %v6903
    %v7096 = vunpack.c.l.s8.bf16 %v6904
    %v7097 = vunpack.c.l.s8.bf16 %v6905
    %v7098 = vunpack.c.l.s8.bf16 %v6906
    %v7099 = vunpack.c.l.s8.bf16 %v6907
    %v7100 = vunpack.c.l.s8.bf16 %v6908
    %v7101 = vunpack.c.h.s8.bf16 %v6903
    %v7102 = vunpack.c.h.s8.bf16 %v6904
    %v7103 = vunpack.c.h.s8.bf16 %v6905
    %v7104 = vunpack.c.h.s8.bf16 %v6906
    %v7105 = vunpack.c.h.s8.bf16 %v6907
    %v7106 = vunpack.c.h.s8.bf16 %v6908
    %v7107 = vunpack.c.l.s8.bf16 %v6909
    %v7108 = vunpack.c.l.s8.bf16 %v6910
    %v7109 = vunpack.c.l.s8.bf16 %v6911
    %v7110 = vunpack.c.l.s8.bf16 %v6912
    %v7111 = vunpack.c.l.s8.bf16 %v6913
    %v7112 = vunpack.c.l.s8.bf16 %v6914
    %v7113 = vunpack.c.h.s8.bf16 %v6909
    %v7114 = vunpack.c.h.s8.bf16 %v6910
    %v7115 = vunpack.c.h.s8.bf16 %v6911
    %v7116 = vunpack.c.h.s8.bf16 %v6912
    %v7117 = vunpack.c.h.s8.bf16 %v6913
    %v7118 = vunpack.c.h.s8.bf16 %v6914
    %v7119 = vunpack.c.l.s8.bf16 %v6915
    %v7120 = vunpack.c.l.s8.bf16 %v6916
    %v7121 = vunpack.c.l.s8.bf16 %v6917
    %v7122 = vunpack.c.l.s8.bf16 %v6918
    %v7123 = vunpack.c.l.s8.bf16 %v6919
    %v7124 = vunpack.c.l.s8.bf16 %v6920
    %v7125 = vunpack.c.h.s8.bf16 %v6915
    %v7126 = vunpack.c.h.s8.bf16 %v6916
    %v7127 = vunpack.c.h.s8.bf16 %v6917
    %v7128 = vunpack.c.h.s8.bf16 %v6918
    %v7129 = vunpack.c.h.s8.bf16 %v6919
    %v7130 = vunpack.c.h.s8.bf16 %v6920
    %v7131 = vunpack.c.l.s8.bf16 %v6921
    %v7132 = vunpack.c.l.s8.bf16 %v6922
    %v7133 = vunpack.c.l.s8.bf16 %v6923
    %v7134 = vunpack.c.l.s8.bf16 %v6924
    %v7135 = vunpack.c.l.s8.bf16 %v6925
    %v7136 = vunpack.c.l.s8.bf16 %v6926
    %v7137 = vunpack.c.h.s8.bf16 %v6921
    %v7138 = vunpack.c.h.s8.bf16 %v6922
    %v7139 = vunpack.c.h.s8.bf16 %v6923
    %v7140 = vunpack.c.h.s8.bf16 %v6924
    %v7141 = vunpack.c.h.s8.bf16 %v6925
    %v7142 = vunpack.c.h.s8.bf16 %v6926
    %v7143 = vunpack.c.l.s8.bf16 %v6927
    %v7144 = vunpack.c.l.s8.bf16 %v6928
    %v7145 = vunpack.c.l.s8.bf16 %v6929
    %v7146 = vunpack.c.l.s8.bf16 %v6930
    %v7147 = vunpack.c.l.s8.bf16 %v6931
    %v7148 = vunpack.c.l.s8.bf16 %v6932
    %v7149 = vunpack.c.h.s8.bf16 %v6927
    %v7150 = vunpack.c.h.s8.bf16 %v6928
    %v7151 = vunpack.c.h.s8.bf16 %v6929
    %v7152 = vunpack.c.h.s8.bf16 %v6930
    %v7153 = vunpack.c.h.s8.bf16 %v6931
    %v7154 = vunpack.c.h.s8.bf16 %v6932
    %v7155 = vunpack.c.l.s8.bf16 %v6933
    %v7156 = vunpack.c.l.s8.bf16 %v6934
    %v7157 = vunpack.c.l.s8.bf16 %v6935
    %v7158 = vunpack.c.l.s8.bf16 %v6936
    %v7159 = vunpack.c.l.s8.bf16 %v6937
    %v7160 = vunpack.c.l.s8.bf16 %v6938
    %v7161 = vunpack.c.h.s8.bf16 %v6933
    %v7162 = vunpack.c.h.s8.bf16 %v6934
    %v7163 = vunpack.c.h.s8.bf16 %v6935
    %v7164 = vunpack.c.h.s8.bf16 %v6936
    %v7165 = vunpack.c.h.s8.bf16 %v6937
    %v7166 = vunpack.c.h.s8.bf16 %v6938
    %v7167 = vunpack.c.l.s8.bf16 %v6939
    %v7168 = vunpack.c.l.s8.bf16 %v6940
    %v7169 = vunpack.c.l.s8.bf16 %v6941
    %v7170 = vunpack.c.l.s8.bf16 %v6942
    %v7171 = vunpack.c.l.s8.bf16 %v6943
    %v7172 = vunpack.c.l.s8.bf16 %v6944
    %v7173 = vunpack.c.h.s8.bf16 %v6939
    %v7174 = vunpack.c.h.s8.bf16 %v6940
    %v7175 = vunpack.c.h.s8.bf16 %v6941
    %v7176 = vunpack.c.h.s8.bf16 %v6942
    %v7177 = vunpack.c.h.s8.bf16 %v6943
    %v7178 = vunpack.c.h.s8.bf16 %v6944
    %v7179 = vunpack.c.l.s8.bf16 %v6945
    %v7180 = vunpack.c.l.s8.bf16 %v6946
    %v7181 = vunpack.c.l.s8.bf16 %v6947
    %v7182 = vunpack.c.l.s8.bf16 %v6948
    %v7183 = vunpack.c.l.s8.bf16 %v6949
    %v7184 = vunpack.c.l.s8.bf16 %v6950
    %v7185 = vunpack.c.h.s8.bf16 %v6945
    %v7186 = vunpack.c.h.s8.bf16 %v6946
    %v7187 = vunpack.c.h.s8.bf16 %v6947
    %v7188 = vunpack.c.h.s8.bf16 %v6948
    %v7189 = vunpack.c.h.s8.bf16 %v6949
    %v7190 = vunpack.c.h.s8.bf16 %v6950
    %v7191 = vunpack.c.l.s8.bf16 %v6951
    %v7192 = vunpack.c.l.s8.bf16 %v6952
    %v7193 = vunpack.c.l.s8.bf16 %v6953
    %v7194 = vunpack.c.l.s8.bf16 %v6954
    %v7195 = vunpack.c.l.s8.bf16 %v6955
    %v7196 = vunpack.c.l.s8.bf16 %v6956
    %v7197 = vunpack.c.h.s8.bf16 %v6951
    %v7198 = vunpack.c.h.s8.bf16 %v6952
    %v7199 = vunpack.c.h.s8.bf16 %v6953
    %v7200 = vunpack.c.h.s8.bf16 %v6954
    %v7201 = vunpack.c.h.s8.bf16 %v6955
    %v7202 = vunpack.c.h.s8.bf16 %v6956
    %v7203 = vunpack.c.l.s8.bf16 %v6957
    %v7204 = vunpack.c.l.s8.bf16 %v6958
    %v7205 = vunpack.c.l.s8.bf16 %v6959
    %v7206 = vunpack.c.l.s8.bf16 %v6960
    %v7207 = vunpack.c.l.s8.bf16 %v6961
    %v7208 = vunpack.c.l.s8.bf16 %v6962
    %v7209 = vunpack.c.h.s8.bf16 %v6957
    %v7210 = vunpack.c.h.s8.bf16 %v6958
    %v7211 = vunpack.c.h.s8.bf16 %v6959
    %v7212 = vunpack.c.h.s8.bf16 %v6960
    %v7213 = vunpack.c.h.s8.bf16 %v6961
    %v7214 = vunpack.c.h.s8.bf16 %v6962
    %v7215 = vunpack.c.l.s8.bf16 %v6963
    %v7216 = vunpack.c.l.s8.bf16 %v6964
    %v7217 = vunpack.c.l.s8.bf16 %v6965
    %v7218 = vunpack.c.l.s8.bf16 %v6966
    %v7219 = vunpack.c.l.s8.bf16 %v6967
    %v7220 = vunpack.c.l.s8.bf16 %v6968
    %v7221 = vunpack.c.h.s8.bf16 %v6963
    %v7222 = vunpack.c.h.s8.bf16 %v6964
    %v7223 = vunpack.c.h.s8.bf16 %v6965
    %v7224 = vunpack.c.h.s8.bf16 %v6966
    %v7225 = vunpack.c.h.s8.bf16 %v6967
    %v7226 = vunpack.c.h.s8.bf16 %v6968
    %v7227 = vunpack.c.l.s8.bf16 %v6969
    %v7228 = vunpack.c.l.s8.bf16 %v6970
    %v7229 = vunpack.c.l.s8.bf16 %v6971
    %v7230 = vunpack.c.l.s8.bf16 %v6972
    %v7231 = vunpack.c.l.s8.bf16 %v6973
    %v7232 = vunpack.c.l.s8.bf16 %v6974
    %v7233 = vunpack.c.h.s8.bf16 %v6969
    %v7234 = vunpack.c.h.s8.bf16 %v6970
    %v7235 = vunpack.c.h.s8.bf16 %v6971
    %v7236 = vunpack.c.h.s8.bf16 %v6972
    %v7237 = vunpack.c.h.s8.bf16 %v6973
    %v7238 = vunpack.c.h.s8.bf16 %v6974
    %v7239 = vunpack.c.l.s8.bf16 %v6975
    %v7240 = vunpack.c.l.s8.bf16 %v6976
    %v7241 = vunpack.c.l.s8.bf16 %v6977
    %v7242 = vunpack.c.l.s8.bf16 %v6978
    %v7243 = vunpack.c.l.s8.bf16 %v6979
    %v7244 = vunpack.c.l.s8.bf16 %v6980
    %v7245 = vunpack.c.h.s8.bf16 %v6975
    %v7246 = vunpack.c.h.s8.bf16 %v6976
    %v7247 = vunpack.c.h.s8.bf16 %v6977
    %v7248 = vunpack.c.h.s8.bf16 %v6978
    %v7249 = vunpack.c.h.s8.bf16 %v6979
    %v7250 = vunpack.c.h.s8.bf16 %v6980
    %v7251 = vunpack.c.l.s8.bf16 %v6981
    %v7252 = vunpack.c.l.s8.bf16 %v6982
    %v7253 = vunpack.c.l.s8.bf16 %v6983
    %v7254 = vunpack.c.l.s8.bf16 %v6984
    %v7255 = vunpack.c.l.s8.bf16 %v6985
    %v7256 = vunpack.c.l.s8.bf16 %v6986
    %v7257 = vunpack.c.h.s8.bf16 %v6981
    %v7258 = vunpack.c.h.s8.bf16 %v6982
    %v7259 = vunpack.c.h.s8.bf16 %v6983
    %v7260 = vunpack.c.h.s8.bf16 %v6984
    %v7261 = vunpack.c.h.s8.bf16 %v6985
    %v7262 = vunpack.c.h.s8.bf16 %v6986
    %v7263 = vunpack.c.l.s8.bf16 %v6987
    %v7264 = vunpack.c.l.s8.bf16 %v6988
    %v7265 = vunpack.c.l.s8.bf16 %v6989
    %v7266 = vunpack.c.l.s8.bf16 %v6990
    %v7267 = vunpack.c.l.s8.bf16 %v6991
    %v7268 = vunpack.c.l.s8.bf16 %v6992
    %v7269 = vunpack.c.h.s8.bf16 %v6987
    %v7270 = vunpack.c.h.s8.bf16 %v6988
    %v7271 = vunpack.c.h.s8.bf16 %v6989
    %v7272 = vunpack.c.h.s8.bf16 %v6990
    %v7273 = vunpack.c.h.s8.bf16 %v6991
    %v7274 = vunpack.c.h.s8.bf16 %v6992
    %v7275 = vunpack.c.l.s8.bf16 %v6993
    %v7276 = vunpack.c.l.s8.bf16 %v6994
    %v7277 = vunpack.c.l.s8.bf16 %v6995
    %v7278 = vunpack.c.l.s8.bf16 %v6996
    %v7279 = vunpack.c.l.s8.bf16 %v6997
    %v7280 = vunpack.c.l.s8.bf16 %v6998
    %v7281 = vunpack.c.h.s8.bf16 %v6993
    %v7282 = vunpack.c.h.s8.bf16 %v6994
    %v7283 = vunpack.c.h.s8.bf16 %v6995
    %v7284 = vunpack.c.h.s8.bf16 %v6996
    %v7285 = vunpack.c.h.s8.bf16 %v6997
    %v7286 = vunpack.c.h.s8.bf16 %v6998
    %v7287 = vunpack.c.l.s8.bf16 %v6999
    %v7288 = vunpack.c.l.s8.bf16 %v7000
    %v7289 = vunpack.c.l.s8.bf16 %v7001
    %v7290 = vunpack.c.l.s8.bf16 %v7002
    %v7291 = vunpack.c.l.s8.bf16 %v7003
    %v7292 = vunpack.c.l.s8.bf16 %v7004
    %v7293 = vunpack.c.h.s8.bf16 %v6999
    %v7294 = vunpack.c.h.s8.bf16 %v7000
    %v7295 = vunpack.c.h.s8.bf16 %v7001
    %v7296 = vunpack.c.h.s8.bf16 %v7002
    %v7297 = vunpack.c.h.s8.bf16 %v7003
    %v7298 = vunpack.c.h.s8.bf16 %v7004
    %v7299 = vunpack.c.l.s8.bf16 %v7005
    %v7300 = vunpack.c.l.s8.bf16 %v7006
    %v7301 = vunpack.c.l.s8.bf16 %v7007
    %v7302 = vunpack.c.l.s8.bf16 %v7008
    %v7303 = vunpack.c.l.s8.bf16 %v7009
    %v7304 = vunpack.c.l.s8.bf16 %v7010
    %v7305 = vunpack.c.h.s8.bf16 %v7005
    %v7306 = vunpack.c.h.s8.bf16 %v7006
    %v7307 = vunpack.c.h.s8.bf16 %v7007
    %v7308 = vunpack.c.h.s8.bf16 %v7008
    %v7309 = vunpack.c.h.s8.bf16 %v7009
    %v7310 = vunpack.c.h.s8.bf16 %v7010
    %v7311 = vunpack.c.l.s8.bf16 %v7011
    %v7312 = vunpack.c.l.s8.bf16 %v7012
    %v7313 = vunpack.c.l.s8.bf16 %v7013
    %v7314 = vunpack.c.l.s8.bf16 %v7014
    %v7315 = vunpack.c.l.s8.bf16 %v7015
    %v7316 = vunpack.c.l.s8.bf16 %v7016
    %v7317 = vunpack.c.h.s8.bf16 %v7011
    %v7318 = vunpack.c.h.s8.bf16 %v7012
    %v7319 = vunpack.c.h.s8.bf16 %v7013
    %v7320 = vunpack.c.h.s8.bf16 %v7014
    %v7321 = vunpack.c.h.s8.bf16 %v7015
    %v7322 = vunpack.c.h.s8.bf16 %v7016
    %v7323 = vunpack.c.l.s8.bf16 %v7017
    %v7324 = vunpack.c.l.s8.bf16 %v7018
    %v7325 = vunpack.c.l.s8.bf16 %v7019
    %v7326 = vunpack.c.l.s8.bf16 %v7020
    %v7327 = vunpack.c.l.s8.bf16 %v7021
    %v7328 = vunpack.c.l.s8.bf16 %v7022
    %v7329 = vunpack.c.h.s8.bf16 %v7017
    %v7330 = vunpack.c.h.s8.bf16 %v7018
    %v7331 = vunpack.c.h.s8.bf16 %v7019
    %v7332 = vunpack.c.h.s8.bf16 %v7020
    %v7333 = vunpack.c.h.s8.bf16 %v7021
    %v7334 = vunpack.c.h.s8.bf16 %v7022
    %v7335 = vunpack.c.l.s8.bf16 %v7023
    %v7336 = vunpack.c.l.s8.bf16 %v7024
    %v7337 = vunpack.c.l.s8.bf16 %v7025
    %v7338 = vunpack.c.l.s8.bf16 %v7026
    %v7339 = vunpack.c.l.s8.bf16 %v7027
    %v7340 = vunpack.c.l.s8.bf16 %v7028
    %v7341 = vunpack.c.h.s8.bf16 %v7023
    %v7342 = vunpack.c.h.s8.bf16 %v7024
    %v7343 = vunpack.c.h.s8.bf16 %v7025
    %v7344 = vunpack.c.h.s8.bf16 %v7026
    %v7345 = vunpack.c.h.s8.bf16 %v7027
    %v7346 = vunpack.c.h.s8.bf16 %v7028
    %v7347 = vunpack.c.l.s8.bf16 %v7029
    %v7348 = vunpack.c.l.s8.bf16 %v7030
    %v7349 = vunpack.c.l.s8.bf16 %v7031
    %v7350 = vunpack.c.l.s8.bf16 %v7032
    %v7351 = vunpack.c.l.s8.bf16 %v7033
    %v7352 = vunpack.c.l.s8.bf16 %v7034
    %v7353 = vunpack.c.h.s8.bf16 %v7029
    %v7354 = vunpack.c.h.s8.bf16 %v7030
    %v7355 = vunpack.c.h.s8.bf16 %v7031
    %v7356 = vunpack.c.h.s8.bf16 %v7032
    %v7357 = vunpack.c.h.s8.bf16 %v7033
    %v7358 = vunpack.c.h.s8.bf16 %v7034
    %v7359 = vunpack.c.l.s8.bf16 %v7035
    %v7360 = vunpack.c.l.s8.bf16 %v7036
    %v7361 = vunpack.c.l.s8.bf16 %v7037
    %v7362 = vunpack.c.l.s8.bf16 %v7038
    %v7363 = vunpack.c.l.s8.bf16 %v7039
    %v7364 = vunpack.c.l.s8.bf16 %v7040
    %v7365 = vunpack.c.h.s8.bf16 %v7035
    %v7366 = vunpack.c.h.s8.bf16 %v7036
    %v7367 = vunpack.c.h.s8.bf16 %v7037
    %v7368 = vunpack.c.h.s8.bf16 %v7038
    %v7369 = vunpack.c.h.s8.bf16 %v7039
    %v7370 = vunpack.c.h.s8.bf16 %v7040
    %v7371 = vunpack.c.l.s8.bf16 %v7041
    %v7372 = vunpack.c.l.s8.bf16 %v7042
    %v7373 = vunpack.c.l.s8.bf16 %v7043
    %v7374 = vunpack.c.l.s8.bf16 %v7044
    %v7375 = vunpack.c.l.s8.bf16 %v7045
    %v7376 = vunpack.c.l.s8.bf16 %v7046
    %v7377 = vunpack.c.h.s8.bf16 %v7041
    %v7378 = vunpack.c.h.s8.bf16 %v7042
    %v7379 = vunpack.c.h.s8.bf16 %v7043
    %v7380 = vunpack.c.h.s8.bf16 %v7044
    %v7381 = vunpack.c.h.s8.bf16 %v7045
    %v7382 = vunpack.c.h.s8.bf16 %v7046
    %7383 = vmatprep.subr.bf16.mxu0 %v7090
    %7384 = vmatpush1.bf16.msra.mxu0 %v7089
    %7385 = vmatprep.subr.bf16.mxu0 %v7084
    %7386 = vmatpush1.bf16.msra.mxu0 %v7083
    %7387 = vmatprep.subr.bf16.mxu0 %v7078
    %7388 = vmatpush1.bf16.msra.mxu0 %v7077
    %7389 = vmatprep.subr.bf16.mxu0 %v7072
    %7390 = vmatpush1.bf16.msra.mxu0 %v7071
    %7391 = vmatprep.subr.bf16.mxu0 %v7066
    %7392 = vmatpush1.bf16.msra.mxu0 %v7065
    %7393 = vmatprep.subr.bf16.mxu0 %v7060
    %7394 = vmatpush1.bf16.msra.mxu0 %v7059
    %7395 = vmatprep.subr.bf16.mxu0 %v7054
    %7396 = vmatpush1.bf16.msra.mxu0 %v7053
    %7397 = vmatprep.subr.bf16.mxu0 %v7048
    %7398 = vmatpush1.bf16.msra.mxu0 %v7047
    %7399 = vmatprep.subr.bf16.mxu0 %v7138
    %7400 = vmatpush2.bf16.msra.mxu0 %v7137
    %7401 = vmatprep.subr.bf16.mxu0 %v7132
    %7402 = vmatpush2.bf16.msra.mxu0 %v7131
    %7403 = vmatprep.subr.bf16.mxu0 %v7126
    %7404 = vmatpush2.bf16.msra.mxu0 %v7125
    %7405 = vmatprep.subr.bf16.mxu0 %v7120
    %7406 = vmatpush2.bf16.msra.mxu0 %v7119
    %7407 = vmatprep.subr.bf16.mxu0 %v7114
    %7408 = vmatpush2.bf16.msra.mxu0 %v7113
    %7409 = vmatprep.subr.bf16.mxu0 %v7108
    %7410 = vmatpush2.bf16.msra.mxu0 %v7107
    %7411 = vmatprep.subr.bf16.mxu0 %v7102
    %7412 = vmatpush2.bf16.msra.mxu0 %v7101
    %7413 = vmatprep.subr.bf16.mxu0 %v7096
    %7414 = vmatpush2.bf16.msra.mxu0 %v7095
    %7415 = vmatprep.mubr.bf16.mxu0 %v6869
    %7416 = vmatmul.mubr.bf16.gmra.mxu0 %v6868
    %v7417 = vpop.f32.mrf.mxu0
    %v7418 = vadd.f32 0.0, %v7417
    %v7419 = vpop.f32.mrf.mxu0
    %v7420 = vadd.f32 0.0, %v7419
    %v7421 = vpop.f32.mrf.mxu0
    %v7422 = vpop.f32.mrf.mxu0
    %7423 = vdwg.mxu0
    %7424 = vmatprep.subr.bf16.mxu0 %v7186
    %7425 = vmatpush1.bf16.msra.mxu0 %v7185
    %7426 = vmatprep.subr.bf16.mxu0 %v7180
    %7427 = vmatpush1.bf16.msra.mxu0 %v7179
    %7428 = vmatprep.subr.bf16.mxu0 %v7174
    %7429 = vmatpush1.bf16.msra.mxu0 %v7173
    %7430 = vmatprep.subr.bf16.mxu0 %v7168
    %7431 = vmatpush1.bf16.msra.mxu0 %v7167
    %7432 = vmatprep.subr.bf16.mxu0 %v7162
    %7433 = vmatpush1.bf16.msra.mxu0 %v7161
    %7434 = vmatprep.subr.bf16.mxu0 %v7156
    %7435 = vmatpush1.bf16.msra.mxu0 %v7155
    %7436 = vmatprep.subr.bf16.mxu0 %v7150
    %7437 = vmatpush1.bf16.msra.mxu0 %v7149
    %7438 = vmatprep.subr.bf16.mxu0 %v7144
    %7439 = vmatpush1.bf16.msra.mxu0 %v7143
    %7440 = vmatprep.subr.bf16.mxu0 %v7234
    %7441 = vmatpush2.bf16.msra.mxu0 %v7233
    %7442 = vmatprep.subr.bf16.mxu0 %v7228
    %7443 = vmatpush2.bf16.msra.mxu0 %v7227
    %7444 = vmatprep.subr.bf16.mxu0 %v7222
    %7445 = vmatpush2.bf16.msra.mxu0 %v7221
    %7446 = vmatprep.subr.bf16.mxu0 %v7216
    %7447 = vmatpush2.bf16.msra.mxu0 %v7215
    %7448 = vmatprep.subr.bf16.mxu0 %v7210
    %7449 = vmatpush2.bf16.msra.mxu0 %v7209
    %7450 = vmatprep.subr.bf16.mxu0 %v7204
    %7451 = vmatpush2.bf16.msra.mxu0 %v7203
    %7452 = vmatprep.subr.bf16.mxu0 %v7198
    %7453 = vmatpush2.bf16.msra.mxu0 %v7197
    %7454 = vmatprep.subr.bf16.mxu0 %v7192
    %7455 = vmatpush2.bf16.msra.mxu0 %v7191
    %7456 = vmatprep.mubr.bf16.mxu0 %v6871
    %7457 = vmatmul.mubr.bf16.gmra.mxu0 %v6870
    %v7458 = vpop.f32.mrf.mxu0
    %v7459 = vadd.f32 %v7418, %v7458
    %v7460 = vpop.f32.mrf.mxu0
    %v7461 = vadd.f32 %v7420, %v7460
    %v7462 = vpop.f32.mrf.mxu0
    %v7463 = vpop.f32.mrf.mxu0
    %7464 = vdwg.mxu0
    %7465 = vmatprep.subr.bf16.mxu0 %v7282
    %7466 = vmatpush1.bf16.msra.mxu0 %v7281
    %7467 = vmatprep.subr.bf16.mxu0 %v7276
    %7468 = vmatpush1.bf16.msra.mxu0 %v7275
    %7469 = vmatprep.subr.bf16.mxu0 %v7270
    %7470 = vmatpush1.bf16.msra.mxu0 %v7269
    %7471 = vmatprep.subr.bf16.mxu0 %v7264
    %7472 = vmatpush1.bf16.msra.mxu0 %v7263
    %7473 = vmatprep.subr.bf16.mxu0 %v7258
    %7474 = vmatpush1.bf16.msra.mxu0 %v7257
    %7475 = vmatprep.subr.bf16.mxu0 %v7252
    %7476 = vmatpush1.bf16.msra.mxu0 %v7251
    %7477 = vmatprep.subr.bf16.mxu0 %v7246
    %7478 = vmatpush1.bf16.msra.mxu0 %v7245
    %7479 = vmatprep.subr.bf16.mxu0 %v7240
    %7480 = vmatpush1.bf16.msra.mxu0 %v7239
    %7481 = vmatprep.subr.bf16.mxu0 %v7330
    %7482 = vmatpush2.bf16.msra.mxu0 %v7329
    %7483 = vmatprep.subr.bf16.mxu0 %v7324
    %7484 = vmatpush2.bf16.msra.mxu0 %v7323
    %7485 = vmatprep.subr.bf16.mxu0 %v7318
    %7486 = vmatpush2.bf16.msra.mxu0 %v7317
    %7487 = vmatprep.subr.bf16.mxu0 %v7312
    %7488 = vmatpush2.bf16.msra.mxu0 %v7311
    %7489 = vmatprep.subr.bf16.mxu0 %v7306
    %7490 = vmatpush2.bf16.msra.mxu0 %v7305
    %7491 = vmatprep.subr.bf16.mxu0 %v7300
    %7492 = vmatpush2.bf16.msra.mxu0 %v7299
    %7493 = vmatprep.subr.bf16.mxu0 %v7294
    %7494 = vmatpush2.bf16.msra.mxu0 %v7293
    %7495 = vmatprep.subr.bf16.mxu0 %v7288
    %7496 = vmatpush2.bf16.msra.mxu0 %v7287
    %7497 = vmatprep.mubr.bf16.mxu0 %v6873
    %7498 = vmatmul.mubr.bf16.gmra.mxu0 %v6872
    %v7499 = vpop.f32.mrf.mxu0
    %v7500 = vadd.f32 %v7459, %v7499
    %v7501 = vpop.f32.mrf.mxu0
    %v7502 = vadd.f32 %v7461, %v7501
    %v7503 = vpop.f32.mrf.mxu0
    %v7504 = vpop.f32.mrf.mxu0
    %7505 = vdwg.mxu0
    %7506 = vmatprep.subr.bf16.mxu0 %v7378
    %7507 = vmatpush1.bf16.msra.mxu0 %v7377
    %7508 = vmatprep.subr.bf16.mxu0 %v7372
    %7509 = vmatpush1.bf16.msra.mxu0 %v7371
    %7510 = vmatprep.subr.bf16.mxu0 %v7366
    %7511 = vmatpush1.bf16.msra.mxu0 %v7365
    %7512 = vmatprep.subr.bf16.mxu0 %v7360
    %7513 = vmatpush1.bf16.msra.mxu0 %v7359
    %7514 = vmatprep.subr.bf16.mxu0 %v7354
    %7515 = vmatpush1.bf16.msra.mxu0 %v7353
    %7516 = vmatprep.subr.bf16.mxu0 %v7348
    %7517 = vmatpush1.bf16.msra.mxu0 %v7347
    %7518 = vmatprep.subr.bf16.mxu0 %v7342
    %7519 = vmatpush1.bf16.msra.mxu0 %v7341
    %7520 = vmatprep.subr.bf16.mxu0 %v7336
    %7521 = vmatpush1.bf16.msra.mxu0 %v7335
    %7522 = vmatprep.subr.bf16.mxu0 0
    %7523 = vmatpush2.bf16.msra.mxu0 0
    %7524 = vmatprep.subr.bf16.mxu0 0
    %7525 = vmatpush2.bf16.msra.mxu0 0
    %7526 = vmatprep.subr.bf16.mxu0 0
    %7527 = vmatpush2.bf16.msra.mxu0 0
    %7528 = vmatprep.subr.bf16.mxu0 0
    %7529 = vmatpush2.bf16.msra.mxu0 0
    %7530 = vmatprep.subr.bf16.mxu0 0
    %7531 = vmatpush2.bf16.msra.mxu0 0
    %7532 = vmatprep.subr.bf16.mxu0 0
    %7533 = vmatpush2.bf16.msra.mxu0 0
    %7534 = vmatprep.subr.bf16.mxu0 0
    %7535 = vmatpush2.bf16.msra.mxu0 0
    %7536 = vmatprep.subr.bf16.mxu0 0
    %7537 = vmatpush2.bf16.msra.mxu0 0
    %7538 = vmatprep.mubr.bf16.mxu0 0
    %7539 = vmatmul.mubr.bf16.gmra.mxu0 %v6874
    %v7540 = vpop.f32.mrf.mxu0
    %v7541 = vadd.f32 %v7500, %v7540
    %v7542 = vpop.f32.mrf.mxu0
    %v7543 = vadd.f32 %v7502, %v7542
    %v7544 = vpop.f32.mrf.mxu0
    %v7545 = vpop.f32.mrf.mxu0
    %7546 = vdwg.mxu0
    %7547 = vmatprep.subr.bf16.mxu0 %v7092
    %7548 = vmatpush1.bf16.msra.mxu0 %v7091
    %7549 = vmatprep.subr.bf16.mxu0 %v7086
    %7550 = vmatpush1.bf16.msra.mxu0 %v7085
    %7551 = vmatprep.subr.bf16.mxu0 %v7080
    %7552 = vmatpush1.bf16.msra.mxu0 %v7079
    %7553 = vmatprep.subr.bf16.mxu0 %v7074
    %7554 = vmatpush1.bf16.msra.mxu0 %v7073
    %7555 = vmatprep.subr.bf16.mxu0 %v7068
    %7556 = vmatpush1.bf16.msra.mxu0 %v7067
    %7557 = vmatprep.subr.bf16.mxu0 %v7062
    %7558 = vmatpush1.bf16.msra.mxu0 %v7061
    %7559 = vmatprep.subr.bf16.mxu0 %v7056
    %7560 = vmatpush1.bf16.msra.mxu0 %v7055
    %7561 = vmatprep.subr.bf16.mxu0 %v7050
    %7562 = vmatpush1.bf16.msra.mxu0 %v7049
    %7563 = vmatprep.subr.bf16.mxu0 %v7140
    %7564 = vmatpush2.bf16.msra.mxu0 %v7139
    %7565 = vmatprep.subr.bf16.mxu0 %v7134
    %7566 = vmatpush2.bf16.msra.mxu0 %v7133
    %7567 = vmatprep.subr.bf16.mxu0 %v7128
    %7568 = vmatpush2.bf16.msra.mxu0 %v7127
    %7569 = vmatprep.subr.bf16.mxu0 %v7122
    %7570 = vmatpush2.bf16.msra.mxu0 %v7121
    %7571 = vmatprep.subr.bf16.mxu0 %v7116
    %7572 = vmatpush2.bf16.msra.mxu0 %v7115
    %7573 = vmatprep.subr.bf16.mxu0 %v7110
    %7574 = vmatpush2.bf16.msra.mxu0 %v7109
    %7575 = vmatprep.subr.bf16.mxu0 %v7104
    %7576 = vmatpush2.bf16.msra.mxu0 %v7103
    %7577 = vmatprep.subr.bf16.mxu0 %v7098
    %7578 = vmatpush2.bf16.msra.mxu0 %v7097
    %7579 = vmatprep.mubr.bf16.mxu0 %v6869
    %7580 = vmatmul.mubr.bf16.gmra.mxu0 %v6868
    %v7581 = vpop.f32.mrf.mxu0
    %v7582 = vadd.f32 0.0, %v7581
    %v7583 = vpop.f32.mrf.mxu0
    %v7584 = vadd.f32 0.0, %v7583
    %v7585 = vpop.f32.mrf.mxu0
    %v7586 = vpop.f32.mrf.mxu0
    %7587 = vdwg.mxu0
    %7588 = vmatprep.subr.bf16.mxu0 %v7188
    %7589 = vmatpush1.bf16.msra.mxu0 %v7187
    %7590 = vmatprep.subr.bf16.mxu0 %v7182
    %7591 = vmatpush1.bf16.msra.mxu0 %v7181
    %7592 = vmatprep.subr.bf16.mxu0 %v7176
    %7593 = vmatpush1.bf16.msra.mxu0 %v7175
    %7594 = vmatprep.subr.bf16.mxu0 %v7170
    %7595 = vmatpush1.bf16.msra.mxu0 %v7169
    %7596 = vmatprep.subr.bf16.mxu0 %v7164
    %7597 = vmatpush1.bf16.msra.mxu0 %v7163
    %7598 = vmatprep.subr.bf16.mxu0 %v7158
    %7599 = vmatpush1.bf16.msra.mxu0 %v7157
    %7600 = vmatprep.subr.bf16.mxu0 %v7152
    %7601 = vmatpush1.bf16.msra.mxu0 %v7151
    %7602 = vmatprep.subr.bf16.mxu0 %v7146
    %7603 = vmatpush1.bf16.msra.mxu0 %v7145
    %7604 = vmatprep.subr.bf16.mxu0 %v7236
    %7605 = vmatpush2.bf16.msra.mxu0 %v7235
    %7606 = vmatprep.subr.bf16.mxu0 %v7230
    %7607 = vmatpush2.bf16.msra.mxu0 %v7229
    %7608 = vmatprep.subr.bf16.mxu0 %v7224
    %7609 = vmatpush2.bf16.msra.mxu0 %v7223
    %7610 = vmatprep.subr.bf16.mxu0 %v7218
    %7611 = vmatpush2.bf16.msra.mxu0 %v7217
    %7612 = vmatprep.subr.bf16.mxu0 %v7212
    %7613 = vmatpush2.bf16.msra.mxu0 %v7211
    %7614 = vmatprep.subr.bf16.mxu0 %v7206
    %7615 = vmatpush2.bf16.msra.mxu0 %v7205
    %7616 = vmatprep.subr.bf16.mxu0 %v7200
    %7617 = vmatpush2.bf16.msra.mxu0 %v7199
    %7618 = vmatprep.subr.bf16.mxu0 %v7194
    %7619 = vmatpush2.bf16.msra.mxu0 %v7193
    %7620 = vmatprep.mubr.bf16.mxu0 %v6871
    %7621 = vmatmul.mubr.bf16.gmra.mxu0 %v6870
    %v7622 = vpop.f32.mrf.mxu0
    %v7623 = vadd.f32 %v7582, %v7622
    %v7624 = vpop.f32.mrf.mxu0
    %v7625 = vadd.f32 %v7584, %v7624
    %v7626 = vpop.f32.mrf.mxu0
    %v7627 = vpop.f32.mrf.mxu0
    %7628 = vdwg.mxu0
    %7629 = vmatprep.subr.bf16.mxu0 %v7284
    %7630 = vmatpush1.bf16.msra.mxu0 %v7283
    %7631 = vmatprep.subr.bf16.mxu0 %v7278
    %7632 = vmatpush1.bf16.msra.mxu0 %v7277
    %7633 = vmatprep.subr.bf16.mxu0 %v7272
    %7634 = vmatpush1.bf16.msra.mxu0 %v7271
    %7635 = vmatprep.subr.bf16.mxu0 %v7266
    %7636 = vmatpush1.bf16.msra.mxu0 %v7265
    %7637 = vmatprep.subr.bf16.mxu0 %v7260
    %7638 = vmatpush1.bf16.msra.mxu0 %v7259
    %7639 = vmatprep.subr.bf16.mxu0 %v7254
    %7640 = vmatpush1.bf16.msra.mxu0 %v7253
    %7641 = vmatprep.subr.bf16.mxu0 %v7248
    %7642 = vmatpush1.bf16.msra.mxu0 %v7247
    %7643 = vmatprep.subr.bf16.mxu0 %v7242
    %7644 = vmatpush1.bf16.msra.mxu0 %v7241
    %7645 = vmatprep.subr.bf16.mxu0 %v7332
    %7646 = vmatpush2.bf16.msra.mxu0 %v7331
    %7647 = vmatprep.subr.bf16.mxu0 %v7326
    %7648 = vmatpush2.bf16.msra.mxu0 %v7325
    %7649 = vmatprep.subr.bf16.mxu0 %v7320
    %7650 = vmatpush2.bf16.msra.mxu0 %v7319
    %7651 = vmatprep.subr.bf16.mxu0 %v7314
    %7652 = vmatpush2.bf16.msra.mxu0 %v7313
    %7653 = vmatprep.subr.bf16.mxu0 %v7308
    %7654 = vmatpush2.bf16.msra.mxu0 %v7307
    %7655 = vmatprep.subr.bf16.mxu0 %v7302
    %7656 = vmatpush2.bf16.msra.mxu0 %v7301
    %7657 = vmatprep.subr.bf16.mxu0 %v7296
    %7658 = vmatpush2.bf16.msra.mxu0 %v7295
    %7659 = vmatprep.subr.bf16.mxu0 %v7290
    %7660 = vmatpush2.bf16.msra.mxu0 %v7289
    %7661 = vmatprep.mubr.bf16.mxu0 %v6873
    %7662 = vmatmul.mubr.bf16.gmra.mxu0 %v6872
    %v7663 = vpop.f32.mrf.mxu0
    %v7664 = vadd.f32 %v7623, %v7663
    %v7665 = vpop.f32.mrf.mxu0
    %v7666 = vadd.f32 %v7625, %v7665
    %v7667 = vpop.f32.mrf.mxu0
    %v7668 = vpop.f32.mrf.mxu0
    %7669 = vdwg.mxu0
    %7670 = vmatprep.subr.bf16.mxu0 %v7380
    %7671 = vmatpush1.bf16.msra.mxu0 %v7379
    %7672 = vmatprep.subr.bf16.mxu0 %v7374
    %7673 = vmatpush1.bf16.msra.mxu0 %v7373
    %7674 = vmatprep.subr.bf16.mxu0 %v7368
    %7675 = vmatpush1.bf16.msra.mxu0 %v7367
    %7676 = vmatprep.subr.bf16.mxu0 %v7362
    %7677 = vmatpush1.bf16.msra.mxu0 %v7361
    %7678 = vmatprep.subr.bf16.mxu0 %v7356
    %7679 = vmatpush1.bf16.msra.mxu0 %v7355
    %7680 = vmatprep.subr.bf16.mxu0 %v7350
    %7681 = vmatpush1.bf16.msra.mxu0 %v7349
    %7682 = vmatprep.subr.bf16.mxu0 %v7344
    %7683 = vmatpush1.bf16.msra.mxu0 %v7343
    %7684 = vmatprep.subr.bf16.mxu0 %v7338
    %7685 = vmatpush1.bf16.msra.mxu0 %v7337
    %7686 = vmatprep.subr.bf16.mxu0 0
    %7687 = vmatpush2.bf16.msra.mxu0 0
    %7688 = vmatprep.subr.bf16.mxu0 0
    %7689 = vmatpush2.bf16.msra.mxu0 0
    %7690 = vmatprep.subr.bf16.mxu0 0
    %7691 = vmatpush2.bf16.msra.mxu0 0
    %7692 = vmatprep.subr.bf16.mxu0 0
    %7693 = vmatpush2.bf16.msra.mxu0 0
    %7694 = vmatprep.subr.bf16.mxu0 0
    %7695 = vmatpush2.bf16.msra.mxu0 0
    %7696 = vmatprep.subr.bf16.mxu0 0
    %7697 = vmatpush2.bf16.msra.mxu0 0
    %7698 = vmatprep.subr.bf16.mxu0 0
    %7699 = vmatpush2.bf16.msra.mxu0 0
    %7700 = vmatprep.subr.bf16.mxu0 0
    %7701 = vmatpush2.bf16.msra.mxu0 0
    %7702 = vmatprep.mubr.bf16.mxu0 0
    %7703 = vmatmul.mubr.bf16.gmra.mxu0 %v6874
    %v7704 = vpop.f32.mrf.mxu0
    %v7705 = vadd.f32 %v7664, %v7704
    %v7706 = vpop.f32.mrf.mxu0
    %v7707 = vadd.f32 %v7666, %v7706
    %v7708 = vpop.f32.mrf.mxu0
    %v7709 = vpop.f32.mrf.mxu0
    %7710 = vdwg.mxu0
    %7711 = vmatprep.subr.bf16.mxu0 %v7094
    %7712 = vmatpush1.bf16.msra.mxu0 %v7093
    %7713 = vmatprep.subr.bf16.mxu0 %v7088
    %7714 = vmatpush1.bf16.msra.mxu0 %v7087
    %7715 = vmatprep.subr.bf16.mxu0 %v7082
    %7716 = vmatpush1.bf16.msra.mxu0 %v7081
    %7717 = vmatprep.subr.bf16.mxu0 %v7076
    %7718 = vmatpush1.bf16.msra.mxu0 %v7075
    %7719 = vmatprep.subr.bf16.mxu0 %v7070
    %7720 = vmatpush1.bf16.msra.mxu0 %v7069
    %7721 = vmatprep.subr.bf16.mxu0 %v7064
    %7722 = vmatpush1.bf16.msra.mxu0 %v7063
    %7723 = vmatprep.subr.bf16.mxu0 %v7058
    %7724 = vmatpush1.bf16.msra.mxu0 %v7057
    %7725 = vmatprep.subr.bf16.mxu0 %v7052
    %7726 = vmatpush1.bf16.msra.mxu0 %v7051
    %7727 = vmatprep.subr.bf16.mxu0 %v7142
    %7728 = vmatpush2.bf16.msra.mxu0 %v7141
    %7729 = vmatprep.subr.bf16.mxu0 %v7136
    %7730 = vmatpush2.bf16.msra.mxu0 %v7135
    %7731 = vmatprep.subr.bf16.mxu0 %v7130
    %7732 = vmatpush2.bf16.msra.mxu0 %v7129
    %7733 = vmatprep.subr.bf16.mxu0 %v7124
    %7734 = vmatpush2.bf16.msra.mxu0 %v7123
    %7735 = vmatprep.subr.bf16.mxu0 %v7118
    %7736 = vmatpush2.bf16.msra.mxu0 %v7117
    %7737 = vmatprep.subr.bf16.mxu0 %v7112
    %7738 = vmatpush2.bf16.msra.mxu0 %v7111
    %7739 = vmatprep.subr.bf16.mxu0 %v7106
    %7740 = vmatpush2.bf16.msra.mxu0 %v7105
    %7741 = vmatprep.subr.bf16.mxu0 %v7100
    %7742 = vmatpush2.bf16.msra.mxu0 %v7099
    %7743 = vmatprep.mubr.bf16.mxu0 %v6869
    %7744 = vmatmul.mubr.bf16.gmra.mxu0 %v6868
    %v7745 = vpop.f32.mrf.mxu0
    %v7746 = vadd.f32 0.0, %v7745
    %v7747 = vpop.f32.mrf.mxu0
    %v7748 = vadd.f32 0.0, %v7747
    %v7749 = vpop.f32.mrf.mxu0
    %v7750 = vpop.f32.mrf.mxu0
    %7751 = vdwg.mxu0
    %7752 = vmatprep.subr.bf16.mxu0 %v7190
    %7753 = vmatpush1.bf16.msra.mxu0 %v7189
    %7754 = vmatprep.subr.bf16.mxu0 %v7184
    %7755 = vmatpush1.bf16.msra.mxu0 %v7183
    %7756 = vmatprep.subr.bf16.mxu0 %v7178
    %7757 = vmatpush1.bf16.msra.mxu0 %v7177
    %7758 = vmatprep.subr.bf16.mxu0 %v7172
    %7759 = vmatpush1.bf16.msra.mxu0 %v7171
    %7760 = vmatprep.subr.bf16.mxu0 %v7166
    %7761 = vmatpush1.bf16.msra.mxu0 %v7165
    %7762 = vmatprep.subr.bf16.mxu0 %v7160
    %7763 = vmatpush1.bf16.msra.mxu0 %v7159
    %7764 = vmatprep.subr.bf16.mxu0 %v7154
    %7765 = vmatpush1.bf16.msra.mxu0 %v7153
    %7766 = vmatprep.subr.bf16.mxu0 %v7148
    %7767 = vmatpush1.bf16.msra.mxu0 %v7147
    %7768 = vmatprep.subr.bf16.mxu0 %v7238
    %7769 = vmatpush2.bf16.msra.mxu0 %v7237
    %7770 = vmatprep.subr.bf16.mxu0 %v7232
    %7771 = vmatpush2.bf16.msra.mxu0 %v7231
    %7772 = vmatprep.subr.bf16.mxu0 %v7226
    %7773 = vmatpush2.bf16.msra.mxu0 %v7225
    %7774 = vmatprep.subr.bf16.mxu0 %v7220
    %7775 = vmatpush2.bf16.msra.mxu0 %v7219
    %7776 = vmatprep.subr.bf16.mxu0 %v7214
    %7777 = vmatpush2.bf16.msra.mxu0 %v7213
    %7778 = vmatprep.subr.bf16.mxu0 %v7208
    %7779 = vmatpush2.bf16.msra.mxu0 %v7207
    %7780 = vmatprep.subr.bf16.mxu0 %v7202
    %7781 = vmatpush2.bf16.msra.mxu0 %v7201
    %7782 = vmatprep.subr.bf16.mxu0 %v7196
    %7783 = vmatpush2.bf16.msra.mxu0 %v7195
    %7784 = vmatprep.mubr.bf16.mxu0 %v6871
    %7785 = vmatmul.mubr.bf16.gmra.mxu0 %v6870
    %v7786 = vpop.f32.mrf.mxu0
    %v7787 = vadd.f32 %v7746, %v7786
    %v7788 = vpop.f32.mrf.mxu0
    %v7789 = vadd.f32 %v7748, %v7788
    %v7790 = vpop.f32.mrf.mxu0
    %v7791 = vpop.f32.mrf.mxu0
    %7792 = vdwg.mxu0
    %7793 = vmatprep.subr.bf16.mxu0 %v7286
    %7794 = vmatpush1.bf16.msra.mxu0 %v7285
    %7795 = vmatprep.subr.bf16.mxu0 %v7280
    %7796 = vmatpush1.bf16.msra.mxu0 %v7279
    %7797 = vmatprep.subr.bf16.mxu0 %v7274
    %7798 = vmatpush1.bf16.msra.mxu0 %v7273
    %7799 = vmatprep.subr.bf16.mxu0 %v7268
    %7800 = vmatpush1.bf16.msra.mxu0 %v7267
    %7801 = vmatprep.subr.bf16.mxu0 %v7262
    %7802 = vmatpush1.bf16.msra.mxu0 %v7261
    %7803 = vmatprep.subr.bf16.mxu0 %v7256
    %7804 = vmatpush1.bf16.msra.mxu0 %v7255
    %7805 = vmatprep.subr.bf16.mxu0 %v7250
    %7806 = vmatpush1.bf16.msra.mxu0 %v7249
    %7807 = vmatprep.subr.bf16.mxu0 %v7244
    %7808 = vmatpush1.bf16.msra.mxu0 %v7243
    %7809 = vmatprep.subr.bf16.mxu0 %v7334
    %7810 = vmatpush2.bf16.msra.mxu0 %v7333
    %7811 = vmatprep.subr.bf16.mxu0 %v7328
    %7812 = vmatpush2.bf16.msra.mxu0 %v7327
    %7813 = vmatprep.subr.bf16.mxu0 %v7322
    %7814 = vmatpush2.bf16.msra.mxu0 %v7321
    %7815 = vmatprep.subr.bf16.mxu0 %v7316
    %7816 = vmatpush2.bf16.msra.mxu0 %v7315
    %7817 = vmatprep.subr.bf16.mxu0 %v7310
    %7818 = vmatpush2.bf16.msra.mxu0 %v7309
    %7819 = vmatprep.subr.bf16.mxu0 %v7304
    %7820 = vmatpush2.bf16.msra.mxu0 %v7303
    %7821 = vmatprep.subr.bf16.mxu0 %v7298
    %7822 = vmatpush2.bf16.msra.mxu0 %v7297
    %7823 = vmatprep.subr.bf16.mxu0 %v7292
    %7824 = vmatpush2.bf16.msra.mxu0 %v7291
    %7825 = vmatprep.mubr.bf16.mxu0 %v6873
    %7826 = vmatmul.mubr.bf16.gmra.mxu0 %v6872
    %v7827 = vpop.f32.mrf.mxu0
    %v7828 = vadd.f32 %v7787, %v7827
    %v7829 = vpop.f32.mrf.mxu0
    %v7830 = vadd.f32 %v7789, %v7829
    %v7831 = vpop.f32.mrf.mxu0
    %v7832 = vpop.f32.mrf.mxu0
    %7833 = vdwg.mxu0
    %7834 = vmatprep.subr.bf16.mxu0 %v7382
    %7835 = vmatpush1.bf16.msra.mxu0 %v7381
    %7836 = vmatprep.subr.bf16.mxu0 %v7376
    %7837 = vmatpush1.bf16.msra.mxu0 %v7375
    %7838 = vmatprep.subr.bf16.mxu0 %v7370
    %7839 = vmatpush1.bf16.msra.mxu0 %v7369
    %7840 = vmatprep.subr.bf16.mxu0 %v7364
    %7841 = vmatpush1.bf16.msra.mxu0 %v7363
    %7842 = vmatprep.subr.bf16.mxu0 %v7358
    %7843 = vmatpush1.bf16.msra.mxu0 %v7357
    %7844 = vmatprep.subr.bf16.mxu0 %v7352
    %7845 = vmatpush1.bf16.msra.mxu0 %v7351
    %7846 = vmatprep.subr.bf16.mxu0 %v7346
    %7847 = vmatpush1.bf16.msra.mxu0 %v7345
    %7848 = vmatprep.subr.bf16.mxu0 %v7340
    %7849 = vmatpush1.bf16.msra.mxu0 %v7339
    %7850 = vmatprep.subr.bf16.mxu0 0
    %7851 = vmatpush2.bf16.msra.mxu0 0
    %7852 = vmatprep.subr.bf16.mxu0 0
    %7853 = vmatpush2.bf16.msra.mxu0 0
    %7854 = vmatprep.subr.bf16.mxu0 0
    %7855 = vmatpush2.bf16.msra.mxu0 0
    %7856 = vmatprep.subr.bf16.mxu0 0
    %7857 = vmatpush2.bf16.msra.mxu0 0
    %7858 = vmatprep.subr.bf16.mxu0 0
    %7859 = vmatpush2.bf16.msra.mxu0 0
    %7860 = vmatprep.subr.bf16.mxu0 0
    %7861 = vmatpush2.bf16.msra.mxu0 0
    %7862 = vmatprep.subr.bf16.mxu0 0
    %7863 = vmatpush2.bf16.msra.mxu0 0
    %7864 = vmatprep.subr.bf16.mxu0 0
    %7865 = vmatpush2.bf16.msra.mxu0 0
    %7866 = vmatprep.mubr.bf16.mxu0 0
    %7867 = vmatmul.mubr.bf16.gmra.mxu0 %v6874
    %v7868 = vpop.f32.mrf.mxu0
    %v7869 = vadd.f32 %v7828, %v7868
    %v7870 = vpop.f32.mrf.mxu0
    %v7871 = vadd.f32 %v7830, %v7870
    %v7872 = vpop.f32.mrf.mxu0
    %v7873 = vpop.f32.mrf.mxu0
    %7874 = vdwg.mxu0
    %s7875 = scalar_lea.vmem [#allocation17], 7
    %v7876 = vld [vmem:[%s7875] ss:$8 sm:$0xf]
    %v7877 = vld [vmem:[%s7875] ss:$8 sm:$0x30]
    %v7878 = vor.u32 %v7876, %v7877
    %s7879 = scalar_lea.vmem [#allocation17], 6
    %v7880 = vld [vmem:[%s7879] ss:$8 sm:$0xf]
    %v7881 = vld [vmem:[%s7879] ss:$8 sm:$0x30]
    %v7882 = vor.u32 %v7880, %v7881
    %v7884 = vlaneseq
    %v7885 = vshrl.u32 %v7884, 7
    %v7886 = vsub.s32 0, %v7885
    %v7887 = vrot.slane %v7878, %v7886
    %v7888 = vlaneseq
    %v7889 = vshrl.u32 %v7888, 7
    %v7890 = vsub.s32 1, %v7889
    %v7891 = vrot.slane %v7878, %v7890
    %v7892 = vlaneseq
    %v7893 = vshrl.u32 %v7892, 7
    %v7894 = vsub.s32 2, %v7893
    %v7895 = vrot.slane %v7878, %v7894
    %v7896 = vlaneseq
    %v7897 = vshrl.u32 %v7896, 7
    %v7898 = vsub.s32 3, %v7897
    %v7899 = vrot.slane %v7878, %v7898
    %v7900 = vlaneseq
    %v7901 = vshrl.u32 %v7900, 7
    %v7902 = vsub.s32 4, %v7901
    %v7903 = vrot.slane %v7878, %v7902
    %v7904 = vlaneseq
    %v7905 = vshrl.u32 %v7904, 7
    %v7906 = vsub.s32 5, %v7905
    %v7907 = vrot.slane %v7878, %v7906
    %v7914 = vmul.f32 %v7541, %v7887
    %v7915 = vmul.f32 %v7543, %v7891
    %v7916 = vmul.f32 %v7705, %v7895
    %v7917 = vmul.f32 %v7707, %v7899
    %v7918 = vmul.f32 %v7869, %v7903
    %v7919 = vmul.f32 %v7871, %v7907
    %v7921 = vlaneseq
    %v7922 = vshrl.u32 %v7921, 7
    %v7923 = vsub.s32 0, %v7922
    %v7924 = vrot.slane %v7882, %v7923
    %v7925 = vlaneseq
    %v7926 = vshrl.u32 %v7925, 7
    %v7927 = vsub.s32 1, %v7926
    %v7928 = vrot.slane %v7882, %v7927
    %v7929 = vlaneseq
    %v7930 = vshrl.u32 %v7929, 7
    %v7931 = vsub.s32 2, %v7930
    %v7932 = vrot.slane %v7882, %v7931
    %v7933 = vlaneseq
    %v7934 = vshrl.u32 %v7933, 7
    %v7935 = vsub.s32 3, %v7934
    %v7936 = vrot.slane %v7882, %v7935
    %v7937 = vlaneseq
    %v7938 = vshrl.u32 %v7937, 7
    %v7939 = vsub.s32 4, %v7938
    %v7940 = vrot.slane %v7882, %v7939
    %v7941 = vlaneseq
    %v7942 = vshrl.u32 %v7941, 7
    %v7943 = vsub.s32 5, %v7942
    %v7944 = vrot.slane %v7882, %v7943
    %v7951 = vadd.f32 %v7914, %v7924
    %v7952 = vadd.f32 %v7915, %v7928
    %v7953 = vadd.f32 %v7916, %v7932
    %v7954 = vadd.f32 %v7917, %v7936
    %v7955 = vadd.f32 %v7918, %v7940
    %v7956 = vadd.f32 %v7919, %v7944
    %vm7957 = vcmp.gt.f32.partialorder %v7951, 0.0
    %vm7958 = vcmp.gt.f32.partialorder %v7952, 0.0
    %vm7959 = vcmp.gt.f32.partialorder %v7953, 0.0
    %vm7960 = vcmp.gt.f32.partialorder %v7954, 0.0
    %vm7961 = vcmp.gt.f32.partialorder %v7955, 0.0
    %vm7962 = vcmp.gt.f32.partialorder %v7956, 0.0
    %v7963 = vstv %s73
    %v7964 = vmul.f32 %v7963, %v7951
    %v7965 = vmul.f32 %v7963, %v7952
    %v7966 = vmul.f32 %v7963, %v7953
    %v7967 = vmul.f32 %v7963, %v7954
    %v7968 = vmul.f32 %v7963, %v7955
    %v7969 = vmul.f32 %v7963, %v7956
    %v7970 = vsel %vm7957, %v7951, %v7964
    %v7971 = vsel %vm7958, %v7952, %v7965
    %v7972 = vsel %vm7959, %v7953, %v7966
    %v7973 = vsel %vm7960, %v7954, %v7967
    %v7974 = vsel %vm7961, %v7955, %v7968
    %v7975 = vsel %vm7962, %v7956, %v7969
    %v7976 = vpack.c.bf16 %v7970, %v7970
    %v7977 = vpack.c.bf16 %v7971, %v7971
    %v7978 = vpack.c.bf16 %v7972, %v7972
    %v7979 = vpack.c.bf16 %v7973, %v7973
    %v7980 = vpack.c.bf16 %v7974, %v7974
    %v7981 = vpack.c.bf16 %v7975, %v7975
    %s7982 = smul.u32 2, 96
    %s7983 = smul.u32 %s7982, 4
    %s7984 = sshll.u32 %s7983, 4
    %7985 = dma.done %s140, %s7984
    %v7986 = vld [vmem:[#allocation7] sm:$0xff]
    %v7987 = vld [vmem:[#allocation7 + $0x8] sm:$0xff]
    %v7988 = vld [vmem:[#allocation7 + $0x10] sm:$0xff]
    %v7989 = vld [vmem:[#allocation7 + $0x18] sm:$0xff]
    %v7990 = vld [vmem:[#allocation7 + $0x20] sm:$0xff]
    %v7991 = vld [vmem:[#allocation7 + $0x28] sm:$0xff]
    %v7992 = vld [vmem:[#allocation7 + $0x30] sm:$0xff]
    %v7993 = vld [vmem:[#allocation7 + $0x38] sm:$0xff]
    %v7994 = vld [vmem:[#allocation7 + $0x40] sm:$0xff]
    %v7995 = vld [vmem:[#allocation7 + $0x48] sm:$0xff]
    %v7996 = vld [vmem:[#allocation7 + $0x50] sm:$0xff]
    %v7997 = vld [vmem:[#allocation7 + $0x58] sm:$0xff]
    %v7998 = vld [vmem:[#allocation7 + $0x60] sm:$0xff]
    %v7999 = vld [vmem:[#allocation7 + $0x68] sm:$0xff]
    %v8000 = vld [vmem:[#allocation7 + $0x70] sm:$0xff]
    %v8001 = vld [vmem:[#allocation7 + $0x78] sm:$0xff]
    %v8002 = vld [vmem:[#allocation7 + $0x80] sm:$0xff]
    %v8003 = vld [vmem:[#allocation7 + $0x88] sm:$0xff]
    %v8004 = vld [vmem:[#allocation7 + $0x90] sm:$0xff]
    %v8005 = vld [vmem:[#allocation7 + $0x98] sm:$0xff]
    %v8006 = vld [vmem:[#allocation7 + $0xa0] sm:$0xff]
    %v8007 = vld [vmem:[#allocation7 + $0xa8] sm:$0xff]
    %v8008 = vld [vmem:[#allocation7 + $0xb0] sm:$0xff]
    %v8009 = vld [vmem:[#allocation7 + $0xb8] sm:$0xff]
    %v8010 = vld [vmem:[#allocation7 + $0xc0] sm:$0xff]
    %v8011 = vld [vmem:[#allocation7 + $0xc8] sm:$0xff]
    %v8012 = vld [vmem:[#allocation7 + $0xd0] sm:$0xff]
    %v8013 = vld [vmem:[#allocation7 + $0xd8] sm:$0xff]
    %v8014 = vld [vmem:[#allocation7 + $0xe0] sm:$0xff]
    %v8015 = vld [vmem:[#allocation7 + $0xe8] sm:$0xff]
    %v8016 = vld [vmem:[#allocation7 + $0xf0] sm:$0xff]
    %v8017 = vld [vmem:[#allocation7 + $0xf8] sm:$0xff]
    %v8018 = vld [vmem:[#allocation7 + $0x100] sm:$0xff]
    %v8019 = vld [vmem:[#allocation7 + $0x108] sm:$0xff]
    %v8020 = vld [vmem:[#allocation7 + $0x110] sm:$0xff]
    %v8021 = vld [vmem:[#allocation7 + $0x118] sm:$0xff]
    %v8022 = vld [vmem:[#allocation7 + $0x120] sm:$0xff]
    %v8023 = vld [vmem:[#allocation7 + $0x128] sm:$0xff]
    %v8024 = vld [vmem:[#allocation7 + $0x130] sm:$0xff]
    %v8025 = vld [vmem:[#allocation7 + $0x138] sm:$0xff]
    %v8026 = vld [vmem:[#allocation7 + $0x140] sm:$0xff]
    %v8027 = vld [vmem:[#allocation7 + $0x148] sm:$0xff]
    %v8028 = vld [vmem:[#allocation7 + $0x150] sm:$0xff]
    %v8029 = vld [vmem:[#allocation7 + $0x158] sm:$0xff]
    %v8030 = vld [vmem:[#allocation7 + $0x160] sm:$0xff]
    %v8031 = vld [vmem:[#allocation7 + $0x168] sm:$0xff]
    %v8032 = vld [vmem:[#allocation7 + $0x170] sm:$0xff]
    %v8033 = vld [vmem:[#allocation7 + $0x178] sm:$0xff]
    %v8034 = vld [vmem:[#allocation7 + $0x180] sm:$0xff]
    %v8035 = vld [vmem:[#allocation7 + $0x188] sm:$0xff]
    %v8036 = vld [vmem:[#allocation7 + $0x190] sm:$0xff]
    %v8037 = vld [vmem:[#allocation7 + $0x198] sm:$0xff]
    %v8038 = vld [vmem:[#allocation7 + $0x1a0] sm:$0xff]
    %v8039 = vld [vmem:[#allocation7 + $0x1a8] sm:$0xff]
    %v8040 = vld [vmem:[#allocation7 + $0x1b0] sm:$0xff]
    %v8041 = vld [vmem:[#allocation7 + $0x1b8] sm:$0xff]
    %v8042 = vld [vmem:[#allocation7 + $0x1c0] sm:$0xff]
    %v8043 = vld [vmem:[#allocation7 + $0x1c8] sm:$0xff]
    %v8044 = vld [vmem:[#allocation7 + $0x1d0] sm:$0xff]
    %v8045 = vld [vmem:[#allocation7 + $0x1d8] sm:$0xff]
    %v8046 = vld [vmem:[#allocation7 + $0x1e0] sm:$0xff]
    %v8047 = vld [vmem:[#allocation7 + $0x1e8] sm:$0xff]
    %v8048 = vld [vmem:[#allocation7 + $0x1f0] sm:$0xff]
    %v8049 = vld [vmem:[#allocation7 + $0x1f8] sm:$0xff]
    %v8050 = vld [vmem:[#allocation7 + $0x200] sm:$0xff]
    %v8051 = vld [vmem:[#allocation7 + $0x208] sm:$0xff]
    %v8052 = vld [vmem:[#allocation7 + $0x210] sm:$0xff]
    %v8053 = vld [vmem:[#allocation7 + $0x218] sm:$0xff]
    %v8054 = vld [vmem:[#allocation7 + $0x220] sm:$0xff]
    %v8055 = vld [vmem:[#allocation7 + $0x228] sm:$0xff]
    %v8056 = vld [vmem:[#allocation7 + $0x230] sm:$0xff]
    %v8057 = vld [vmem:[#allocation7 + $0x238] sm:$0xff]
    %v8058 = vld [vmem:[#allocation7 + $0x240] sm:$0xff]
    %v8059 = vld [vmem:[#allocation7 + $0x248] sm:$0xff]
    %v8060 = vld [vmem:[#allocation7 + $0x250] sm:$0xff]
    %v8061 = vld [vmem:[#allocation7 + $0x258] sm:$0xff]
    %v8062 = vld [vmem:[#allocation7 + $0x260] sm:$0xff]
    %v8063 = vld [vmem:[#allocation7 + $0x268] sm:$0xff]
    %v8064 = vld [vmem:[#allocation7 + $0x270] sm:$0xff]
    %v8065 = vld [vmem:[#allocation7 + $0x278] sm:$0xff]
    %v8066 = vld [vmem:[#allocation7 + $0x280] sm:$0xff]
    %v8067 = vld [vmem:[#allocation7 + $0x288] sm:$0xff]
    %v8068 = vld [vmem:[#allocation7 + $0x290] sm:$0xff]
    %v8069 = vld [vmem:[#allocation7 + $0x298] sm:$0xff]
    %v8070 = vld [vmem:[#allocation7 + $0x2a0] sm:$0xff]
    %v8071 = vld [vmem:[#allocation7 + $0x2a8] sm:$0xff]
    %v8072 = vld [vmem:[#allocation7 + $0x2b0] sm:$0xff]
    %v8073 = vld [vmem:[#allocation7 + $0x2b8] sm:$0xff]
    %v8074 = vld [vmem:[#allocation7 + $0x2c0] sm:$0xff]
    %v8075 = vld [vmem:[#allocation7 + $0x2c8] sm:$0xff]
    %v8076 = vld [vmem:[#allocation7 + $0x2d0] sm:$0xff]
    %v8077 = vld [vmem:[#allocation7 + $0x2d8] sm:$0xff]
    %v8078 = vld [vmem:[#allocation7 + $0x2e0] sm:$0xff]
    %v8079 = vld [vmem:[#allocation7 + $0x2e8] sm:$0xff]
    %v8080 = vld [vmem:[#allocation7 + $0x2f0] sm:$0xff]
    %v8081 = vld [vmem:[#allocation7 + $0x2f8] sm:$0xff]
    %v8082 = vunpack.c.l.s8.bf16 %v7986
    %v8083 = vunpack.c.l.s8.bf16 %v7987
    %v8084 = vunpack.c.l.s8.bf16 %v7988
    %v8085 = vunpack.c.l.s8.bf16 %v7989
    %v8086 = vunpack.c.h.s8.bf16 %v7986
    %v8087 = vunpack.c.h.s8.bf16 %v7987
    %v8088 = vunpack.c.h.s8.bf16 %v7988
    %v8089 = vunpack.c.h.s8.bf16 %v7989
    %v8090 = vunpack.c.l.s8.bf16 %v7990
    %v8091 = vunpack.c.l.s8.bf16 %v7991
    %v8092 = vunpack.c.l.s8.bf16 %v7992
    %v8093 = vunpack.c.l.s8.bf16 %v7993
    %v8094 = vunpack.c.h.s8.bf16 %v7990
    %v8095 = vunpack.c.h.s8.bf16 %v7991
    %v8096 = vunpack.c.h.s8.bf16 %v7992
    %v8097 = vunpack.c.h.s8.bf16 %v7993
    %v8098 = vunpack.c.l.s8.bf16 %v7994
    %v8099 = vunpack.c.l.s8.bf16 %v7995
    %v8100 = vunpack.c.l.s8.bf16 %v7996
    %v8101 = vunpack.c.l.s8.bf16 %v7997
    %v8102 = vunpack.c.h.s8.bf16 %v7994
    %v8103 = vunpack.c.h.s8.bf16 %v7995
    %v8104 = vunpack.c.h.s8.bf16 %v7996
    %v8105 = vunpack.c.h.s8.bf16 %v7997
    %v8106 = vunpack.c.l.s8.bf16 %v7998
    %v8107 = vunpack.c.l.s8.bf16 %v7999
    %v8108 = vunpack.c.l.s8.bf16 %v8000
    %v8109 = vunpack.c.l.s8.bf16 %v8001
    %v8110 = vunpack.c.h.s8.bf16 %v7998
    %v8111 = vunpack.c.h.s8.bf16 %v7999
    %v8112 = vunpack.c.h.s8.bf16 %v8000
    %v8113 = vunpack.c.h.s8.bf16 %v8001
    %v8114 = vunpack.c.l.s8.bf16 %v8002
    %v8115 = vunpack.c.l.s8.bf16 %v8003
    %v8116 = vunpack.c.l.s8.bf16 %v8004
    %v8117 = vunpack.c.l.s8.bf16 %v8005
    %v8118 = vunpack.c.h.s8.bf16 %v8002
    %v8119 = vunpack.c.h.s8.bf16 %v8003
    %v8120 = vunpack.c.h.s8.bf16 %v8004
    %v8121 = vunpack.c.h.s8.bf16 %v8005
    %v8122 = vunpack.c.l.s8.bf16 %v8006
    %v8123 = vunpack.c.l.s8.bf16 %v8007
    %v8124 = vunpack.c.l.s8.bf16 %v8008
    %v8125 = vunpack.c.l.s8.bf16 %v8009
    %v8126 = vunpack.c.h.s8.bf16 %v8006
    %v8127 = vunpack.c.h.s8.bf16 %v8007
    %v8128 = vunpack.c.h.s8.bf16 %v8008
    %v8129 = vunpack.c.h.s8.bf16 %v8009
    %v8130 = vunpack.c.l.s8.bf16 %v8010
    %v8131 = vunpack.c.l.s8.bf16 %v8011
    %v8132 = vunpack.c.l.s8.bf16 %v8012
    %v8133 = vunpack.c.l.s8.bf16 %v8013
    %v8134 = vunpack.c.h.s8.bf16 %v8010
    %v8135 = vunpack.c.h.s8.bf16 %v8011
    %v8136 = vunpack.c.h.s8.bf16 %v8012
    %v8137 = vunpack.c.h.s8.bf16 %v8013
    %v8138 = vunpack.c.l.s8.bf16 %v8014
    %v8139 = vunpack.c.l.s8.bf16 %v8015
    %v8140 = vunpack.c.l.s8.bf16 %v8016
    %v8141 = vunpack.c.l.s8.bf16 %v8017
    %v8142 = vunpack.c.h.s8.bf16 %v8014
    %v8143 = vunpack.c.h.s8.bf16 %v8015
    %v8144 = vunpack.c.h.s8.bf16 %v8016
    %v8145 = vunpack.c.h.s8.bf16 %v8017
    %v8146 = vunpack.c.l.s8.bf16 %v8018
    %v8147 = vunpack.c.l.s8.bf16 %v8019
    %v8148 = vunpack.c.l.s8.bf16 %v8020
    %v8149 = vunpack.c.l.s8.bf16 %v8021
    %v8150 = vunpack.c.h.s8.bf16 %v8018
    %v8151 = vunpack.c.h.s8.bf16 %v8019
    %v8152 = vunpack.c.h.s8.bf16 %v8020
    %v8153 = vunpack.c.h.s8.bf16 %v8021
    %v8154 = vunpack.c.l.s8.bf16 %v8022
    %v8155 = vunpack.c.l.s8.bf16 %v8023
    %v8156 = vunpack.c.l.s8.bf16 %v8024
    %v8157 = vunpack.c.l.s8.bf16 %v8025
    %v8158 = vunpack.c.h.s8.bf16 %v8022
    %v8159 = vunpack.c.h.s8.bf16 %v8023
    %v8160 = vunpack.c.h.s8.bf16 %v8024
    %v8161 = vunpack.c.h.s8.bf16 %v8025
    %v8162 = vunpack.c.l.s8.bf16 %v8026
    %v8163 = vunpack.c.l.s8.bf16 %v8027
    %v8164 = vunpack.c.l.s8.bf16 %v8028
    %v8165 = vunpack.c.l.s8.bf16 %v8029
    %v8166 = vunpack.c.h.s8.bf16 %v8026
    %v8167 = vunpack.c.h.s8.bf16 %v8027
    %v8168 = vunpack.c.h.s8.bf16 %v8028
    %v8169 = vunpack.c.h.s8.bf16 %v8029
    %v8170 = vunpack.c.l.s8.bf16 %v8030
    %v8171 = vunpack.c.l.s8.bf16 %v8031
    %v8172 = vunpack.c.l.s8.bf16 %v8032
    %v8173 = vunpack.c.l.s8.bf16 %v8033
    %v8174 = vunpack.c.h.s8.bf16 %v8030
    %v8175 = vunpack.c.h.s8.bf16 %v8031
    %v8176 = vunpack.c.h.s8.bf16 %v8032
    %v8177 = vunpack.c.h.s8.bf16 %v8033
    %v8178 = vunpack.c.l.s8.bf16 %v8034
    %v8179 = vunpack.c.l.s8.bf16 %v8035
    %v8180 = vunpack.c.l.s8.bf16 %v8036
    %v8181 = vunpack.c.l.s8.bf16 %v8037
    %v8182 = vunpack.c.h.s8.bf16 %v8034
    %v8183 = vunpack.c.h.s8.bf16 %v8035
    %v8184 = vunpack.c.h.s8.bf16 %v8036
    %v8185 = vunpack.c.h.s8.bf16 %v8037
    %v8186 = vunpack.c.l.s8.bf16 %v8038
    %v8187 = vunpack.c.l.s8.bf16 %v8039
    %v8188 = vunpack.c.l.s8.bf16 %v8040
    %v8189 = vunpack.c.l.s8.bf16 %v8041
    %v8190 = vunpack.c.h.s8.bf16 %v8038
    %v8191 = vunpack.c.h.s8.bf16 %v8039
    %v8192 = vunpack.c.h.s8.bf16 %v8040
    %v8193 = vunpack.c.h.s8.bf16 %v8041
    %v8194 = vunpack.c.l.s8.bf16 %v8042
    %v8195 = vunpack.c.l.s8.bf16 %v8043
    %v8196 = vunpack.c.l.s8.bf16 %v8044
    %v8197 = vunpack.c.l.s8.bf16 %v8045
    %v8198 = vunpack.c.h.s8.bf16 %v8042
    %v8199 = vunpack.c.h.s8.bf16 %v8043
    %v8200 = vunpack.c.h.s8.bf16 %v8044
    %v8201 = vunpack.c.h.s8.bf16 %v8045
    %v8202 = vunpack.c.l.s8.bf16 %v8046
    %v8203 = vunpack.c.l.s8.bf16 %v8047
    %v8204 = vunpack.c.l.s8.bf16 %v8048
    %v8205 = vunpack.c.l.s8.bf16 %v8049
    %v8206 = vunpack.c.h.s8.bf16 %v8046
    %v8207 = vunpack.c.h.s8.bf16 %v8047
    %v8208 = vunpack.c.h.s8.bf16 %v8048
    %v8209 = vunpack.c.h.s8.bf16 %v8049
    %v8210 = vunpack.c.l.s8.bf16 %v8050
    %v8211 = vunpack.c.l.s8.bf16 %v8051
    %v8212 = vunpack.c.l.s8.bf16 %v8052
    %v8213 = vunpack.c.l.s8.bf16 %v8053
    %v8214 = vunpack.c.h.s8.bf16 %v8050
    %v8215 = vunpack.c.h.s8.bf16 %v8051
    %v8216 = vunpack.c.h.s8.bf16 %v8052
    %v8217 = vunpack.c.h.s8.bf16 %v8053
    %v8218 = vunpack.c.l.s8.bf16 %v8054
    %v8219 = vunpack.c.l.s8.bf16 %v8055
    %v8220 = vunpack.c.l.s8.bf16 %v8056
    %v8221 = vunpack.c.l.s8.bf16 %v8057
    %v8222 = vunpack.c.h.s8.bf16 %v8054
    %v8223 = vunpack.c.h.s8.bf16 %v8055
    %v8224 = vunpack.c.h.s8.bf16 %v8056
    %v8225 = vunpack.c.h.s8.bf16 %v8057
    %v8226 = vunpack.c.l.s8.bf16 %v8058
    %v8227 = vunpack.c.l.s8.bf16 %v8059
    %v8228 = vunpack.c.l.s8.bf16 %v8060
    %v8229 = vunpack.c.l.s8.bf16 %v8061
    %v8230 = vunpack.c.h.s8.bf16 %v8058
    %v8231 = vunpack.c.h.s8.bf16 %v8059
    %v8232 = vunpack.c.h.s8.bf16 %v8060
    %v8233 = vunpack.c.h.s8.bf16 %v8061
    %v8234 = vunpack.c.l.s8.bf16 %v8062
    %v8235 = vunpack.c.l.s8.bf16 %v8063
    %v8236 = vunpack.c.l.s8.bf16 %v8064
    %v8237 = vunpack.c.l.s8.bf16 %v8065
    %v8238 = vunpack.c.h.s8.bf16 %v8062
    %v8239 = vunpack.c.h.s8.bf16 %v8063
    %v8240 = vunpack.c.h.s8.bf16 %v8064
    %v8241 = vunpack.c.h.s8.bf16 %v8065
    %v8242 = vunpack.c.l.s8.bf16 %v8066
    %v8243 = vunpack.c.l.s8.bf16 %v8067
    %v8244 = vunpack.c.l.s8.bf16 %v8068
    %v8245 = vunpack.c.l.s8.bf16 %v8069
    %v8246 = vunpack.c.h.s8.bf16 %v8066
    %v8247 = vunpack.c.h.s8.bf16 %v8067
    %v8248 = vunpack.c.h.s8.bf16 %v8068
    %v8249 = vunpack.c.h.s8.bf16 %v8069
    %v8250 = vunpack.c.l.s8.bf16 %v8070
    %v8251 = vunpack.c.l.s8.bf16 %v8071
    %v8252 = vunpack.c.l.s8.bf16 %v8072
    %v8253 = vunpack.c.l.s8.bf16 %v8073
    %v8254 = vunpack.c.h.s8.bf16 %v8070
    %v8255 = vunpack.c.h.s8.bf16 %v8071
    %v8256 = vunpack.c.h.s8.bf16 %v8072
    %v8257 = vunpack.c.h.s8.bf16 %v8073
    %v8258 = vunpack.c.l.s8.bf16 %v8074
    %v8259 = vunpack.c.l.s8.bf16 %v8075
    %v8260 = vunpack.c.l.s8.bf16 %v8076
    %v8261 = vunpack.c.l.s8.bf16 %v8077
    %v8262 = vunpack.c.h.s8.bf16 %v8074
    %v8263 = vunpack.c.h.s8.bf16 %v8075
    %v8264 = vunpack.c.h.s8.bf16 %v8076
    %v8265 = vunpack.c.h.s8.bf16 %v8077
    %v8266 = vunpack.c.l.s8.bf16 %v8078
    %v8267 = vunpack.c.l.s8.bf16 %v8079
    %v8268 = vunpack.c.l.s8.bf16 %v8080
    %v8269 = vunpack.c.l.s8.bf16 %v8081
    %v8270 = vunpack.c.h.s8.bf16 %v8078
    %v8271 = vunpack.c.h.s8.bf16 %v8079
    %v8272 = vunpack.c.h.s8.bf16 %v8080
    %v8273 = vunpack.c.h.s8.bf16 %v8081
    %8274 = vmatprep.subr.bf16.mxu0 %v8111
    %8275 = vmatpush1.bf16.msra.mxu0 %v8110
    %8276 = vmatprep.subr.bf16.mxu0 %v8107
    %8277 = vmatpush1.bf16.msra.mxu0 %v8106
    %8278 = vmatprep.subr.bf16.mxu0 %v8103
    %8279 = vmatpush1.bf16.msra.mxu0 %v8102
    %8280 = vmatprep.subr.bf16.mxu0 %v8099
    %8281 = vmatpush1.bf16.msra.mxu0 %v8098
    %8282 = vmatprep.subr.bf16.mxu0 %v8095
    %8283 = vmatpush1.bf16.msra.mxu0 %v8094
    %8284 = vmatprep.subr.bf16.mxu0 %v8091
    %8285 = vmatpush1.bf16.msra.mxu0 %v8090
    %8286 = vmatprep.subr.bf16.mxu0 %v8087
    %8287 = vmatpush1.bf16.msra.mxu0 %v8086
    %8288 = vmatprep.subr.bf16.mxu0 %v8083
    %8289 = vmatpush1.bf16.msra.mxu0 %v8082
    %8290 = vmatprep.subr.bf16.mxu0 %v8143
    %8291 = vmatpush2.bf16.msra.mxu0 %v8142
    %8292 = vmatprep.subr.bf16.mxu0 %v8139
    %8293 = vmatpush2.bf16.msra.mxu0 %v8138
    %8294 = vmatprep.subr.bf16.mxu0 %v8135
    %8295 = vmatpush2.bf16.msra.mxu0 %v8134
    %8296 = vmatprep.subr.bf16.mxu0 %v8131
    %8297 = vmatpush2.bf16.msra.mxu0 %v8130
    %8298 = vmatprep.subr.bf16.mxu0 %v8127
    %8299 = vmatpush2.bf16.msra.mxu0 %v8126
    %8300 = vmatprep.subr.bf16.mxu0 %v8123
    %8301 = vmatpush2.bf16.msra.mxu0 %v8122
    %8302 = vmatprep.subr.bf16.mxu0 %v8119
    %8303 = vmatpush2.bf16.msra.mxu0 %v8118
    %8304 = vmatprep.subr.bf16.mxu0 %v8115
    %8305 = vmatpush2.bf16.msra.mxu0 %v8114
    %8306 = vmatprep.mubr.bf16.mxu0 %v7977
    %8307 = vmatmul.mubr.bf16.gmra.mxu0 %v7976
    %v8308 = vpop.f32.mrf.mxu0
    %v8309 = vadd.f32 0.0, %v8308
    %v8310 = vpop.f32.mrf.mxu0
    %v8311 = vadd.f32 0.0, %v8310
    %v8312 = vpop.f32.mrf.mxu0
    %v8313 = vpop.f32.mrf.mxu0
    %8314 = vdwg.mxu0
    %8315 = vmatprep.subr.bf16.mxu0 %v8175
    %8316 = vmatpush1.bf16.msra.mxu0 %v8174
    %8317 = vmatprep.subr.bf16.mxu0 %v8171
    %8318 = vmatpush1.bf16.msra.mxu0 %v8170
    %8319 = vmatprep.subr.bf16.mxu0 %v8167
    %8320 = vmatpush1.bf16.msra.mxu0 %v8166
    %8321 = vmatprep.subr.bf16.mxu0 %v8163
    %8322 = vmatpush1.bf16.msra.mxu0 %v8162
    %8323 = vmatprep.subr.bf16.mxu0 %v8159
    %8324 = vmatpush1.bf16.msra.mxu0 %v8158
    %8325 = vmatprep.subr.bf16.mxu0 %v8155
    %8326 = vmatpush1.bf16.msra.mxu0 %v8154
    %8327 = vmatprep.subr.bf16.mxu0 %v8151
    %8328 = vmatpush1.bf16.msra.mxu0 %v8150
    %8329 = vmatprep.subr.bf16.mxu0 %v8147
    %8330 = vmatpush1.bf16.msra.mxu0 %v8146
    %8331 = vmatprep.subr.bf16.mxu0 %v8207
    %8332 = vmatpush2.bf16.msra.mxu0 %v8206
    %8333 = vmatprep.subr.bf16.mxu0 %v8203
    %8334 = vmatpush2.bf16.msra.mxu0 %v8202
    %8335 = vmatprep.subr.bf16.mxu0 %v8199
    %8336 = vmatpush2.bf16.msra.mxu0 %v8198
    %8337 = vmatprep.subr.bf16.mxu0 %v8195
    %8338 = vmatpush2.bf16.msra.mxu0 %v8194
    %8339 = vmatprep.subr.bf16.mxu0 %v8191
    %8340 = vmatpush2.bf16.msra.mxu0 %v8190
    %8341 = vmatprep.subr.bf16.mxu0 %v8187
    %8342 = vmatpush2.bf16.msra.mxu0 %v8186
    %8343 = vmatprep.subr.bf16.mxu0 %v8183
    %8344 = vmatpush2.bf16.msra.mxu0 %v8182
    %8345 = vmatprep.subr.bf16.mxu0 %v8179
    %8346 = vmatpush2.bf16.msra.mxu0 %v8178
    %8347 = vmatprep.mubr.bf16.mxu0 %v7979
    %8348 = vmatmul.mubr.bf16.gmra.mxu0 %v7978
    %v8349 = vpop.f32.mrf.mxu0
    %v8350 = vadd.f32 %v8309, %v8349
    %v8351 = vpop.f32.mrf.mxu0
    %v8352 = vadd.f32 %v8311, %v8351
    %v8353 = vpop.f32.mrf.mxu0
    %v8354 = vpop.f32.mrf.mxu0
    %8355 = vdwg.mxu0
    %8356 = vmatprep.subr.bf16.mxu0 %v8239
    %8357 = vmatpush1.bf16.msra.mxu0 %v8238
    %8358 = vmatprep.subr.bf16.mxu0 %v8235
    %8359 = vmatpush1.bf16.msra.mxu0 %v8234
    %8360 = vmatprep.subr.bf16.mxu0 %v8231
    %8361 = vmatpush1.bf16.msra.mxu0 %v8230
    %8362 = vmatprep.subr.bf16.mxu0 %v8227
    %8363 = vmatpush1.bf16.msra.mxu0 %v8226
    %8364 = vmatprep.subr.bf16.mxu0 %v8223
    %8365 = vmatpush1.bf16.msra.mxu0 %v8222
    %8366 = vmatprep.subr.bf16.mxu0 %v8219
    %8367 = vmatpush1.bf16.msra.mxu0 %v8218
    %8368 = vmatprep.subr.bf16.mxu0 %v8215
    %8369 = vmatpush1.bf16.msra.mxu0 %v8214
    %8370 = vmatprep.subr.bf16.mxu0 %v8211
    %8371 = vmatpush1.bf16.msra.mxu0 %v8210
    %8372 = vmatprep.subr.bf16.mxu0 %v8271
    %8373 = vmatpush2.bf16.msra.mxu0 %v8270
    %8374 = vmatprep.subr.bf16.mxu0 %v8267
    %8375 = vmatpush2.bf16.msra.mxu0 %v8266
    %8376 = vmatprep.subr.bf16.mxu0 %v8263
    %8377 = vmatpush2.bf16.msra.mxu0 %v8262
    %8378 = vmatprep.subr.bf16.mxu0 %v8259
    %8379 = vmatpush2.bf16.msra.mxu0 %v8258
    %8380 = vmatprep.subr.bf16.mxu0 %v8255
    %8381 = vmatpush2.bf16.msra.mxu0 %v8254
    %8382 = vmatprep.subr.bf16.mxu0 %v8251
    %8383 = vmatpush2.bf16.msra.mxu0 %v8250
    %8384 = vmatprep.subr.bf16.mxu0 %v8247
    %8385 = vmatpush2.bf16.msra.mxu0 %v8246
    %8386 = vmatprep.subr.bf16.mxu0 %v8243
    %8387 = vmatpush2.bf16.msra.mxu0 %v8242
    %8388 = vmatprep.mubr.bf16.mxu0 %v7981
    %8389 = vmatmul.mubr.bf16.gmra.mxu0 %v7980
    %v8390 = vpop.f32.mrf.mxu0
    %v8391 = vadd.f32 %v8350, %v8390
    %v8392 = vpop.f32.mrf.mxu0
    %v8393 = vadd.f32 %v8352, %v8392
    %v8394 = vpop.f32.mrf.mxu0
    %v8395 = vpop.f32.mrf.mxu0
    %8396 = vdwg.mxu0
    %8397 = vmatprep.subr.bf16.mxu0 %v8113
    %8398 = vmatpush1.bf16.msra.mxu0 %v8112
    %8399 = vmatprep.subr.bf16.mxu0 %v8109
    %8400 = vmatpush1.bf16.msra.mxu0 %v8108
    %8401 = vmatprep.subr.bf16.mxu0 %v8105
    %8402 = vmatpush1.bf16.msra.mxu0 %v8104
    %8403 = vmatprep.subr.bf16.mxu0 %v8101
    %8404 = vmatpush1.bf16.msra.mxu0 %v8100
    %8405 = vmatprep.subr.bf16.mxu0 %v8097
    %8406 = vmatpush1.bf16.msra.mxu0 %v8096
    %8407 = vmatprep.subr.bf16.mxu0 %v8093
    %8408 = vmatpush1.bf16.msra.mxu0 %v8092
    %8409 = vmatprep.subr.bf16.mxu0 %v8089
    %8410 = vmatpush1.bf16.msra.mxu0 %v8088
    %8411 = vmatprep.subr.bf16.mxu0 %v8085
    %8412 = vmatpush1.bf16.msra.mxu0 %v8084
    %8413 = vmatprep.subr.bf16.mxu0 %v8145
    %8414 = vmatpush2.bf16.msra.mxu0 %v8144
    %8415 = vmatprep.subr.bf16.mxu0 %v8141
    %8416 = vmatpush2.bf16.msra.mxu0 %v8140
    %8417 = vmatprep.subr.bf16.mxu0 %v8137
    %8418 = vmatpush2.bf16.msra.mxu0 %v8136
    %8419 = vmatprep.subr.bf16.mxu0 %v8133
    %8420 = vmatpush2.bf16.msra.mxu0 %v8132
    %8421 = vmatprep.subr.bf16.mxu0 %v8129
    %8422 = vmatpush2.bf16.msra.mxu0 %v8128
    %8423 = vmatprep.subr.bf16.mxu0 %v8125
    %8424 = vmatpush2.bf16.msra.mxu0 %v8124
    %8425 = vmatprep.subr.bf16.mxu0 %v8121
    %8426 = vmatpush2.bf16.msra.mxu0 %v8120
    %8427 = vmatprep.subr.bf16.mxu0 %v8117
    %8428 = vmatpush2.bf16.msra.mxu0 %v8116
    %8429 = vmatprep.mubr.bf16.mxu0 %v7977
    %8430 = vmatmul.mubr.bf16.gmra.mxu0 %v7976
    %v8431 = vpop.f32.mrf.mxu0
    %v8432 = vadd.f32 0.0, %v8431
    %v8433 = vpop.f32.mrf.mxu0
    %v8434 = vadd.f32 0.0, %v8433
    %v8435 = vpop.f32.mrf.mxu0
    %v8436 = vpop.f32.mrf.mxu0
    %8437 = vdwg.mxu0
    %8438 = vmatprep.subr.bf16.mxu0 %v8177
    %8439 = vmatpush1.bf16.msra.mxu0 %v8176
    %8440 = vmatprep.subr.bf16.mxu0 %v8173
    %8441 = vmatpush1.bf16.msra.mxu0 %v8172
    %8442 = vmatprep.subr.bf16.mxu0 %v8169
    %8443 = vmatpush1.bf16.msra.mxu0 %v8168
    %8444 = vmatprep.subr.bf16.mxu0 %v8165
    %8445 = vmatpush1.bf16.msra.mxu0 %v8164
    %8446 = vmatprep.subr.bf16.mxu0 %v8161
    %8447 = vmatpush1.bf16.msra.mxu0 %v8160
    %8448 = vmatprep.subr.bf16.mxu0 %v8157
    %8449 = vmatpush1.bf16.msra.mxu0 %v8156
    %8450 = vmatprep.subr.bf16.mxu0 %v8153
    %8451 = vmatpush1.bf16.msra.mxu0 %v8152
    %8452 = vmatprep.subr.bf16.mxu0 %v8149
    %8453 = vmatpush1.bf16.msra.mxu0 %v8148
    %8454 = vmatprep.subr.bf16.mxu0 %v8209
    %8455 = vmatpush2.bf16.msra.mxu0 %v8208
    %8456 = vmatprep.subr.bf16.mxu0 %v8205
    %8457 = vmatpush2.bf16.msra.mxu0 %v8204
    %8458 = vmatprep.subr.bf16.mxu0 %v8201
    %8459 = vmatpush2.bf16.msra.mxu0 %v8200
    %8460 = vmatprep.subr.bf16.mxu0 %v8197
    %8461 = vmatpush2.bf16.msra.mxu0 %v8196
    %8462 = vmatprep.subr.bf16.mxu0 %v8193
    %8463 = vmatpush2.bf16.msra.mxu0 %v8192
    %8464 = vmatprep.subr.bf16.mxu0 %v8189
    %8465 = vmatpush2.bf16.msra.mxu0 %v8188
    %8466 = vmatprep.subr.bf16.mxu0 %v8185
    %8467 = vmatpush2.bf16.msra.mxu0 %v8184
    %8468 = vmatprep.subr.bf16.mxu0 %v8181
    %8469 = vmatpush2.bf16.msra.mxu0 %v8180
    %8470 = vmatprep.mubr.bf16.mxu0 %v7979
    %8471 = vmatmul.mubr.bf16.gmra.mxu0 %v7978
    %v8472 = vpop.f32.mrf.mxu0
    %v8473 = vadd.f32 %v8432, %v8472
    %v8474 = vpop.f32.mrf.mxu0
    %v8475 = vadd.f32 %v8434, %v8474
    %v8476 = vpop.f32.mrf.mxu0
    %v8477 = vpop.f32.mrf.mxu0
    %8478 = vdwg.mxu0
    %8479 = vmatprep.subr.bf16.mxu0 %v8241
    %8480 = vmatpush1.bf16.msra.mxu0 %v8240
    %8481 = vmatprep.subr.bf16.mxu0 %v8237
    %8482 = vmatpush1.bf16.msra.mxu0 %v8236
    %8483 = vmatprep.subr.bf16.mxu0 %v8233
    %8484 = vmatpush1.bf16.msra.mxu0 %v8232
    %8485 = vmatprep.subr.bf16.mxu0 %v8229
    %8486 = vmatpush1.bf16.msra.mxu0 %v8228
    %8487 = vmatprep.subr.bf16.mxu0 %v8225
    %8488 = vmatpush1.bf16.msra.mxu0 %v8224
    %8489 = vmatprep.subr.bf16.mxu0 %v8221
    %8490 = vmatpush1.bf16.msra.mxu0 %v8220
    %8491 = vmatprep.subr.bf16.mxu0 %v8217
    %8492 = vmatpush1.bf16.msra.mxu0 %v8216
    %8493 = vmatprep.subr.bf16.mxu0 %v8213
    %8494 = vmatpush1.bf16.msra.mxu0 %v8212
    %8495 = vmatprep.subr.bf16.mxu0 %v8273
    %8496 = vmatpush2.bf16.msra.mxu0 %v8272
    %8497 = vmatprep.subr.bf16.mxu0 %v8269
    %8498 = vmatpush2.bf16.msra.mxu0 %v8268
    %8499 = vmatprep.subr.bf16.mxu0 %v8265
    %8500 = vmatpush2.bf16.msra.mxu0 %v8264
    %8501 = vmatprep.subr.bf16.mxu0 %v8261
    %8502 = vmatpush2.bf16.msra.mxu0 %v8260
    %8503 = vmatprep.subr.bf16.mxu0 %v8257
    %8504 = vmatpush2.bf16.msra.mxu0 %v8256
    %8505 = vmatprep.subr.bf16.mxu0 %v8253
    %8506 = vmatpush2.bf16.msra.mxu0 %v8252
    %8507 = vmatprep.subr.bf16.mxu0 %v8249
    %8508 = vmatpush2.bf16.msra.mxu0 %v8248
    %8509 = vmatprep.subr.bf16.mxu0 %v8245
    %8510 = vmatpush2.bf16.msra.mxu0 %v8244
    %8511 = vmatprep.mubr.bf16.mxu0 %v7981
    %8512 = vmatmul.mubr.bf16.gmra.mxu0 %v7980
    %v8513 = vpop.f32.mrf.mxu0
    %v8514 = vadd.f32 %v8473, %v8513
    %v8515 = vpop.f32.mrf.mxu0
    %v8516 = vadd.f32 %v8475, %v8515
    %v8517 = vpop.f32.mrf.mxu0
    %v8518 = vpop.f32.mrf.mxu0
    %8519 = vdwg.mxu0
    %s8520 = scalar_lea.vmem [#allocation17], 81
    %v8521 = vld [vmem:[%s8520] ss:$8 sm:$0xf]
    %s8522 = scalar_lea.vmem [#allocation17], 80
    %v8523 = vld [vmem:[%s8522] ss:$8 sm:$0xf]
    %v8525 = vlaneseq
    %v8526 = vshrl.u32 %v8525, 7
    %v8527 = vsub.s32 0, %v8526
    %v8528 = vrot.slane %v8521, %v8527
    %v8529 = vlaneseq
    %v8530 = vshrl.u32 %v8529, 7
    %v8531 = vsub.s32 1, %v8530
    %v8532 = vrot.slane %v8521, %v8531
    %v8533 = vlaneseq
    %v8534 = vshrl.u32 %v8533, 7
    %v8535 = vsub.s32 2, %v8534
    %v8536 = vrot.slane %v8521, %v8535
    %v8537 = vlaneseq
    %v8538 = vshrl.u32 %v8537, 7
    %v8539 = vsub.s32 3, %v8538
    %v8540 = vrot.slane %v8521, %v8539
    %v8545 = vmul.f32 %v8391, %v8528
    %v8546 = vmul.f32 %v8393, %v8532
    %v8547 = vmul.f32 %v8514, %v8536
    %v8548 = vmul.f32 %v8516, %v8540
    %v8550 = vlaneseq
    %v8551 = vshrl.u32 %v8550, 7
    %v8552 = vsub.s32 0, %v8551
    %v8553 = vrot.slane %v8523, %v8552
    %v8554 = vlaneseq
    %v8555 = vshrl.u32 %v8554, 7
    %v8556 = vsub.s32 1, %v8555
    %v8557 = vrot.slane %v8523, %v8556
    %v8558 = vlaneseq
    %v8559 = vshrl.u32 %v8558, 7
    %v8560 = vsub.s32 2, %v8559
    %v8561 = vrot.slane %v8523, %v8560
    %v8562 = vlaneseq
    %v8563 = vshrl.u32 %v8562, 7
    %v8564 = vsub.s32 3, %v8563
    %v8565 = vrot.slane %v8523, %v8564
    %v8570 = vadd.f32 %v8545, %v8553
    %v8571 = vadd.f32 %v8546, %v8557
    %v8572 = vadd.f32 %v8547, %v8561
    %v8573 = vadd.f32 %v8548, %v8565
    %vm8574 = vcmp.gt.f32.partialorder %v8570, 0.0
    %vm8575 = vcmp.gt.f32.partialorder %v8571, 0.0
    %vm8576 = vcmp.gt.f32.partialorder %v8572, 0.0
    %vm8577 = vcmp.gt.f32.partialorder %v8573, 0.0
    %v8578 = vstv %s74
    %v8579 = vmul.f32 %v8578, %v8570
    %v8580 = vmul.f32 %v8578, %v8571
    %v8581 = vmul.f32 %v8578, %v8572
    %v8582 = vmul.f32 %v8578, %v8573
    %v8583 = vsel %vm8574, %v8570, %v8579
    %v8584 = vsel %vm8575, %v8571, %v8580
    %v8585 = vsel %vm8576, %v8572, %v8581
    %v8586 = vsel %vm8577, %v8573, %v8582
    %v8587 = vpack.c.bf16 %v8583, %v8583
    %v8588 = vpack.c.bf16 %v8584, %v8584
    %v8589 = vpack.c.bf16 %v8585, %v8585
    %v8590 = vpack.c.bf16 %v8586, %v8586
    %s8591 = smul.u32 2, 64
    %s8592 = smul.u32 %s8591, 3
    %s8593 = sshll.u32 %s8592, 4
    %8594 = dma.done %s152, %s8593
    %v8595 = vld [vmem:[#allocation8] sm:$0xff]
    %v8596 = vld [vmem:[#allocation8 + $0x8] sm:$0xff]
    %v8597 = vld [vmem:[#allocation8 + $0x10] sm:$0xff]
    %v8598 = vld [vmem:[#allocation8 + $0x18] sm:$0xff]
    %v8599 = vld [vmem:[#allocation8 + $0x20] sm:$0xff]
    %v8600 = vld [vmem:[#allocation8 + $0x28] sm:$0xff]
    %v8601 = vld [vmem:[#allocation8 + $0x30] sm:$0xff]
    %v8602 = vld [vmem:[#allocation8 + $0x38] sm:$0xff]
    %v8603 = vld [vmem:[#allocation8 + $0x40] sm:$0xff]
    %v8604 = vld [vmem:[#allocation8 + $0x48] sm:$0xff]
    %v8605 = vld [vmem:[#allocation8 + $0x50] sm:$0xff]
    %v8606 = vld [vmem:[#allocation8 + $0x58] sm:$0xff]
    %v8607 = vld [vmem:[#allocation8 + $0x60] sm:$0xff]
    %v8608 = vld [vmem:[#allocation8 + $0x68] sm:$0xff]
    %v8609 = vld [vmem:[#allocation8 + $0x70] sm:$0xff]
    %v8610 = vld [vmem:[#allocation8 + $0x78] sm:$0xff]
    %v8611 = vld [vmem:[#allocation8 + $0x80] sm:$0xff]
    %v8612 = vld [vmem:[#allocation8 + $0x88] sm:$0xff]
    %v8613 = vld [vmem:[#allocation8 + $0x90] sm:$0xff]
    %v8614 = vld [vmem:[#allocation8 + $0x98] sm:$0xff]
    %v8615 = vld [vmem:[#allocation8 + $0xa0] sm:$0xff]
    %v8616 = vld [vmem:[#allocation8 + $0xa8] sm:$0xff]
    %v8617 = vld [vmem:[#allocation8 + $0xb0] sm:$0xff]
    %v8618 = vld [vmem:[#allocation8 + $0xb8] sm:$0xff]
    %v8619 = vld [vmem:[#allocation8 + $0xc0] sm:$0xff]
    %v8620 = vld [vmem:[#allocation8 + $0xc8] sm:$0xff]
    %v8621 = vld [vmem:[#allocation8 + $0xd0] sm:$0xff]
    %v8622 = vld [vmem:[#allocation8 + $0xd8] sm:$0xff]
    %v8623 = vld [vmem:[#allocation8 + $0xe0] sm:$0xff]
    %v8624 = vld [vmem:[#allocation8 + $0xe8] sm:$0xff]
    %v8625 = vld [vmem:[#allocation8 + $0xf0] sm:$0xff]
    %v8626 = vld [vmem:[#allocation8 + $0xf8] sm:$0xff]
    %v8627 = vld [vmem:[#allocation8 + $0x100] sm:$0xff]
    %v8628 = vld [vmem:[#allocation8 + $0x108] sm:$0xff]
    %v8629 = vld [vmem:[#allocation8 + $0x110] sm:$0xff]
    %v8630 = vld [vmem:[#allocation8 + $0x118] sm:$0xff]
    %v8631 = vld [vmem:[#allocation8 + $0x120] sm:$0xff]
    %v8632 = vld [vmem:[#allocation8 + $0x128] sm:$0xff]
    %v8633 = vld [vmem:[#allocation8 + $0x130] sm:$0xff]
    %v8634 = vld [vmem:[#allocation8 + $0x138] sm:$0xff]
    %v8635 = vld [vmem:[#allocation8 + $0x140] sm:$0xff]
    %v8636 = vld [vmem:[#allocation8 + $0x148] sm:$0xff]
    %v8637 = vld [vmem:[#allocation8 + $0x150] sm:$0xff]
    %v8638 = vld [vmem:[#allocation8 + $0x158] sm:$0xff]
    %v8639 = vld [vmem:[#allocation8 + $0x160] sm:$0xff]
    %v8640 = vld [vmem:[#allocation8 + $0x168] sm:$0xff]
    %v8641 = vld [vmem:[#allocation8 + $0x170] sm:$0xff]
    %v8642 = vld [vmem:[#allocation8 + $0x178] sm:$0xff]
    %v8643 = vunpack.c.l.s8.bf16 %v8595
    %v8644 = vunpack.c.l.s8.bf16 %v8596
    %v8645 = vunpack.c.l.s8.bf16 %v8597
    %v8646 = vunpack.c.h.s8.bf16 %v8595
    %v8647 = vunpack.c.h.s8.bf16 %v8596
    %v8648 = vunpack.c.h.s8.bf16 %v8597
    %v8649 = vunpack.c.l.s8.bf16 %v8598
    %v8650 = vunpack.c.l.s8.bf16 %v8599
    %v8651 = vunpack.c.l.s8.bf16 %v8600
    %v8652 = vunpack.c.h.s8.bf16 %v8598
    %v8653 = vunpack.c.h.s8.bf16 %v8599
    %v8654 = vunpack.c.h.s8.bf16 %v8600
    %v8655 = vunpack.c.l.s8.bf16 %v8601
    %v8656 = vunpack.c.l.s8.bf16 %v8602
    %v8657 = vunpack.c.l.s8.bf16 %v8603
    %v8658 = vunpack.c.h.s8.bf16 %v8601
    %v8659 = vunpack.c.h.s8.bf16 %v8602
    %v8660 = vunpack.c.h.s8.bf16 %v8603
    %v8661 = vunpack.c.l.s8.bf16 %v8604
    %v8662 = vunpack.c.l.s8.bf16 %v8605
    %v8663 = vunpack.c.l.s8.bf16 %v8606
    %v8664 = vunpack.c.h.s8.bf16 %v8604
    %v8665 = vunpack.c.h.s8.bf16 %v8605
    %v8666 = vunpack.c.h.s8.bf16 %v8606
    %v8667 = vunpack.c.l.s8.bf16 %v8607
    %v8668 = vunpack.c.l.s8.bf16 %v8608
    %v8669 = vunpack.c.l.s8.bf16 %v8609
    %v8670 = vunpack.c.h.s8.bf16 %v8607
    %v8671 = vunpack.c.h.s8.bf16 %v8608
    %v8672 = vunpack.c.h.s8.bf16 %v8609
    %v8673 = vunpack.c.l.s8.bf16 %v8610
    %v8674 = vunpack.c.l.s8.bf16 %v8611
    %v8675 = vunpack.c.l.s8.bf16 %v8612
    %v8676 = vunpack.c.h.s8.bf16 %v8610
    %v8677 = vunpack.c.h.s8.bf16 %v8611
    %v8678 = vunpack.c.h.s8.bf16 %v8612
    %v8679 = vunpack.c.l.s8.bf16 %v8613
    %v8680 = vunpack.c.l.s8.bf16 %v8614
    %v8681 = vunpack.c.l.s8.bf16 %v8615
    %v8682 = vunpack.c.h.s8.bf16 %v8613
    %v8683 = vunpack.c.h.s8.bf16 %v8614
    %v8684 = vunpack.c.h.s8.bf16 %v8615
    %v8685 = vunpack.c.l.s8.bf16 %v8616
    %v8686 = vunpack.c.l.s8.bf16 %v8617
    %v8687 = vunpack.c.l.s8.bf16 %v8618
    %v8688 = vunpack.c.h.s8.bf16 %v8616
    %v8689 = vunpack.c.h.s8.bf16 %v8617
    %v8690 = vunpack.c.h.s8.bf16 %v8618
    %v8691 = vunpack.c.l.s8.bf16 %v8619
    %v8692 = vunpack.c.l.s8.bf16 %v8620
    %v8693 = vunpack.c.l.s8.bf16 %v8621
    %v8694 = vunpack.c.h.s8.bf16 %v8619
    %v8695 = vunpack.c.h.s8.bf16 %v8620
    %v8696 = vunpack.c.h.s8.bf16 %v8621
    %v8697 = vunpack.c.l.s8.bf16 %v8622
    %v8698 = vunpack.c.l.s8.bf16 %v8623
    %v8699 = vunpack.c.l.s8.bf16 %v8624
    %v8700 = vunpack.c.h.s8.bf16 %v8622
    %v8701 = vunpack.c.h.s8.bf16 %v8623
    %v8702 = vunpack.c.h.s8.bf16 %v8624
    %v8703 = vunpack.c.l.s8.bf16 %v8625
    %v8704 = vunpack.c.l.s8.bf16 %v8626
    %v8705 = vunpack.c.l.s8.bf16 %v8627
    %v8706 = vunpack.c.h.s8.bf16 %v8625
    %v8707 = vunpack.c.h.s8.bf16 %v8626
    %v8708 = vunpack.c.h.s8.bf16 %v8627
    %v8709 = vunpack.c.l.s8.bf16 %v8628
    %v8710 = vunpack.c.l.s8.bf16 %v8629
    %v8711 = vunpack.c.l.s8.bf16 %v8630
    %v8712 = vunpack.c.h.s8.bf16 %v8628
    %v8713 = vunpack.c.h.s8.bf16 %v8629
    %v8714 = vunpack.c.h.s8.bf16 %v8630
    %v8715 = vunpack.c.l.s8.bf16 %v8631
    %v8716 = vunpack.c.l.s8.bf16 %v8632
    %v8717 = vunpack.c.l.s8.bf16 %v8633
    %v8718 = vunpack.c.h.s8.bf16 %v8631
    %v8719 = vunpack.c.h.s8.bf16 %v8632
    %v8720 = vunpack.c.h.s8.bf16 %v8633
    %v8721 = vunpack.c.l.s8.bf16 %v8634
    %v8722 = vunpack.c.l.s8.bf16 %v8635
    %v8723 = vunpack.c.l.s8.bf16 %v8636
    %v8724 = vunpack.c.h.s8.bf16 %v8634
    %v8725 = vunpack.c.h.s8.bf16 %v8635
    %v8726 = vunpack.c.h.s8.bf16 %v8636
    %v8727 = vunpack.c.l.s8.bf16 %v8637
    %v8728 = vunpack.c.l.s8.bf16 %v8638
    %v8729 = vunpack.c.l.s8.bf16 %v8639
    %v8730 = vunpack.c.h.s8.bf16 %v8637
    %v8731 = vunpack.c.h.s8.bf16 %v8638
    %v8732 = vunpack.c.h.s8.bf16 %v8639
    %v8733 = vunpack.c.l.s8.bf16 %v8640
    %v8734 = vunpack.c.l.s8.bf16 %v8641
    %v8735 = vunpack.c.l.s8.bf16 %v8642
    %v8736 = vunpack.c.h.s8.bf16 %v8640
    %v8737 = vunpack.c.h.s8.bf16 %v8641
    %v8738 = vunpack.c.h.s8.bf16 %v8642
    %8739 = vmatprep.subr.bf16.mxu0 %v8665
    %8740 = vmatpush1.bf16.msra.mxu0 %v8664
    %8741 = vmatprep.subr.bf16.mxu0 %v8662
    %8742 = vmatpush1.bf16.msra.mxu0 %v8661
    %8743 = vmatprep.subr.bf16.mxu0 %v8659
    %8744 = vmatpush1.bf16.msra.mxu0 %v8658
    %8745 = vmatprep.subr.bf16.mxu0 %v8656
    %8746 = vmatpush1.bf16.msra.mxu0 %v8655
    %8747 = vmatprep.subr.bf16.mxu0 %v8653
    %8748 = vmatpush1.bf16.msra.mxu0 %v8652
    %8749 = vmatprep.subr.bf16.mxu0 %v8650
    %8750 = vmatpush1.bf16.msra.mxu0 %v8649
    %8751 = vmatprep.subr.bf16.mxu0 %v8647
    %8752 = vmatpush1.bf16.msra.mxu0 %v8646
    %8753 = vmatprep.subr.bf16.mxu0 %v8644
    %8754 = vmatpush1.bf16.msra.mxu0 %v8643
    %8755 = vmatprep.subr.bf16.mxu0 %v8689
    %8756 = vmatpush2.bf16.msra.mxu0 %v8688
    %8757 = vmatprep.subr.bf16.mxu0 %v8686
    %8758 = vmatpush2.bf16.msra.mxu0 %v8685
    %8759 = vmatprep.subr.bf16.mxu0 %v8683
    %8760 = vmatpush2.bf16.msra.mxu0 %v8682
    %8761 = vmatprep.subr.bf16.mxu0 %v8680
    %8762 = vmatpush2.bf16.msra.mxu0 %v8679
    %8763 = vmatprep.subr.bf16.mxu0 %v8677
    %8764 = vmatpush2.bf16.msra.mxu0 %v8676
    %8765 = vmatprep.subr.bf16.mxu0 %v8674
    %8766 = vmatpush2.bf16.msra.mxu0 %v8673
    %8767 = vmatprep.subr.bf16.mxu0 %v8671
    %8768 = vmatpush2.bf16.msra.mxu0 %v8670
    %8769 = vmatprep.subr.bf16.mxu0 %v8668
    %8770 = vmatpush2.bf16.msra.mxu0 %v8667
    %8771 = vmatprep.mubr.bf16.mxu0 %v8588
    %8772 = vmatmul.mubr.bf16.gmra.mxu0 %v8587
    %v8773 = vpop.f32.mrf.mxu0
    %v8774 = vadd.f32 0.0, %v8773
    %v8775 = vpop.f32.mrf.mxu0
    %v8776 = vadd.f32 0.0, %v8775
    %v8777 = vpop.f32.mrf.mxu0
    %v8778 = vpop.f32.mrf.mxu0
    %8779 = vdwg.mxu0
    %8780 = vmatprep.subr.bf16.mxu0 %v8713
    %8781 = vmatpush1.bf16.msra.mxu0 %v8712
    %8782 = vmatprep.subr.bf16.mxu0 %v8710
    %8783 = vmatpush1.bf16.msra.mxu0 %v8709
    %8784 = vmatprep.subr.bf16.mxu0 %v8707
    %8785 = vmatpush1.bf16.msra.mxu0 %v8706
    %8786 = vmatprep.subr.bf16.mxu0 %v8704
    %8787 = vmatpush1.bf16.msra.mxu0 %v8703
    %8788 = vmatprep.subr.bf16.mxu0 %v8701
    %8789 = vmatpush1.bf16.msra.mxu0 %v8700
    %8790 = vmatprep.subr.bf16.mxu0 %v8698
    %8791 = vmatpush1.bf16.msra.mxu0 %v8697
    %8792 = vmatprep.subr.bf16.mxu0 %v8695
    %8793 = vmatpush1.bf16.msra.mxu0 %v8694
    %8794 = vmatprep.subr.bf16.mxu0 %v8692
    %8795 = vmatpush1.bf16.msra.mxu0 %v8691
    %8796 = vmatprep.subr.bf16.mxu0 %v8737
    %8797 = vmatpush2.bf16.msra.mxu0 %v8736
    %8798 = vmatprep.subr.bf16.mxu0 %v8734
    %8799 = vmatpush2.bf16.msra.mxu0 %v8733
    %8800 = vmatprep.subr.bf16.mxu0 %v8731
    %8801 = vmatpush2.bf16.msra.mxu0 %v8730
    %8802 = vmatprep.subr.bf16.mxu0 %v8728
    %8803 = vmatpush2.bf16.msra.mxu0 %v8727
    %8804 = vmatprep.subr.bf16.mxu0 %v8725
    %8805 = vmatpush2.bf16.msra.mxu0 %v8724
    %8806 = vmatprep.subr.bf16.mxu0 %v8722
    %8807 = vmatpush2.bf16.msra.mxu0 %v8721
    %8808 = vmatprep.subr.bf16.mxu0 %v8719
    %8809 = vmatpush2.bf16.msra.mxu0 %v8718
    %8810 = vmatprep.subr.bf16.mxu0 %v8716
    %8811 = vmatpush2.bf16.msra.mxu0 %v8715
    %8812 = vmatprep.mubr.bf16.mxu0 %v8590
    %8813 = vmatmul.mubr.bf16.gmra.mxu0 %v8589
    %v8814 = vpop.f32.mrf.mxu0
    %v8815 = vadd.f32 %v8774, %v8814
    %v8816 = vpop.f32.mrf.mxu0
    %v8817 = vadd.f32 %v8776, %v8816
    %v8818 = vpop.f32.mrf.mxu0
    %v8819 = vpop.f32.mrf.mxu0
    %8820 = vdwg.mxu0
    %8821 = vmatprep.subr.bf16.mxu0 0
    %8822 = vmatpush1.bf16.msra.mxu0 %v8666
    %8823 = vmatprep.subr.bf16.mxu0 0
    %8824 = vmatpush1.bf16.msra.mxu0 %v8663
    %8825 = vmatprep.subr.bf16.mxu0 0
    %8826 = vmatpush1.bf16.msra.mxu0 %v8660
    %8827 = vmatprep.subr.bf16.mxu0 0
    %8828 = vmatpush1.bf16.msra.mxu0 %v8657
    %8829 = vmatprep.subr.bf16.mxu0 0
    %8830 = vmatpush1.bf16.msra.mxu0 %v8654
    %8831 = vmatprep.subr.bf16.mxu0 0
    %8832 = vmatpush1.bf16.msra.mxu0 %v8651
    %8833 = vmatprep.subr.bf16.mxu0 0
    %8834 = vmatpush1.bf16.msra.mxu0 %v8648
    %8835 = vmatprep.subr.bf16.mxu0 0
    %8836 = vmatpush1.bf16.msra.mxu0 %v8645
    %8837 = vmatprep.subr.bf16.mxu0 0
    %8838 = vmatpush2.bf16.msra.mxu0 %v8690
    %8839 = vmatprep.subr.bf16.mxu0 0
    %8840 = vmatpush2.bf16.msra.mxu0 %v8687
    %8841 = vmatprep.subr.bf16.mxu0 0
    %8842 = vmatpush2.bf16.msra.mxu0 %v8684
    %8843 = vmatprep.subr.bf16.mxu0 0
    %8844 = vmatpush2.bf16.msra.mxu0 %v8681
    %8845 = vmatprep.subr.bf16.mxu0 0
    %8846 = vmatpush2.bf16.msra.mxu0 %v8678
    %8847 = vmatprep.subr.bf16.mxu0 0
    %8848 = vmatpush2.bf16.msra.mxu0 %v8675
    %8849 = vmatprep.subr.bf16.mxu0 0
    %8850 = vmatpush2.bf16.msra.mxu0 %v8672
    %8851 = vmatprep.subr.bf16.mxu0 0
    %8852 = vmatpush2.bf16.msra.mxu0 %v8669
    %8853 = vmatprep.mubr.bf16.mxu0 %v8588
    %8854 = vmatmul.mubr.bf16.gmra.mxu0 %v8587
    %v8855 = vpop.f32.mrf.mxu0
    %v8856 = vadd.f32 0.0, %v8855
    %v8857 = vpop.f32.mrf.mxu0
    %v8858 = vpop.f32.mrf.mxu0
    %v8859 = vpop.f32.mrf.mxu0
    %8860 = vdwg.mxu0
    %8861 = vmatprep.subr.bf16.mxu0 0
    %8862 = vmatpush1.bf16.msra.mxu0 %v8714
    %8863 = vmatprep.subr.bf16.mxu0 0
    %8864 = vmatpush1.bf16.msra.mxu0 %v8711
    %8865 = vmatprep.subr.bf16.mxu0 0
    %8866 = vmatpush1.bf16.msra.mxu0 %v8708
    %8867 = vmatprep.subr.bf16.mxu0 0
    %8868 = vmatpush1.bf16.msra.mxu0 %v8705
    %8869 = vmatprep.subr.bf16.mxu0 0
    %8870 = vmatpush1.bf16.msra.mxu0 %v8702
    %8871 = vmatprep.subr.bf16.mxu0 0
    %8872 = vmatpush1.bf16.msra.mxu0 %v8699
    %8873 = vmatprep.subr.bf16.mxu0 0
    %8874 = vmatpush1.bf16.msra.mxu0 %v8696
    %8875 = vmatprep.subr.bf16.mxu0 0
    %8876 = vmatpush1.bf16.msra.mxu0 %v8693
    %8877 = vmatprep.subr.bf16.mxu0 0
    %8878 = vmatpush2.bf16.msra.mxu0 %v8738
    %8879 = vmatprep.subr.bf16.mxu0 0
    %8880 = vmatpush2.bf16.msra.mxu0 %v8735
    %8881 = vmatprep.subr.bf16.mxu0 0
    %8882 = vmatpush2.bf16.msra.mxu0 %v8732
    %8883 = vmatprep.subr.bf16.mxu0 0
    %8884 = vmatpush2.bf16.msra.mxu0 %v8729
    %8885 = vmatprep.subr.bf16.mxu0 0
    %8886 = vmatpush2.bf16.msra.mxu0 %v8726
    %8887 = vmatprep.subr.bf16.mxu0 0
    %8888 = vmatpush2.bf16.msra.mxu0 %v8723
    %8889 = vmatprep.subr.bf16.mxu0 0
    %8890 = vmatpush2.bf16.msra.mxu0 %v8720
    %8891 = vmatprep.subr.bf16.mxu0 0
    %8892 = vmatpush2.bf16.msra.mxu0 %v8717
    %8893 = vmatprep.mubr.bf16.mxu0 %v8590
    %8894 = vmatmul.mubr.bf16.gmra.mxu0 %v8589
    %v8895 = vpop.f32.mrf.mxu0
    %v8896 = vadd.f32 %v8856, %v8895
    %v8897 = vpop.f32.mrf.mxu0
    %v8898 = vpop.f32.mrf.mxu0
    %v8899 = vpop.f32.mrf.mxu0
    %8900 = vdwg.mxu0
    %s8901 = scalar_lea.vmem [#allocation17], 83
    %v8902 = vld [vmem:[%s8901] ss:$8 sm:$0x7]
    %s8903 = scalar_lea.vmem [#allocation17], 82
    %v8904 = vld [vmem:[%s8903] ss:$8 sm:$0x7]
    %v8906 = vlaneseq
    %v8907 = vshrl.u32 %v8906, 7
    %v8908 = vsub.s32 0, %v8907
    %v8909 = vrot.slane %v8902, %v8908
    %v8910 = vlaneseq
    %v8911 = vshrl.u32 %v8910, 7
    %v8912 = vsub.s32 1, %v8911
    %v8913 = vrot.slane %v8902, %v8912
    %v8914 = vlaneseq
    %v8915 = vshrl.u32 %v8914, 7
    %v8916 = vsub.s32 2, %v8915
    %v8917 = vrot.slane %v8902, %v8916
    %v8921 = vmul.f32 %v8815, %v8909
    %v8922 = vmul.f32 %v8817, %v8913
    %v8923 = vmul.f32 %v8896, %v8917
    %v8925 = vlaneseq
    %v8926 = vshrl.u32 %v8925, 7
    %v8927 = vsub.s32 0, %v8926
    %v8928 = vrot.slane %v8904, %v8927
    %v8929 = vlaneseq
    %v8930 = vshrl.u32 %v8929, 7
    %v8931 = vsub.s32 1, %v8930
    %v8932 = vrot.slane %v8904, %v8931
    %v8933 = vlaneseq
    %v8934 = vshrl.u32 %v8933, 7
    %v8935 = vsub.s32 2, %v8934
    %v8936 = vrot.slane %v8904, %v8935
    %v8940 = vadd.f32 %v8921, %v8928
    %v8941 = vadd.f32 %v8922, %v8932
    %v8942 = vadd.f32 %v8923, %v8936
    %vm8943 = vcmp.gt.f32.partialorder %v8940, 0.0
    %vm8944 = vcmp.gt.f32.partialorder %v8941, 0.0
    %vm8945 = vcmp.gt.f32.partialorder %v8942, 0.0
    %v8946 = vstv %s75
    %v8947 = vmul.f32 %v8946, %v8940
    %v8948 = vmul.f32 %v8946, %v8941
    %v8949 = vmul.f32 %v8946, %v8942
    %v8950 = vsel %vm8943, %v8940, %v8947
    %v8951 = vsel %vm8944, %v8941, %v8948
    %v8952 = vsel %vm8945, %v8942, %v8949
    %v8953 = vpack.c.bf16 %v8950, %v8950
    %v8954 = vpack.c.bf16 %v8951, %v8951
    %v8955 = vpack.c.bf16 %v8952, %v8952
    %s8956 = smul.u32 2, 48
    %s8957 = smul.u32 %s8956, 2
    %s8958 = sshll.u32 %s8957, 4
    %8959 = dma.done %s164, %s8958
    %v8960 = vld [vmem:[#allocation9] sm:$0xff]
    %v8961 = vld [vmem:[#allocation9 + $0x8] sm:$0xff]
    %v8962 = vld [vmem:[#allocation9 + $0x10] sm:$0xff]
    %v8963 = vld [vmem:[#allocation9 + $0x18] sm:$0xff]
    %v8964 = vld [vmem:[#allocation9 + $0x20] sm:$0xff]
    %v8965 = vld [vmem:[#allocation9 + $0x28] sm:$0xff]
    %v8966 = vld [vmem:[#allocation9 + $0x30] sm:$0xff]
    %v8967 = vld [vmem:[#allocation9 + $0x38] sm:$0xff]
    %v8968 = vld [vmem:[#allocation9 + $0x40] sm:$0xff]
    %v8969 = vld [vmem:[#allocation9 + $0x48] sm:$0xff]
    %v8970 = vld [vmem:[#allocation9 + $0x50] sm:$0xff]
    %v8971 = vld [vmem:[#allocation9 + $0x58] sm:$0xff]
    %v8972 = vld [vmem:[#allocation9 + $0x60] sm:$0xff]
    %v8973 = vld [vmem:[#allocation9 + $0x68] sm:$0xff]
    %v8974 = vld [vmem:[#allocation9 + $0x70] sm:$0xff]
    %v8975 = vld [vmem:[#allocation9 + $0x78] sm:$0xff]
    %v8976 = vld [vmem:[#allocation9 + $0x80] sm:$0xff]
    %v8977 = vld [vmem:[#allocation9 + $0x88] sm:$0xff]
    %v8978 = vld [vmem:[#allocation9 + $0x90] sm:$0xff]
    %v8979 = vld [vmem:[#allocation9 + $0x98] sm:$0xff]
    %v8980 = vld [vmem:[#allocation9 + $0xa0] sm:$0xff]
    %v8981 = vld [vmem:[#allocation9 + $0xa8] sm:$0xff]
    %v8982 = vld [vmem:[#allocation9 + $0xb0] sm:$0xff]
    %v8983 = vld [vmem:[#allocation9 + $0xb8] sm:$0xff]
    %v8984 = vunpack.c.l.s8.bf16 %v8960
    %v8985 = vunpack.c.l.s8.bf16 %v8961
    %v8986 = vunpack.c.h.s8.bf16 %v8960
    %v8987 = vunpack.c.h.s8.bf16 %v8961
    %v8988 = vunpack.c.l.s8.bf16 %v8962
    %v8989 = vunpack.c.l.s8.bf16 %v8963
    %v8990 = vunpack.c.h.s8.bf16 %v8962
    %v8991 = vunpack.c.h.s8.bf16 %v8963
    %v8992 = vunpack.c.l.s8.bf16 %v8964
    %v8993 = vunpack.c.l.s8.bf16 %v8965
    %v8994 = vunpack.c.h.s8.bf16 %v8964
    %v8995 = vunpack.c.h.s8.bf16 %v8965
    %v8996 = vunpack.c.l.s8.bf16 %v8966
    %v8997 = vunpack.c.l.s8.bf16 %v8967
    %v8998 = vunpack.c.h.s8.bf16 %v8966
    %v8999 = vunpack.c.h.s8.bf16 %v8967
    %v9000 = vunpack.c.l.s8.bf16 %v8968
    %v9001 = vunpack.c.l.s8.bf16 %v8969
    %v9002 = vunpack.c.h.s8.bf16 %v8968
    %v9003 = vunpack.c.h.s8.bf16 %v8969
    %v9004 = vunpack.c.l.s8.bf16 %v8970
    %v9005 = vunpack.c.l.s8.bf16 %v8971
    %v9006 = vunpack.c.h.s8.bf16 %v8970
    %v9007 = vunpack.c.h.s8.bf16 %v8971
    %v9008 = vunpack.c.l.s8.bf16 %v8972
    %v9009 = vunpack.c.l.s8.bf16 %v8973
    %v9010 = vunpack.c.h.s8.bf16 %v8972
    %v9011 = vunpack.c.h.s8.bf16 %v8973
    %v9012 = vunpack.c.l.s8.bf16 %v8974
    %v9013 = vunpack.c.l.s8.bf16 %v8975
    %v9014 = vunpack.c.h.s8.bf16 %v8974
    %v9015 = vunpack.c.h.s8.bf16 %v8975
    %v9016 = vunpack.c.l.s8.bf16 %v8976
    %v9017 = vunpack.c.l.s8.bf16 %v8977
    %v9018 = vunpack.c.h.s8.bf16 %v8976
    %v9019 = vunpack.c.h.s8.bf16 %v8977
    %v9020 = vunpack.c.l.s8.bf16 %v8978
    %v9021 = vunpack.c.l.s8.bf16 %v8979
    %v9022 = vunpack.c.h.s8.bf16 %v8978
    %v9023 = vunpack.c.h.s8.bf16 %v8979
    %v9024 = vunpack.c.l.s8.bf16 %v8980
    %v9025 = vunpack.c.l.s8.bf16 %v8981
    %v9026 = vunpack.c.h.s8.bf16 %v8980
    %v9027 = vunpack.c.h.s8.bf16 %v8981
    %v9028 = vunpack.c.l.s8.bf16 %v8982
    %v9029 = vunpack.c.l.s8.bf16 %v8983
    %v9030 = vunpack.c.h.s8.bf16 %v8982
    %v9031 = vunpack.c.h.s8.bf16 %v8983
    %9032 = vmatprep.subr.bf16.mxu0 %v8999
    %9033 = vmatpush1.bf16.msra.mxu0 %v8998
    %9034 = vmatprep.subr.bf16.mxu0 %v8997
    %9035 = vmatpush1.bf16.msra.mxu0 %v8996
    %9036 = vmatprep.subr.bf16.mxu0 %v8995
    %9037 = vmatpush1.bf16.msra.mxu0 %v8994
    %9038 = vmatprep.subr.bf16.mxu0 %v8993
    %9039 = vmatpush1.bf16.msra.mxu0 %v8992
    %9040 = vmatprep.subr.bf16.mxu0 %v8991
    %9041 = vmatpush1.bf16.msra.mxu0 %v8990
    %9042 = vmatprep.subr.bf16.mxu0 %v8989
    %9043 = vmatpush1.bf16.msra.mxu0 %v8988
    %9044 = vmatprep.subr.bf16.mxu0 %v8987
    %9045 = vmatpush1.bf16.msra.mxu0 %v8986
    %9046 = vmatprep.subr.bf16.mxu0 %v8985
    %9047 = vmatpush1.bf16.msra.mxu0 %v8984
    %9048 = vmatprep.subr.bf16.mxu0 %v9015
    %9049 = vmatpush2.bf16.msra.mxu0 %v9014
    %9050 = vmatprep.subr.bf16.mxu0 %v9013
    %9051 = vmatpush2.bf16.msra.mxu0 %v9012
    %9052 = vmatprep.subr.bf16.mxu0 %v9011
    %9053 = vmatpush2.bf16.msra.mxu0 %v9010
    %9054 = vmatprep.subr.bf16.mxu0 %v9009
    %9055 = vmatpush2.bf16.msra.mxu0 %v9008
    %9056 = vmatprep.subr.bf16.mxu0 %v9007
    %9057 = vmatpush2.bf16.msra.mxu0 %v9006
    %9058 = vmatprep.subr.bf16.mxu0 %v9005
    %9059 = vmatpush2.bf16.msra.mxu0 %v9004
    %9060 = vmatprep.subr.bf16.mxu0 %v9003
    %9061 = vmatpush2.bf16.msra.mxu0 %v9002
    %9062 = vmatprep.subr.bf16.mxu0 %v9001
    %9063 = vmatpush2.bf16.msra.mxu0 %v9000
    %9064 = vmatprep.mubr.bf16.mxu0 %v8954
    %9065 = vmatmul.mubr.bf16.gmra.mxu0 %v8953
    %v9066 = vpop.f32.mrf.mxu0
    %v9067 = vadd.f32 0.0, %v9066
    %v9068 = vpop.f32.mrf.mxu0
    %v9069 = vadd.f32 0.0, %v9068
    %v9070 = vpop.f32.mrf.mxu0
    %v9071 = vpop.f32.mrf.mxu0
    %9072 = vdwg.mxu0
    %9073 = vmatprep.subr.bf16.mxu0 %v9031
    %9074 = vmatpush1.bf16.msra.mxu0 %v9030
    %9075 = vmatprep.subr.bf16.mxu0 %v9029
    %9076 = vmatpush1.bf16.msra.mxu0 %v9028
    %9077 = vmatprep.subr.bf16.mxu0 %v9027
    %9078 = vmatpush1.bf16.msra.mxu0 %v9026
    %9079 = vmatprep.subr.bf16.mxu0 %v9025
    %9080 = vmatpush1.bf16.msra.mxu0 %v9024
    %9081 = vmatprep.subr.bf16.mxu0 %v9023
    %9082 = vmatpush1.bf16.msra.mxu0 %v9022
    %9083 = vmatprep.subr.bf16.mxu0 %v9021
    %9084 = vmatpush1.bf16.msra.mxu0 %v9020
    %9085 = vmatprep.subr.bf16.mxu0 %v9019
    %9086 = vmatpush1.bf16.msra.mxu0 %v9018
    %9087 = vmatprep.subr.bf16.mxu0 %v9017
    %9088 = vmatpush1.bf16.msra.mxu0 %v9016
    %9089 = vmatprep.subr.bf16.mxu0 0
    %9090 = vmatpush2.bf16.msra.mxu0 0
    %9091 = vmatprep.subr.bf16.mxu0 0
    %9092 = vmatpush2.bf16.msra.mxu0 0
    %9093 = vmatprep.subr.bf16.mxu0 0
    %9094 = vmatpush2.bf16.msra.mxu0 0
    %9095 = vmatprep.subr.bf16.mxu0 0
    %9096 = vmatpush2.bf16.msra.mxu0 0
    %9097 = vmatprep.subr.bf16.mxu0 0
    %9098 = vmatpush2.bf16.msra.mxu0 0
    %9099 = vmatprep.subr.bf16.mxu0 0
    %9100 = vmatpush2.bf16.msra.mxu0 0
    %9101 = vmatprep.subr.bf16.mxu0 0
    %9102 = vmatpush2.bf16.msra.mxu0 0
    %9103 = vmatprep.subr.bf16.mxu0 0
    %9104 = vmatpush2.bf16.msra.mxu0 0
    %9105 = vmatprep.mubr.bf16.mxu0 0
    %9106 = vmatmul.mubr.bf16.gmra.mxu0 %v8955
    %v9107 = vpop.f32.mrf.mxu0
    %v9108 = vadd.f32 %v9067, %v9107
    %v9109 = vpop.f32.mrf.mxu0
    %v9110 = vadd.f32 %v9069, %v9109
    %v9111 = vpop.f32.mrf.mxu0
    %v9112 = vpop.f32.mrf.mxu0
    %9113 = vdwg.mxu0
    %s9114 = scalar_lea.vmem [#allocation17], 85
    %v9115 = vld [vmem:[%s9114] ss:$8 sm:$0x3]
    %s9116 = scalar_lea.vmem [#allocation17], 84
    %v9117 = vld [vmem:[%s9116] ss:$8 sm:$0x3]
    %v9119 = vlaneseq
    %v9120 = vshrl.u32 %v9119, 7
    %v9121 = vsub.s32 0, %v9120
    %v9122 = vrot.slane %v9115, %v9121
    %v9123 = vlaneseq
    %v9124 = vshrl.u32 %v9123, 7
    %v9125 = vsub.s32 1, %v9124
    %v9126 = vrot.slane %v9115, %v9125
    %v9129 = vmul.f32 %v9108, %v9122
    %v9130 = vmul.f32 %v9110, %v9126
    %v9132 = vlaneseq
    %v9133 = vshrl.u32 %v9132, 7
    %v9134 = vsub.s32 0, %v9133
    %v9135 = vrot.slane %v9117, %v9134
    %v9136 = vlaneseq
    %v9137 = vshrl.u32 %v9136, 7
    %v9138 = vsub.s32 1, %v9137
    %v9139 = vrot.slane %v9117, %v9138
    %v9142 = vadd.f32 %v9129, %v9135
    %v9143 = vadd.f32 %v9130, %v9139
    %vm9144 = vcmp.gt.f32.partialorder %v9142, 0.0
    %vm9145 = vcmp.gt.f32.partialorder %v9143, 0.0
    %v9146 = vstv %s76
    %v9147 = vmul.f32 %v9146, %v9142
    %v9148 = vmul.f32 %v9146, %v9143
    %v9149 = vsel %vm9144, %v9142, %v9147
    %v9150 = vsel %vm9145, %v9143, %v9148
    %v9151 = vpack.c.bf16 %v9149, %v9149
    %v9152 = vpack.c.bf16 %v9150, %v9150
    %s9153 = smul.u32 2, 32
    %s9154 = smul.u32 %s9153, 2
    %s9155 = sshll.u32 %s9154, 4
    %9156 = dma.done %s176, %s9155
    %v9157 = vld [vmem:[#allocation10] sm:$0xff]
    %v9158 = vld [vmem:[#allocation10 + $0x8] sm:$0xff]
    %v9159 = vld [vmem:[#allocation10 + $0x10] sm:$0xff]
    %v9160 = vld [vmem:[#allocation10 + $0x18] sm:$0xff]
    %v9161 = vld [vmem:[#allocation10 + $0x20] sm:$0xff]
    %v9162 = vld [vmem:[#allocation10 + $0x28] sm:$0xff]
    %v9163 = vld [vmem:[#allocation10 + $0x30] sm:$0xff]
    %v9164 = vld [vmem:[#allocation10 + $0x38] sm:$0xff]
    %v9165 = vld [vmem:[#allocation10 + $0x40] sm:$0xff]
    %v9166 = vld [vmem:[#allocation10 + $0x48] sm:$0xff]
    %v9167 = vld [vmem:[#allocation10 + $0x50] sm:$0xff]
    %v9168 = vld [vmem:[#allocation10 + $0x58] sm:$0xff]
    %v9169 = vld [vmem:[#allocation10 + $0x60] sm:$0xff]
    %v9170 = vld [vmem:[#allocation10 + $0x68] sm:$0xff]
    %v9171 = vld [vmem:[#allocation10 + $0x70] sm:$0xff]
    %v9172 = vld [vmem:[#allocation10 + $0x78] sm:$0xff]
    %v9173 = vunpack.c.l.s8.bf16 %v9157
    %v9174 = vunpack.c.l.s8.bf16 %v9158
    %v9175 = vunpack.c.h.s8.bf16 %v9157
    %v9176 = vunpack.c.h.s8.bf16 %v9158
    %v9177 = vunpack.c.l.s8.bf16 %v9159
    %v9178 = vunpack.c.l.s8.bf16 %v9160
    %v9179 = vunpack.c.h.s8.bf16 %v9159
    %v9180 = vunpack.c.h.s8.bf16 %v9160
    %v9181 = vunpack.c.l.s8.bf16 %v9161
    %v9182 = vunpack.c.l.s8.bf16 %v9162
    %v9183 = vunpack.c.h.s8.bf16 %v9161
    %v9184 = vunpack.c.h.s8.bf16 %v9162
    %v9185 = vunpack.c.l.s8.bf16 %v9163
    %v9186 = vunpack.c.l.s8.bf16 %v9164
    %v9187 = vunpack.c.h.s8.bf16 %v9163
    %v9188 = vunpack.c.h.s8.bf16 %v9164
    %v9189 = vunpack.c.l.s8.bf16 %v9165
    %v9190 = vunpack.c.l.s8.bf16 %v9166
    %v9191 = vunpack.c.h.s8.bf16 %v9165
    %v9192 = vunpack.c.h.s8.bf16 %v9166
    %v9193 = vunpack.c.l.s8.bf16 %v9167
    %v9194 = vunpack.c.l.s8.bf16 %v9168
    %v9195 = vunpack.c.h.s8.bf16 %v9167
    %v9196 = vunpack.c.h.s8.bf16 %v9168
    %v9197 = vunpack.c.l.s8.bf16 %v9169
    %v9198 = vunpack.c.l.s8.bf16 %v9170
    %v9199 = vunpack.c.h.s8.bf16 %v9169
    %v9200 = vunpack.c.h.s8.bf16 %v9170
    %v9201 = vunpack.c.l.s8.bf16 %v9171
    %v9202 = vunpack.c.l.s8.bf16 %v9172
    %v9203 = vunpack.c.h.s8.bf16 %v9171
    %v9204 = vunpack.c.h.s8.bf16 %v9172
    %9205 = vmatprep.subr.bf16.mxu0 %v9188
    %9206 = vmatpush1.bf16.msra.mxu0 %v9187
    %9207 = vmatprep.subr.bf16.mxu0 %v9186
    %9208 = vmatpush1.bf16.msra.mxu0 %v9185
    %9209 = vmatprep.subr.bf16.mxu0 %v9184
    %9210 = vmatpush1.bf16.msra.mxu0 %v9183
    %9211 = vmatprep.subr.bf16.mxu0 %v9182
    %9212 = vmatpush1.bf16.msra.mxu0 %v9181
    %9213 = vmatprep.subr.bf16.mxu0 %v9180
    %9214 = vmatpush1.bf16.msra.mxu0 %v9179
    %9215 = vmatprep.subr.bf16.mxu0 %v9178
    %9216 = vmatpush1.bf16.msra.mxu0 %v9177
    %9217 = vmatprep.subr.bf16.mxu0 %v9176
    %9218 = vmatpush1.bf16.msra.mxu0 %v9175
    %9219 = vmatprep.subr.bf16.mxu0 %v9174
    %9220 = vmatpush1.bf16.msra.mxu0 %v9173
    %9221 = vmatprep.subr.bf16.mxu0 %v9204
    %9222 = vmatpush2.bf16.msra.mxu0 %v9203
    %9223 = vmatprep.subr.bf16.mxu0 %v9202
    %9224 = vmatpush2.bf16.msra.mxu0 %v9201
    %9225 = vmatprep.subr.bf16.mxu0 %v9200
    %9226 = vmatpush2.bf16.msra.mxu0 %v9199
    %9227 = vmatprep.subr.bf16.mxu0 %v9198
    %9228 = vmatpush2.bf16.msra.mxu0 %v9197
    %9229 = vmatprep.subr.bf16.mxu0 %v9196
    %9230 = vmatpush2.bf16.msra.mxu0 %v9195
    %9231 = vmatprep.subr.bf16.mxu0 %v9194
    %9232 = vmatpush2.bf16.msra.mxu0 %v9193
    %9233 = vmatprep.subr.bf16.mxu0 %v9192
    %9234 = vmatpush2.bf16.msra.mxu0 %v9191
    %9235 = vmatprep.subr.bf16.mxu0 %v9190
    %9236 = vmatpush2.bf16.msra.mxu0 %v9189
    %9237 = vmatprep.mubr.bf16.mxu0 %v9152
    %9238 = vmatmul.mubr.bf16.gmra.mxu0 %v9151
    %v9239 = vpop.f32.mrf.mxu0
    %v9240 = vadd.f32 0.0, %v9239
    %v9241 = vpop.f32.mrf.mxu0
    %v9242 = vadd.f32 0.0, %v9241
    %v9243 = vpop.f32.mrf.mxu0
    %v9244 = vpop.f32.mrf.mxu0
    %9245 = vdwg.mxu0
    %s9246 = scalar_lea.vmem [#allocation17], 87
    %v9247 = vld [vmem:[%s9246] ss:$8 sm:$0x3]
    %s9248 = scalar_lea.vmem [#allocation17], 86
    %v9249 = vld [vmem:[%s9248] ss:$8 sm:$0x3]
    %v9251 = vlaneseq
    %v9252 = vshrl.u32 %v9251, 7
    %v9253 = vsub.s32 0, %v9252
    %v9254 = vrot.slane %v9247, %v9253
    %v9255 = vlaneseq
    %v9256 = vshrl.u32 %v9255, 7
    %v9257 = vsub.s32 1, %v9256
    %v9258 = vrot.slane %v9247, %v9257
    %v9261 = vmul.f32 %v9240, %v9254
    %v9262 = vmul.f32 %v9242, %v9258
    %v9264 = vlaneseq
    %v9265 = vshrl.u32 %v9264, 7
    %v9266 = vsub.s32 0, %v9265
    %v9267 = vrot.slane %v9249, %v9266
    %v9268 = vlaneseq
    %v9269 = vshrl.u32 %v9268, 7
    %v9270 = vsub.s32 1, %v9269
    %v9271 = vrot.slane %v9249, %v9270
    %v9274 = vadd.f32 %v9261, %v9267
    %v9275 = vadd.f32 %v9262, %v9271
    %vm9276 = vcmp.gt.f32.partialorder %v9274, 0.0
    %vm9277 = vcmp.gt.f32.partialorder %v9275, 0.0
    %v9278 = vstv %s77
    %v9279 = vmul.f32 %v9278, %v9274
    %v9280 = vmul.f32 %v9278, %v9275
    %v9281 = vsel %vm9276, %v9274, %v9279
    %v9282 = vsel %vm9277, %v9275, %v9280
    %v9283 = vpack.c.bf16 %v9281, %v9281
    %v9284 = vpack.c.bf16 %v9282, %v9282
    %s9285 = smul.u32 2, 60
    %s9286 = smul.u32 %s9285, 1
    %s9287 = sshll.u32 %s9286, 4
    %9288 = dma.done %s188, %s9287
    %v9289 = vld [vmem:[#allocation11] sm:$0xff]
    %v9290 = vld [vmem:[#allocation11 + $0x8] sm:$0xff]
    %v9291 = vld [vmem:[#allocation11 + $0x10] sm:$0xff]
    %v9292 = vld [vmem:[#allocation11 + $0x18] sm:$0xff]
    %v9293 = vld [vmem:[#allocation11 + $0x20] sm:$0xff]
    %v9294 = vld [vmem:[#allocation11 + $0x28] sm:$0xff]
    %v9295 = vld [vmem:[#allocation11 + $0x30] sm:$0xff]
    %v9296 = vld [vmem:[#allocation11 + $0x38] sm:$0xff]
    %v9297 = vunpack.c.l.s8.bf16 %v9289
    %v9298 = vunpack.c.h.s8.bf16 %v9289
    %v9299 = vunpack.c.l.s8.bf16 %v9290
    %v9300 = vunpack.c.h.s8.bf16 %v9290
    %v9301 = vunpack.c.l.s8.bf16 %v9291
    %v9302 = vunpack.c.h.s8.bf16 %v9291
    %v9303 = vunpack.c.l.s8.bf16 %v9292
    %v9304 = vunpack.c.h.s8.bf16 %v9292
    %v9305 = vunpack.c.l.s8.bf16 %v9293
    %v9306 = vunpack.c.h.s8.bf16 %v9293
    %v9307 = vunpack.c.l.s8.bf16 %v9294
    %v9308 = vunpack.c.h.s8.bf16 %v9294
    %v9309 = vunpack.c.l.s8.bf16 %v9295
    %v9310 = vunpack.c.h.s8.bf16 %v9295
    %v9311 = vunpack.c.l.s8.bf16 %v9296
    %v9312 = vunpack.c.h.s8.bf16 %v9296
    %9313 = vmatprep.subr.bf16.mxu0 0
    %9314 = vmatpush1.bf16.msra.mxu0 %v9304
    %9315 = vmatprep.subr.bf16.mxu0 0
    %9316 = vmatpush1.bf16.msra.mxu0 %v9303
    %9317 = vmatprep.subr.bf16.mxu0 0
    %9318 = vmatpush1.bf16.msra.mxu0 %v9302
    %9319 = vmatprep.subr.bf16.mxu0 0
    %9320 = vmatpush1.bf16.msra.mxu0 %v9301
    %9321 = vmatprep.subr.bf16.mxu0 0
    %9322 = vmatpush1.bf16.msra.mxu0 %v9300
    %9323 = vmatprep.subr.bf16.mxu0 0
    %9324 = vmatpush1.bf16.msra.mxu0 %v9299
    %9325 = vmatprep.subr.bf16.mxu0 0
    %9326 = vmatpush1.bf16.msra.mxu0 %v9298
    %9327 = vmatprep.subr.bf16.mxu0 0
    %9328 = vmatpush1.bf16.msra.mxu0 %v9297
    %9329 = vmatprep.subr.bf16.mxu0 0
    %9330 = vmatpush2.bf16.msra.mxu0 %v9312
    %9331 = vmatprep.subr.bf16.mxu0 0
    %9332 = vmatpush2.bf16.msra.mxu0 %v9311
    %9333 = vmatprep.subr.bf16.mxu0 0
    %9334 = vmatpush2.bf16.msra.mxu0 %v9310
    %9335 = vmatprep.subr.bf16.mxu0 0
    %9336 = vmatpush2.bf16.msra.mxu0 %v9309
    %9337 = vmatprep.subr.bf16.mxu0 0
    %9338 = vmatpush2.bf16.msra.mxu0 %v9308
    %9339 = vmatprep.subr.bf16.mxu0 0
    %9340 = vmatpush2.bf16.msra.mxu0 %v9307
    %9341 = vmatprep.subr.bf16.mxu0 0
    %9342 = vmatpush2.bf16.msra.mxu0 %v9306
    %9343 = vmatprep.subr.bf16.mxu0 0
    %9344 = vmatpush2.bf16.msra.mxu0 %v9305
    %9345 = vmatprep.mubr.bf16.mxu0 %v9284
    %9346 = vmatmul.mubr.bf16.gmra.mxu0 %v9283
    %v9347 = vpop.f32.mrf.mxu0
    %v9348 = vadd.f32 0.0, %v9347
    %v9349 = vpop.f32.mrf.mxu0
    %v9350 = vpop.f32.mrf.mxu0
    %v9351 = vpop.f32.mrf.mxu0
    %9352 = vdwg.mxu0
    %v9353 = vld [vmem:[#allocation17 + $0xa1] ss:$0 sm:$0xff]
    %v9354 = vld [vmem:[#allocation17 + $0xa0] ss:$0 sm:$0xff]
    %v9355 = vmul.f32 %v9348, %v9353
    %v9356 = vadd.f32 %v9355, %v9354
    %vm9357 = vcmp.gt.f32.partialorder %v9356, 0.0
    %v9358 = vstv %s78
    %v9359 = vmul.f32 %v9358, %v9356
    %v9360 = vsel %vm9357, %v9356, %v9359
    %v9361 = vpack.c.bf16 %v9360, %v9360
    %v9362 = vld [vmem:[#allocation11 + $0x40] sm:$0xff]
    %v9363 = vld [vmem:[#allocation11 + $0x48] sm:$0xff]
    %v9364 = vld [vmem:[#allocation11 + $0x50] sm:$0xff]
    %v9365 = vld [vmem:[#allocation11 + $0x58] sm:$0xff]
    %v9366 = vunpack.c.l.s8.bf16 %v9362
    %v9367 = vunpack.c.h.s8.bf16 %v9362
    %v9368 = vunpack.c.l.s8.bf16 %v9363
    %v9369 = vunpack.c.h.s8.bf16 %v9363
    %v9370 = vunpack.c.l.s8.bf16 %v9364
    %v9371 = vunpack.c.h.s8.bf16 %v9364
    %v9372 = vunpack.c.l.s8.bf16 %v9365
    %v9373 = vunpack.c.h.s8.bf16 %v9365
    %9374 = vmatprep.subr.bf16.mxu0 0
    %9375 = vmatpush1.bf16.msra.mxu0 %v9373
    %9376 = vmatprep.subr.bf16.mxu0 0
    %9377 = vmatpush1.bf16.msra.mxu0 %v9372
    %9378 = vmatprep.subr.bf16.mxu0 0
    %9379 = vmatpush1.bf16.msra.mxu0 %v9371
    %9380 = vmatprep.subr.bf16.mxu0 0
    %9381 = vmatpush1.bf16.msra.mxu0 %v9370
    %9382 = vmatprep.subr.bf16.mxu0 0
    %9383 = vmatpush1.bf16.msra.mxu0 %v9369
    %9384 = vmatprep.subr.bf16.mxu0 0
    %9385 = vmatpush1.bf16.msra.mxu0 %v9368
    %9386 = vmatprep.subr.bf16.mxu0 0
    %9387 = vmatpush1.bf16.msra.mxu0 %v9367
    %9388 = vmatprep.subr.bf16.mxu0 0
    %9389 = vmatpush1.bf16.msra.mxu0 %v9366
    %9390 = vmatprep.subr.bf16.mxu0 0
    %9391 = vmatpush2.bf16.msra.mxu0 0
    %9392 = vmatprep.subr.bf16.mxu0 0
    %9393 = vmatpush2.bf16.msra.mxu0 0
    %9394 = vmatprep.subr.bf16.mxu0 0
    %9395 = vmatpush2.bf16.msra.mxu0 0
    %9396 = vmatprep.subr.bf16.mxu0 0
    %9397 = vmatpush2.bf16.msra.mxu0 0
    %9398 = vmatprep.subr.bf16.mxu0 0
    %9399 = vmatpush2.bf16.msra.mxu0 0
    %9400 = vmatprep.subr.bf16.mxu0 0
    %9401 = vmatpush2.bf16.msra.mxu0 0
    %9402 = vmatprep.subr.bf16.mxu0 0
    %9403 = vmatpush2.bf16.msra.mxu0 0
    %9404 = vmatprep.subr.bf16.mxu0 0
    %9405 = vmatpush2.bf16.msra.mxu0 0
    %9406 = vmatprep.mubr.bf16.mxu0 0
    %9407 = vmatmul.mubr.bf16.gmra.mxu0 %v9361
    %v9408 = vpop.f32.mrf.mxu0
    %v9409 = vadd.f32 0.0, %v9408
    %v9410 = vpop.f32.mrf.mxu0
    %v9411 = vpop.f32.mrf.mxu0
    %v9412 = vpop.f32.mrf.mxu0
    %9413 = vdwg.mxu0
    %v9414 = vld [vmem:[#allocation17 + $0xa3] ss:$0 sm:$0xff]
    %v9415 = vld [vmem:[#allocation17 + $0xa2] ss:$0 sm:$0xff]
    %v9416 = vmul.f32 %v9409, %v9414
    %v9417 = vadd.f32 %v9416, %v9415
    %vm9418 = vcmp.gt.f32.partialorder %v9417, 0.0
    %v9419 = vstv %s79
    %v9420 = vmul.f32 %v9419, %v9417
    %v9421 = vsel %vm9418, %v9417, %v9420
    %v9422 = vpack.c.bf16 %v9421, %v9421
    %v9423 = vld [vmem:[#allocation11 + $0x60] sm:$0xff]
    %v9424 = vld [vmem:[#allocation11 + $0x68] sm:$0xff]
    %v9425 = vunpack.c.l.s8.bf16 %v9423
    %v9426 = vunpack.c.h.s8.bf16 %v9423
    %v9427 = vunpack.c.l.s8.bf16 %v9424
    %v9428 = vunpack.c.h.s8.bf16 %v9424
    %vm9429 = vcmask 523264
    %v9431 = vsel %vm9429, %v9422, 0
    %9433 = vmatprep.subr.bf16.mxu0 0
    %9434 = vmatpush1.bf16.msra.mxu0 0
    %9435 = vmatprep.subr.bf16.mxu0 0
    %9436 = vmatpush1.bf16.msra.mxu0 0
    %9437 = vmatprep.subr.bf16.mxu0 0
    %9438 = vmatpush1.bf16.msra.mxu0 0
    %9439 = vmatprep.subr.bf16.mxu0 0
    %9440 = vmatpush1.bf16.msra.mxu0 0
    %9441 = vmatprep.subr.bf16.mxu0 0
    %9442 = vmatpush1.bf16.msra.mxu0 %v9428
    %9443 = vmatprep.subr.bf16.mxu0 0
    %9444 = vmatpush1.bf16.msra.mxu0 %v9427
    %9445 = vmatprep.subr.bf16.mxu0 0
    %9446 = vmatpush1.bf16.msra.mxu0 %v9426
    %9447 = vmatprep.subr.bf16.mxu0 0
    %9448 = vmatpush1.bf16.msra.mxu0 %v9425
    %9449 = vmatprep.subr.bf16.mxu0 0
    %9450 = vmatpush2.bf16.msra.mxu0 0
    %9451 = vmatprep.subr.bf16.mxu0 0
    %9452 = vmatpush2.bf16.msra.mxu0 0
    %9453 = vmatprep.subr.bf16.mxu0 0
    %9454 = vmatpush2.bf16.msra.mxu0 0
    %9455 = vmatprep.subr.bf16.mxu0 0
    %9456 = vmatpush2.bf16.msra.mxu0 0
    %9457 = vmatprep.subr.bf16.mxu0 0
    %9458 = vmatpush2.bf16.msra.mxu0 0
    %9459 = vmatprep.subr.bf16.mxu0 0
    %9460 = vmatpush2.bf16.msra.mxu0 0
    %9461 = vmatprep.subr.bf16.mxu0 0
    %9462 = vmatpush2.bf16.msra.mxu0 0
    %9463 = vmatprep.subr.bf16.mxu0 0
    %9464 = vmatpush2.bf16.msra.mxu0 0
    %9465 = vmatprep.mubr.bf16.mxu0 0
    %9466 = vmatmul.mubr.bf16.gmra.mxu0 %v9431
    %v9467 = vpop.f32.mrf.mxu0
    %v9468 = vadd.f32 0.0, %v9467
    %v9469 = vpop.f32.mrf.mxu0
    %v9470 = vpop.f32.mrf.mxu0
    %v9471 = vpop.f32.mrf.mxu0
    %9472 = vdwg.mxu0
    %v9473 = vld [vmem:[#allocation17 + $0xa5] ss:$0 sm:$0xff]
    %v9474 = vld [vmem:[#allocation17 + $0xa4] ss:$0 sm:$0xff]
    %v9475 = vmul.f32 %v9468, %v9473
    %v9476 = vadd.f32 %v9475, %v9474
    %vm9477 = vcmp.gt.f32.partialorder %v9476, 0.0
    %v9478 = vstv %s80
    %v9479 = vmul.f32 %v9478, %v9476
    %v9480 = vsel %vm9477, %v9476, %v9479
    %v9481 = vpack.c.bf16 %v9480, %v9480
    %v9482 = vld [vmem:[#allocation11 + $0x70] sm:$0xff]
    %v9483 = vunpack.c.l.s8.bf16 %v9482
    %v9484 = vunpack.c.h.s8.bf16 %v9482
    %vm9485 = vcmask 261120
    %v9487 = vsel %vm9485, %v9481, 0
    %9489 = vmatprep.subr.bf16.mxu0 0
    %9490 = vmatpush1.bf16.msra.mxu0 0
    %9491 = vmatprep.subr.bf16.mxu0 0
    %9492 = vmatpush1.bf16.msra.mxu0 0
    %9493 = vmatprep.subr.bf16.mxu0 0
    %9494 = vmatpush1.bf16.msra.mxu0 0
    %9495 = vmatprep.subr.bf16.mxu0 0
    %9496 = vmatpush1.bf16.msra.mxu0 0
    %9497 = vmatprep.subr.bf16.mxu0 0
    %9498 = vmatpush1.bf16.msra.mxu0 0
    %9499 = vmatprep.subr.bf16.mxu0 0
    %9500 = vmatpush1.bf16.msra.mxu0 0
    %9501 = vmatprep.subr.bf16.mxu0 0
    %9502 = vmatpush1.bf16.msra.mxu0 %v9484
    %9503 = vmatprep.subr.bf16.mxu0 0
    %9504 = vmatpush1.bf16.msra.mxu0 %v9483
    %9505 = vmatprep.subr.bf16.mxu0 0
    %9506 = vmatpush2.bf16.msra.mxu0 0
    %9507 = vmatprep.subr.bf16.mxu0 0
    %9508 = vmatpush2.bf16.msra.mxu0 0
    %9509 = vmatprep.subr.bf16.mxu0 0
    %9510 = vmatpush2.bf16.msra.mxu0 0
    %9511 = vmatprep.subr.bf16.mxu0 0
    %9512 = vmatpush2.bf16.msra.mxu0 0
    %9513 = vmatprep.subr.bf16.mxu0 0
    %9514 = vmatpush2.bf16.msra.mxu0 0
    %9515 = vmatprep.subr.bf16.mxu0 0
    %9516 = vmatpush2.bf16.msra.mxu0 0
    %9517 = vmatprep.subr.bf16.mxu0 0
    %9518 = vmatpush2.bf16.msra.mxu0 0
    %9519 = vmatprep.subr.bf16.mxu0 0
    %9520 = vmatpush2.bf16.msra.mxu0 0
    %9521 = vmatprep.mubr.bf16.mxu0 0
    %9522 = vmatmul.mubr.bf16.gmra.mxu0 %v9487
    %v9523 = vpop.f32.mrf.mxu0
    %v9524 = vadd.f32 0.0, %v9523
    %v9525 = vpop.f32.mrf.mxu0
    %v9526 = vpop.f32.mrf.mxu0
    %v9527 = vpop.f32.mrf.mxu0
    %9528 = vdwg.mxu0
    %v9529 = vld [vmem:[#allocation17 + $0xa7] ss:$0 sm:$0xff]
    %v9530 = vld [vmem:[#allocation17 + $0xa6] ss:$0 sm:$0xff]
    %v9531 = vmul.f32 %v9524, %v9529
    %v9532 = vadd.f32 %v9531, %v9530
    %vm9533 = vcmask 15360
    %9534 = vst.msk [vmem:[%s15] sm:$0xff] %vm9533, %v9532
    // Predicated region
    $region74: #{mlp_forward.1} parent=1 // pred_check
      _
    $region75: #{mlp_forward.1} parent=1 // pred_check_branch
      %9536 = sbr.rel (0) target = $region77
    $region76: #{mlp_forward.1} parent=1 // pred_region
      _
    $region77: #{mlp_forward.1} parent=1 // pred_fallthru
      _
    // Predicated region
    $region78: #{mlp_forward.1} parent=1 // pred_check
      _
    $region79: #{mlp_forward.1} parent=1 // pred_check_branch
      %9538 = sbr.rel (0) target = $region81
    $region80: #{mlp_forward.1} parent=1 // pred_region
      _
    $region81: #{mlp_forward.1} parent=1 // pred_fallthru
      _
    %9539 = vsyncpa [#allocation14], 1
    %9540 = vsyncpa [#allocation18], 1
    %9541 = vsyncpa [#allocation15], 1
  %9542 = vsyncmov [#allocation12]
  %s9543 = vpop.sfrf %9542
  %p9544 = scmp.eq.s32.totalorder %s9543, 0
  %p9545 = pneg %p9544
  %9547 = shalt.err (%p9545)
  %s9548 = scalar_lea.sflag [#allocation12], 1
  %9549 = vsyncmov %s9548
  %s9550 = vpop.sfrf %9549
  %p9551 = scmp.eq.s32.totalorder %s9550, 0
  %p9552 = pneg %p9551
  %9554 = shalt.err (%p9552)
  %s9555 = scalar_lea.sflag [#allocation12], 2
  %9556 = vsyncmov %s9555
  %s9557 = vpop.sfrf %9556
  %p9558 = scmp.eq.s32.totalorder %s9557, 0
  %p9559 = pneg %p9558
  %9561 = shalt.err (%p9559)
  %s9562 = scalar_lea.sflag [#allocation12], 3
  %9563 = vsyncmov %s9562
  %s9564 = vpop.sfrf %9563
  %p9565 = scmp.eq.s32.totalorder %s9564, 0
  %p9566 = pneg %p9565
  %9568 = shalt.err (%p9566)
  %s9569 = scalar_lea.sflag [#allocation12], 4
  %9570 = vsyncmov %s9569
  %s9571 = vpop.sfrf %9570
  %p9572 = scmp.eq.s32.totalorder %s9571, 0
  %p9573 = pneg %p9572
  %9575 = shalt.err (%p9573)
  %s9576 = scalar_lea.sflag [#allocation12], 5
  %9577 = vsyncmov %s9576
  %s9578 = vpop.sfrf %9577
  %p9579 = scmp.eq.s32.totalorder %s9578, 0
  %p9580 = pneg %p9579
  %9582 = shalt.err (%p9580)
  %s9583 = scalar_lea.sflag [#allocation12], 6
  %9584 = vsyncmov %s9583
  %s9585 = vpop.sfrf %9584
  %p9586 = scmp.eq.s32.totalorder %s9585, 0
  %p9587 = pneg %p9586
  %9589 = shalt.err (%p9587)
  %s9590 = scalar_lea.sflag [#allocation12], 7
  %9591 = vsyncmov %s9590
  %s9592 = vpop.sfrf %9591
  %p9593 = scmp.eq.s32.totalorder %s9592, 0
  %p9594 = pneg %p9593
  %9596 = shalt.err (%p9594)
  %s9597 = scalar_lea.sflag [#allocation12], 8
  %9598 = vsyncmov %s9597
  %s9599 = vpop.sfrf %9598
  %p9600 = scmp.eq.s32.totalorder %s9599, 0
  %p9601 = pneg %p9600
  %9603 = shalt.err (%p9601)
  %s9604 = scalar_lea.sflag [#allocation12], 9
  %9605 = vsyncmov %s9604
  %s9606 = vpop.sfrf %9605
  %p9607 = scmp.eq.s32.totalorder %s9606, 0
  %p9608 = pneg %p9607
  %9610 = shalt.err (%p9608)

</llo_original>
